<compile_context>
chip_gen: v7x
topology: tpu7x:2x2x1
jax: 0.10.0
libtpu: 0.0.40
codegen_flags: <defaults>
</compile_context>

<pallas_src>
import numpy as np
import jax
import jax.numpy as jnp
from jax import lax
from jax.experimental import pallas as pl
from jax.experimental.pallas import tpu as pltpu

KSIZE = 5
PAD = 2
C_OUT = 62
THRESHOLD = 5.0

_ROW_TILE = 8                  # inner accumulator tile: 8 rows = one sublane tile
_HBLOCK_TARGET_ELEMS = 16384   # per-channel pixels per grid step (~4 MiB / 62-ch out block)


def _build_hpf_kernel(w_np, *, W, h_tile, rows, n_inner, tail_rows):
    """Build a Pallas kernel specialized on the fixed filter bank `w_np`.

    w_np: (62, 5, 5) numpy float32 -- compile-time constants (the HPF weights are a
    non-trainable buffer, so baking them is semantics-preserving).
    """
    # Per-channel nonzero-tap lists: 3x3 SRM-style kernels zero-padded to 5x5 keep
    # only 9/25 taps, so skipping zero taps removes ~2/3 of their FMAs.
    taps = []
    for c in range(C_OUT):
        tl = [(ki, kj, float(w_np[c, ki, kj]))
              for ki in range(KSIZE) for kj in range(KSIZE)
              if float(w_np[c, ki, kj]) != 0.0]
        taps.append(tl)

    def kernel(x_ref, o_ref):
        # x_ref: (1, n_hblocks*h_tile + 4, W + 4)  zero-padded input (VMEM; its block
        #        index only changes with the batch axis, so it is fetched once/image)
        # o_ref: (1, 62, h_tile, W)                output block, NCHW, W on lanes
        hb = pl.program_id(1)
        h_base = hb * h_tile          # top output row of this block (padded coords)

        def do_rows(h0, ht):
            # 25 shifted input slabs, loaded once per row tile and reused by all 62
            # channels (previously re-sliced for every 2-channel block).
            slabs = [[x_ref[0, pl.ds(h_base + h0 + ki, ht), pl.ds(kj, W)]
                      for kj in range(KSIZE)]
                     for ki in range(KSIZE)]
            for c in range(C_OUT):
                tl = taps[c]
                if tl:
                    ki0, kj0, w0 = tl[0]
                    acc = w0 * slabs[ki0][kj0]
                    for ki, kj, wv in tl[1:]:       # nonzero taps only
                        acc = acc + wv * slabs[ki][kj]
                else:
                    acc = jnp.zeros((ht, W), jnp.float32)
                # TLU: clamp to [-5, 5]; store with W on the lane dimension.
                o_ref[0, c, pl.ds(h0, ht), :] = jnp.clip(acc, -THRESHOLD, THRESHOLD)

        if n_inner > 1:
            def body(t, carry):
                h0 = t * rows
                if rows % 8 == 0:
                    h0 = pl.multiple_of(h0, 8)      # aligned sublane stores
                do_rows(h0, rows)
                return carry
            lax.fori_loop(0, n_inner, body, 0)
        else:
            do_rows(0, rows)
        if tail_rows:                                # only when h_tile == H, H % 8 != 0
            do_rows(n_inner * rows, tail_rows)

    return kernel


def hpf_forward(x_nchw, weight):
    """x_nchw: (N, 1, H, W); weight: (62, 1, 5, 5) fixed filter bank (concrete values).

    Returns (N, 62, H, W) float32 = clamp(conv2d(x, weight, padding=2), -5, 5),
    matching PyTorch HPF.forward.
    """
    N, Cin, H, W = x_nchw.shape
    assert Cin == 1
    # Weights are a fixed buffer -> bake as compile-time constants.
    w_np = np.asarray(weight, dtype=np.float32).reshape(C_OUT, KSIZE, KSIZE)

    # --- tiling --------------------------------------------------------------
    rows = min(H, _ROW_TILE)                               # inner accumulator tile
    n_inner = max(1, _HBLOCK_TARGET_ELEMS // (rows * W))
    h_tile = rows * n_inner
    if h_tile >= H:
        h_tile = H                                         # single h-block per image
    n_hblocks = pl.cdiv(H, h_tile)
    n_inner = h_tile // rows
    tail_rows = h_tile % rows

    # Zero-pad: +2 conv-padding rows/cols, plus extra bottom rows so the last
    # (possibly partial) h-block's reads stay inside the VMEM input buffer.
    h_cover = n_hblocks * h_tile
    x_pad = jnp.pad(x_nchw[:, 0, :, :].astype(jnp.float32),
                    ((0, 0), (PAD, PAD + h_cover - H), (PAD, PAD)))
    Hp, Wp = h_cover + 2 * PAD, W + 2 * PAD

    kernel = _build_hpf_kernel(w_np, W=W, h_tile=h_tile, rows=rows,
                               n_inner=n_inner, tail_rows=tail_rows)

    return pl.pallas_call(
        kernel,
        out_shape=jax.ShapeDtypeStruct((N, C_OUT, H, W), jnp.float32),
        grid_spec=pltpu.PrefetchScalarGridSpec(
            num_scalar_prefetch=0,
            grid=(N, n_hblocks),
            in_specs=[
                # Full padded image per batch element; block index is constant across
                # the h axis, so it is not re-fetched between h-blocks.
                pl.BlockSpec((1, Hp, Wp), lambda n, hb: (n, 0, 0)),
            ],
            out_specs=pl.BlockSpec((1, C_OUT, h_tile, W),
                                   lambda n, hb: (n, 0, hb, 0)),
        ),
        compiler_params=pltpu.CompilerParams(
            dimension_semantics=("parallel", "parallel"),
            vmem_limit_bytes=64 * 1024 * 1024,
        ),
    )(x_pad)


def make_hpf_weights():
    """Deterministic stand-in for build_filters(): a (62, 1, 5, 5) filter bank.

    30 SRM-style residual filters (zero-mean 3x3 kernels zero-padded to 5x5, so 16/25
    taps are structurally zero) + 32 Gabor kernels with the same (theta, sigma, phi)
    sweep as the PyTorch code, computed in numpy with cv2.getGaborKernel's formula.
    """
    # TODO(synk): substitute the real `all_normalized_hpf_list` SRM filters (not
    # provided in the spec); the Gabor half follows cv2's kernel formula exactly.
    filters = []
    rng = np.random.RandomState(0)
    for _ in range(30):
        k = rng.randn(3, 3).astype(np.float64)
        k -= k.mean()                                      # high-pass: zero DC gain
        k /= max(np.abs(k).max(), 1e-6)
        filters.append(np.pad(k, ((1, 1), (1, 1))))
    sigmas, phis, gamma = (0.5, 1.0), (0.0, np.pi / 2.0), 0.5
    ys, xs = np.mgrid[-2:3, -2:3].astype(np.float64)
    for theta in np.arange(0.0, np.pi, np.pi / 8.0):
        for sigma in sigmas:
            lambd = sigma / 0.56
            for psi in phis:
                xr = xs * np.cos(theta) + ys * np.sin(theta)
                yr = -xs * np.sin(theta) + ys * np.cos(theta)
                g = (np.exp(-(xr ** 2 + (gamma ** 2) * yr ** 2) / (2.0 * sigma ** 2))
                     * np.cos(2.0 * np.pi * xr / lambd + psi))
                filters.append(g)
    w = np.stack(filters, axis=0).astype(np.float32)
    assert w.shape == (C_OUT, KSIZE, KSIZE)
    return w.reshape(C_OUT, 1, KSIZE, KSIZE)


if __name__ == "__main__":
    x = jax.random.normal(jax.random.PRNGKey(0), (2, 1, 16, 16), dtype=jnp.float32) * 3.0
    weight = make_hpf_weights()                            # fixed, non-trainable bank

    out = jax.block_until_ready(hpf_forward(x, weight))

    # Reference check against XLA conv + clamp (same semantics as PyTorch HPF).
    ref = lax.conv_general_dilated(
        x, jnp.asarray(weight),
        window_strides=(1, 1),
        padding=((PAD, PAD), (PAD, PAD)),
        dimension_numbers=("NCHW", "OIHW", "NCHW"),
        precision=lax.Precision.HIGHEST,
    )
    ref = jnp.clip(ref, -THRESHOLD, THRESHOLD)

    np.testing.assert_allclose(np.asarray(out), np.asarray(ref), rtol=1e-5, atol=1e-4)
    print("KERNEL_OK")
</pallas_src>

<mosaic_0001>
module attributes {stable_mosaic.version = 11 : i64} {
  func.func @kernel(%arg0: i32, %arg1: i32, %arg2: memref<1x20x20xf32, #tpu.memory_space<vmem>>, %arg3: memref<1x62x16x16xf32, #tpu.memory_space<vmem>>) attributes {dimension_semantics = [#tpu.dimension_semantics<parallel>, #tpu.dimension_semantics<parallel>], iteration_bounds = array<i64: 2, 1>, scalar_prefetch = 0 : i64, scratch_operands = 0 : i64, tpu.core_type = #tpu.core_type<tc>, window_params = [{transform_indices = @transform_0, window_bounds = array<i64: 1, 20, 20>}, {transform_indices = @transform_1, window_bounds = array<i64: 1, 62, 16, 16>}]} {
    %c16_i32 = arith.constant 16 : i32
    %0 = arith.muli %arg1, %c16_i32 : i32
    %c0_i32 = arith.constant 0 : i32
    %c2_i32 = arith.constant 2 : i32
    %1 = arith.addi %c0_i32, %c2_i32 : i32
    %c1_i32 = arith.constant 1 : i32
    scf.for %arg4 = %c0_i32 to %1 step %c1_i32  : i32 {
      %c8_i32 = arith.constant 8 : i32
      %2 = arith.muli %arg4, %c8_i32 : i32
      %3 = tpu.assume_multiple %2, 8 : i32
      %4 = arith.addi %0, %3 : i32
      %c0_i32_1 = arith.constant 0 : i32
      %5 = arith.addi %4, %c0_i32_1 : i32
      %c0 = arith.constant 0 : index
      %6 = arith.index_cast %5 : i32 to index
      %c0_2 = arith.constant 0 : index
      %7 = vector.load %arg2[%c0, %6, %c0_2] : memref<1x20x20xf32, #tpu.memory_space<vmem>>, vector<1x8x16xf32>
      %8 = vector.shape_cast %7 : vector<1x8x16xf32> to vector<8x16xf32>
      %9 = arith.addi %0, %3 : i32
      %c0_i32_3 = arith.constant 0 : i32
      %10 = arith.addi %9, %c0_i32_3 : i32
      %c0_4 = arith.constant 0 : index
      %11 = arith.index_cast %10 : i32 to index
      %c1 = arith.constant 1 : index
      %12 = vector.load %arg2[%c0_4, %11, %c1] : memref<1x20x20xf32, #tpu.memory_space<vmem>>, vector<1x8x16xf32>
      %13 = vector.shape_cast %12 : vector<1x8x16xf32> to vector<8x16xf32>
      %14 = arith.addi %0, %3 : i32
      %c0_i32_5 = arith.constant 0 : i32
      %15 = arith.addi %14, %c0_i32_5 : i32
      %c0_6 = arith.constant 0 : index
      %16 = arith.index_cast %15 : i32 to index
      %c2 = arith.constant 2 : index
      %17 = vector.load %arg2[%c0_6, %16, %c2] : memref<1x20x20xf32, #tpu.memory_space<vmem>>, vector<1x8x16xf32>
      %18 = vector.shape_cast %17 : vector<1x8x16xf32> to vector<8x16xf32>
      %19 = arith.addi %0, %3 : i32
      %c0_i32_7 = arith.constant 0 : i32
      %20 = arith.addi %19, %c0_i32_7 : i32
      %c0_8 = arith.constant 0 : index
      %21 = arith.index_cast %20 : i32 to index
      %c3 = arith.constant 3 : index
      %22 = vector.load %arg2[%c0_8, %21, %c3] : memref<1x20x20xf32, #tpu.memory_space<vmem>>, vector<1x8x16xf32>
      %23 = vector.shape_cast %22 : vector<1x8x16xf32> to vector<8x16xf32>
      %24 = arith.addi %0, %3 : i32
      %c0_i32_9 = arith.constant 0 : i32
      %25 = arith.addi %24, %c0_i32_9 : i32
      %c0_10 = arith.constant 0 : index
      %26 = arith.index_cast %25 : i32 to index
      %c4 = arith.constant 4 : index
      %27 = vector.load %arg2[%c0_10, %26, %c4] : memref<1x20x20xf32, #tpu.memory_space<vmem>>, vector<1x8x16xf32>
      %28 = vector.shape_cast %27 : vector<1x8x16xf32> to vector<8x16xf32>
      %29 = arith.addi %0, %3 : i32
      %c1_i32_11 = arith.constant 1 : i32
      %30 = arith.addi %29, %c1_i32_11 : i32
      %c0_12 = arith.constant 0 : index
      %31 = arith.index_cast %30 : i32 to index
      %c0_13 = arith.constant 0 : index
      %32 = vector.load %arg2[%c0_12, %31, %c0_13] : memref<1x20x20xf32, #tpu.memory_space<vmem>>, vector<1x8x16xf32>
      %33 = vector.shape_cast %32 : vector<1x8x16xf32> to vector<8x16xf32>
      %34 = arith.addi %0, %3 : i32
      %c1_i32_14 = arith.constant 1 : i32
      %35 = arith.addi %34, %c1_i32_14 : i32
      %c0_15 = arith.constant 0 : index
      %36 = arith.index_cast %35 : i32 to index
      %c1_16 = arith.constant 1 : index
      %37 = vector.load %arg2[%c0_15, %36, %c1_16] : memref<1x20x20xf32, #tpu.memory_space<vmem>>, vector<1x8x16xf32>
      %38 = vector.shape_cast %37 : vector<1x8x16xf32> to vector<8x16xf32>
      %39 = arith.addi %0, %3 : i32
      %c1_i32_17 = arith.constant 1 : i32
      %40 = arith.addi %39, %c1_i32_17 : i32
      %c0_18 = arith.constant 0 : index
      %41 = arith.index_cast %40 : i32 to index
      %c2_19 = arith.constant 2 : index
      %42 = vector.load %arg2[%c0_18, %41, %c2_19] : memref<1x20x20xf32, #tpu.memory_space<vmem>>, vector<1x8x16xf32>
      %43 = vector.shape_cast %42 : vector<1x8x16xf32> to vector<8x16xf32>
      %44 = arith.addi %0, %3 : i32
      %c1_i32_20 = arith.constant 1 : i32
      %45 = arith.addi %44, %c1_i32_20 : i32
      %c0_21 = arith.constant 0 : index
      %46 = arith.index_cast %45 : i32 to index
      %c3_22 = arith.constant 3 : index
      %47 = vector.load %arg2[%c0_21, %46, %c3_22] : memref<1x20x20xf32, #tpu.memory_space<vmem>>, vector<1x8x16xf32>
      %48 = vector.shape_cast %47 : vector<1x8x16xf32> to vector<8x16xf32>
      %49 = arith.addi %0, %3 : i32
      %c1_i32_23 = arith.constant 1 : i32
      %50 = arith.addi %49, %c1_i32_23 : i32
      %c0_24 = arith.constant 0 : index
      %51 = arith.index_cast %50 : i32 to index
      %c4_25 = arith.constant 4 : index
      %52 = vector.load %arg2[%c0_24, %51, %c4_25] : memref<1x20x20xf32, #tpu.memory_space<vmem>>, vector<1x8x16xf32>
      %53 = vector.shape_cast %52 : vector<1x8x16xf32> to vector<8x16xf32>
      %54 = arith.addi %0, %3 : i32
      %c2_i32_26 = arith.constant 2 : i32
      %55 = arith.addi %54, %c2_i32_26 : i32
      %c0_27 = arith.constant 0 : index
      %56 = arith.index_cast %55 : i32 to index
      %c0_28 = arith.constant 0 : index
      %57 = vector.load %arg2[%c0_27, %56, %c0_28] : memref<1x20x20xf32, #tpu.memory_space<vmem>>, vector<1x8x16xf32>
      %58 = vector.shape_cast %57 : vector<1x8x16xf32> to vector<8x16xf32>
      %59 = arith.addi %0, %3 : i32
      %c2_i32_29 = arith.constant 2 : i32
      %60 = arith.addi %59, %c2_i32_29 : i32
      %c0_30 = arith.constant 0 : index
      %61 = arith.index_cast %60 : i32 to index
      %c1_31 = arith.constant 1 : index
      %62 = vector.load %arg2[%c0_30, %61, %c1_31] : memref<1x20x20xf32, #tpu.memory_space<vmem>>, vector<1x8x16xf32>
      %63 = vector.shape_cast %62 : vector<1x8x16xf32> to vector<8x16xf32>
      %64 = arith.addi %0, %3 : i32
      %c2_i32_32 = arith.constant 2 : i32
      %65 = arith.addi %64, %c2_i32_32 : i32
      %c0_33 = arith.constant 0 : index
      %66 = arith.index_cast %65 : i32 to index
      %c2_34 = arith.constant 2 : index
      %67 = vector.load %arg2[%c0_33, %66, %c2_34] : memref<1x20x20xf32, #tpu.memory_space<vmem>>, vector<1x8x16xf32>
      %68 = vector.shape_cast %67 : vector<1x8x16xf32> to vector<8x16xf32>
      %69 = arith.addi %0, %3 : i32
      %c2_i32_35 = arith.constant 2 : i32
      %70 = arith.addi %69, %c2_i32_35 : i32
      %c0_36 = arith.constant 0 : index
      %71 = arith.index_cast %70 : i32 to index
      %c3_37 = arith.constant 3 : index
      %72 = vector.load %arg2[%c0_36, %71, %c3_37] : memref<1x20x20xf32, #tpu.memory_space<vmem>>, vector<1x8x16xf32>
      %73 = vector.shape_cast %72 : vector<1x8x16xf32> to vector<8x16xf32>
      %74 = arith.addi %0, %3 : i32
      %c2_i32_38 = arith.constant 2 : i32
      %75 = arith.addi %74, %c2_i32_38 : i32
      %c0_39 = arith.constant 0 : index
      %76 = arith.index_cast %75 : i32 to index
      %c4_40 = arith.constant 4 : index
      %77 = vector.load %arg2[%c0_39, %76, %c4_40] : memref<1x20x20xf32, #tpu.memory_space<vmem>>, vector<1x8x16xf32>
      %78 = vector.shape_cast %77 : vector<1x8x16xf32> to vector<8x16xf32>
      %79 = arith.addi %0, %3 : i32
      %c3_i32 = arith.constant 3 : i32
      %80 = arith.addi %79, %c3_i32 : i32
      %c0_41 = arith.constant 0 : index
      %81 = arith.index_cast %80 : i32 to index
      %c0_42 = arith.constant 0 : index
      %82 = vector.load %arg2[%c0_41, %81, %c0_42] : memref<1x20x20xf32, #tpu.memory_space<vmem>>, vector<1x8x16xf32>
      %83 = vector.shape_cast %82 : vector<1x8x16xf32> to vector<8x16xf32>
      %84 = arith.addi %0, %3 : i32
      %c3_i32_43 = arith.constant 3 : i32
      %85 = arith.addi %84, %c3_i32_43 : i32
      %c0_44 = arith.constant 0 : index
      %86 = arith.index_cast %85 : i32 to index
      %c1_45 = arith.constant 1 : index
      %87 = vector.load %arg2[%c0_44, %86, %c1_45] : memref<1x20x20xf32, #tpu.memory_space<vmem>>, vector<1x8x16xf32>
      %88 = vector.shape_cast %87 : vector<1x8x16xf32> to vector<8x16xf32>
      %89 = arith.addi %0, %3 : i32
      %c3_i32_46 = arith.constant 3 : i32
      %90 = arith.addi %89, %c3_i32_46 : i32
      %c0_47 = arith.constant 0 : index
      %91 = arith.index_cast %90 : i32 to index
      %c2_48 = arith.constant 2 : index
      %92 = vector.load %arg2[%c0_47, %91, %c2_48] : memref<1x20x20xf32, #tpu.memory_space<vmem>>, vector<1x8x16xf32>
      %93 = vector.shape_cast %92 : vector<1x8x16xf32> to vector<8x16xf32>
      %94 = arith.addi %0, %3 : i32
      %c3_i32_49 = arith.constant 3 : i32
      %95 = arith.addi %94, %c3_i32_49 : i32
      %c0_50 = arith.constant 0 : index
      %96 = arith.index_cast %95 : i32 to index
      %c3_51 = arith.constant 3 : index
      %97 = vector.load %arg2[%c0_50, %96, %c3_51] : memref<1x20x20xf32, #tpu.memory_space<vmem>>, vector<1x8x16xf32>
      %98 = vector.shape_cast %97 : vector<1x8x16xf32> to vector<8x16xf32>
      %99 = arith.addi %0, %3 : i32
      %c3_i32_52 = arith.constant 3 : i32
      %100 = arith.addi %99, %c3_i32_52 : i32
      %c0_53 = arith.constant 0 : index
      %101 = arith.index_cast %100 : i32 to index
      %c4_54 = arith.constant 4 : index
      %102 = vector.load %arg2[%c0_53, %101, %c4_54] : memref<1x20x20xf32, #tpu.memory_space<vmem>>, vector<1x8x16xf32>
      %103 = vector.shape_cast %102 : vector<1x8x16xf32> to vector<8x16xf32>
      %104 = arith.addi %0, %3 : i32
      %c4_i32 = arith.constant 4 : i32
      %105 = arith.addi %104, %c4_i32 : i32
      %c0_55 = arith.constant 0 : index
      %106 = arith.index_cast %105 : i32 to index
      %c0_56 = arith.constant 0 : index
      %107 = vector.load %arg2[%c0_55, %106, %c0_56] : memref<1x20x20xf32, #tpu.memory_space<vmem>>, vector<1x8x16xf32>
      %108 = vector.shape_cast %107 : vector<1x8x16xf32> to vector<8x16xf32>
      %109 = arith.addi %0, %3 : i32
      %c4_i32_57 = arith.constant 4 : i32
      %110 = arith.addi %109, %c4_i32_57 : i32
      %c0_58 = arith.constant 0 : index
      %111 = arith.index_cast %110 : i32 to index
      %c1_59 = arith.constant 1 : index
      %112 = vector.load %arg2[%c0_58, %111, %c1_59] : memref<1x20x20xf32, #tpu.memory_space<vmem>>, vector<1x8x16xf32>
      %113 = vector.shape_cast %112 : vector<1x8x16xf32> to vector<8x16xf32>
      %114 = arith.addi %0, %3 : i32
      %c4_i32_60 = arith.constant 4 : i32
      %115 = arith.addi %114, %c4_i32_60 : i32
      %c0_61 = arith.constant 0 : index
      %116 = arith.index_cast %115 : i32 to index
      %c2_62 = arith.constant 2 : index
      %117 = vector.load %arg2[%c0_61, %116, %c2_62] : memref<1x20x20xf32, #tpu.memory_space<vmem>>, vector<1x8x16xf32>
      %118 = vector.shape_cast %117 : vector<1x8x16xf32> to vector<8x16xf32>
      %119 = arith.addi %0, %3 : i32
      %c4_i32_63 = arith.constant 4 : i32
      %120 = arith.addi %119, %c4_i32_63 : i32
      %c0_64 = arith.constant 0 : index
      %121 = arith.index_cast %120 : i32 to index
      %c3_65 = arith.constant 3 : index
      %122 = vector.load %arg2[%c0_64, %121, %c3_65] : memref<1x20x20xf32, #tpu.memory_space<vmem>>, vector<1x8x16xf32>
      %123 = vector.shape_cast %122 : vector<1x8x16xf32> to vector<8x16xf32>
      %124 = arith.addi %0, %3 : i32
      %c4_i32_66 = arith.constant 4 : i32
      %125 = arith.addi %124, %c4_i32_66 : i32
      %c0_67 = arith.constant 0 : index
      %126 = arith.index_cast %125 : i32 to index
      %c4_68 = arith.constant 4 : index
      %127 = vector.load %arg2[%c0_67, %126, %c4_68] : memref<1x20x20xf32, #tpu.memory_space<vmem>>, vector<1x8x16xf32>
      %128 = vector.shape_cast %127 : vector<1x8x16xf32> to vector<8x16xf32>
      %cst = arith.constant 0.564970613 : f32
      %129 = vector.broadcast %cst : f32 to vector<8x16xf32>
      %130 = arith.mulf %129, %38 : vector<8x16xf32>
      %cst_69 = arith.constant -0.213649839 : f32
      %131 = vector.broadcast %cst_69 : f32 to vector<8x16xf32>
      %132 = arith.mulf %131, %43 : vector<8x16xf32>
      %133 = arith.addf %130, %132 : vector<8x16xf32>
      %cst_70 = arith.constant 0.116650365 : f32
      %134 = vector.broadcast %cst_70 : f32 to vector<8x16xf32>
      %135 = arith.mulf %134, %48 : vector<8x16xf32>
      %136 = arith.addf %133, %135 : vector<8x16xf32>
      %cst_71 = arith.constant 0.837189555 : f32
      %137 = vector.broadcast %cst_71 : f32 to vector<8x16xf32>
      %138 = arith.mulf %137, %63 : vector<8x16xf32>
      %139 = arith.addf %136, %138 : vector<8x16xf32>
      %cst_72 = arith.constant 0.624059916 : f32
      %140 = vector.broadcast %cst_72 : f32 to vector<8x16xf32>
      %141 = arith.mulf %140, %68 : vector<8x16xf32>
      %142 = arith.addf %139, %141 : vector<8x16xf32>
      %cst_73 = arith.constant -1.000000e+00 : f32
      %143 = vector.broadcast %cst_73 : f32 to vector<8x16xf32>
      %144 = arith.mulf %143, %73 : vector<8x16xf32>
      %145 = arith.addf %142, %144 : vector<8x16xf32>
      %cst_74 = arith.constant 0.100294903 : f32
      %146 = vector.broadcast %cst_74 : f32 to vector<8x16xf32>
      %147 = arith.mulf %146, %88 : vector<8x16xf32>
      %148 = arith.addf %145, %147 : vector<8x16xf32>
      %cst_75 = arith.constant -0.528498411 : f32
      %149 = vector.broadcast %cst_75 : f32 to vector<8x16xf32>
      %150 = arith.mulf %149, %93 : vector<8x16xf32>
      %151 = arith.addf %148, %150 : vector<8x16xf32>
      %cst_76 = arith.constant -0.501017153 : f32
      %152 = vector.broadcast %cst_76 : f32 to vector<8x16xf32>
      %153 = arith.mulf %152, %98 : vector<8x16xf32>
      %154 = arith.addf %151, %153 : vector<8x16xf32>
      %cst_77 = arith.constant -5.000000e+00 : f32
      %cst_78 = arith.constant 5.000000e+00 : f32
      %155 = vector.broadcast %cst_77 : f32 to vector<8x16xf32>
      %156 = arith.maximumf %155, %154 : vector<8x16xf32>
      %157 = vector.broadcast %cst_78 : f32 to vector<8x16xf32>
      %158 = arith.minimumf %157, %156 : vector<8x16xf32>
      %c0_79 = arith.constant 0 : index
      %c0_80 = arith.constant 0 : index
      %159 = arith.index_cast %3 : i32 to index
      %c0_81 = arith.constant 0 : index
      %160 = vector.load %arg3[%c0_79, %c0_80, %159, %c0_81] : memref<1x62x16x16xf32, #tpu.memory_space<vmem>>, vector<1x1x8x16xf32>
      %161 = vector.shape_cast %160 : vector<1x1x8x16xf32> to vector<8x16xf32>
      %162 = vector.shape_cast %158 : vector<8x16xf32> to vector<1x1x8x16xf32>
      tpu.vector_store %arg3[%c0_79, %c0_80, %159, %c0_81], %162 {strides = array<i32>} : memref<1x62x16x16xf32, #tpu.memory_space<vmem>>, vector<1x1x8x16xf32>,
      %cst_82 = arith.constant -0.148752034 : f32
      %163 = vector.broadcast %cst_82 : f32 to vector<8x16xf32>
      %164 = arith.mulf %163, %38 : vector<8x16xf32>
      %cst_83 = arith.constant -0.431364864 : f32
      %165 = vector.broadcast %cst_83 : f32 to vector<8x16xf32>
      %166 = arith.mulf %165, %43 : vector<8x16xf32>
      %167 = arith.addf %164, %166 : vector<8x16xf32>
      %cst_84 = arith.constant 0.957796454 : f32
      %168 = vector.broadcast %cst_84 : f32 to vector<8x16xf32>
      %169 = arith.mulf %168, %48 : vector<8x16xf32>
      %170 = arith.addf %167, %169 : vector<8x16xf32>
      %cst_85 = arith.constant 0.222798496 : f32
      %171 = vector.broadcast %cst_85 : f32 to vector<8x16xf32>
      %172 = arith.mulf %171, %63 : vector<8x16xf32>
      %173 = arith.addf %170, %172 : vector<8x16xf32>
      %cst_86 = arith.constant -0.455080956 : f32
      %174 = vector.broadcast %cst_86 : f32 to vector<8x16xf32>
      %175 = arith.mulf %174, %68 : vector<8x16xf32>
      %176 = arith.addf %173, %175 : vector<8x16xf32>
      %cst_87 = arith.constant -0.113483347 : f32
      %177 = vector.broadcast %cst_87 : f32 to vector<8x16xf32>
      %178 = arith.mulf %177, %73 : vector<8x16xf32>
      %179 = arith.addf %176, %178 : vector<8x16xf32>
      %cst_88 = arith.constant -0.230310291 : f32
      %180 = vector.broadcast %cst_88 : f32 to vector<8x16xf32>
      %181 = arith.mulf %180, %88 : vector<8x16xf32>
      %182 = arith.addf %179, %181 : vector<8x16xf32>
      %cst_89 = arith.constant 1.000000e+00 : f32
      %183 = vector.broadcast %cst_89 : f32 to vector<8x16xf32>
      %184 = arith.mulf %183, %93 : vector<8x16xf32>
      %185 = arith.addf %182, %184 : vector<8x16xf32>
      %cst_90 = arith.constant -0.801603436 : f32
      %186 = vector.broadcast %cst_90 : f32 to vector<8x16xf32>
      %187 = arith.mulf %186, %98 : vector<8x16xf32>
      %188 = arith.addf %185, %187 : vector<8x16xf32>
      %cst_91 = arith.constant -5.000000e+00 : f32
      %cst_92 = arith.constant 5.000000e+00 : f32
      %189 = vector.broadcast %cst_91 : f32 to vector<8x16xf32>
      %190 = arith.maximumf %189, %188 : vector<8x16xf32>
      %191 = vector.broadcast %cst_92 : f32 to vector<8x16xf32>
      %192 = arith.minimumf %191, %190 : vector<8x16xf32>
      %c0_93 = arith.constant 0 : index
      %c1_94 = arith.constant 1 : index
      %193 = arith.index_cast %3 : i32 to index
      %c0_95 = arith.constant 0 : index
      %194 = vector.load %arg3[%c0_93, %c1_94, %193, %c0_95] : memref<1x62x16x16xf32, #tpu.memory_space<vmem>>, vector<1x1x8x16xf32>
      %195 = vector.shape_cast %194 : vector<1x1x8x16xf32> to vector<8x16xf32>
      %196 = vector.shape_cast %192 : vector<8x16xf32> to vector<1x1x8x16xf32>
      tpu.vector_store %arg3[%c0_93, %c1_94, %193, %c0_95], %196 {strides = array<i32>} : memref<1x62x16x16xf32, #tpu.memory_space<vmem>>, vector<1x1x8x16xf32>,
      %cst_96 = arith.constant 0.195322573 : f32
      %197 = vector.broadcast %cst_96 : f32 to vector<8x16xf32>
      %198 = arith.mulf %197, %38 : vector<8x16xf32>
      %cst_97 = arith.constant -0.284667403 : f32
      %199 = vector.broadcast %cst_97 : f32 to vector<8x16xf32>
      %200 = arith.mulf %199, %43 : vector<8x16xf32>
      %201 = arith.addf %198, %200 : vector<8x16xf32>
      %cst_98 = arith.constant -0.983328819 : f32
      %202 = vector.broadcast %cst_98 : f32 to vector<8x16xf32>
      %203 = arith.mulf %202, %48 : vector<8x16xf32>
      %204 = arith.addf %201, %203 : vector<8x16xf32>
      %cst_99 = arith.constant 0.335372359 : f32
      %205 = vector.broadcast %cst_99 : f32 to vector<8x16xf32>
      %206 = arith.mulf %205, %63 : vector<8x16xf32>
      %207 = arith.addf %204, %206 : vector<8x16xf32>
      %cst_100 = arith.constant 0.422070026 : f32
      %208 = vector.broadcast %cst_100 : f32 to vector<8x16xf32>
      %209 = arith.mulf %208, %68 : vector<8x16xf32>
      %210 = arith.addf %207, %209 : vector<8x16xf32>
      %cst_101 = arith.constant -0.238636464 : f32
      %211 = vector.broadcast %cst_101 : f32 to vector<8x16xf32>
      %212 = arith.mulf %211, %73 : vector<8x16xf32>
      %213 = arith.addf %210, %212 : vector<8x16xf32>
      %cst_102 = arith.constant 1.000000e+00 : f32
      %214 = vector.broadcast %cst_102 : f32 to vector<8x16xf32>
      %215 = arith.mulf %214, %88 : vector<8x16xf32>
      %216 = arith.addf %213, %215 : vector<8x16xf32>
      %cst_103 = arith.constant -0.531525314 : f32
      %217 = vector.broadcast %cst_103 : f32 to vector<8x16xf32>
      %218 = arith.mulf %217, %93 : vector<8x16xf32>
      %219 = arith.addf %216, %218 : vector<8x16xf32>
      %cst_104 = arith.constant 0.0853930413 : f32
      %220 = vector.broadcast %cst_104 : f32 to vector<8x16xf32>
      %221 = arith.mulf %220, %98 : vector<8x16xf32>
      %222 = arith.addf %219, %221 : vector<8x16xf32>
      %cst_105 = arith.constant -5.000000e+00 : f32
      %cst_106 = arith.constant 5.000000e+00 : f32
      %223 = vector.broadcast %cst_105 : f32 to vector<8x16xf32>
      %224 = arith.maximumf %223, %222 : vector<8x16xf32>
      %225 = vector.broadcast %cst_106 : f32 to vector<8x16xf32>
      %226 = arith.minimumf %225, %224 : vector<8x16xf32>
      %c0_107 = arith.constant 0 : index
      %c2_108 = arith.constant 2 : index
      %227 = arith.index_cast %3 : i32 to index
      %c0_109 = arith.constant 0 : index
      %228 = vector.load %arg3[%c0_107, %c2_108, %227, %c0_109] : memref<1x62x16x16xf32, #tpu.memory_space<vmem>>, vector<1x1x8x16xf32>
      %229 = vector.shape_cast %228 : vector<1x1x8x16xf32> to vector<8x16xf32>
      %230 = vector.shape_cast %226 : vector<8x16xf32> to vector<1x1x8x16xf32>
      tpu.vector_store %arg3[%c0_107, %c2_108, %227, %c0_109], %230 {strides = array<i32>} : memref<1x62x16x16xf32, #tpu.memory_space<vmem>>, vector<1x1x8x16xf32>,
      %cst_110 = arith.constant -0.108891189 : f32
      %231 = vector.broadcast %cst_110 : f32 to vector<8x16xf32>
      %232 = arith.mulf %231, %38 : vector<8x16xf32>
      %cst_111 = arith.constant 0.745626807 : f32
      %233 = vector.broadcast %cst_111 : f32 to vector<8x16xf32>
      %234 = arith.mulf %233, %43 : vector<8x16xf32>
      %235 = arith.addf %232, %234 : vector<8x16xf32>
      %cst_112 = arith.constant 0.714118063 : f32
      %236 = vector.broadcast %cst_112 : f32 to vector<8x16xf32>
      %237 = arith.mulf %236, %48 : vector<8x16xf32>
      %238 = arith.addf %235, %237 : vector<8x16xf32>
      %cst_113 = arith.constant 0.061087653 : f32
      %239 = vector.broadcast %cst_113 : f32 to vector<8x16xf32>
      %240 = arith.mulf %239, %63 : vector<8x16xf32>
      %241 = arith.addf %238, %240 : vector<8x16xf32>
      %cst_114 = arith.constant 0.171986148 : f32
      %242 = vector.broadcast %cst_114 : f32 to vector<8x16xf32>
      %243 = arith.mulf %242, %68 : vector<8x16xf32>
      %244 = arith.addf %241, %243 : vector<8x16xf32>
      %cst_115 = arith.constant -0.456966639 : f32
      %245 = vector.broadcast %cst_115 : f32 to vector<8x16xf32>
      %246 = arith.mulf %245, %73 : vector<8x16xf32>
      %247 = arith.addf %244, %246 : vector<8x16xf32>
      %cst_116 = arith.constant -1.000000e+00 : f32
      %248 = vector.broadcast %cst_116 : f32 to vector<8x16xf32>
      %249 = arith.mulf %248, %88 : vector<8x16xf32>
      %250 = arith.addf %247, %249 : vector<8x16xf32>
      %cst_117 = arith.constant -0.188744783 : f32
      %251 = vector.broadcast %cst_117 : f32 to vector<8x16xf32>
      %252 = arith.mulf %251, %93 : vector<8x16xf32>
      %253 = arith.addf %250, %252 : vector<8x16xf32>
      %cst_118 = arith.constant 0.0617839731 : f32
      %254 = vector.broadcast %cst_118 : f32 to vector<8x16xf32>
      %255 = arith.mulf %254, %98 : vector<8x16xf32>
      %256 = arith.addf %253, %255 : vector<8x16xf32>
      %cst_119 = arith.constant -5.000000e+00 : f32
      %cst_120 = arith.constant 5.000000e+00 : f32
      %257 = vector.broadcast %cst_119 : f32 to vector<8x16xf32>
      %258 = arith.maximumf %257, %256 : vector<8x16xf32>
      %259 = vector.broadcast %cst_120 : f32 to vector<8x16xf32>
      %260 = arith.minimumf %259, %258 : vector<8x16xf32>
      %c0_121 = arith.constant 0 : index
      %c3_122 = arith.constant 3 : index
      %261 = arith.index_cast %3 : i32 to index
      %c0_123 = arith.constant 0 : index
      %262 = vector.load %arg3[%c0_121, %c3_122, %261, %c0_123] : memref<1x62x16x16xf32, #tpu.memory_space<vmem>>, vector<1x1x8x16xf32>
      %263 = vector.shape_cast %262 : vector<1x1x8x16xf32> to vector<8x16xf32>
      %264 = vector.shape_cast %260 : vector<8x16xf32> to vector<1x1x8x16xf32>
      tpu.vector_store %arg3[%c0_121, %c3_122, %261, %c0_123], %264 {strides = array<i32>} : memref<1x62x16x16xf32, #tpu.memory_space<vmem>>, vector<1x1x8x16xf32>,
      %cst_124 = arith.constant 0.650394499 : f32
      %265 = vector.broadcast %cst_124 : f32 to vector<8x16xf32>
      %266 = arith.mulf %265, %38 : vector<8x16xf32>
      %cst_125 = arith.constant 0.636851131 : f32
      %267 = vector.broadcast %cst_125 : f32 to vector<8x16xf32>
      %268 = arith.mulf %267, %43 : vector<8x16xf32>
      %269 = arith.addf %266, %268 : vector<8x16xf32>
      %cst_126 = arith.constant -0.134532601 : f32
      %270 = vector.broadcast %cst_126 : f32 to vector<8x16xf32>
      %271 = arith.mulf %270, %48 : vector<8x16xf32>
      %272 = arith.addf %269, %271 : vector<8x16xf32>
      %cst_127 = arith.constant -0.0932758226 : f32
      %273 = vector.broadcast %cst_127 : f32 to vector<8x16xf32>
      %274 = arith.mulf %273, %63 : vector<8x16xf32>
      %275 = arith.addf %272, %274 : vector<8x16xf32>
      %cst_128 = arith.constant -0.455383688 : f32
      %276 = vector.broadcast %cst_128 : f32 to vector<8x16xf32>
      %277 = arith.mulf %276, %68 : vector<8x16xf32>
      %278 = arith.addf %275, %277 : vector<8x16xf32>
      %cst_129 = arith.constant -0.635632038 : f32
      %279 = vector.broadcast %cst_129 : f32 to vector<8x16xf32>
      %280 = arith.mulf %279, %73 : vector<8x16xf32>
      %281 = arith.addf %278, %280 : vector<8x16xf32>
      %cst_130 = arith.constant -0.774532139 : f32
      %282 = vector.broadcast %cst_130 : f32 to vector<8x16xf32>
      %283 = arith.mulf %282, %88 : vector<8x16xf32>
      %284 = arith.addf %281, %283 : vector<8x16xf32>
      %cst_131 = arith.constant 1.000000e+00 : f32
      %285 = vector.broadcast %cst_131 : f32 to vector<8x16xf32>
      %286 = arith.mulf %285, %93 : vector<8x16xf32>
      %287 = arith.addf %284, %286 : vector<8x16xf32>
      %cst_132 = arith.constant -0.193889335 : f32
      %288 = vector.broadcast %cst_132 : f32 to vector<8x16xf32>
      %289 = arith.mulf %288, %98 : vector<8x16xf32>
      %290 = arith.addf %287, %289 : vector<8x16xf32>
      %cst_133 = arith.constant -5.000000e+00 : f32
      %cst_134 = arith.constant 5.000000e+00 : f32
      %291 = vector.broadcast %cst_133 : f32 to vector<8x16xf32>
      %292 = arith.maximumf %291, %290 : vector<8x16xf32>
      %293 = vector.broadcast %cst_134 : f32 to vector<8x16xf32>
      %294 = arith.minimumf %293, %292 : vector<8x16xf32>
      %c0_135 = arith.constant 0 : index
      %c4_136 = arith.constant 4 : index
      %295 = arith.index_cast %3 : i32 to index
      %c0_137 = arith.constant 0 : index
      %296 = vector.load %arg3[%c0_135, %c4_136, %295, %c0_137] : memref<1x62x16x16xf32, #tpu.memory_space<vmem>>, vector<1x1x8x16xf32>
      %297 = vector.shape_cast %296 : vector<1x1x8x16xf32> to vector<8x16xf32>
      %298 = vector.shape_cast %294 : vector<8x16xf32> to vector<1x1x8x16xf32>
      tpu.vector_store %arg3[%c0_135, %c4_136, %295, %c0_137], %298 {strides = array<i32>} : memref<1x62x16x16xf32, #tpu.memory_space<vmem>>, vector<1x1x8x16xf32>,
      %cst_138 = arith.constant 0.0835481286 : f32
      %299 = vector.broadcast %cst_138 : f32 to vector<8x16xf32>
      %300 = arith.mulf %299, %38 : vector<8x16xf32>
      %cst_139 = arith.constant -0.530695319 : f32
      %301 = vector.broadcast %cst_139 : f32 to vector<8x16xf32>
      %302 = arith.mulf %301, %43 : vector<8x16xf32>
      %303 = arith.addf %300, %302 : vector<8x16xf32>
      %cst_140 = arith.constant 1.000000e+00 : f32
      %304 = vector.broadcast %cst_140 : f32 to vector<8x16xf32>
      %305 = arith.mulf %304, %48 : vector<8x16xf32>
      %306 = arith.addf %303, %305 : vector<8x16xf32>
      %cst_141 = arith.constant -0.802941679 : f32
      %307 = vector.broadcast %cst_141 : f32 to vector<8x16xf32>
      %308 = arith.mulf %307, %63 : vector<8x16xf32>
      %309 = arith.addf %306, %308 : vector<8x16xf32>
      %cst_142 = arith.constant 0.25343442 : f32
      %310 = vector.broadcast %cst_142 : f32 to vector<8x16xf32>
      %311 = arith.mulf %310, %68 : vector<8x16xf32>
      %312 = arith.addf %309, %311 : vector<8x16xf32>
      %cst_143 = arith.constant -0.261294067 : f32
      %313 = vector.broadcast %cst_143 : f32 to vector<8x16xf32>
      %314 = arith.mulf %313, %73 : vector<8x16xf32>
      %315 = arith.addf %312, %314 : vector<8x16xf32>
      %cst_144 = arith.constant 0.705523729 : f32
      %316 = vector.broadcast %cst_144 : f32 to vector<8x16xf32>
      %317 = arith.mulf %316, %88 : vector<8x16xf32>
      %318 = arith.addf %315, %317 : vector<8x16xf32>
      %cst_145 = arith.constant 0.0287140962 : f32
      %319 = vector.broadcast %cst_145 : f32 to vector<8x16xf32>
      %320 = arith.mulf %319, %93 : vector<8x16xf32>
      %321 = arith.addf %318, %320 : vector<8x16xf32>
      %cst_146 = arith.constant -0.476289272 : f32
      %322 = vector.broadcast %cst_146 : f32 to vector<8x16xf32>
      %323 = arith.mulf %322, %98 : vector<8x16xf32>
      %324 = arith.addf %321, %323 : vector<8x16xf32>
      %cst_147 = arith.constant -5.000000e+00 : f32
      %cst_148 = arith.constant 5.000000e+00 : f32
      %325 = vector.broadcast %cst_147 : f32 to vector<8x16xf32>
      %326 = arith.maximumf %325, %324 : vector<8x16xf32>
      %327 = vector.broadcast %cst_148 : f32 to vector<8x16xf32>
      %328 = arith.minimumf %327, %326 : vector<8x16xf32>
      %c0_149 = arith.constant 0 : index
      %c5 = arith.constant 5 : index
      %329 = arith.index_cast %3 : i32 to index
      %c0_150 = arith.constant 0 : index
      %330 = vector.load %arg3[%c0_149, %c5, %329, %c0_150] : memref<1x62x16x16xf32, #tpu.memory_space<vmem>>, vector<1x1x8x16xf32>
      %331 = vector.shape_cast %330 : vector<1x1x8x16xf32> to vector<8x16xf32>
      %332 = vector.shape_cast %328 : vector<8x16xf32> to vector<1x1x8x16xf32>
      tpu.vector_store %arg3[%c0_149, %c5, %329, %c0_150], %332 {strides = array<i32>} : memref<1x62x16x16xf32, #tpu.memory_space<vmem>>, vector<1x1x8x16xf32>,
      %cst_151 = arith.constant 0.306920111 : f32
      %333 = vector.broadcast %cst_151 : f32 to vector<8x16xf32>
      %334 = arith.mulf %333, %38 : vector<8x16xf32>
      %cst_152 = arith.constant 1.000000e+00 : f32
      %335 = vector.broadcast %cst_152 : f32 to vector<8x16xf32>
      %336 = arith.mulf %335, %43 : vector<8x16xf32>
      %337 = arith.addf %334, %336 : vector<8x16xf32>
      %cst_153 = arith.constant 0.450692862 : f32
      %338 = vector.broadcast %cst_153 : f32 to vector<8x16xf32>
      %339 = arith.mulf %338, %48 : vector<8x16xf32>
      %340 = arith.addf %337, %339 : vector<8x16xf32>
      %cst_154 = arith.constant 0.80891937 : f32
      %341 = vector.broadcast %cst_154 : f32 to vector<8x16xf32>
      %342 = arith.mulf %341, %63 : vector<8x16xf32>
      %343 = arith.addf %340, %342 : vector<8x16xf32>
      %cst_155 = arith.constant -0.613321662 : f32
      %344 = vector.broadcast %cst_155 : f32 to vector<8x16xf32>
      %345 = arith.mulf %344, %68 : vector<8x16xf32>
      %346 = arith.addf %343, %345 : vector<8x16xf32>
      %cst_156 = arith.constant -0.201007381 : f32
      %347 = vector.broadcast %cst_156 : f32 to vector<8x16xf32>
      %348 = arith.mulf %347, %73 : vector<8x16xf32>
      %349 = arith.addf %346, %348 : vector<8x16xf32>
      %cst_157 = arith.constant -0.671223342 : f32
      %350 = vector.broadcast %cst_157 : f32 to vector<8x16xf32>
      %351 = arith.mulf %350, %88 : vector<8x16xf32>
      %352 = arith.addf %349, %351 : vector<8x16xf32>
      %cst_158 = arith.constant -0.19616735 : f32
      %353 = vector.broadcast %cst_158 : f32 to vector<8x16xf32>
      %354 = arith.mulf %353, %93 : vector<8x16xf32>
      %355 = arith.addf %352, %354 : vector<8x16xf32>
      %cst_159 = arith.constant -0.884812593 : f32
      %356 = vector.broadcast %cst_159 : f32 to vector<8x16xf32>
      %357 = arith.mulf %356, %98 : vector<8x16xf32>
      %358 = arith.addf %355, %357 : vector<8x16xf32>
      %cst_160 = arith.constant -5.000000e+00 : f32
      %cst_161 = arith.constant 5.000000e+00 : f32
      %359 = vector.broadcast %cst_160 : f32 to vector<8x16xf32>
      %360 = arith.maximumf %359, %358 : vector<8x16xf32>
      %361 = vector.broadcast %cst_161 : f32 to vector<8x16xf32>
      %362 = arith.minimumf %361, %360 : vector<8x16xf32>
      %c0_162 = arith.constant 0 : index
      %c6 = arith.constant 6 : index
      %363 = arith.index_cast %3 : i32 to index
      %c0_163 = arith.constant 0 : index
      %364 = vector.load %arg3[%c0_162, %c6, %363, %c0_163] : memref<1x62x16x16xf32, #tpu.memory_space<vmem>>, vector<1x1x8x16xf32>
      %365 = vector.shape_cast %364 : vector<1x1x8x16xf32> to vector<8x16xf32>
      %366 = vector.shape_cast %362 : vector<8x16xf32> to vector<1x1x8x16xf32>
      tpu.vector_store %arg3[%c0_162, %c6, %363, %c0_163], %366 {strides = array<i32>} : memref<1x62x16x16xf32, #tpu.memory_space<vmem>>, vector<1x1x8x16xf32>,
      %cst_164 = arith.constant -1.000000e+00 : f32
      %367 = vector.broadcast %cst_164 : f32 to vector<8x16xf32>
      %368 = arith.mulf %367, %38 : vector<8x16xf32>
      %cst_165 = arith.constant 0.379364669 : f32
      %369 = vector.broadcast %cst_165 : f32 to vector<8x16xf32>
      %370 = arith.mulf %369, %43 : vector<8x16xf32>
      %371 = arith.addf %368, %370 : vector<8x16xf32>
      %cst_166 = arith.constant -0.040309716 : f32
      %372 = vector.broadcast %cst_166 : f32 to vector<8x16xf32>
      %373 = arith.mulf %372, %48 : vector<8x16xf32>
      %374 = arith.addf %371, %373 : vector<8x16xf32>
      %cst_167 = arith.constant -0.930380523 : f32
      %375 = vector.broadcast %cst_167 : f32 to vector<8x16xf32>
      %376 = arith.mulf %375, %63 : vector<8x16xf32>
      %377 = arith.addf %374, %376 : vector<8x16xf32>
      %cst_168 = arith.constant 0.586124301 : f32
      %378 = vector.broadcast %cst_168 : f32 to vector<8x16xf32>
      %379 = arith.mulf %378, %68 : vector<8x16xf32>
      %380 = arith.addf %377, %379 : vector<8x16xf32>
      %cst_169 = arith.constant -4.065910e-01 : f32
      %381 = vector.broadcast %cst_169 : f32 to vector<8x16xf32>
      %382 = arith.mulf %381, %73 : vector<8x16xf32>
      %383 = arith.addf %380, %382 : vector<8x16xf32>
      %cst_170 = arith.constant 0.288445443 : f32
      %384 = vector.broadcast %cst_170 : f32 to vector<8x16xf32>
      %385 = arith.mulf %384, %88 : vector<8x16xf32>
      %386 = arith.addf %383, %385 : vector<8x16xf32>
      %cst_171 = arith.constant 0.779082537 : f32
      %387 = vector.broadcast %cst_171 : f32 to vector<8x16xf32>
      %388 = arith.mulf %387, %93 : vector<8x16xf32>
      %389 = arith.addf %386, %388 : vector<8x16xf32>
      %cst_172 = arith.constant 0.344264299 : f32
      %390 = vector.broadcast %cst_172 : f32 to vector<8x16xf32>
      %391 = arith.mulf %390, %98 : vector<8x16xf32>
      %392 = arith.addf %389, %391 : vector<8x16xf32>
      %cst_173 = arith.constant -5.000000e+00 : f32
      %cst_174 = arith.constant 5.000000e+00 : f32
      %393 = vector.broadcast %cst_173 : f32 to vector<8x16xf32>
      %394 = arith.maximumf %393, %392 : vector<8x16xf32>
      %395 = vector.broadcast %cst_174 : f32 to vector<8x16xf32>
      %396 = arith.minimumf %395, %394 : vector<8x16xf32>
      %c0_175 = arith.constant 0 : index
      %c7 = arith.constant 7 : index
      %397 = arith.index_cast %3 : i32 to index
      %c0_176 = arith.constant 0 : index
      %398 = vector.load %arg3[%c0_175, %c7, %397, %c0_176] : memref<1x62x16x16xf32, #tpu.memory_space<vmem>>, vector<1x1x8x16xf32>
      %399 = vector.shape_cast %398 : vector<1x1x8x16xf32> to vector<8x16xf32>
      %400 = vector.shape_cast %396 : vector<8x16xf32> to vector<1x1x8x16xf32>
      tpu.vector_store %arg3[%c0_175, %c7, %397, %c0_176], %400 {strides = array<i32>} : memref<1x62x16x16xf32, #tpu.memory_space<vmem>>, vector<1x1x8x16xf32>,
      %cst_177 = arith.constant 1.000000e+00 : f32
      %401 = vector.broadcast %cst_177 : f32 to vector<8x16xf32>
      %402 = arith.mulf %401, %38 : vector<8x16xf32>
      %cst_178 = arith.constant -0.58250308 : f32
      %403 = vector.broadcast %cst_178 : f32 to vector<8x16xf32>
      %404 = arith.mulf %403, %43 : vector<8x16xf32>
      %405 = arith.addf %402, %404 : vector<8x16xf32>
      %cst_179 = arith.constant 5.087250e-01 : f32
      %406 = vector.broadcast %cst_179 : f32 to vector<8x16xf32>
      %407 = arith.mulf %406, %48 : vector<8x16xf32>
      %408 = arith.addf %405, %407 : vector<8x16xf32>
      %cst_180 = arith.constant -0.215898812 : f32
      %409 = vector.broadcast %cst_180 : f32 to vector<8x16xf32>
      %410 = arith.mulf %409, %63 : vector<8x16xf32>
      %411 = arith.addf %408, %410 : vector<8x16xf32>
      %cst_181 = arith.constant -0.339865535 : f32
      %412 = vector.broadcast %cst_181 : f32 to vector<8x16xf32>
      %413 = arith.mulf %412, %68 : vector<8x16xf32>
      %414 = arith.addf %411, %413 : vector<8x16xf32>
      %cst_182 = arith.constant -0.145272568 : f32
      %415 = vector.broadcast %cst_182 : f32 to vector<8x16xf32>
      %416 = arith.mulf %415, %73 : vector<8x16xf32>
      %417 = arith.addf %414, %416 : vector<8x16xf32>
      %cst_183 = arith.constant 0.0328901038 : f32
      %418 = vector.broadcast %cst_183 : f32 to vector<8x16xf32>
      %419 = arith.mulf %418, %88 : vector<8x16xf32>
      %420 = arith.addf %417, %419 : vector<8x16xf32>
      %cst_184 = arith.constant 0.277986616 : f32
      %421 = vector.broadcast %cst_184 : f32 to vector<8x16xf32>
      %422 = arith.mulf %421, %93 : vector<8x16xf32>
      %423 = arith.addf %420, %422 : vector<8x16xf32>
      %cst_185 = arith.constant -0.536061645 : f32
      %424 = vector.broadcast %cst_185 : f32 to vector<8x16xf32>
      %425 = arith.mulf %424, %98 : vector<8x16xf32>
      %426 = arith.addf %423, %425 : vector<8x16xf32>
      %cst_186 = arith.constant -5.000000e+00 : f32
      %cst_187 = arith.constant 5.000000e+00 : f32
      %427 = vector.broadcast %cst_186 : f32 to vector<8x16xf32>
      %428 = arith.maximumf %427, %426 : vector<8x16xf32>
      %429 = vector.broadcast %cst_187 : f32 to vector<8x16xf32>
      %430 = arith.minimumf %429, %428 : vector<8x16xf32>
      %c0_188 = arith.constant 0 : index
      %c8 = arith.constant 8 : index
      %431 = arith.index_cast %3 : i32 to index
      %c0_189 = arith.constant 0 : index
      %432 = vector.load %arg3[%c0_188, %c8, %431, %c0_189] : memref<1x62x16x16xf32, #tpu.memory_space<vmem>>, vector<1x1x8x16xf32>
      %433 = vector.shape_cast %432 : vector<1x1x8x16xf32> to vector<8x16xf32>
      %434 = vector.shape_cast %430 : vector<8x16xf32> to vector<1x1x8x16xf32>
      tpu.vector_store %arg3[%c0_188, %c8, %431, %c0_189], %434 {strides = array<i32>} : memref<1x62x16x16xf32, #tpu.memory_space<vmem>>, vector<1x1x8x16xf32>,
      %cst_190 = arith.constant 0.21697104 : f32
      %435 = vector.broadcast %cst_190 : f32 to vector<8x16xf32>
      %436 = arith.mulf %435, %38 : vector<8x16xf32>
      %cst_191 = arith.constant -3.31712217E-4 : f32
      %437 = vector.broadcast %cst_191 : f32 to vector<8x16xf32>
      %438 = arith.mulf %437, %43 : vector<8x16xf32>
      %439 = arith.addf %436, %438 : vector<8x16xf32>
      %cst_192 = arith.constant -1.000000e+00 : f32
      %440 = vector.broadcast %cst_192 : f32 to vector<8x16xf32>
      %441 = arith.mulf %440, %48 : vector<8x16xf32>
      %442 = arith.addf %439, %441 : vector<8x16xf32>
      %cst_193 = arith.constant 0.510306895 : f32
      %443 = vector.broadcast %cst_193 : f32 to vector<8x16xf32>
      %444 = arith.mulf %443, %63 : vector<8x16xf32>
      %445 = arith.addf %442, %444 : vector<8x16xf32>
      %cst_194 = arith.constant 0.71386379 : f32
      %446 = vector.broadcast %cst_194 : f32 to vector<8x16xf32>
      %447 = arith.mulf %446, %68 : vector<8x16xf32>
      %448 = arith.addf %445, %447 : vector<8x16xf32>
      %cst_195 = arith.constant 0.355769187 : f32
      %449 = vector.broadcast %cst_195 : f32 to vector<8x16xf32>
      %450 = arith.mulf %449, %73 : vector<8x16xf32>
      %451 = arith.addf %448, %450 : vector<8x16xf32>
      %cst_196 = arith.constant -0.322711021 : f32
      %452 = vector.broadcast %cst_196 : f32 to vector<8x16xf32>
      %453 = arith.mulf %452, %88 : vector<8x16xf32>
      %454 = arith.addf %451, %453 : vector<8x16xf32>
      %cst_197 = arith.constant -0.76755321 : f32
      %455 = vector.broadcast %cst_197 : f32 to vector<8x16xf32>
      %456 = arith.mulf %455, %93 : vector<8x16xf32>
      %457 = arith.addf %454, %456 : vector<8x16xf32>
      %cst_198 = arith.constant 0.293685049 : f32
      %458 = vector.broadcast %cst_198 : f32 to vector<8x16xf32>
      %459 = arith.mulf %458, %98 : vector<8x16xf32>
      %460 = arith.addf %457, %459 : vector<8x16xf32>
      %cst_199 = arith.constant -5.000000e+00 : f32
      %cst_200 = arith.constant 5.000000e+00 : f32
      %461 = vector.broadcast %cst_199 : f32 to vector<8x16xf32>
      %462 = arith.maximumf %461, %460 : vector<8x16xf32>
      %463 = vector.broadcast %cst_200 : f32 to vector<8x16xf32>
      %464 = arith.minimumf %463, %462 : vector<8x16xf32>
      %c0_201 = arith.constant 0 : index
      %c9 = arith.constant 9 : index
      %465 = arith.index_cast %3 : i32 to index
      %c0_202 = arith.constant 0 : index
      %466 = vector.load %arg3[%c0_201, %c9, %465, %c0_202] : memref<1x62x16x16xf32, #tpu.memory_space<vmem>>, vector<1x1x8x16xf32>
      %467 = vector.shape_cast %466 : vector<1x1x8x16xf32> to vector<8x16xf32>
      %468 = vector.shape_cast %464 : vector<8x16xf32> to vector<1x1x8x16xf32>
      tpu.vector_store %arg3[%c0_201, %c9, %465, %c0_202], %468 {strides = array<i32>} : memref<1x62x16x16xf32, #tpu.memory_space<vmem>>, vector<1x1x8x16xf32>,
      %cst_203 = arith.constant -0.777717232 : f32
      %469 = vector.broadcast %cst_203 : f32 to vector<8x16xf32>
      %470 = arith.mulf %469, %38 : vector<8x16xf32>
      %cst_204 = arith.constant 0.542444348 : f32
      %471 = vector.broadcast %cst_204 : f32 to vector<8x16xf32>
      %472 = arith.mulf %471, %43 : vector<8x16xf32>
      %473 = arith.addf %470, %472 : vector<8x16xf32>
      %cst_205 = arith.constant -0.281159401 : f32
      %474 = vector.broadcast %cst_205 : f32 to vector<8x16xf32>
      %475 = arith.mulf %474, %48 : vector<8x16xf32>
      %476 = arith.addf %473, %475 : vector<8x16xf32>
      %cst_206 = arith.constant 0.342826158 : f32
      %477 = vector.broadcast %cst_206 : f32 to vector<8x16xf32>
      %478 = arith.mulf %477, %63 : vector<8x16xf32>
      %479 = arith.addf %476, %478 : vector<8x16xf32>
      %cst_207 = arith.constant -0.160894915 : f32
      %480 = vector.broadcast %cst_207 : f32 to vector<8x16xf32>
      %481 = arith.mulf %480, %68 : vector<8x16xf32>
      %482 = arith.addf %479, %481 : vector<8x16xf32>
      %cst_208 = arith.constant 0.123506688 : f32
      %483 = vector.broadcast %cst_208 : f32 to vector<8x16xf32>
      %484 = arith.mulf %483, %73 : vector<8x16xf32>
      %485 = arith.addf %482, %484 : vector<8x16xf32>
      %cst_209 = arith.constant -0.441771716 : f32
      %486 = vector.broadcast %cst_209 : f32 to vector<8x16xf32>
      %487 = arith.mulf %486, %88 : vector<8x16xf32>
      %488 = arith.addf %485, %487 : vector<8x16xf32>
      %cst_210 = arith.constant 1.000000e+00 : f32
      %489 = vector.broadcast %cst_210 : f32 to vector<8x16xf32>
      %490 = arith.mulf %489, %93 : vector<8x16xf32>
      %491 = arith.addf %488, %490 : vector<8x16xf32>
      %cst_211 = arith.constant -0.347233891 : f32
      %492 = vector.broadcast %cst_211 : f32 to vector<8x16xf32>
      %493 = arith.mulf %492, %98 : vector<8x16xf32>
      %494 = arith.addf %491, %493 : vector<8x16xf32>
      %cst_212 = arith.constant -5.000000e+00 : f32
      %cst_213 = arith.constant 5.000000e+00 : f32
      %495 = vector.broadcast %cst_212 : f32 to vector<8x16xf32>
      %496 = arith.maximumf %495, %494 : vector<8x16xf32>
      %497 = vector.broadcast %cst_213 : f32 to vector<8x16xf32>
      %498 = arith.minimumf %497, %496 : vector<8x16xf32>
      %c0_214 = arith.constant 0 : index
      %c10 = arith.constant 10 : index
      %499 = arith.index_cast %3 : i32 to index
      %c0_215 = arith.constant 0 : index
      %500 = vector.load %arg3[%c0_214, %c10, %499, %c0_215] : memref<1x62x16x16xf32, #tpu.memory_space<vmem>>, vector<1x1x8x16xf32>
      %501 = vector.shape_cast %500 : vector<1x1x8x16xf32> to vector<8x16xf32>
      %502 = vector.shape_cast %498 : vector<8x16xf32> to vector<1x1x8x16xf32>
      tpu.vector_store %arg3[%c0_214, %c10, %499, %c0_215], %502 {strides = array<i32>} : memref<1x62x16x16xf32, #tpu.memory_space<vmem>>, vector<1x1x8x16xf32>,
      %cst_216 = arith.constant 0.195524573 : f32
      %503 = vector.broadcast %cst_216 : f32 to vector<8x16xf32>
      %504 = arith.mulf %503, %38 : vector<8x16xf32>
      %cst_217 = arith.constant 0.968444466 : f32
      %505 = vector.broadcast %cst_217 : f32 to vector<8x16xf32>
      %506 = arith.mulf %505, %43 : vector<8x16xf32>
      %507 = arith.addf %504, %506 : vector<8x16xf32>
      %cst_218 = arith.constant -0.717553139 : f32
      %508 = vector.broadcast %cst_218 : f32 to vector<8x16xf32>
      %509 = arith.mulf %508, %48 : vector<8x16xf32>
      %510 = arith.addf %507, %509 : vector<8x16xf32>
      %cst_219 = arith.constant -0.677228928 : f32
      %511 = vector.broadcast %cst_219 : f32 to vector<8x16xf32>
      %512 = arith.mulf %511, %63 : vector<8x16xf32>
      %513 = arith.addf %510, %512 : vector<8x16xf32>
      %cst_220 = arith.constant 0.491616845 : f32
      %514 = vector.broadcast %cst_220 : f32 to vector<8x16xf32>
      %515 = arith.mulf %514, %68 : vector<8x16xf32>
      %516 = arith.addf %513, %515 : vector<8x16xf32>
      %cst_221 = arith.constant -0.626422345 : f32
      %517 = vector.broadcast %cst_221 : f32 to vector<8x16xf32>
      %518 = arith.mulf %517, %73 : vector<8x16xf32>
      %519 = arith.addf %516, %518 : vector<8x16xf32>
      %cst_222 = arith.constant 1.000000e+00 : f32
      %520 = vector.broadcast %cst_222 : f32 to vector<8x16xf32>
      %521 = arith.mulf %520, %88 : vector<8x16xf32>
      %522 = arith.addf %519, %521 : vector<8x16xf32>
      %cst_223 = arith.constant -0.230087355 : f32
      %523 = vector.broadcast %cst_223 : f32 to vector<8x16xf32>
      %524 = arith.mulf %523, %93 : vector<8x16xf32>
      %525 = arith.addf %522, %524 : vector<8x16xf32>
      %cst_224 = arith.constant -0.404294133 : f32
      %526 = vector.broadcast %cst_224 : f32 to vector<8x16xf32>
      %527 = arith.mulf %526, %98 : vector<8x16xf32>
      %528 = arith.addf %525, %527 : vector<8x16xf32>
      %cst_225 = arith.constant -5.000000e+00 : f32
      %cst_226 = arith.constant 5.000000e+00 : f32
      %529 = vector.broadcast %cst_225 : f32 to vector<8x16xf32>
      %530 = arith.maximumf %529, %528 : vector<8x16xf32>
      %531 = vector.broadcast %cst_226 : f32 to vector<8x16xf32>
      %532 = arith.minimumf %531, %530 : vector<8x16xf32>
      %c0_227 = arith.constant 0 : index
      %c11 = arith.constant 11 : index
      %533 = arith.index_cast %3 : i32 to index
      %c0_228 = arith.constant 0 : index
      %534 = vector.load %arg3[%c0_227, %c11, %533, %c0_228] : memref<1x62x16x16xf32, #tpu.memory_space<vmem>>, vector<1x1x8x16xf32>
      %535 = vector.shape_cast %534 : vector<1x1x8x16xf32> to vector<8x16xf32>
      %536 = vector.shape_cast %532 : vector<8x16xf32> to vector<1x1x8x16xf32>
      tpu.vector_store %arg3[%c0_227, %c11, %533, %c0_228], %536 {strides = array<i32>} : memref<1x62x16x16xf32, #tpu.memory_space<vmem>>, vector<1x1x8x16xf32>,
      %cst_229 = arith.constant 0.522453606 : f32
      %537 = vector.broadcast %cst_229 : f32 to vector<8x16xf32>
      %538 = arith.mulf %537, %38 : vector<8x16xf32>
      %cst_230 = arith.constant 0.280523151 : f32
      %539 = vector.broadcast %cst_230 : f32 to vector<8x16xf32>
      %540 = arith.mulf %539, %43 : vector<8x16xf32>
      %541 = arith.addf %538, %540 : vector<8x16xf32>
      %cst_231 = arith.constant 0.492168725 : f32
      %542 = vector.broadcast %cst_231 : f32 to vector<8x16xf32>
      %543 = arith.mulf %542, %48 : vector<8x16xf32>
      %544 = arith.addf %541, %543 : vector<8x16xf32>
      %cst_232 = arith.constant -0.0336117037 : f32
      %545 = vector.broadcast %cst_232 : f32 to vector<8x16xf32>
      %546 = arith.mulf %545, %63 : vector<8x16xf32>
      %547 = arith.addf %544, %546 : vector<8x16xf32>
      %cst_233 = arith.constant -1.000000e+00 : f32
      %548 = vector.broadcast %cst_233 : f32 to vector<8x16xf32>
      %549 = arith.mulf %548, %68 : vector<8x16xf32>
      %550 = arith.addf %547, %549 : vector<8x16xf32>
      %cst_234 = arith.constant 0.515412092 : f32
      %551 = vector.broadcast %cst_234 : f32 to vector<8x16xf32>
      %552 = arith.mulf %551, %73 : vector<8x16xf32>
      %553 = arith.addf %550, %552 : vector<8x16xf32>
      %cst_235 = arith.constant -0.675610959 : f32
      %554 = vector.broadcast %cst_235 : f32 to vector<8x16xf32>
      %555 = arith.mulf %554, %88 : vector<8x16xf32>
      %556 = arith.addf %553, %555 : vector<8x16xf32>
      %cst_236 = arith.constant -0.0902563929 : f32
      %557 = vector.broadcast %cst_236 : f32 to vector<8x16xf32>
      %558 = arith.mulf %557, %93 : vector<8x16xf32>
      %559 = arith.addf %556, %558 : vector<8x16xf32>
      %cst_237 = arith.constant -0.0110784993 : f32
      %560 = vector.broadcast %cst_237 : f32 to vector<8x16xf32>
      %561 = arith.mulf %560, %98 : vector<8x16xf32>
      %562 = arith.addf %559, %561 : vector<8x16xf32>
      %cst_238 = arith.constant -5.000000e+00 : f32
      %cst_239 = arith.constant 5.000000e+00 : f32
      %563 = vector.broadcast %cst_238 : f32 to vector<8x16xf32>
      %564 = arith.maximumf %563, %562 : vector<8x16xf32>
      %565 = vector.broadcast %cst_239 : f32 to vector<8x16xf32>
      %566 = arith.minimumf %565, %564 : vector<8x16xf32>
      %c0_240 = arith.constant 0 : index
      %c12 = arith.constant 12 : index
      %567 = arith.index_cast %3 : i32 to index
      %c0_241 = arith.constant 0 : index
      %568 = vector.load %arg3[%c0_240, %c12, %567, %c0_241] : memref<1x62x16x16xf32, #tpu.memory_space<vmem>>, vector<1x1x8x16xf32>
      %569 = vector.shape_cast %568 : vector<1x1x8x16xf32> to vector<8x16xf32>
      %570 = vector.shape_cast %566 : vector<8x16xf32> to vector<1x1x8x16xf32>
      tpu.vector_store %arg3[%c0_240, %c12, %567, %c0_241], %570 {strides = array<i32>} : memref<1x62x16x16xf32, #tpu.memory_space<vmem>>, vector<1x1x8x16xf32>,
      %cst_242 = arith.constant -0.250042439 : f32
      %571 = vector.broadcast %cst_242 : f32 to vector<8x16xf32>
      %572 = arith.mulf %571, %38 : vector<8x16xf32>
      %cst_243 = arith.constant 0.360705286 : f32
      %573 = vector.broadcast %cst_243 : f32 to vector<8x16xf32>
      %574 = arith.mulf %573, %43 : vector<8x16xf32>
      %575 = arith.addf %572, %574 : vector<8x16xf32>
      %cst_244 = arith.constant 0.605394721 : f32
      %576 = vector.broadcast %cst_244 : f32 to vector<8x16xf32>
      %577 = arith.mulf %576, %48 : vector<8x16xf32>
      %578 = arith.addf %575, %577 : vector<8x16xf32>
      %cst_245 = arith.constant 0.171980128 : f32
      %579 = vector.broadcast %cst_245 : f32 to vector<8x16xf32>
      %580 = arith.mulf %579, %63 : vector<8x16xf32>
      %581 = arith.addf %578, %580 : vector<8x16xf32>
      %cst_246 = arith.constant -1.000000e+00 : f32
      %582 = vector.broadcast %cst_246 : f32 to vector<8x16xf32>
      %583 = arith.mulf %582, %68 : vector<8x16xf32>
      %584 = arith.addf %581, %583 : vector<8x16xf32>
      %cst_247 = arith.constant 0.109890141 : f32
      %585 = vector.broadcast %cst_247 : f32 to vector<8x16xf32>
      %586 = arith.mulf %585, %73 : vector<8x16xf32>
      %587 = arith.addf %584, %586 : vector<8x16xf32>
      %cst_248 = arith.constant 0.926360666 : f32
      %588 = vector.broadcast %cst_248 : f32 to vector<8x16xf32>
      %589 = arith.mulf %588, %88 : vector<8x16xf32>
      %590 = arith.addf %587, %589 : vector<8x16xf32>
      %cst_249 = arith.constant -0.678514897 : f32
      %591 = vector.broadcast %cst_249 : f32 to vector<8x16xf32>
      %592 = arith.mulf %591, %93 : vector<8x16xf32>
      %593 = arith.addf %590, %592 : vector<8x16xf32>
      %cst_250 = arith.constant -0.245773599 : f32
      %594 = vector.broadcast %cst_250 : f32 to vector<8x16xf32>
      %595 = arith.mulf %594, %98 : vector<8x16xf32>
      %596 = arith.addf %593, %595 : vector<8x16xf32>
      %cst_251 = arith.constant -5.000000e+00 : f32
      %cst_252 = arith.constant 5.000000e+00 : f32
      %597 = vector.broadcast %cst_251 : f32 to vector<8x16xf32>
      %598 = arith.maximumf %597, %596 : vector<8x16xf32>
      %599 = vector.broadcast %cst_252 : f32 to vector<8x16xf32>
      %600 = arith.minimumf %599, %598 : vector<8x16xf32>
      %c0_253 = arith.constant 0 : index
      %c13 = arith.constant 13 : index
      %601 = arith.index_cast %3 : i32 to index
      %c0_254 = arith.constant 0 : index
      %602 = vector.load %arg3[%c0_253, %c13, %601, %c0_254] : memref<1x62x16x16xf32, #tpu.memory_space<vmem>>, vector<1x1x8x16xf32>
      %603 = vector.shape_cast %602 : vector<1x1x8x16xf32> to vector<8x16xf32>
      %604 = vector.shape_cast %600 : vector<8x16xf32> to vector<1x1x8x16xf32>
      tpu.vector_store %arg3[%c0_253, %c13, %601, %c0_254], %604 {strides = array<i32>} : memref<1x62x16x16xf32, #tpu.memory_space<vmem>>, vector<1x1x8x16xf32>,
      %cst_255 = arith.constant -0.313007444 : f32
      %605 = vector.broadcast %cst_255 : f32 to vector<8x16xf32>
      %606 = arith.mulf %605, %38 : vector<8x16xf32>
      %cst_256 = arith.constant 1.000000e+00 : f32
      %607 = vector.broadcast %cst_256 : f32 to vector<8x16xf32>
      %608 = arith.mulf %607, %43 : vector<8x16xf32>
      %609 = arith.addf %606, %608 : vector<8x16xf32>
      %cst_257 = arith.constant 0.323517203 : f32
      %610 = vector.broadcast %cst_257 : f32 to vector<8x16xf32>
      %611 = arith.mulf %610, %48 : vector<8x16xf32>
      %612 = arith.addf %609, %611 : vector<8x16xf32>
      %cst_258 = arith.constant 0.171300009 : f32
      %613 = vector.broadcast %cst_258 : f32 to vector<8x16xf32>
      %614 = arith.mulf %613, %63 : vector<8x16xf32>
      %615 = arith.addf %612, %614 : vector<8x16xf32>
      %cst_259 = arith.constant -0.505417824 : f32
      %616 = vector.broadcast %cst_259 : f32 to vector<8x16xf32>
      %617 = arith.mulf %616, %68 : vector<8x16xf32>
      %618 = arith.addf %615, %617 : vector<8x16xf32>
      %cst_260 = arith.constant 2.470470e-01 : f32
      %619 = vector.broadcast %cst_260 : f32 to vector<8x16xf32>
      %620 = arith.mulf %619, %73 : vector<8x16xf32>
      %621 = arith.addf %618, %620 : vector<8x16xf32>
      %cst_261 = arith.constant -0.450479656 : f32
      %622 = vector.broadcast %cst_261 : f32 to vector<8x16xf32>
      %623 = arith.mulf %622, %88 : vector<8x16xf32>
      %624 = arith.addf %621, %623 : vector<8x16xf32>
      %cst_262 = arith.constant -0.0446004234 : f32
      %625 = vector.broadcast %cst_262 : f32 to vector<8x16xf32>
      %626 = arith.mulf %625, %93 : vector<8x16xf32>
      %627 = arith.addf %624, %626 : vector<8x16xf32>
      %cst_263 = arith.constant -0.428358853 : f32
      %628 = vector.broadcast %cst_263 : f32 to vector<8x16xf32>
      %629 = arith.mulf %628, %98 : vector<8x16xf32>
      %630 = arith.addf %627, %629 : vector<8x16xf32>
      %cst_264 = arith.constant -5.000000e+00 : f32
      %cst_265 = arith.constant 5.000000e+00 : f32
      %631 = vector.broadcast %cst_264 : f32 to vector<8x16xf32>
      %632 = arith.maximumf %631, %630 : vector<8x16xf32>
      %633 = vector.broadcast %cst_265 : f32 to vector<8x16xf32>
      %634 = arith.minimumf %633, %632 : vector<8x16xf32>
      %c0_266 = arith.constant 0 : index
      %c14 = arith.constant 14 : index
      %635 = arith.index_cast %3 : i32 to index
      %c0_267 = arith.constant 0 : index
      %636 = vector.load %arg3[%c0_266, %c14, %635, %c0_267] : memref<1x62x16x16xf32, #tpu.memory_space<vmem>>, vector<1x1x8x16xf32>
      %637 = vector.shape_cast %636 : vector<1x1x8x16xf32> to vector<8x16xf32>
      %638 = vector.shape_cast %634 : vector<8x16xf32> to vector<1x1x8x16xf32>
      tpu.vector_store %arg3[%c0_266, %c14, %635, %c0_267], %638 {strides = array<i32>} : memref<1x62x16x16xf32, #tpu.memory_space<vmem>>, vector<1x1x8x16xf32>,
      %cst_268 = arith.constant 0.443114609 : f32
      %639 = vector.broadcast %cst_268 : f32 to vector<8x16xf32>
      %640 = arith.mulf %639, %38 : vector<8x16xf32>
      %cst_269 = arith.constant 0.376645654 : f32
      %641 = vector.broadcast %cst_269 : f32 to vector<8x16xf32>
      %642 = arith.mulf %641, %43 : vector<8x16xf32>
      %643 = arith.addf %640, %642 : vector<8x16xf32>
      %cst_270 = arith.constant -0.145885304 : f32
      %644 = vector.broadcast %cst_270 : f32 to vector<8x16xf32>
      %645 = arith.mulf %644, %48 : vector<8x16xf32>
      %646 = arith.addf %643, %645 : vector<8x16xf32>
      %cst_271 = arith.constant 0.25642392 : f32
      %647 = vector.broadcast %cst_271 : f32 to vector<8x16xf32>
      %648 = arith.mulf %647, %63 : vector<8x16xf32>
      %649 = arith.addf %646, %648 : vector<8x16xf32>
      %cst_272 = arith.constant -0.73490566 : f32
      %650 = vector.broadcast %cst_272 : f32 to vector<8x16xf32>
      %651 = arith.mulf %650, %68 : vector<8x16xf32>
      %652 = arith.addf %649, %651 : vector<8x16xf32>
      %cst_273 = arith.constant -1.000000e+00 : f32
      %653 = vector.broadcast %cst_273 : f32 to vector<8x16xf32>
      %654 = arith.mulf %653, %73 : vector<8x16xf32>
      %655 = arith.addf %652, %654 : vector<8x16xf32>
      %cst_274 = arith.constant 0.28530696 : f32
      %656 = vector.broadcast %cst_274 : f32 to vector<8x16xf32>
      %657 = arith.mulf %656, %88 : vector<8x16xf32>
      %658 = arith.addf %655, %657 : vector<8x16xf32>
      %cst_275 = arith.constant 0.103748038 : f32
      %659 = vector.broadcast %cst_275 : f32 to vector<8x16xf32>
      %660 = arith.mulf %659, %93 : vector<8x16xf32>
      %661 = arith.addf %658, %660 : vector<8x16xf32>
      %cst_276 = arith.constant 0.415551811 : f32
      %662 = vector.broadcast %cst_276 : f32 to vector<8x16xf32>
      %663 = arith.mulf %662, %98 : vector<8x16xf32>
      %664 = arith.addf %661, %663 : vector<8x16xf32>
      %cst_277 = arith.constant -5.000000e+00 : f32
      %cst_278 = arith.constant 5.000000e+00 : f32
      %665 = vector.broadcast %cst_277 : f32 to vector<8x16xf32>
      %666 = arith.maximumf %665, %664 : vector<8x16xf32>
      %667 = vector.broadcast %cst_278 : f32 to vector<8x16xf32>
      %668 = arith.minimumf %667, %666 : vector<8x16xf32>
      %c0_279 = arith.constant 0 : index
      %c15 = arith.constant 15 : index
      %669 = arith.index_cast %3 : i32 to index
      %c0_280 = arith.constant 0 : index
      %670 = vector.load %arg3[%c0_279, %c15, %669, %c0_280] : memref<1x62x16x16xf32, #tpu.memory_space<vmem>>, vector<1x1x8x16xf32>
      %671 = vector.shape_cast %670 : vector<1x1x8x16xf32> to vector<8x16xf32>
      %672 = vector.shape_cast %668 : vector<8x16xf32> to vector<1x1x8x16xf32>
      tpu.vector_store %arg3[%c0_279, %c15, %669, %c0_280], %672 {strides = array<i32>} : memref<1x62x16x16xf32, #tpu.memory_space<vmem>>, vector<1x1x8x16xf32>,
      %cst_281 = arith.constant 1.000000e+00 : f32
      %673 = vector.broadcast %cst_281 : f32 to vector<8x16xf32>
      %674 = arith.mulf %673, %38 : vector<8x16xf32>
      %cst_282 = arith.constant 0.311043829 : f32
      %675 = vector.broadcast %cst_282 : f32 to vector<8x16xf32>
      %676 = arith.mulf %675, %43 : vector<8x16xf32>
      %677 = arith.addf %674, %676 : vector<8x16xf32>
      %cst_283 = arith.constant -0.578391314 : f32
      %678 = vector.broadcast %cst_283 : f32 to vector<8x16xf32>
      %679 = arith.mulf %678, %48 : vector<8x16xf32>
      %680 = arith.addf %677, %679 : vector<8x16xf32>
      %cst_284 = arith.constant 0.393669218 : f32
      %681 = vector.broadcast %cst_284 : f32 to vector<8x16xf32>
      %682 = arith.mulf %681, %63 : vector<8x16xf32>
      %683 = arith.addf %680, %682 : vector<8x16xf32>
      %cst_285 = arith.constant -0.771423041 : f32
      %684 = vector.broadcast %cst_285 : f32 to vector<8x16xf32>
      %685 = arith.mulf %684, %68 : vector<8x16xf32>
      %686 = arith.addf %683, %685 : vector<8x16xf32>
      %cst_286 = arith.constant -0.362300098 : f32
      %687 = vector.broadcast %cst_286 : f32 to vector<8x16xf32>
      %688 = arith.mulf %687, %73 : vector<8x16xf32>
      %689 = arith.addf %686, %688 : vector<8x16xf32>
      %cst_287 = arith.constant -0.173933774 : f32
      %690 = vector.broadcast %cst_287 : f32 to vector<8x16xf32>
      %691 = arith.mulf %690, %88 : vector<8x16xf32>
      %692 = arith.addf %689, %691 : vector<8x16xf32>
      %cst_288 = arith.constant 0.679241419 : f32
      %693 = vector.broadcast %cst_288 : f32 to vector<8x16xf32>
      %694 = arith.mulf %693, %93 : vector<8x16xf32>
      %695 = arith.addf %692, %694 : vector<8x16xf32>
      %cst_289 = arith.constant -0.497906238 : f32
      %696 = vector.broadcast %cst_289 : f32 to vector<8x16xf32>
      %697 = arith.mulf %696, %98 : vector<8x16xf32>
      %698 = arith.addf %695, %697 : vector<8x16xf32>
      %cst_290 = arith.constant -5.000000e+00 : f32
      %cst_291 = arith.constant 5.000000e+00 : f32
      %699 = vector.broadcast %cst_290 : f32 to vector<8x16xf32>
      %700 = arith.maximumf %699, %698 : vector<8x16xf32>
      %701 = vector.broadcast %cst_291 : f32 to vector<8x16xf32>
      %702 = arith.minimumf %701, %700 : vector<8x16xf32>
      %c0_292 = arith.constant 0 : index
      %c16 = arith.constant 16 : index
      %703 = arith.index_cast %3 : i32 to index
      %c0_293 = arith.constant 0 : index
      %704 = vector.load %arg3[%c0_292, %c16, %703, %c0_293] : memref<1x62x16x16xf32, #tpu.memory_space<vmem>>, vector<1x1x8x16xf32>
      %705 = vector.shape_cast %704 : vector<1x1x8x16xf32> to vector<8x16xf32>
      %706 = vector.shape_cast %702 : vector<8x16xf32> to vector<1x1x8x16xf32>
      tpu.vector_store %arg3[%c0_292, %c16, %703, %c0_293], %706 {strides = array<i32>} : memref<1x62x16x16xf32, #tpu.memory_space<vmem>>, vector<1x1x8x16xf32>,
      %cst_294 = arith.constant -0.301265389 : f32
      %707 = vector.broadcast %cst_294 : f32 to vector<8x16xf32>
      %708 = arith.mulf %707, %38 : vector<8x16xf32>
      %cst_295 = arith.constant 0.0424621478 : f32
      %709 = vector.broadcast %cst_295 : f32 to vector<8x16xf32>
      %710 = arith.mulf %709, %43 : vector<8x16xf32>
      %711 = arith.addf %708, %710 : vector<8x16xf32>
      %cst_296 = arith.constant -0.224321708 : f32
      %712 = vector.broadcast %cst_296 : f32 to vector<8x16xf32>
      %713 = arith.mulf %712, %48 : vector<8x16xf32>
      %714 = arith.addf %711, %713 : vector<8x16xf32>
      %cst_297 = arith.constant 0.620902717 : f32
      %715 = vector.broadcast %cst_297 : f32 to vector<8x16xf32>
      %716 = arith.mulf %715, %63 : vector<8x16xf32>
      %717 = arith.addf %714, %716 : vector<8x16xf32>
      %cst_298 = arith.constant -0.420955211 : f32
      %718 = vector.broadcast %cst_298 : f32 to vector<8x16xf32>
      %719 = arith.mulf %718, %68 : vector<8x16xf32>
      %720 = arith.addf %717, %719 : vector<8x16xf32>
      %cst_299 = arith.constant -0.452843726 : f32
      %721 = vector.broadcast %cst_299 : f32 to vector<8x16xf32>
      %722 = arith.mulf %721, %73 : vector<8x16xf32>
      %723 = arith.addf %720, %722 : vector<8x16xf32>
      %cst_300 = arith.constant -0.117774397 : f32
      %724 = vector.broadcast %cst_300 : f32 to vector<8x16xf32>
      %725 = arith.mulf %724, %88 : vector<8x16xf32>
      %726 = arith.addf %723, %725 : vector<8x16xf32>
      %cst_301 = arith.constant -0.146204427 : f32
      %727 = vector.broadcast %cst_301 : f32 to vector<8x16xf32>
      %728 = arith.mulf %727, %93 : vector<8x16xf32>
      %729 = arith.addf %726, %728 : vector<8x16xf32>
      %cst_302 = arith.constant 1.000000e+00 : f32
      %730 = vector.broadcast %cst_302 : f32 to vector<8x16xf32>
      %731 = arith.mulf %730, %98 : vector<8x16xf32>
      %732 = arith.addf %729, %731 : vector<8x16xf32>
      %cst_303 = arith.constant -5.000000e+00 : f32
      %cst_304 = arith.constant 5.000000e+00 : f32
      %733 = vector.broadcast %cst_303 : f32 to vector<8x16xf32>
      %734 = arith.maximumf %733, %732 : vector<8x16xf32>
      %735 = vector.broadcast %cst_304 : f32 to vector<8x16xf32>
      %736 = arith.minimumf %735, %734 : vector<8x16xf32>
      %c0_305 = arith.constant 0 : index
      %c17 = arith.constant 17 : index
      %737 = arith.index_cast %3 : i32 to index
      %c0_306 = arith.constant 0 : index
      %738 = vector.load %arg3[%c0_305, %c17, %737, %c0_306] : memref<1x62x16x16xf32, #tpu.memory_space<vmem>>, vector<1x1x8x16xf32>
      %739 = vector.shape_cast %738 : vector<1x1x8x16xf32> to vector<8x16xf32>
      %740 = vector.shape_cast %736 : vector<8x16xf32> to vector<1x1x8x16xf32>
      tpu.vector_store %arg3[%c0_305, %c17, %737, %c0_306], %740 {strides = array<i32>} : memref<1x62x16x16xf32, #tpu.memory_space<vmem>>, vector<1x1x8x16xf32>,
      %cst_307 = arith.constant 0.554585755 : f32
      %741 = vector.broadcast %cst_307 : f32 to vector<8x16xf32>
      %742 = arith.mulf %741, %38 : vector<8x16xf32>
      %cst_308 = arith.constant 0.0173976719 : f32
      %743 = vector.broadcast %cst_308 : f32 to vector<8x16xf32>
      %744 = arith.mulf %743, %43 : vector<8x16xf32>
      %745 = arith.addf %742, %744 : vector<8x16xf32>
      %cst_309 = arith.constant -0.800963759 : f32
      %746 = vector.broadcast %cst_309 : f32 to vector<8x16xf32>
      %747 = arith.mulf %746, %48 : vector<8x16xf32>
      %748 = arith.addf %745, %747 : vector<8x16xf32>
      %cst_310 = arith.constant 0.489105046 : f32
      %749 = vector.broadcast %cst_310 : f32 to vector<8x16xf32>
      %750 = arith.mulf %749, %63 : vector<8x16xf32>
      %751 = arith.addf %748, %750 : vector<8x16xf32>
      %cst_311 = arith.constant -6.605880e-01 : f32
      %752 = vector.broadcast %cst_311 : f32 to vector<8x16xf32>
      %753 = arith.mulf %752, %68 : vector<8x16xf32>
      %754 = arith.addf %751, %753 : vector<8x16xf32>
      %cst_312 = arith.constant -1.000000e+00 : f32
      %755 = vector.broadcast %cst_312 : f32 to vector<8x16xf32>
      %756 = arith.mulf %755, %73 : vector<8x16xf32>
      %757 = arith.addf %754, %756 : vector<8x16xf32>
      %cst_313 = arith.constant 0.703306496 : f32
      %758 = vector.broadcast %cst_313 : f32 to vector<8x16xf32>
      %759 = arith.mulf %758, %88 : vector<8x16xf32>
      %760 = arith.addf %757, %759 : vector<8x16xf32>
      %cst_314 = arith.constant 0.160373256 : f32
      %761 = vector.broadcast %cst_314 : f32 to vector<8x16xf32>
      %762 = arith.mulf %761, %93 : vector<8x16xf32>
      %763 = arith.addf %760, %762 : vector<8x16xf32>
      %cst_315 = arith.constant 0.536783576 : f32
      %764 = vector.broadcast %cst_315 : f32 to vector<8x16xf32>
      %765 = arith.mulf %764, %98 : vector<8x16xf32>
      %766 = arith.addf %763, %765 : vector<8x16xf32>
      %cst_316 = arith.constant -5.000000e+00 : f32
      %cst_317 = arith.constant 5.000000e+00 : f32
      %767 = vector.broadcast %cst_316 : f32 to vector<8x16xf32>
      %768 = arith.maximumf %767, %766 : vector<8x16xf32>
      %769 = vector.broadcast %cst_317 : f32 to vector<8x16xf32>
      %770 = arith.minimumf %769, %768 : vector<8x16xf32>
      %c0_318 = arith.constant 0 : index
      %c18 = arith.constant 18 : index
      %771 = arith.index_cast %3 : i32 to index
      %c0_319 = arith.constant 0 : index
      %772 = vector.load %arg3[%c0_318, %c18, %771, %c0_319] : memref<1x62x16x16xf32, #tpu.memory_space<vmem>>, vector<1x1x8x16xf32>
      %773 = vector.shape_cast %772 : vector<1x1x8x16xf32> to vector<8x16xf32>
      %774 = vector.shape_cast %770 : vector<8x16xf32> to vector<1x1x8x16xf32>
      tpu.vector_store %arg3[%c0_318, %c18, %771, %c0_319], %774 {strides = array<i32>} : memref<1x62x16x16xf32, #tpu.memory_space<vmem>>, vector<1x1x8x16xf32>,
      %cst_320 = arith.constant 0.488635927 : f32
      %775 = vector.broadcast %cst_320 : f32 to vector<8x16xf32>
      %776 = arith.mulf %775, %38 : vector<8x16xf32>
      %cst_321 = arith.constant 1.000000e+00 : f32
      %777 = vector.broadcast %cst_321 : f32 to vector<8x16xf32>
      %778 = arith.mulf %777, %43 : vector<8x16xf32>
      %779 = arith.addf %776, %778 : vector<8x16xf32>
      %cst_322 = arith.constant -0.432929307 : f32
      %780 = vector.broadcast %cst_322 : f32 to vector<8x16xf32>
      %781 = arith.mulf %780, %48 : vector<8x16xf32>
      %782 = arith.addf %779, %781 : vector<8x16xf32>
      %cst_323 = arith.constant -0.79710406 : f32
      %783 = vector.broadcast %cst_323 : f32 to vector<8x16xf32>
      %784 = arith.mulf %783, %63 : vector<8x16xf32>
      %785 = arith.addf %782, %784 : vector<8x16xf32>
      %cst_324 = arith.constant 0.833471537 : f32
      %786 = vector.broadcast %cst_324 : f32 to vector<8x16xf32>
      %787 = arith.mulf %786, %68 : vector<8x16xf32>
      %788 = arith.addf %785, %787 : vector<8x16xf32>
      %cst_325 = arith.constant -0.577741265 : f32
      %789 = vector.broadcast %cst_325 : f32 to vector<8x16xf32>
      %790 = arith.mulf %789, %73 : vector<8x16xf32>
      %791 = arith.addf %788, %790 : vector<8x16xf32>
      %cst_326 = arith.constant -0.469539165 : f32
      %792 = vector.broadcast %cst_326 : f32 to vector<8x16xf32>
      %793 = arith.mulf %792, %88 : vector<8x16xf32>
      %794 = arith.addf %791, %793 : vector<8x16xf32>
      %cst_327 = arith.constant -0.247150451 : f32
      %795 = vector.broadcast %cst_327 : f32 to vector<8x16xf32>
      %796 = arith.mulf %795, %93 : vector<8x16xf32>
      %797 = arith.addf %794, %796 : vector<8x16xf32>
      %cst_328 = arith.constant 0.202356771 : f32
      %798 = vector.broadcast %cst_328 : f32 to vector<8x16xf32>
      %799 = arith.mulf %798, %98 : vector<8x16xf32>
      %800 = arith.addf %797, %799 : vector<8x16xf32>
      %cst_329 = arith.constant -5.000000e+00 : f32
      %cst_330 = arith.constant 5.000000e+00 : f32
      %801 = vector.broadcast %cst_329 : f32 to vector<8x16xf32>
      %802 = arith.maximumf %801, %800 : vector<8x16xf32>
      %803 = vector.broadcast %cst_330 : f32 to vector<8x16xf32>
      %804 = arith.minimumf %803, %802 : vector<8x16xf32>
      %c0_331 = arith.constant 0 : index
      %c19 = arith.constant 19 : index
      %805 = arith.index_cast %3 : i32 to index
      %c0_332 = arith.constant 0 : index
      %806 = vector.load %arg3[%c0_331, %c19, %805, %c0_332] : memref<1x62x16x16xf32, #tpu.memory_space<vmem>>, vector<1x1x8x16xf32>
      %807 = vector.shape_cast %806 : vector<1x1x8x16xf32> to vector<8x16xf32>
      %808 = vector.shape_cast %804 : vector<8x16xf32> to vector<1x1x8x16xf32>
      tpu.vector_store %arg3[%c0_331, %c19, %805, %c0_332], %808 {strides = array<i32>} : memref<1x62x16x16xf32, #tpu.memory_space<vmem>>, vector<1x1x8x16xf32>,
      %cst_333 = arith.constant 0.321639419 : f32
      %809 = vector.broadcast %cst_333 : f32 to vector<8x16xf32>
      %810 = arith.mulf %809, %38 : vector<8x16xf32>
      %cst_334 = arith.constant -0.385631114 : f32
      %811 = vector.broadcast %cst_334 : f32 to vector<8x16xf32>
      %812 = arith.mulf %811, %43 : vector<8x16xf32>
      %813 = arith.addf %810, %812 : vector<8x16xf32>
      %cst_335 = arith.constant 0.121001393 : f32
      %814 = vector.broadcast %cst_335 : f32 to vector<8x16xf32>
      %815 = arith.mulf %814, %48 : vector<8x16xf32>
      %816 = arith.addf %813, %815 : vector<8x16xf32>
      %cst_336 = arith.constant -0.973398089 : f32
      %817 = vector.broadcast %cst_336 : f32 to vector<8x16xf32>
      %818 = arith.mulf %817, %63 : vector<8x16xf32>
      %819 = arith.addf %816, %818 : vector<8x16xf32>
      %cst_337 = arith.constant 1.000000e+00 : f32
      %820 = vector.broadcast %cst_337 : f32 to vector<8x16xf32>
      %821 = arith.mulf %820, %68 : vector<8x16xf32>
      %822 = arith.addf %819, %821 : vector<8x16xf32>
      %cst_338 = arith.constant -0.542959571 : f32
      %823 = vector.broadcast %cst_338 : f32 to vector<8x16xf32>
      %824 = arith.mulf %823, %73 : vector<8x16xf32>
      %825 = arith.addf %822, %824 : vector<8x16xf32>
      %cst_339 = arith.constant -0.198194563 : f32
      %826 = vector.broadcast %cst_339 : f32 to vector<8x16xf32>
      %827 = arith.mulf %826, %88 : vector<8x16xf32>
      %828 = arith.addf %825, %827 : vector<8x16xf32>
      %cst_340 = arith.constant 0.603006959 : f32
      %829 = vector.broadcast %cst_340 : f32 to vector<8x16xf32>
      %830 = arith.mulf %829, %93 : vector<8x16xf32>
      %831 = arith.addf %828, %830 : vector<8x16xf32>
      %cst_341 = arith.constant 0.0545355566 : f32
      %832 = vector.broadcast %cst_341 : f32 to vector<8x16xf32>
      %833 = arith.mulf %832, %98 : vector<8x16xf32>
      %834 = arith.addf %831, %833 : vector<8x16xf32>
      %cst_342 = arith.constant -5.000000e+00 : f32
      %cst_343 = arith.constant 5.000000e+00 : f32
      %835 = vector.broadcast %cst_342 : f32 to vector<8x16xf32>
      %836 = arith.maximumf %835, %834 : vector<8x16xf32>
      %837 = vector.broadcast %cst_343 : f32 to vector<8x16xf32>
      %838 = arith.minimumf %837, %836 : vector<8x16xf32>
      %c0_344 = arith.constant 0 : index
      %c20 = arith.constant 20 : index
      %839 = arith.index_cast %3 : i32 to index
      %c0_345 = arith.constant 0 : index
      %840 = vector.load %arg3[%c0_344, %c20, %839, %c0_345] : memref<1x62x16x16xf32, #tpu.memory_space<vmem>>, vector<1x1x8x16xf32>
      %841 = vector.shape_cast %840 : vector<1x1x8x16xf32> to vector<8x16xf32>
      %842 = vector.shape_cast %838 : vector<8x16xf32> to vector<1x1x8x16xf32>
      tpu.vector_store %arg3[%c0_344, %c20, %839, %c0_345], %842 {strides = array<i32>} : memref<1x62x16x16xf32, #tpu.memory_space<vmem>>, vector<1x1x8x16xf32>,
      %cst_346 = arith.constant 0.979655325 : f32
      %843 = vector.broadcast %cst_346 : f32 to vector<8x16xf32>
      %844 = arith.mulf %843, %38 : vector<8x16xf32>
      %cst_347 = arith.constant -1.000000e+00 : f32
      %845 = vector.broadcast %cst_347 : f32 to vector<8x16xf32>
      %846 = arith.mulf %845, %43 : vector<8x16xf32>
      %847 = arith.addf %844, %846 : vector<8x16xf32>
      %cst_348 = arith.constant 0.0889349877 : f32
      %848 = vector.broadcast %cst_348 : f32 to vector<8x16xf32>
      %849 = arith.mulf %848, %48 : vector<8x16xf32>
      %850 = arith.addf %847, %849 : vector<8x16xf32>
      %cst_349 = arith.constant -0.124909364 : f32
      %851 = vector.broadcast %cst_349 : f32 to vector<8x16xf32>
      %852 = arith.mulf %851, %63 : vector<8x16xf32>
      %853 = arith.addf %850, %852 : vector<8x16xf32>
      %cst_350 = arith.constant -0.912905573 : f32
      %854 = vector.broadcast %cst_350 : f32 to vector<8x16xf32>
      %855 = arith.mulf %854, %68 : vector<8x16xf32>
      %856 = arith.addf %853, %855 : vector<8x16xf32>
      %cst_351 = arith.constant 0.267800212 : f32
      %857 = vector.broadcast %cst_351 : f32 to vector<8x16xf32>
      %858 = arith.mulf %857, %73 : vector<8x16xf32>
      %859 = arith.addf %856, %858 : vector<8x16xf32>
      %cst_352 = arith.constant -0.21723941 : f32
      %860 = vector.broadcast %cst_352 : f32 to vector<8x16xf32>
      %861 = arith.mulf %860, %88 : vector<8x16xf32>
      %862 = arith.addf %859, %861 : vector<8x16xf32>
      %cst_353 = arith.constant 0.441281915 : f32
      %863 = vector.broadcast %cst_353 : f32 to vector<8x16xf32>
      %864 = arith.mulf %863, %93 : vector<8x16xf32>
      %865 = arith.addf %862, %864 : vector<8x16xf32>
      %cst_354 = arith.constant 0.477381974 : f32
      %866 = vector.broadcast %cst_354 : f32 to vector<8x16xf32>
      %867 = arith.mulf %866, %98 : vector<8x16xf32>
      %868 = arith.addf %865, %867 : vector<8x16xf32>
      %cst_355 = arith.constant -5.000000e+00 : f32
      %cst_356 = arith.constant 5.000000e+00 : f32
      %869 = vector.broadcast %cst_355 : f32 to vector<8x16xf32>
      %870 = arith.maximumf %869, %868 : vector<8x16xf32>
      %871 = vector.broadcast %cst_356 : f32 to vector<8x16xf32>
      %872 = arith.minimumf %871, %870 : vector<8x16xf32>
      %c0_357 = arith.constant 0 : index
      %c21 = arith.constant 21 : index
      %873 = arith.index_cast %3 : i32 to index
      %c0_358 = arith.constant 0 : index
      %874 = vector.load %arg3[%c0_357, %c21, %873, %c0_358] : memref<1x62x16x16xf32, #tpu.memory_space<vmem>>, vector<1x1x8x16xf32>
      %875 = vector.shape_cast %874 : vector<1x1x8x16xf32> to vector<8x16xf32>
      %876 = vector.shape_cast %872 : vector<8x16xf32> to vector<1x1x8x16xf32>
      tpu.vector_store %arg3[%c0_357, %c21, %873, %c0_358], %876 {strides = array<i32>} : memref<1x62x16x16xf32, #tpu.memory_space<vmem>>, vector<1x1x8x16xf32>,
      %cst_359 = arith.constant 0.869574308 : f32
      %877 = vector.broadcast %cst_359 : f32 to vector<8x16xf32>
      %878 = arith.mulf %877, %38 : vector<8x16xf32>
      %cst_360 = arith.constant 0.46070829 : f32
      %879 = vector.broadcast %cst_360 : f32 to vector<8x16xf32>
      %880 = arith.mulf %879, %43 : vector<8x16xf32>
      %881 = arith.addf %878, %880 : vector<8x16xf32>
      %cst_361 = arith.constant -0.382886738 : f32
      %882 = vector.broadcast %cst_361 : f32 to vector<8x16xf32>
      %883 = arith.mulf %882, %48 : vector<8x16xf32>
      %884 = arith.addf %881, %883 : vector<8x16xf32>
      %cst_362 = arith.constant -0.318690091 : f32
      %885 = vector.broadcast %cst_362 : f32 to vector<8x16xf32>
      %886 = arith.mulf %885, %63 : vector<8x16xf32>
      %887 = arith.addf %884, %886 : vector<8x16xf32>
      %cst_363 = arith.constant 3.435600e-01 : f32
      %888 = vector.broadcast %cst_363 : f32 to vector<8x16xf32>
      %889 = arith.mulf %888, %68 : vector<8x16xf32>
      %890 = arith.addf %887, %889 : vector<8x16xf32>
      %cst_364 = arith.constant 0.123774588 : f32
      %891 = vector.broadcast %cst_364 : f32 to vector<8x16xf32>
      %892 = arith.mulf %891, %73 : vector<8x16xf32>
      %893 = arith.addf %890, %892 : vector<8x16xf32>
      %cst_365 = arith.constant 0.116290636 : f32
      %894 = vector.broadcast %cst_365 : f32 to vector<8x16xf32>
      %895 = arith.mulf %894, %88 : vector<8x16xf32>
      %896 = arith.addf %893, %895 : vector<8x16xf32>
      %cst_366 = arith.constant -1.000000e+00 : f32
      %897 = vector.broadcast %cst_366 : f32 to vector<8x16xf32>
      %898 = arith.mulf %897, %93 : vector<8x16xf32>
      %899 = arith.addf %896, %898 : vector<8x16xf32>
      %cst_367 = arith.constant -0.212331012 : f32
      %900 = vector.broadcast %cst_367 : f32 to vector<8x16xf32>
      %901 = arith.mulf %900, %98 : vector<8x16xf32>
      %902 = arith.addf %899, %901 : vector<8x16xf32>
      %cst_368 = arith.constant -5.000000e+00 : f32
      %cst_369 = arith.constant 5.000000e+00 : f32
      %903 = vector.broadcast %cst_368 : f32 to vector<8x16xf32>
      %904 = arith.maximumf %903, %902 : vector<8x16xf32>
      %905 = vector.broadcast %cst_369 : f32 to vector<8x16xf32>
      %906 = arith.minimumf %905, %904 : vector<8x16xf32>
      %c0_370 = arith.constant 0 : index
      %c22 = arith.constant 22 : index
      %907 = arith.index_cast %3 : i32 to index
      %c0_371 = arith.constant 0 : index
      %908 = vector.load %arg3[%c0_370, %c22, %907, %c0_371] : memref<1x62x16x16xf32, #tpu.memory_space<vmem>>, vector<1x1x8x16xf32>
      %909 = vector.shape_cast %908 : vector<1x1x8x16xf32> to vector<8x16xf32>
      %910 = vector.shape_cast %906 : vector<8x16xf32> to vector<1x1x8x16xf32>
      tpu.vector_store %arg3[%c0_370, %c22, %907, %c0_371], %910 {strides = array<i32>} : memref<1x62x16x16xf32, #tpu.memory_space<vmem>>, vector<1x1x8x16xf32>,
      %cst_372 = arith.constant -0.733932197 : f32
      %911 = vector.broadcast %cst_372 : f32 to vector<8x16xf32>
      %912 = arith.mulf %911, %38 : vector<8x16xf32>
      %cst_373 = arith.constant 0.336966544 : f32
      %913 = vector.broadcast %cst_373 : f32 to vector<8x16xf32>
      %914 = arith.mulf %913, %43 : vector<8x16xf32>
      %915 = arith.addf %912, %914 : vector<8x16xf32>
      %cst_374 = arith.constant -0.0607718751 : f32
      %916 = vector.broadcast %cst_374 : f32 to vector<8x16xf32>
      %917 = arith.mulf %916, %48 : vector<8x16xf32>
      %918 = arith.addf %915, %917 : vector<8x16xf32>
      %cst_375 = arith.constant 1.000000e+00 : f32
      %919 = vector.broadcast %cst_375 : f32 to vector<8x16xf32>
      %920 = arith.mulf %919, %63 : vector<8x16xf32>
      %921 = arith.addf %918, %920 : vector<8x16xf32>
      %cst_376 = arith.constant 0.376199782 : f32
      %922 = vector.broadcast %cst_376 : f32 to vector<8x16xf32>
      %923 = arith.mulf %922, %68 : vector<8x16xf32>
      %924 = arith.addf %921, %923 : vector<8x16xf32>
      %cst_377 = arith.constant 0.869707643 : f32
      %925 = vector.broadcast %cst_377 : f32 to vector<8x16xf32>
      %926 = arith.mulf %925, %73 : vector<8x16xf32>
      %927 = arith.addf %924, %926 : vector<8x16xf32>
      %cst_378 = arith.constant -4.481940e-01 : f32
      %928 = vector.broadcast %cst_378 : f32 to vector<8x16xf32>
      %929 = arith.mulf %928, %88 : vector<8x16xf32>
      %930 = arith.addf %927, %929 : vector<8x16xf32>
      %cst_379 = arith.constant -0.951083064 : f32
      %931 = vector.broadcast %cst_379 : f32 to vector<8x16xf32>
      %932 = arith.mulf %931, %93 : vector<8x16xf32>
      %933 = arith.addf %930, %932 : vector<8x16xf32>
      %cst_380 = arith.constant -0.388892859 : f32
      %934 = vector.broadcast %cst_380 : f32 to vector<8x16xf32>
      %935 = arith.mulf %934, %98 : vector<8x16xf32>
      %936 = arith.addf %933, %935 : vector<8x16xf32>
      %cst_381 = arith.constant -5.000000e+00 : f32
      %cst_382 = arith.constant 5.000000e+00 : f32
      %937 = vector.broadcast %cst_381 : f32 to vector<8x16xf32>
      %938 = arith.maximumf %937, %936 : vector<8x16xf32>
      %939 = vector.broadcast %cst_382 : f32 to vector<8x16xf32>
      %940 = arith.minimumf %939, %938 : vector<8x16xf32>
      %c0_383 = arith.constant 0 : index
      %c23 = arith.constant 23 : index
      %941 = arith.index_cast %3 : i32 to index
      %c0_384 = arith.constant 0 : index
      %942 = vector.load %arg3[%c0_383, %c23, %941, %c0_384] : memref<1x62x16x16xf32, #tpu.memory_space<vmem>>, vector<1x1x8x16xf32>
      %943 = vector.shape_cast %942 : vector<1x1x8x16xf32> to vector<8x16xf32>
      %944 = vector.shape_cast %940 : vector<8x16xf32> to vector<1x1x8x16xf32>
      tpu.vector_store %arg3[%c0_383, %c23, %941, %c0_384], %944 {strides = array<i32>} : memref<1x62x16x16xf32, #tpu.memory_space<vmem>>, vector<1x1x8x16xf32>,
      %cst_385 = arith.constant 0.00449339068 : f32
      %945 = vector.broadcast %cst_385 : f32 to vector<8x16xf32>
      %946 = arith.mulf %945, %38 : vector<8x16xf32>
      %cst_386 = arith.constant 0.177751273 : f32
      %947 = vector.broadcast %cst_386 : f32 to vector<8x16xf32>
      %948 = arith.mulf %947, %43 : vector<8x16xf32>
      %949 = arith.addf %946, %948 : vector<8x16xf32>
      %cst_387 = arith.constant 1.000000e+00 : f32
      %950 = vector.broadcast %cst_387 : f32 to vector<8x16xf32>
      %951 = arith.mulf %950, %48 : vector<8x16xf32>
      %952 = arith.addf %949, %951 : vector<8x16xf32>
      %cst_388 = arith.constant -0.00654338626 : f32
      %953 = vector.broadcast %cst_388 : f32 to vector<8x16xf32>
      %954 = arith.mulf %953, %63 : vector<8x16xf32>
      %955 = arith.addf %952, %954 : vector<8x16xf32>
      %cst_389 = arith.constant -0.406126291 : f32
      %956 = vector.broadcast %cst_389 : f32 to vector<8x16xf32>
      %957 = arith.mulf %956, %68 : vector<8x16xf32>
      %958 = arith.addf %955, %957 : vector<8x16xf32>
      %cst_390 = arith.constant -0.139371201 : f32
      %959 = vector.broadcast %cst_390 : f32 to vector<8x16xf32>
      %960 = arith.mulf %959, %73 : vector<8x16xf32>
      %961 = arith.addf %958, %960 : vector<8x16xf32>
      %cst_391 = arith.constant -0.190807402 : f32
      %962 = vector.broadcast %cst_391 : f32 to vector<8x16xf32>
      %963 = arith.mulf %962, %88 : vector<8x16xf32>
      %964 = arith.addf %961, %963 : vector<8x16xf32>
      %cst_392 = arith.constant 0.222503111 : f32
      %965 = vector.broadcast %cst_392 : f32 to vector<8x16xf32>
      %966 = arith.mulf %965, %93 : vector<8x16xf32>
      %967 = arith.addf %964, %966 : vector<8x16xf32>
      %cst_393 = arith.constant -0.661899507 : f32
      %968 = vector.broadcast %cst_393 : f32 to vector<8x16xf32>
      %969 = arith.mulf %968, %98 : vector<8x16xf32>
      %970 = arith.addf %967, %969 : vector<8x16xf32>
      %cst_394 = arith.constant -5.000000e+00 : f32
      %cst_395 = arith.constant 5.000000e+00 : f32
      %971 = vector.broadcast %cst_394 : f32 to vector<8x16xf32>
      %972 = arith.maximumf %971, %970 : vector<8x16xf32>
      %973 = vector.broadcast %cst_395 : f32 to vector<8x16xf32>
      %974 = arith.minimumf %973, %972 : vector<8x16xf32>
      %c0_396 = arith.constant 0 : index
      %c24 = arith.constant 24 : index
      %975 = arith.index_cast %3 : i32 to index
      %c0_397 = arith.constant 0 : index
      %976 = vector.load %arg3[%c0_396, %c24, %975, %c0_397] : memref<1x62x16x16xf32, #tpu.memory_space<vmem>>, vector<1x1x8x16xf32>
      %977 = vector.shape_cast %976 : vector<1x1x8x16xf32> to vector<8x16xf32>
      %978 = vector.shape_cast %974 : vector<8x16xf32> to vector<1x1x8x16xf32>
      tpu.vector_store %arg3[%c0_396, %c24, %975, %c0_397], %978 {strides = array<i32>} : memref<1x62x16x16xf32, #tpu.memory_space<vmem>>, vector<1x1x8x16xf32>,
      %cst_398 = arith.constant 0.288460761 : f32
      %979 = vector.broadcast %cst_398 : f32 to vector<8x16xf32>
      %980 = arith.mulf %979, %38 : vector<8x16xf32>
      %cst_399 = arith.constant 0.369238079 : f32
      %981 = vector.broadcast %cst_399 : f32 to vector<8x16xf32>
      %982 = arith.mulf %981, %43 : vector<8x16xf32>
      %983 = arith.addf %980, %982 : vector<8x16xf32>
      %cst_400 = arith.constant 0.434794515 : f32
      %984 = vector.broadcast %cst_400 : f32 to vector<8x16xf32>
      %985 = arith.mulf %984, %48 : vector<8x16xf32>
      %986 = arith.addf %983, %985 : vector<8x16xf32>
      %cst_401 = arith.constant -0.28379488 : f32
      %987 = vector.broadcast %cst_401 : f32 to vector<8x16xf32>
      %988 = arith.mulf %987, %63 : vector<8x16xf32>
      %989 = arith.addf %986, %988 : vector<8x16xf32>
      %cst_402 = arith.constant 0.0275467336 : f32
      %990 = vector.broadcast %cst_402 : f32 to vector<8x16xf32>
      %991 = arith.mulf %990, %68 : vector<8x16xf32>
      %992 = arith.addf %989, %991 : vector<8x16xf32>
      %cst_403 = arith.constant -1.000000e+00 : f32
      %993 = vector.broadcast %cst_403 : f32 to vector<8x16xf32>
      %994 = arith.mulf %993, %73 : vector<8x16xf32>
      %995 = arith.addf %992, %994 : vector<8x16xf32>
      %cst_404 = arith.constant -0.193703473 : f32
      %996 = vector.broadcast %cst_404 : f32 to vector<8x16xf32>
      %997 = arith.mulf %996, %88 : vector<8x16xf32>
      %998 = arith.addf %995, %997 : vector<8x16xf32>
      %cst_405 = arith.constant -0.236621112 : f32
      %999 = vector.broadcast %cst_405 : f32 to vector<8x16xf32>
      %1000 = arith.mulf %999, %93 : vector<8x16xf32>
      %1001 = arith.addf %998, %1000 : vector<8x16xf32>
      %cst_406 = arith.constant 0.594079375 : f32
      %1002 = vector.broadcast %cst_406 : f32 to vector<8x16xf32>
      %1003 = arith.mulf %1002, %98 : vector<8x16xf32>
      %1004 = arith.addf %1001, %1003 : vector<8x16xf32>
      %cst_407 = arith.constant -5.000000e+00 : f32
      %cst_408 = arith.constant 5.000000e+00 : f32
      %1005 = vector.broadcast %cst_407 : f32 to vector<8x16xf32>
      %1006 = arith.maximumf %1005, %1004 : vector<8x16xf32>
      %1007 = vector.broadcast %cst_408 : f32 to vector<8x16xf32>
      %1008 = arith.minimumf %1007, %1006 : vector<8x16xf32>
      %c0_409 = arith.constant 0 : index
      %c25 = arith.constant 25 : index
      %1009 = arith.index_cast %3 : i32 to index
      %c0_410 = arith.constant 0 : index
      %1010 = vector.load %arg3[%c0_409, %c25, %1009, %c0_410] : memref<1x62x16x16xf32, #tpu.memory_space<vmem>>, vector<1x1x8x16xf32>
      %1011 = vector.shape_cast %1010 : vector<1x1x8x16xf32> to vector<8x16xf32>
      %1012 = vector.shape_cast %1008 : vector<8x16xf32> to vector<1x1x8x16xf32>
      tpu.vector_store %arg3[%c0_409, %c25, %1009, %c0_410], %1012 {strides = array<i32>} : memref<1x62x16x16xf32, #tpu.memory_space<vmem>>, vector<1x1x8x16xf32>,
      %cst_411 = arith.constant -0.533111393 : f32
      %1013 = vector.broadcast %cst_411 : f32 to vector<8x16xf32>
      %1014 = arith.mulf %1013, %38 : vector<8x16xf32>
      %cst_412 = arith.constant 0.456753314 : f32
      %1015 = vector.broadcast %cst_412 : f32 to vector<8x16xf32>
      %1016 = arith.mulf %1015, %43 : vector<8x16xf32>
      %1017 = arith.addf %1014, %1016 : vector<8x16xf32>
      %cst_413 = arith.constant 0.821192324 : f32
      %1018 = vector.broadcast %cst_413 : f32 to vector<8x16xf32>
      %1019 = arith.mulf %1018, %48 : vector<8x16xf32>
      %1020 = arith.addf %1017, %1019 : vector<8x16xf32>
      %cst_414 = arith.constant -1.000000e+00 : f32
      %1021 = vector.broadcast %cst_414 : f32 to vector<8x16xf32>
      %1022 = arith.mulf %1021, %63 : vector<8x16xf32>
      %1023 = arith.addf %1020, %1022 : vector<8x16xf32>
      %cst_415 = arith.constant 0.275404364 : f32
      %1024 = vector.broadcast %cst_415 : f32 to vector<8x16xf32>
      %1025 = arith.mulf %1024, %68 : vector<8x16xf32>
      %1026 = arith.addf %1023, %1025 : vector<8x16xf32>
      %cst_416 = arith.constant 0.40346846 : f32
      %1027 = vector.broadcast %cst_416 : f32 to vector<8x16xf32>
      %1028 = arith.mulf %1027, %73 : vector<8x16xf32>
      %1029 = arith.addf %1026, %1028 : vector<8x16xf32>
      %cst_417 = arith.constant -0.268069088 : f32
      %1030 = vector.broadcast %cst_417 : f32 to vector<8x16xf32>
      %1031 = arith.mulf %1030, %88 : vector<8x16xf32>
      %1032 = arith.addf %1029, %1031 : vector<8x16xf32>
      %cst_418 = arith.constant -0.145361617 : f32
      %1033 = vector.broadcast %cst_418 : f32 to vector<8x16xf32>
      %1034 = arith.mulf %1033, %93 : vector<8x16xf32>
      %1035 = arith.addf %1032, %1034 : vector<8x16xf32>
      %cst_419 = arith.constant -0.0102763651 : f32
      %1036 = vector.broadcast %cst_419 : f32 to vector<8x16xf32>
      %1037 = arith.mulf %1036, %98 : vector<8x16xf32>
      %1038 = arith.addf %1035, %1037 : vector<8x16xf32>
      %cst_420 = arith.constant -5.000000e+00 : f32
      %cst_421 = arith.constant 5.000000e+00 : f32
      %1039 = vector.broadcast %cst_420 : f32 to vector<8x16xf32>
      %1040 = arith.maximumf %1039, %1038 : vector<8x16xf32>
      %1041 = vector.broadcast %cst_421 : f32 to vector<8x16xf32>
      %1042 = arith.minimumf %1041, %1040 : vector<8x16xf32>
      %c0_422 = arith.constant 0 : index
      %c26 = arith.constant 26 : index
      %1043 = arith.index_cast %3 : i32 to index
      %c0_423 = arith.constant 0 : index
      %1044 = vector.load %arg3[%c0_422, %c26, %1043, %c0_423] : memref<1x62x16x16xf32, #tpu.memory_space<vmem>>, vector<1x1x8x16xf32>
      %1045 = vector.shape_cast %1044 : vector<1x1x8x16xf32> to vector<8x16xf32>
      %1046 = vector.shape_cast %1042 : vector<8x16xf32> to vector<1x1x8x16xf32>
      tpu.vector_store %arg3[%c0_422, %c26, %1043, %c0_423], %1046 {strides = array<i32>} : memref<1x62x16x16xf32, #tpu.memory_space<vmem>>, vector<1x1x8x16xf32>,
      %cst_424 = arith.constant -0.0231060348 : f32
      %1047 = vector.broadcast %cst_424 : f32 to vector<8x16xf32>
      %1048 = arith.mulf %1047, %38 : vector<8x16xf32>
      %cst_425 = arith.constant -0.0310235638 : f32
      %1049 = vector.broadcast %cst_425 : f32 to vector<8x16xf32>
      %1050 = arith.mulf %1049, %43 : vector<8x16xf32>
      %1051 = arith.addf %1048, %1050 : vector<8x16xf32>
      %cst_426 = arith.constant -0.995477676 : f32
      %1052 = vector.broadcast %cst_426 : f32 to vector<8x16xf32>
      %1053 = arith.mulf %1052, %48 : vector<8x16xf32>
      %1054 = arith.addf %1051, %1053 : vector<8x16xf32>
      %cst_427 = arith.constant 1.000000e+00 : f32
      %1055 = vector.broadcast %cst_427 : f32 to vector<8x16xf32>
      %1056 = arith.mulf %1055, %63 : vector<8x16xf32>
      %1057 = arith.addf %1054, %1056 : vector<8x16xf32>
      %cst_428 = arith.constant 0.948698759 : f32
      %1058 = vector.broadcast %cst_428 : f32 to vector<8x16xf32>
      %1059 = arith.mulf %1058, %68 : vector<8x16xf32>
      %1060 = arith.addf %1057, %1059 : vector<8x16xf32>
      %cst_429 = arith.constant -0.38685894 : f32
      %1061 = vector.broadcast %cst_429 : f32 to vector<8x16xf32>
      %1062 = arith.mulf %1061, %73 : vector<8x16xf32>
      %1063 = arith.addf %1060, %1062 : vector<8x16xf32>
      %cst_430 = arith.constant -0.847612917 : f32
      %1064 = vector.broadcast %cst_430 : f32 to vector<8x16xf32>
      %1065 = arith.mulf %1064, %88 : vector<8x16xf32>
      %1066 = arith.addf %1063, %1065 : vector<8x16xf32>
      %cst_431 = arith.constant 0.554621935 : f32
      %1067 = vector.broadcast %cst_431 : f32 to vector<8x16xf32>
      %1068 = arith.mulf %1067, %93 : vector<8x16xf32>
      %1069 = arith.addf %1066, %1068 : vector<8x16xf32>
      %cst_432 = arith.constant -0.219241545 : f32
      %1070 = vector.broadcast %cst_432 : f32 to vector<8x16xf32>
      %1071 = arith.mulf %1070, %98 : vector<8x16xf32>
      %1072 = arith.addf %1069, %1071 : vector<8x16xf32>
      %cst_433 = arith.constant -5.000000e+00 : f32
      %cst_434 = arith.constant 5.000000e+00 : f32
      %1073 = vector.broadcast %cst_433 : f32 to vector<8x16xf32>
      %1074 = arith.maximumf %1073, %1072 : vector<8x16xf32>
      %1075 = vector.broadcast %cst_434 : f32 to vector<8x16xf32>
      %1076 = arith.minimumf %1075, %1074 : vector<8x16xf32>
      %c0_435 = arith.constant 0 : index
      %c27 = arith.constant 27 : index
      %1077 = arith.index_cast %3 : i32 to index
      %c0_436 = arith.constant 0 : index
      %1078 = vector.load %arg3[%c0_435, %c27, %1077, %c0_436] : memref<1x62x16x16xf32, #tpu.memory_space<vmem>>, vector<1x1x8x16xf32>
      %1079 = vector.shape_cast %1078 : vector<1x1x8x16xf32> to vector<8x16xf32>
      %1080 = vector.shape_cast %1076 : vector<8x16xf32> to vector<1x1x8x16xf32>
      tpu.vector_store %arg3[%c0_435, %c27, %1077, %c0_436], %1080 {strides = array<i32>} : memref<1x62x16x16xf32, #tpu.memory_space<vmem>>, vector<1x1x8x16xf32>,
      %cst_437 = arith.constant 0.387935072 : f32
      %1081 = vector.broadcast %cst_437 : f32 to vector<8x16xf32>
      %1082 = arith.mulf %1081, %38 : vector<8x16xf32>
      %cst_438 = arith.constant 0.016764557 : f32
      %1083 = vector.broadcast %cst_438 : f32 to vector<8x16xf32>
      %1084 = arith.mulf %1083, %43 : vector<8x16xf32>
      %1085 = arith.addf %1082, %1084 : vector<8x16xf32>
      %cst_439 = arith.constant 0.830159426 : f32
      %1086 = vector.broadcast %cst_439 : f32 to vector<8x16xf32>
      %1087 = arith.mulf %1086, %48 : vector<8x16xf32>
      %1088 = arith.addf %1085, %1087 : vector<8x16xf32>
      %cst_440 = arith.constant 0.832742691 : f32
      %1089 = vector.broadcast %cst_440 : f32 to vector<8x16xf32>
      %1090 = arith.mulf %1089, %63 : vector<8x16xf32>
      %1091 = arith.addf %1088, %1090 : vector<8x16xf32>
      %cst_441 = arith.constant -3.101400e-01 : f32
      %1092 = vector.broadcast %cst_441 : f32 to vector<8x16xf32>
      %1093 = arith.mulf %1092, %68 : vector<8x16xf32>
      %1094 = arith.addf %1091, %1093 : vector<8x16xf32>
      %cst_442 = arith.constant -0.839412271 : f32
      %1095 = vector.broadcast %cst_442 : f32 to vector<8x16xf32>
      %1096 = arith.mulf %1095, %73 : vector<8x16xf32>
      %1097 = arith.addf %1094, %1096 : vector<8x16xf32>
      %cst_443 = arith.constant -1.000000e+00 : f32
      %1098 = vector.broadcast %cst_443 : f32 to vector<8x16xf32>
      %1099 = arith.mulf %1098, %88 : vector<8x16xf32>
      %1100 = arith.addf %1097, %1099 : vector<8x16xf32>
      %cst_444 = arith.constant 0.76485449 : f32
      %1101 = vector.broadcast %cst_444 : f32 to vector<8x16xf32>
      %1102 = arith.mulf %1101, %93 : vector<8x16xf32>
      %1103 = arith.addf %1100, %1102 : vector<8x16xf32>
      %cst_445 = arith.constant -0.682903945 : f32
      %1104 = vector.broadcast %cst_445 : f32 to vector<8x16xf32>
      %1105 = arith.mulf %1104, %98 : vector<8x16xf32>
      %1106 = arith.addf %1103, %1105 : vector<8x16xf32>
      %cst_446 = arith.constant -5.000000e+00 : f32
      %cst_447 = arith.constant 5.000000e+00 : f32
      %1107 = vector.broadcast %cst_446 : f32 to vector<8x16xf32>
      %1108 = arith.maximumf %1107, %1106 : vector<8x16xf32>
      %1109 = vector.broadcast %cst_447 : f32 to vector<8x16xf32>
      %1110 = arith.minimumf %1109, %1108 : vector<8x16xf32>
      %c0_448 = arith.constant 0 : index
      %c28 = arith.constant 28 : index
      %1111 = arith.index_cast %3 : i32 to index
      %c0_449 = arith.constant 0 : index
      %1112 = vector.load %arg3[%c0_448, %c28, %1111, %c0_449] : memref<1x62x16x16xf32, #tpu.memory_space<vmem>>, vector<1x1x8x16xf32>
      %1113 = vector.shape_cast %1112 : vector<1x1x8x16xf32> to vector<8x16xf32>
      %1114 = vector.shape_cast %1110 : vector<8x16xf32> to vector<1x1x8x16xf32>
      tpu.vector_store %arg3[%c0_448, %c28, %1111, %c0_449], %1114 {strides = array<i32>} : memref<1x62x16x16xf32, #tpu.memory_space<vmem>>, vector<1x1x8x16xf32>,
      %cst_450 = arith.constant -0.137847155 : f32
      %1115 = vector.broadcast %cst_450 : f32 to vector<8x16xf32>
      %1116 = arith.mulf %1115, %38 : vector<8x16xf32>
      %cst_451 = arith.constant -0.191825926 : f32
      %1117 = vector.broadcast %cst_451 : f32 to vector<8x16xf32>
      %1118 = arith.mulf %1117, %43 : vector<8x16xf32>
      %1119 = arith.addf %1116, %1118 : vector<8x16xf32>
      %cst_452 = arith.constant 0.136124253 : f32
      %1120 = vector.broadcast %cst_452 : f32 to vector<8x16xf32>
      %1121 = arith.mulf %1120, %48 : vector<8x16xf32>
      %1122 = arith.addf %1119, %1121 : vector<8x16xf32>
      %cst_453 = arith.constant -1.000000e+00 : f32
      %1123 = vector.broadcast %cst_453 : f32 to vector<8x16xf32>
      %1124 = arith.mulf %1123, %63 : vector<8x16xf32>
      %1125 = arith.addf %1122, %1124 : vector<8x16xf32>
      %cst_454 = arith.constant 0.281687289 : f32
      %1126 = vector.broadcast %cst_454 : f32 to vector<8x16xf32>
      %1127 = arith.mulf %1126, %68 : vector<8x16xf32>
      %1128 = arith.addf %1125, %1127 : vector<8x16xf32>
      %cst_455 = arith.constant 0.483803779 : f32
      %1129 = vector.broadcast %cst_455 : f32 to vector<8x16xf32>
      %1130 = arith.mulf %1129, %73 : vector<8x16xf32>
      %1131 = arith.addf %1128, %1130 : vector<8x16xf32>
      %cst_456 = arith.constant 0.221159235 : f32
      %1132 = vector.broadcast %cst_456 : f32 to vector<8x16xf32>
      %1133 = arith.mulf %1132, %88 : vector<8x16xf32>
      %1134 = arith.addf %1131, %1133 : vector<8x16xf32>
      %cst_457 = arith.constant -0.0196757056 : f32
      %1135 = vector.broadcast %cst_457 : f32 to vector<8x16xf32>
      %1136 = arith.mulf %1135, %93 : vector<8x16xf32>
      %1137 = arith.addf %1134, %1136 : vector<8x16xf32>
      %cst_458 = arith.constant 0.226574197 : f32
      %1138 = vector.broadcast %cst_458 : f32 to vector<8x16xf32>
      %1139 = arith.mulf %1138, %98 : vector<8x16xf32>
      %1140 = arith.addf %1137, %1139 : vector<8x16xf32>
      %cst_459 = arith.constant -5.000000e+00 : f32
      %cst_460 = arith.constant 5.000000e+00 : f32
      %1141 = vector.broadcast %cst_459 : f32 to vector<8x16xf32>
      %1142 = arith.maximumf %1141, %1140 : vector<8x16xf32>
      %1143 = vector.broadcast %cst_460 : f32 to vector<8x16xf32>
      %1144 = arith.minimumf %1143, %1142 : vector<8x16xf32>
      %c0_461 = arith.constant 0 : index
      %c29 = arith.constant 29 : index
      %1145 = arith.index_cast %3 : i32 to index
      %c0_462 = arith.constant 0 : index
      %1146 = vector.load %arg3[%c0_461, %c29, %1145, %c0_462] : memref<1x62x16x16xf32, #tpu.memory_space<vmem>>, vector<1x1x8x16xf32>
      %1147 = vector.shape_cast %1146 : vector<1x1x8x16xf32> to vector<8x16xf32>
      %1148 = vector.shape_cast %1144 : vector<8x16xf32> to vector<1x1x8x16xf32>
      tpu.vector_store %arg3[%c0_461, %c29, %1145, %c0_462], %1148 {strides = array<i32>} : memref<1x62x16x16xf32, #tpu.memory_space<vmem>>, vector<1x1x8x16xf32>,
      %cst_463 = arith.constant 2.85068518E-6 : f32
      %1149 = vector.broadcast %cst_463 : f32 to vector<8x16xf32>
      %1150 = arith.mulf %1149, %8 : vector<8x16xf32>
      %cst_464 = arith.constant 0.0133515261 : f32
      %1151 = vector.broadcast %cst_464 : f32 to vector<8x16xf32>
      %1152 = arith.mulf %1151, %13 : vector<8x16xf32>
      %1153 = arith.addf %1150, %1152 : vector<8x16xf32>
      %cst_465 = arith.constant 0.135335281 : f32
      %1154 = vector.broadcast %cst_465 : f32 to vector<8x16xf32>
      %1155 = arith.mulf %1154, %18 : vector<8x16xf32>
      %1156 = arith.addf %1153, %1155 : vector<8x16xf32>
      %cst_466 = arith.constant 0.0133515261 : f32
      %1157 = vector.broadcast %cst_466 : f32 to vector<8x16xf32>
      %1158 = arith.mulf %1157, %23 : vector<8x16xf32>
      %1159 = arith.addf %1156, %1158 : vector<8x16xf32>
      %cst_467 = arith.constant 2.85068518E-6 : f32
      %1160 = vector.broadcast %cst_467 : f32 to vector<8x16xf32>
      %1161 = arith.mulf %1160, %28 : vector<8x16xf32>
      %1162 = arith.addf %1159, %1161 : vector<8x16xf32>
      %cst_468 = arith.constant 1.27758849E-5 : f32
      %1163 = vector.broadcast %cst_468 : f32 to vector<8x16xf32>
      %1164 = arith.mulf %1163, %33 : vector<8x16xf32>
      %1165 = arith.addf %1162, %1164 : vector<8x16xf32>
      %cst_469 = arith.constant 0.0598373897 : f32
      %1166 = vector.broadcast %cst_469 : f32 to vector<8x16xf32>
      %1167 = arith.mulf %1166, %38 : vector<8x16xf32>
      %1168 = arith.addf %1165, %1167 : vector<8x16xf32>
      %cst_470 = arith.constant 0.606530666 : f32
      %1169 = vector.broadcast %cst_470 : f32 to vector<8x16xf32>
      %1170 = arith.mulf %1169, %43 : vector<8x16xf32>
      %1171 = arith.addf %1168, %1170 : vector<8x16xf32>
      %cst_471 = arith.constant 0.0598373897 : f32
      %1172 = vector.broadcast %cst_471 : f32 to vector<8x16xf32>
      %1173 = arith.mulf %1172, %48 : vector<8x16xf32>
      %1174 = arith.addf %1171, %1173 : vector<8x16xf32>
      %cst_472 = arith.constant 1.27758849E-5 : f32
      %1175 = vector.broadcast %cst_472 : f32 to vector<8x16xf32>
      %1176 = arith.mulf %1175, %53 : vector<8x16xf32>
      %1177 = arith.addf %1174, %1176 : vector<8x16xf32>
      %cst_473 = arith.constant 2.10638718E-5 : f32
      %1178 = vector.broadcast %cst_473 : f32 to vector<8x16xf32>
      %1179 = arith.mulf %1178, %58 : vector<8x16xf32>
      %1180 = arith.addf %1177, %1179 : vector<8x16xf32>
      %cst_474 = arith.constant 0.0986551791 : f32
      %1181 = vector.broadcast %cst_474 : f32 to vector<8x16xf32>
      %1182 = arith.mulf %1181, %63 : vector<8x16xf32>
      %1183 = arith.addf %1180, %1182 : vector<8x16xf32>
      %cst_475 = arith.constant 1.000000e+00 : f32
      %1184 = vector.broadcast %cst_475 : f32 to vector<8x16xf32>
      %1185 = arith.mulf %1184, %68 : vector<8x16xf32>
      %1186 = arith.addf %1183, %1185 : vector<8x16xf32>
      %cst_476 = arith.constant 0.0986551791 : f32
      %1187 = vector.broadcast %cst_476 : f32 to vector<8x16xf32>
      %1188 = arith.mulf %1187, %73 : vector<8x16xf32>
      %1189 = arith.addf %1186, %1188 : vector<8x16xf32>
      %cst_477 = arith.constant 2.10638718E-5 : f32
      %1190 = vector.broadcast %cst_477 : f32 to vector<8x16xf32>
      %1191 = arith.mulf %1190, %78 : vector<8x16xf32>
      %1192 = arith.addf %1189, %1191 : vector<8x16xf32>
      %cst_478 = arith.constant 1.27758849E-5 : f32
      %1193 = vector.broadcast %cst_478 : f32 to vector<8x16xf32>
      %1194 = arith.mulf %1193, %83 : vector<8x16xf32>
      %1195 = arith.addf %1192, %1194 : vector<8x16xf32>
      %cst_479 = arith.constant 0.0598373897 : f32
      %1196 = vector.broadcast %cst_479 : f32 to vector<8x16xf32>
      %1197 = arith.mulf %1196, %88 : vector<8x16xf32>
      %1198 = arith.addf %1195, %1197 : vector<8x16xf32>
      %cst_480 = arith.constant 0.606530666 : f32
      %1199 = vector.broadcast %cst_480 : f32 to vector<8x16xf32>
      %1200 = arith.mulf %1199, %93 : vector<8x16xf32>
      %1201 = arith.addf %1198, %1200 : vector<8x16xf32>
      %cst_481 = arith.constant 0.0598373897 : f32
      %1202 = vector.broadcast %cst_481 : f32 to vector<8x16xf32>
      %1203 = arith.mulf %1202, %98 : vector<8x16xf32>
      %1204 = arith.addf %1201, %1203 : vector<8x16xf32>
      %cst_482 = arith.constant 1.27758849E-5 : f32
      %1205 = vector.broadcast %cst_482 : f32 to vector<8x16xf32>
      %1206 = arith.mulf %1205, %103 : vector<8x16xf32>
      %1207 = arith.addf %1204, %1206 : vector<8x16xf32>
      %cst_483 = arith.constant 2.85068518E-6 : f32
      %1208 = vector.broadcast %cst_483 : f32 to vector<8x16xf32>
      %1209 = arith.mulf %1208, %108 : vector<8x16xf32>
      %1210 = arith.addf %1207, %1209 : vector<8x16xf32>
      %cst_484 = arith.constant 0.0133515261 : f32
      %1211 = vector.broadcast %cst_484 : f32 to vector<8x16xf32>
      %1212 = arith.mulf %1211, %113 : vector<8x16xf32>
      %1213 = arith.addf %1210, %1212 : vector<8x16xf32>
      %cst_485 = arith.constant 0.135335281 : f32
      %1214 = vector.broadcast %cst_485 : f32 to vector<8x16xf32>
      %1215 = arith.mulf %1214, %118 : vector<8x16xf32>
      %1216 = arith.addf %1213, %1215 : vector<8x16xf32>
      %cst_486 = arith.constant 0.0133515261 : f32
      %1217 = vector.broadcast %cst_486 : f32 to vector<8x16xf32>
      %1218 = arith.mulf %1217, %123 : vector<8x16xf32>
      %1219 = arith.addf %1216, %1218 : vector<8x16xf32>
      %cst_487 = arith.constant 2.85068518E-6 : f32
      %1220 = vector.broadcast %cst_487 : f32 to vector<8x16xf32>
      %1221 = arith.mulf %1220, %128 : vector<8x16xf32>
      %1222 = arith.addf %1219, %1221 : vector<8x16xf32>
      %cst_488 = arith.constant -5.000000e+00 : f32
      %cst_489 = arith.constant 5.000000e+00 : f32
      %1223 = vector.broadcast %cst_488 : f32 to vector<8x16xf32>
      %1224 = arith.maximumf %1223, %1222 : vector<8x16xf32>
      %1225 = vector.broadcast %cst_489 : f32 to vector<8x16xf32>
      %1226 = arith.minimumf %1225, %1224 : vector<8x16xf32>
      %c0_490 = arith.constant 0 : index
      %c30 = arith.constant 30 : index
      %1227 = arith.index_cast %3 : i32 to index
      %c0_491 = arith.constant 0 : index
      %1228 = vector.load %arg3[%c0_490, %c30, %1227, %c0_491] : memref<1x62x16x16xf32, #tpu.memory_space<vmem>>, vector<1x1x8x16xf32>
      %1229 = vector.shape_cast %1228 : vector<1x1x8x16xf32> to vector<8x16xf32>
      %1230 = vector.shape_cast %1226 : vector<8x16xf32> to vector<1x1x8x16xf32>
      tpu.vector_store %arg3[%c0_490, %c30, %1227, %c0_491], %1230 {strides = array<i32>} : memref<1x62x16x16xf32, #tpu.memory_space<vmem>>, vector<1x1x8x16xf32>,
      %cst_492 = arith.constant 4.53103421E-5 : f32
      %1231 = vector.broadcast %cst_492 : f32 to vector<8x16xf32>
      %1232 = arith.mulf %1231, %8 : vector<8x16xf32>
      %cst_493 = arith.constant 0.0125379181 : f32
      %1233 = vector.broadcast %cst_493 : f32 to vector<8x16xf32>
      %1234 = arith.mulf %1233, %13 : vector<8x16xf32>
      %1235 = arith.addf %1232, %1234 : vector<8x16xf32>
      %cst_494 = arith.constant 8.28689638E-18 : f32
      %1236 = vector.broadcast %cst_494 : f32 to vector<8x16xf32>
      %1237 = arith.mulf %1236, %18 : vector<8x16xf32>
      %1238 = arith.addf %1235, %1237 : vector<8x16xf32>
      %cst_495 = arith.constant -0.0125379181 : f32
      %1239 = vector.broadcast %cst_495 : f32 to vector<8x16xf32>
      %1240 = arith.mulf %1239, %23 : vector<8x16xf32>
      %1241 = arith.addf %1238, %1240 : vector<8x16xf32>
      %cst_496 = arith.constant -4.53103421E-5 : f32
      %1242 = vector.broadcast %cst_496 : f32 to vector<8x16xf32>
      %1243 = arith.mulf %1242, %28 : vector<8x16xf32>
      %1244 = arith.addf %1241, %1243 : vector<8x16xf32>
      %cst_497 = arith.constant 2.03066869E-4 : f32
      %1245 = vector.broadcast %cst_497 : f32 to vector<8x16xf32>
      %1246 = arith.mulf %1245, %33 : vector<8x16xf32>
      %1247 = arith.addf %1244, %1246 : vector<8x16xf32>
      %cst_498 = arith.constant 0.0561910495 : f32
      %1248 = vector.broadcast %cst_498 : f32 to vector<8x16xf32>
      %1249 = arith.mulf %1248, %38 : vector<8x16xf32>
      %1250 = arith.addf %1247, %1249 : vector<8x16xf32>
      %cst_499 = arith.constant 3.71392912E-17 : f32
      %1251 = vector.broadcast %cst_499 : f32 to vector<8x16xf32>
      %1252 = arith.mulf %1251, %43 : vector<8x16xf32>
      %1253 = arith.addf %1250, %1252 : vector<8x16xf32>
      %cst_500 = arith.constant -0.0561910495 : f32
      %1254 = vector.broadcast %cst_500 : f32 to vector<8x16xf32>
      %1255 = arith.mulf %1254, %48 : vector<8x16xf32>
      %1256 = arith.addf %1253, %1255 : vector<8x16xf32>
      %cst_501 = arith.constant -2.03066869E-4 : f32
      %1257 = vector.broadcast %cst_501 : f32 to vector<8x16xf32>
      %1258 = arith.mulf %1257, %53 : vector<8x16xf32>
      %1259 = arith.addf %1256, %1258 : vector<8x16xf32>
      %cst_502 = arith.constant 3.34800658E-4 : f32
      %1260 = vector.broadcast %cst_502 : f32 to vector<8x16xf32>
      %1261 = arith.mulf %1260, %58 : vector<8x16xf32>
      %1262 = arith.addf %1259, %1261 : vector<8x16xf32>
      %cst_503 = arith.constant 0.0926433802 : f32
      %1263 = vector.broadcast %cst_503 : f32 to vector<8x16xf32>
      %1264 = arith.mulf %1263, %63 : vector<8x16xf32>
      %1265 = arith.addf %1262, %1264 : vector<8x16xf32>
      %cst_504 = arith.constant 6.12323426E-17 : f32
      %1266 = vector.broadcast %cst_504 : f32 to vector<8x16xf32>
      %1267 = arith.mulf %1266, %68 : vector<8x16xf32>
      %1268 = arith.addf %1265, %1267 : vector<8x16xf32>
      %cst_505 = arith.constant -0.0926433802 : f32
      %1269 = vector.broadcast %cst_505 : f32 to vector<8x16xf32>
      %1270 = arith.mulf %1269, %73 : vector<8x16xf32>
      %1271 = arith.addf %1268, %1270 : vector<8x16xf32>
      %cst_506 = arith.constant -3.34800658E-4 : f32
      %1272 = vector.broadcast %cst_506 : f32 to vector<8x16xf32>
      %1273 = arith.mulf %1272, %78 : vector<8x16xf32>
      %1274 = arith.addf %1271, %1273 : vector<8x16xf32>
      %cst_507 = arith.constant 2.03066869E-4 : f32
      %1275 = vector.broadcast %cst_507 : f32 to vector<8x16xf32>
      %1276 = arith.mulf %1275, %83 : vector<8x16xf32>
      %1277 = arith.addf %1274, %1276 : vector<8x16xf32>
      %cst_508 = arith.constant 0.0561910495 : f32
      %1278 = vector.broadcast %cst_508 : f32 to vector<8x16xf32>
      %1279 = arith.mulf %1278, %88 : vector<8x16xf32>
      %1280 = arith.addf %1277, %1279 : vector<8x16xf32>
      %cst_509 = arith.constant 3.71392912E-17 : f32
      %1281 = vector.broadcast %cst_509 : f32 to vector<8x16xf32>
      %1282 = arith.mulf %1281, %93 : vector<8x16xf32>
      %1283 = arith.addf %1280, %1282 : vector<8x16xf32>
      %cst_510 = arith.constant -0.0561910495 : f32
      %1284 = vector.broadcast %cst_510 : f32 to vector<8x16xf32>
      %1285 = arith.mulf %1284, %98 : vector<8x16xf32>
      %1286 = arith.addf %1283, %1285 : vector<8x16xf32>
      %cst_511 = arith.constant -2.03066869E-4 : f32
      %1287 = vector.broadcast %cst_511 : f32 to vector<8x16xf32>
      %1288 = arith.mulf %1287, %103 : vector<8x16xf32>
      %1289 = arith.addf %1286, %1288 : vector<8x16xf32>
      %cst_512 = arith.constant 4.53103421E-5 : f32
      %1290 = vector.broadcast %cst_512 : f32 to vector<8x16xf32>
      %1291 = arith.mulf %1290, %108 : vector<8x16xf32>
      %1292 = arith.addf %1289, %1291 : vector<8x16xf32>
      %cst_513 = arith.constant 0.0125379181 : f32
      %1293 = vector.broadcast %cst_513 : f32 to vector<8x16xf32>
      %1294 = arith.mulf %1293, %113 : vector<8x16xf32>
      %1295 = arith.addf %1292, %1294 : vector<8x16xf32>
      %cst_514 = arith.constant 8.28689638E-18 : f32
      %1296 = vector.broadcast %cst_514 : f32 to vector<8x16xf32>
      %1297 = arith.mulf %1296, %118 : vector<8x16xf32>
      %1298 = arith.addf %1295, %1297 : vector<8x16xf32>
      %cst_515 = arith.constant -0.0125379181 : f32
      %1299 = vector.broadcast %cst_515 : f32 to vector<8x16xf32>
      %1300 = arith.mulf %1299, %123 : vector<8x16xf32>
      %1301 = arith.addf %1298, %1300 : vector<8x16xf32>
      %cst_516 = arith.constant -4.53103421E-5 : f32
      %1302 = vector.broadcast %cst_516 : f32 to vector<8x16xf32>
      %1303 = arith.mulf %1302, %128 : vector<8x16xf32>
      %1304 = arith.addf %1301, %1303 : vector<8x16xf32>
      %cst_517 = arith.constant -5.000000e+00 : f32
      %cst_518 = arith.constant 5.000000e+00 : f32
      %1305 = vector.broadcast %cst_517 : f32 to vector<8x16xf32>
      %1306 = arith.maximumf %1305, %1304 : vector<8x16xf32>
      %1307 = vector.broadcast %cst_518 : f32 to vector<8x16xf32>
      %1308 = arith.minimumf %1307, %1306 : vector<8x16xf32>
      %c0_519 = arith.constant 0 : index
      %c31 = arith.constant 31 : index
      %1309 = arith.index_cast %3 : i32 to index
      %c0_520 = arith.constant 0 : index
      %1310 = vector.load %arg3[%c0_519, %c31, %1309, %c0_520] : memref<1x62x16x16xf32, #tpu.memory_space<vmem>>, vector<1x1x8x16xf32>
      %1311 = vector.shape_cast %1310 : vector<1x1x8x16xf32> to vector<8x16xf32>
      %1312 = vector.shape_cast %1308 : vector<8x16xf32> to vector<1x1x8x16xf32>
      tpu.vector_store %arg3[%c0_519, %c31, %1309, %c0_520], %1312 {strides = array<i32>} : memref<1x62x16x16xf32, #tpu.memory_space<vmem>>, vector<1x1x8x16xf32>,
      %cst_521 = arith.constant 0.0598373897 : f32
      %1313 = vector.broadcast %cst_521 : f32 to vector<8x16xf32>
      %1314 = arith.mulf %1313, %8 : vector<8x16xf32>
      %cst_522 = arith.constant -0.342045665 : f32
      %1315 = vector.broadcast %cst_522 : f32 to vector<8x16xf32>
      %1316 = arith.mulf %1315, %13 : vector<8x16xf32>
      %1317 = arith.addf %1314, %1316 : vector<8x16xf32>
      %cst_523 = arith.constant 0.606530666 : f32
      %1318 = vector.broadcast %cst_523 : f32 to vector<8x16xf32>
      %1319 = arith.mulf %1318, %18 : vector<8x16xf32>
      %1320 = arith.addf %1317, %1319 : vector<8x16xf32>
      %cst_524 = arith.constant -0.342045665 : f32
      %1321 = vector.broadcast %cst_524 : f32 to vector<8x16xf32>
      %1322 = arith.mulf %1321, %23 : vector<8x16xf32>
      %1323 = arith.addf %1320, %1322 : vector<8x16xf32>
      %cst_525 = arith.constant 0.0598373897 : f32
      %1324 = vector.broadcast %cst_525 : f32 to vector<8x16xf32>
      %1325 = arith.mulf %1324, %28 : vector<8x16xf32>
      %1326 = arith.addf %1323, %1325 : vector<8x16xf32>
      %cst_526 = arith.constant 0.0870628878 : f32
      %1327 = vector.broadcast %cst_526 : f32 to vector<8x16xf32>
      %1328 = arith.mulf %1327, %33 : vector<8x16xf32>
      %1329 = arith.addf %1326, %1328 : vector<8x16xf32>
      %cst_527 = arith.constant -0.497673482 : f32
      %1330 = vector.broadcast %cst_527 : f32 to vector<8x16xf32>
      %1331 = arith.mulf %1330, %38 : vector<8x16xf32>
      %1332 = arith.addf %1329, %1331 : vector<8x16xf32>
      %cst_528 = arith.constant 0.882496893 : f32
      %1333 = vector.broadcast %cst_528 : f32 to vector<8x16xf32>
      %1334 = arith.mulf %1333, %43 : vector<8x16xf32>
      %1335 = arith.addf %1332, %1334 : vector<8x16xf32>
      %cst_529 = arith.constant -0.497673482 : f32
      %1336 = vector.broadcast %cst_529 : f32 to vector<8x16xf32>
      %1337 = arith.mulf %1336, %48 : vector<8x16xf32>
      %1338 = arith.addf %1335, %1337 : vector<8x16xf32>
      %cst_530 = arith.constant 0.0870628878 : f32
      %1339 = vector.broadcast %cst_530 : f32 to vector<8x16xf32>
      %1340 = arith.mulf %1339, %53 : vector<8x16xf32>
      %1341 = arith.addf %1338, %1340 : vector<8x16xf32>
      %cst_531 = arith.constant 0.0986551791 : f32
      %1342 = vector.broadcast %cst_531 : f32 to vector<8x16xf32>
      %1343 = arith.mulf %1342, %58 : vector<8x16xf32>
      %1344 = arith.addf %1341, %1343 : vector<8x16xf32>
      %cst_532 = arith.constant -0.563937962 : f32
      %1345 = vector.broadcast %cst_532 : f32 to vector<8x16xf32>
      %1346 = arith.mulf %1345, %63 : vector<8x16xf32>
      %1347 = arith.addf %1344, %1346 : vector<8x16xf32>
      %cst_533 = arith.constant 1.000000e+00 : f32
      %1348 = vector.broadcast %cst_533 : f32 to vector<8x16xf32>
      %1349 = arith.mulf %1348, %68 : vector<8x16xf32>
      %1350 = arith.addf %1347, %1349 : vector<8x16xf32>
      %cst_534 = arith.constant -0.563937962 : f32
      %1351 = vector.broadcast %cst_534 : f32 to vector<8x16xf32>
      %1352 = arith.mulf %1351, %73 : vector<8x16xf32>
      %1353 = arith.addf %1350, %1352 : vector<8x16xf32>
      %cst_535 = arith.constant 0.0986551791 : f32
      %1354 = vector.broadcast %cst_535 : f32 to vector<8x16xf32>
      %1355 = arith.mulf %1354, %78 : vector<8x16xf32>
      %1356 = arith.addf %1353, %1355 : vector<8x16xf32>
      %cst_536 = arith.constant 0.0870628878 : f32
      %1357 = vector.broadcast %cst_536 : f32 to vector<8x16xf32>
      %1358 = arith.mulf %1357, %83 : vector<8x16xf32>
      %1359 = arith.addf %1356, %1358 : vector<8x16xf32>
      %cst_537 = arith.constant -0.497673482 : f32
      %1360 = vector.broadcast %cst_537 : f32 to vector<8x16xf32>
      %1361 = arith.mulf %1360, %88 : vector<8x16xf32>
      %1362 = arith.addf %1359, %1361 : vector<8x16xf32>
      %cst_538 = arith.constant 0.882496893 : f32
      %1363 = vector.broadcast %cst_538 : f32 to vector<8x16xf32>
      %1364 = arith.mulf %1363, %93 : vector<8x16xf32>
      %1365 = arith.addf %1362, %1364 : vector<8x16xf32>
      %cst_539 = arith.constant -0.497673482 : f32
      %1366 = vector.broadcast %cst_539 : f32 to vector<8x16xf32>
      %1367 = arith.mulf %1366, %98 : vector<8x16xf32>
      %1368 = arith.addf %1365, %1367 : vector<8x16xf32>
      %cst_540 = arith.constant 0.0870628878 : f32
      %1369 = vector.broadcast %cst_540 : f32 to vector<8x16xf32>
      %1370 = arith.mulf %1369, %103 : vector<8x16xf32>
      %1371 = arith.addf %1368, %1370 : vector<8x16xf32>
      %cst_541 = arith.constant 0.0598373897 : f32
      %1372 = vector.broadcast %cst_541 : f32 to vector<8x16xf32>
      %1373 = arith.mulf %1372, %108 : vector<8x16xf32>
      %1374 = arith.addf %1371, %1373 : vector<8x16xf32>
      %cst_542 = arith.constant -0.342045665 : f32
      %1375 = vector.broadcast %cst_542 : f32 to vector<8x16xf32>
      %1376 = arith.mulf %1375, %113 : vector<8x16xf32>
      %1377 = arith.addf %1374, %1376 : vector<8x16xf32>
      %cst_543 = arith.constant 0.606530666 : f32
      %1378 = vector.broadcast %cst_543 : f32 to vector<8x16xf32>
      %1379 = arith.mulf %1378, %118 : vector<8x16xf32>
      %1380 = arith.addf %1377, %1379 : vector<8x16xf32>
      %cst_544 = arith.constant -0.342045665 : f32
      %1381 = vector.broadcast %cst_544 : f32 to vector<8x16xf32>
      %1382 = arith.mulf %1381, %123 : vector<8x16xf32>
      %1383 = arith.addf %1380, %1382 : vector<8x16xf32>
      %cst_545 = arith.constant 0.0598373897 : f32
      %1384 = vector.broadcast %cst_545 : f32 to vector<8x16xf32>
      %1385 = arith.mulf %1384, %128 : vector<8x16xf32>
      %1386 = arith.addf %1383, %1385 : vector<8x16xf32>
      %cst_546 = arith.constant -5.000000e+00 : f32
      %cst_547 = arith.constant 5.000000e+00 : f32
      %1387 = vector.broadcast %cst_546 : f32 to vector<8x16xf32>
      %1388 = arith.maximumf %1387, %1386 : vector<8x16xf32>
      %1389 = vector.broadcast %cst_547 : f32 to vector<8x16xf32>
      %1390 = arith.minimumf %1389, %1388 : vector<8x16xf32>
      %c0_548 = arith.constant 0 : index
      %c32 = arith.constant 32 : index
      %1391 = arith.index_cast %3 : i32 to index
      %c0_549 = arith.constant 0 : index
      %1392 = vector.load %arg3[%c0_548, %c32, %1391, %c0_549] : memref<1x62x16x16xf32, #tpu.memory_space<vmem>>, vector<1x1x8x16xf32>
      %1393 = vector.shape_cast %1392 : vector<1x1x8x16xf32> to vector<8x16xf32>
      %1394 = vector.shape_cast %1390 : vector<8x16xf32> to vector<1x1x8x16xf32>
      tpu.vector_store %arg3[%c0_548, %c32, %1391, %c0_549], %1394 {strides = array<i32>} : memref<1x62x16x16xf32, #tpu.memory_space<vmem>>, vector<1x1x8x16xf32>,
      %cst_550 = arith.constant 0.0561910495 : f32
      %1395 = vector.broadcast %cst_550 : f32 to vector<8x16xf32>
      %1396 = arith.mulf %1395, %8 : vector<8x16xf32>
      %cst_551 = arith.constant -0.135425448 : f32
      %1397 = vector.broadcast %cst_551 : f32 to vector<8x16xf32>
      %1398 = arith.mulf %1397, %13 : vector<8x16xf32>
      %1399 = arith.addf %1396, %1398 : vector<8x16xf32>
      %cst_552 = arith.constant 3.71392912E-17 : f32
      %1400 = vector.broadcast %cst_552 : f32 to vector<8x16xf32>
      %1401 = arith.mulf %1400, %18 : vector<8x16xf32>
      %1402 = arith.addf %1399, %1401 : vector<8x16xf32>
      %cst_553 = arith.constant 0.135425448 : f32
      %1403 = vector.broadcast %cst_553 : f32 to vector<8x16xf32>
      %1404 = arith.mulf %1403, %23 : vector<8x16xf32>
      %1405 = arith.addf %1402, %1404 : vector<8x16xf32>
      %cst_554 = arith.constant -0.0561910495 : f32
      %1406 = vector.broadcast %cst_554 : f32 to vector<8x16xf32>
      %1407 = arith.mulf %1406, %28 : vector<8x16xf32>
      %1408 = arith.addf %1405, %1407 : vector<8x16xf32>
      %cst_555 = arith.constant 0.0817574933 : f32
      %1409 = vector.broadcast %cst_555 : f32 to vector<8x16xf32>
      %1410 = arith.mulf %1409, %33 : vector<8x16xf32>
      %1411 = arith.addf %1408, %1410 : vector<8x16xf32>
      %cst_556 = arith.constant -0.197042868 : f32
      %1412 = vector.broadcast %cst_556 : f32 to vector<8x16xf32>
      %1413 = arith.mulf %1412, %38 : vector<8x16xf32>
      %1414 = arith.addf %1411, %1413 : vector<8x16xf32>
      %cst_557 = arith.constant 5.40373503E-17 : f32
      %1415 = vector.broadcast %cst_557 : f32 to vector<8x16xf32>
      %1416 = arith.mulf %1415, %43 : vector<8x16xf32>
      %1417 = arith.addf %1414, %1416 : vector<8x16xf32>
      %cst_558 = arith.constant 0.197042868 : f32
      %1418 = vector.broadcast %cst_558 : f32 to vector<8x16xf32>
      %1419 = arith.mulf %1418, %48 : vector<8x16xf32>
      %1420 = arith.addf %1417, %1419 : vector<8x16xf32>
      %cst_559 = arith.constant -0.0817574933 : f32
      %1421 = vector.broadcast %cst_559 : f32 to vector<8x16xf32>
      %1422 = arith.mulf %1421, %53 : vector<8x16xf32>
      %1423 = arith.addf %1420, %1422 : vector<8x16xf32>
      %cst_560 = arith.constant 0.0926433802 : f32
      %1424 = vector.broadcast %cst_560 : f32 to vector<8x16xf32>
      %1425 = arith.mulf %1424, %58 : vector<8x16xf32>
      %1426 = arith.addf %1423, %1425 : vector<8x16xf32>
      %cst_561 = arith.constant -0.223278821 : f32
      %1427 = vector.broadcast %cst_561 : f32 to vector<8x16xf32>
      %1428 = arith.mulf %1427, %63 : vector<8x16xf32>
      %1429 = arith.addf %1426, %1428 : vector<8x16xf32>
      %cst_562 = arith.constant 6.12323426E-17 : f32
      %1430 = vector.broadcast %cst_562 : f32 to vector<8x16xf32>
      %1431 = arith.mulf %1430, %68 : vector<8x16xf32>
      %1432 = arith.addf %1429, %1431 : vector<8x16xf32>
      %cst_563 = arith.constant 0.223278821 : f32
      %1433 = vector.broadcast %cst_563 : f32 to vector<8x16xf32>
      %1434 = arith.mulf %1433, %73 : vector<8x16xf32>
      %1435 = arith.addf %1432, %1434 : vector<8x16xf32>
      %cst_564 = arith.constant -0.0926433802 : f32
      %1436 = vector.broadcast %cst_564 : f32 to vector<8x16xf32>
      %1437 = arith.mulf %1436, %78 : vector<8x16xf32>
      %1438 = arith.addf %1435, %1437 : vector<8x16xf32>
      %cst_565 = arith.constant 0.0817574933 : f32
      %1439 = vector.broadcast %cst_565 : f32 to vector<8x16xf32>
      %1440 = arith.mulf %1439, %83 : vector<8x16xf32>
      %1441 = arith.addf %1438, %1440 : vector<8x16xf32>
      %cst_566 = arith.constant -0.197042868 : f32
      %1442 = vector.broadcast %cst_566 : f32 to vector<8x16xf32>
      %1443 = arith.mulf %1442, %88 : vector<8x16xf32>
      %1444 = arith.addf %1441, %1443 : vector<8x16xf32>
      %cst_567 = arith.constant 5.40373503E-17 : f32
      %1445 = vector.broadcast %cst_567 : f32 to vector<8x16xf32>
      %1446 = arith.mulf %1445, %93 : vector<8x16xf32>
      %1447 = arith.addf %1444, %1446 : vector<8x16xf32>
      %cst_568 = arith.constant 0.197042868 : f32
      %1448 = vector.broadcast %cst_568 : f32 to vector<8x16xf32>
      %1449 = arith.mulf %1448, %98 : vector<8x16xf32>
      %1450 = arith.addf %1447, %1449 : vector<8x16xf32>
      %cst_569 = arith.constant -0.0817574933 : f32
      %1451 = vector.broadcast %cst_569 : f32 to vector<8x16xf32>
      %1452 = arith.mulf %1451, %103 : vector<8x16xf32>
      %1453 = arith.addf %1450, %1452 : vector<8x16xf32>
      %cst_570 = arith.constant 0.0561910495 : f32
      %1454 = vector.broadcast %cst_570 : f32 to vector<8x16xf32>
      %1455 = arith.mulf %1454, %108 : vector<8x16xf32>
      %1456 = arith.addf %1453, %1455 : vector<8x16xf32>
      %cst_571 = arith.constant -0.135425448 : f32
      %1457 = vector.broadcast %cst_571 : f32 to vector<8x16xf32>
      %1458 = arith.mulf %1457, %113 : vector<8x16xf32>
      %1459 = arith.addf %1456, %1458 : vector<8x16xf32>
      %cst_572 = arith.constant 3.71392912E-17 : f32
      %1460 = vector.broadcast %cst_572 : f32 to vector<8x16xf32>
      %1461 = arith.mulf %1460, %118 : vector<8x16xf32>
      %1462 = arith.addf %1459, %1461 : vector<8x16xf32>
      %cst_573 = arith.constant 0.135425448 : f32
      %1463 = vector.broadcast %cst_573 : f32 to vector<8x16xf32>
      %1464 = arith.mulf %1463, %123 : vector<8x16xf32>
      %1465 = arith.addf %1462, %1464 : vector<8x16xf32>
      %cst_574 = arith.constant -0.0561910495 : f32
      %1466 = vector.broadcast %cst_574 : f32 to vector<8x16xf32>
      %1467 = arith.mulf %1466, %128 : vector<8x16xf32>
      %1468 = arith.addf %1465, %1467 : vector<8x16xf32>
      %cst_575 = arith.constant -5.000000e+00 : f32
      %cst_576 = arith.constant 5.000000e+00 : f32
      %1469 = vector.broadcast %cst_575 : f32 to vector<8x16xf32>
      %1470 = arith.maximumf %1469, %1468 : vector<8x16xf32>
      %1471 = vector.broadcast %cst_576 : f32 to vector<8x16xf32>
      %1472 = arith.minimumf %1471, %1470 : vector<8x16xf32>
      %c0_577 = arith.constant 0 : index
      %c33 = arith.constant 33 : index
      %1473 = arith.index_cast %3 : i32 to index
      %c0_578 = arith.constant 0 : index
      %1474 = vector.load %arg3[%c0_577, %c33, %1473, %c0_578] : memref<1x62x16x16xf32, #tpu.memory_space<vmem>>, vector<1x1x8x16xf32>
      %1475 = vector.shape_cast %1474 : vector<1x1x8x16xf32> to vector<8x16xf32>
      %1476 = vector.shape_cast %1472 : vector<8x16xf32> to vector<1x1x8x16xf32>
      tpu.vector_store %arg3[%c0_577, %c33, %1473, %c0_578], %1476 {strides = array<i32>} : memref<1x62x16x16xf32, #tpu.memory_space<vmem>>, vector<1x1x8x16xf32>,
      %cst_579 = arith.constant 5.84405882E-7 : f32
      %1477 = vector.broadcast %cst_579 : f32 to vector<8x16xf32>
      %1478 = arith.mulf %1477, %8 : vector<8x16xf32>
      %cst_580 = arith.constant 8.84057953E-4 : f32
      %1479 = vector.broadcast %cst_580 : f32 to vector<8x16xf32>
      %1480 = arith.mulf %1479, %13 : vector<8x16xf32>
      %1481 = arith.addf %1478, %1480 : vector<8x16xf32>
      %cst_581 = arith.constant 0.0350644775 : f32
      %1482 = vector.broadcast %cst_581 : f32 to vector<8x16xf32>
      %1483 = arith.mulf %1482, %18 : vector<8x16xf32>
      %1484 = arith.addf %1481, %1483 : vector<8x16xf32>
      %cst_582 = arith.constant 0.0347614326 : f32
      %1485 = vector.broadcast %cst_582 : f32 to vector<8x16xf32>
      %1486 = arith.mulf %1485, %23 : vector<8x16xf32>
      %1487 = arith.addf %1484, %1486 : vector<8x16xf32>
      %cst_583 = arith.constant 7.41817581E-4 : f32
      %1488 = vector.broadcast %cst_583 : f32 to vector<8x16xf32>
      %1489 = arith.mulf %1488, %28 : vector<8x16xf32>
      %1490 = arith.addf %1487, %1489 : vector<8x16xf32>
      %cst_584 = arith.constant -4.71403036E-5 : f32
      %1491 = vector.broadcast %cst_584 : f32 to vector<8x16xf32>
      %1492 = arith.mulf %1491, %33 : vector<8x16xf32>
      %1493 = arith.addf %1490, %1492 : vector<8x16xf32>
      %cst_585 = arith.constant -0.0276698675 : f32
      %1494 = vector.broadcast %cst_585 : f32 to vector<8x16xf32>
      %1495 = arith.mulf %1494, %38 : vector<8x16xf32>
      %1496 = arith.addf %1493, %1495 : vector<8x16xf32>
      %cst_586 = arith.constant -0.438738555 : f32
      %1497 = vector.broadcast %cst_586 : f32 to vector<8x16xf32>
      %1498 = arith.mulf %1497, %43 : vector<8x16xf32>
      %1499 = arith.addf %1496, %1498 : vector<8x16xf32>
      %cst_587 = arith.constant -1.862880e-01 : f32
      %1500 = vector.broadcast %cst_587 : f32 to vector<8x16xf32>
      %1501 = arith.mulf %1500, %48 : vector<8x16xf32>
      %1502 = arith.addf %1499, %1501 : vector<8x16xf32>
      %cst_588 = arith.constant -0.00207717228 : f32
      %1503 = vector.broadcast %cst_588 : f32 to vector<8x16xf32>
      %1504 = arith.mulf %1503, %53 : vector<8x16xf32>
      %1505 = arith.addf %1502, %1504 : vector<8x16xf32>
      %cst_589 = arith.constant 7.31926353E-4 : f32
      %1506 = vector.broadcast %cst_589 : f32 to vector<8x16xf32>
      %1507 = arith.mulf %1506, %58 : vector<8x16xf32>
      %1508 = arith.addf %1505, %1507 : vector<8x16xf32>
      %cst_590 = arith.constant 0.164581165 : f32
      %1509 = vector.broadcast %cst_590 : f32 to vector<8x16xf32>
      %1510 = arith.mulf %1509, %63 : vector<8x16xf32>
      %1511 = arith.addf %1508, %1510 : vector<8x16xf32>
      %cst_591 = arith.constant 1.000000e+00 : f32
      %1512 = vector.broadcast %cst_591 : f32 to vector<8x16xf32>
      %1513 = arith.mulf %1512, %68 : vector<8x16xf32>
      %1514 = arith.addf %1511, %1513 : vector<8x16xf32>
      %cst_592 = arith.constant 0.164581165 : f32
      %1515 = vector.broadcast %cst_592 : f32 to vector<8x16xf32>
      %1516 = arith.mulf %1515, %73 : vector<8x16xf32>
      %1517 = arith.addf %1514, %1516 : vector<8x16xf32>
      %cst_593 = arith.constant 7.31926353E-4 : f32
      %1518 = vector.broadcast %cst_593 : f32 to vector<8x16xf32>
      %1519 = arith.mulf %1518, %78 : vector<8x16xf32>
      %1520 = arith.addf %1517, %1519 : vector<8x16xf32>
      %cst_594 = arith.constant -0.00207717228 : f32
      %1521 = vector.broadcast %cst_594 : f32 to vector<8x16xf32>
      %1522 = arith.mulf %1521, %83 : vector<8x16xf32>
      %1523 = arith.addf %1520, %1522 : vector<8x16xf32>
      %cst_595 = arith.constant -1.862880e-01 : f32
      %1524 = vector.broadcast %cst_595 : f32 to vector<8x16xf32>
      %1525 = arith.mulf %1524, %88 : vector<8x16xf32>
      %1526 = arith.addf %1523, %1525 : vector<8x16xf32>
      %cst_596 = arith.constant -0.438738555 : f32
      %1527 = vector.broadcast %cst_596 : f32 to vector<8x16xf32>
      %1528 = arith.mulf %1527, %93 : vector<8x16xf32>
      %1529 = arith.addf %1526, %1528 : vector<8x16xf32>
      %cst_597 = arith.constant -0.0276698675 : f32
      %1530 = vector.broadcast %cst_597 : f32 to vector<8x16xf32>
      %1531 = arith.mulf %1530, %98 : vector<8x16xf32>
      %1532 = arith.addf %1529, %1531 : vector<8x16xf32>
      %cst_598 = arith.constant -4.71403036E-5 : f32
      %1533 = vector.broadcast %cst_598 : f32 to vector<8x16xf32>
      %1534 = arith.mulf %1533, %103 : vector<8x16xf32>
      %1535 = arith.addf %1532, %1534 : vector<8x16xf32>
      %cst_599 = arith.constant 7.41817581E-4 : f32
      %1536 = vector.broadcast %cst_599 : f32 to vector<8x16xf32>
      %1537 = arith.mulf %1536, %108 : vector<8x16xf32>
      %1538 = arith.addf %1535, %1537 : vector<8x16xf32>
      %cst_600 = arith.constant 0.0347614326 : f32
      %1539 = vector.broadcast %cst_600 : f32 to vector<8x16xf32>
      %1540 = arith.mulf %1539, %113 : vector<8x16xf32>
      %1541 = arith.addf %1538, %1540 : vector<8x16xf32>
      %cst_601 = arith.constant 0.0350644775 : f32
      %1542 = vector.broadcast %cst_601 : f32 to vector<8x16xf32>
      %1543 = arith.mulf %1542, %118 : vector<8x16xf32>
      %1544 = arith.addf %1541, %1543 : vector<8x16xf32>
      %cst_602 = arith.constant 8.84057953E-4 : f32
      %1545 = vector.broadcast %cst_602 : f32 to vector<8x16xf32>
      %1546 = arith.mulf %1545, %123 : vector<8x16xf32>
      %1547 = arith.addf %1544, %1546 : vector<8x16xf32>
      %cst_603 = arith.constant 5.84405882E-7 : f32
      %1548 = vector.broadcast %cst_603 : f32 to vector<8x16xf32>
      %1549 = arith.mulf %1548, %128 : vector<8x16xf32>
      %1550 = arith.addf %1547, %1549 : vector<8x16xf32>
      %cst_604 = arith.constant -5.000000e+00 : f32
      %cst_605 = arith.constant 5.000000e+00 : f32
      %1551 = vector.broadcast %cst_604 : f32 to vector<8x16xf32>
      %1552 = arith.maximumf %1551, %1550 : vector<8x16xf32>
      %1553 = vector.broadcast %cst_605 : f32 to vector<8x16xf32>
      %1554 = arith.minimumf %1553, %1552 : vector<8x16xf32>
      %c0_606 = arith.constant 0 : index
      %c34 = arith.constant 34 : index
      %1555 = arith.index_cast %3 : i32 to index
      %c0_607 = arith.constant 0 : index
      %1556 = vector.load %arg3[%c0_606, %c34, %1555, %c0_607] : memref<1x62x16x16xf32, #tpu.memory_space<vmem>>, vector<1x1x8x16xf32>
      %1557 = vector.shape_cast %1556 : vector<1x1x8x16xf32> to vector<8x16xf32>
      %1558 = vector.shape_cast %1554 : vector<8x16xf32> to vector<1x1x8x16xf32>
      tpu.vector_store %arg3[%c0_606, %c34, %1555, %c0_607], %1558 {strides = array<i32>} : memref<1x62x16x16xf32, #tpu.memory_space<vmem>>, vector<1x1x8x16xf32>,
      %cst_608 = arith.constant -2.89944296E-7 : f32
      %1559 = vector.broadcast %cst_608 : f32 to vector<8x16xf32>
      %1560 = arith.mulf %1559, %8 : vector<8x16xf32>
      %cst_609 = arith.constant -7.13239191E-4 : f32
      %1561 = vector.broadcast %cst_609 : f32 to vector<8x16xf32>
      %1562 = arith.mulf %1561, %13 : vector<8x16xf32>
      %1563 = arith.addf %1560, %1562 : vector<8x16xf32>
      %cst_610 = arith.constant -0.0439309254 : f32
      %1564 = vector.broadcast %cst_610 : f32 to vector<8x16xf32>
      %1565 = arith.mulf %1564, %18 : vector<8x16xf32>
      %1566 = arith.addf %1563, %1565 : vector<8x16xf32>
      %cst_611 = arith.constant -0.0709955096 : f32
      %1567 = vector.broadcast %cst_611 : f32 to vector<8x16xf32>
      %1568 = arith.mulf %1567, %23 : vector<8x16xf32>
      %1569 = arith.addf %1566, %1568 : vector<8x16xf32>
      %cst_612 = arith.constant -0.0030711221 : f32
      %1570 = vector.broadcast %cst_612 : f32 to vector<8x16xf32>
      %1571 = arith.mulf %1570, %28 : vector<8x16xf32>
      %1572 = arith.addf %1569, %1571 : vector<8x16xf32>
      %cst_613 = arith.constant 5.64094421E-7 : f32
      %1573 = vector.broadcast %cst_613 : f32 to vector<8x16xf32>
      %1574 = arith.mulf %1573, %33 : vector<8x16xf32>
      %1575 = arith.addf %1572, %1574 : vector<8x16xf32>
      %cst_614 = arith.constant 0.00648675672 : f32
      %1576 = vector.broadcast %cst_614 : f32 to vector<8x16xf32>
      %1577 = arith.mulf %1576, %38 : vector<8x16xf32>
      %1578 = arith.addf %1575, %1577 : vector<8x16xf32>
      %cst_615 = arith.constant 0.211169854 : f32
      %1579 = vector.broadcast %cst_615 : f32 to vector<8x16xf32>
      %1580 = arith.mulf %1579, %43 : vector<8x16xf32>
      %1581 = arith.addf %1578, %1580 : vector<8x16xf32>
      %cst_616 = arith.constant 0.146648258 : f32
      %1582 = vector.broadcast %cst_616 : f32 to vector<8x16xf32>
      %1583 = arith.mulf %1582, %48 : vector<8x16xf32>
      %1584 = arith.addf %1581, %1583 : vector<8x16xf32>
      %cst_617 = arith.constant 0.0025394808 : f32
      %1585 = vector.broadcast %cst_617 : f32 to vector<8x16xf32>
      %1586 = arith.mulf %1585, %53 : vector<8x16xf32>
      %1587 = arith.addf %1584, %1586 : vector<8x16xf32>
      %cst_618 = arith.constant 3.41558829E-4 : f32
      %1588 = vector.broadcast %cst_618 : f32 to vector<8x16xf32>
      %1589 = arith.mulf %1588, %58 : vector<8x16xf32>
      %1590 = arith.addf %1587, %1589 : vector<8x16xf32>
      %cst_619 = arith.constant 0.0365115628 : f32
      %1591 = vector.broadcast %cst_619 : f32 to vector<8x16xf32>
      %1592 = arith.mulf %1591, %63 : vector<8x16xf32>
      %1593 = arith.addf %1590, %1592 : vector<8x16xf32>
      %cst_620 = arith.constant 6.12323426E-17 : f32
      %1594 = vector.broadcast %cst_620 : f32 to vector<8x16xf32>
      %1595 = arith.mulf %1594, %68 : vector<8x16xf32>
      %1596 = arith.addf %1593, %1595 : vector<8x16xf32>
      %cst_621 = arith.constant -0.0365115628 : f32
      %1597 = vector.broadcast %cst_621 : f32 to vector<8x16xf32>
      %1598 = arith.mulf %1597, %73 : vector<8x16xf32>
      %1599 = arith.addf %1596, %1598 : vector<8x16xf32>
      %cst_622 = arith.constant -3.41558829E-4 : f32
      %1600 = vector.broadcast %cst_622 : f32 to vector<8x16xf32>
      %1601 = arith.mulf %1600, %78 : vector<8x16xf32>
      %1602 = arith.addf %1599, %1601 : vector<8x16xf32>
      %cst_623 = arith.constant -0.0025394808 : f32
      %1603 = vector.broadcast %cst_623 : f32 to vector<8x16xf32>
      %1604 = arith.mulf %1603, %83 : vector<8x16xf32>
      %1605 = arith.addf %1602, %1604 : vector<8x16xf32>
      %cst_624 = arith.constant -0.146648258 : f32
      %1606 = vector.broadcast %cst_624 : f32 to vector<8x16xf32>
      %1607 = arith.mulf %1606, %88 : vector<8x16xf32>
      %1608 = arith.addf %1605, %1607 : vector<8x16xf32>
      %cst_625 = arith.constant -0.211169854 : f32
      %1609 = vector.broadcast %cst_625 : f32 to vector<8x16xf32>
      %1610 = arith.mulf %1609, %93 : vector<8x16xf32>
      %1611 = arith.addf %1608, %1610 : vector<8x16xf32>
      %cst_626 = arith.constant -0.00648675672 : f32
      %1612 = vector.broadcast %cst_626 : f32 to vector<8x16xf32>
      %1613 = arith.mulf %1612, %98 : vector<8x16xf32>
      %1614 = arith.addf %1611, %1613 : vector<8x16xf32>
      %cst_627 = arith.constant -5.64094421E-7 : f32
      %1615 = vector.broadcast %cst_627 : f32 to vector<8x16xf32>
      %1616 = arith.mulf %1615, %103 : vector<8x16xf32>
      %1617 = arith.addf %1614, %1616 : vector<8x16xf32>
      %cst_628 = arith.constant 0.0030711221 : f32
      %1618 = vector.broadcast %cst_628 : f32 to vector<8x16xf32>
      %1619 = arith.mulf %1618, %108 : vector<8x16xf32>
      %1620 = arith.addf %1617, %1619 : vector<8x16xf32>
      %cst_629 = arith.constant 0.0709955096 : f32
      %1621 = vector.broadcast %cst_629 : f32 to vector<8x16xf32>
      %1622 = arith.mulf %1621, %113 : vector<8x16xf32>
      %1623 = arith.addf %1620, %1622 : vector<8x16xf32>
      %cst_630 = arith.constant 0.0439309254 : f32
      %1624 = vector.broadcast %cst_630 : f32 to vector<8x16xf32>
      %1625 = arith.mulf %1624, %118 : vector<8x16xf32>
      %1626 = arith.addf %1623, %1625 : vector<8x16xf32>
      %cst_631 = arith.constant 7.13239191E-4 : f32
      %1627 = vector.broadcast %cst_631 : f32 to vector<8x16xf32>
      %1628 = arith.mulf %1627, %123 : vector<8x16xf32>
      %1629 = arith.addf %1626, %1628 : vector<8x16xf32>
      %cst_632 = arith.constant 2.89944296E-7 : f32
      %1630 = vector.broadcast %cst_632 : f32 to vector<8x16xf32>
      %1631 = arith.mulf %1630, %128 : vector<8x16xf32>
      %1632 = arith.addf %1629, %1631 : vector<8x16xf32>
      %cst_633 = arith.constant -5.000000e+00 : f32
      %cst_634 = arith.constant 5.000000e+00 : f32
      %1633 = vector.broadcast %cst_633 : f32 to vector<8x16xf32>
      %1634 = arith.maximumf %1633, %1632 : vector<8x16xf32>
      %1635 = vector.broadcast %cst_634 : f32 to vector<8x16xf32>
      %1636 = arith.minimumf %1635, %1634 : vector<8x16xf32>
      %c0_635 = arith.constant 0 : index
      %c35 = arith.constant 35 : index
      %1637 = arith.index_cast %3 : i32 to index
      %c0_636 = arith.constant 0 : index
      %1638 = vector.load %arg3[%c0_635, %c35, %1637, %c0_636] : memref<1x62x16x16xf32, #tpu.memory_space<vmem>>, vector<1x1x8x16xf32>
      %1639 = vector.shape_cast %1638 : vector<1x1x8x16xf32> to vector<8x16xf32>
      %1640 = vector.shape_cast %1636 : vector<8x16xf32> to vector<1x1x8x16xf32>
      tpu.vector_store %arg3[%c0_635, %c35, %1637, %c0_636], %1640 {strides = array<i32>} : memref<1x62x16x16xf32, #tpu.memory_space<vmem>>, vector<1x1x8x16xf32>,
      %cst_637 = arith.constant -0.0276698675 : f32
      %1641 = vector.broadcast %cst_637 : f32 to vector<8x16xf32>
      %1642 = arith.mulf %1641, %8 : vector<8x16xf32>
      %cst_638 = arith.constant 0.173109591 : f32
      %1643 = vector.broadcast %cst_638 : f32 to vector<8x16xf32>
      %1644 = arith.mulf %1643, %13 : vector<8x16xf32>
      %1645 = arith.addf %1642, %1644 : vector<8x16xf32>
      %cst_639 = arith.constant -0.438738555 : f32
      %1646 = vector.broadcast %cst_639 : f32 to vector<8x16xf32>
      %1647 = arith.mulf %1646, %18 : vector<8x16xf32>
      %1648 = arith.addf %1645, %1647 : vector<8x16xf32>
      %cst_640 = arith.constant 0.449885368 : f32
      %1649 = vector.broadcast %cst_640 : f32 to vector<8x16xf32>
      %1650 = arith.mulf %1649, %23 : vector<8x16xf32>
      %1651 = arith.addf %1648, %1650 : vector<8x16xf32>
      %cst_641 = arith.constant -1.862880e-01 : f32
      %1652 = vector.broadcast %cst_641 : f32 to vector<8x16xf32>
      %1653 = arith.mulf %1652, %28 : vector<8x16xf32>
      %1654 = arith.addf %1651, %1653 : vector<8x16xf32>
      %cst_642 = arith.constant 4.95749176E-4 : f32
      %1655 = vector.broadcast %cst_642 : f32 to vector<8x16xf32>
      %1656 = arith.mulf %1655, %33 : vector<8x16xf32>
      %1657 = arith.addf %1654, %1656 : vector<8x16xf32>
      %cst_643 = arith.constant -0.0471697897 : f32
      %1658 = vector.broadcast %cst_643 : f32 to vector<8x16xf32>
      %1659 = arith.mulf %1658, %38 : vector<8x16xf32>
      %1660 = arith.addf %1657, %1659 : vector<8x16xf32>
      %cst_644 = arith.constant 0.185793415 : f32
      %1661 = vector.broadcast %cst_644 : f32 to vector<8x16xf32>
      %1662 = arith.mulf %1661, %43 : vector<8x16xf32>
      %1663 = arith.addf %1660, %1662 : vector<8x16xf32>
      %cst_645 = arith.constant -0.22838895 : f32
      %1664 = vector.broadcast %cst_645 : f32 to vector<8x16xf32>
      %1665 = arith.mulf %1664, %48 : vector<8x16xf32>
      %1666 = arith.addf %1663, %1665 : vector<8x16xf32>
      %cst_646 = arith.constant 0.102502681 : f32
      %1667 = vector.broadcast %cst_646 : f32 to vector<8x16xf32>
      %1668 = arith.mulf %1667, %53 : vector<8x16xf32>
      %1669 = arith.addf %1666, %1668 : vector<8x16xf32>
      %cst_647 = arith.constant 0.164581165 : f32
      %1670 = vector.broadcast %cst_647 : f32 to vector<8x16xf32>
      %1671 = arith.mulf %1670, %58 : vector<8x16xf32>
      %1672 = arith.addf %1669, %1671 : vector<8x16xf32>
      %cst_648 = arith.constant -0.636957884 : f32
      %1673 = vector.broadcast %cst_648 : f32 to vector<8x16xf32>
      %1674 = arith.mulf %1673, %63 : vector<8x16xf32>
      %1675 = arith.addf %1672, %1674 : vector<8x16xf32>
      %cst_649 = arith.constant 1.000000e+00 : f32
      %1676 = vector.broadcast %cst_649 : f32 to vector<8x16xf32>
      %1677 = arith.mulf %1676, %68 : vector<8x16xf32>
      %1678 = arith.addf %1675, %1677 : vector<8x16xf32>
      %cst_650 = arith.constant -0.636957884 : f32
      %1679 = vector.broadcast %cst_650 : f32 to vector<8x16xf32>
      %1680 = arith.mulf %1679, %73 : vector<8x16xf32>
      %1681 = arith.addf %1678, %1680 : vector<8x16xf32>
      %cst_651 = arith.constant 0.164581165 : f32
      %1682 = vector.broadcast %cst_651 : f32 to vector<8x16xf32>
      %1683 = arith.mulf %1682, %78 : vector<8x16xf32>
      %1684 = arith.addf %1681, %1683 : vector<8x16xf32>
      %cst_652 = arith.constant 0.102502681 : f32
      %1685 = vector.broadcast %cst_652 : f32 to vector<8x16xf32>
      %1686 = arith.mulf %1685, %83 : vector<8x16xf32>
      %1687 = arith.addf %1684, %1686 : vector<8x16xf32>
      %cst_653 = arith.constant -0.22838895 : f32
      %1688 = vector.broadcast %cst_653 : f32 to vector<8x16xf32>
      %1689 = arith.mulf %1688, %88 : vector<8x16xf32>
      %1690 = arith.addf %1687, %1689 : vector<8x16xf32>
      %cst_654 = arith.constant 0.185793415 : f32
      %1691 = vector.broadcast %cst_654 : f32 to vector<8x16xf32>
      %1692 = arith.mulf %1691, %93 : vector<8x16xf32>
      %1693 = arith.addf %1690, %1692 : vector<8x16xf32>
      %cst_655 = arith.constant -0.0471697897 : f32
      %1694 = vector.broadcast %cst_655 : f32 to vector<8x16xf32>
      %1695 = arith.mulf %1694, %98 : vector<8x16xf32>
      %1696 = arith.addf %1693, %1695 : vector<8x16xf32>
      %cst_656 = arith.constant 4.95749176E-4 : f32
      %1697 = vector.broadcast %cst_656 : f32 to vector<8x16xf32>
      %1698 = arith.mulf %1697, %103 : vector<8x16xf32>
      %1699 = arith.addf %1696, %1698 : vector<8x16xf32>
      %cst_657 = arith.constant -1.862880e-01 : f32
      %1700 = vector.broadcast %cst_657 : f32 to vector<8x16xf32>
      %1701 = arith.mulf %1700, %108 : vector<8x16xf32>
      %1702 = arith.addf %1699, %1701 : vector<8x16xf32>
      %cst_658 = arith.constant 0.449885368 : f32
      %1703 = vector.broadcast %cst_658 : f32 to vector<8x16xf32>
      %1704 = arith.mulf %1703, %113 : vector<8x16xf32>
      %1705 = arith.addf %1702, %1704 : vector<8x16xf32>
      %cst_659 = arith.constant -0.438738555 : f32
      %1706 = vector.broadcast %cst_659 : f32 to vector<8x16xf32>
      %1707 = arith.mulf %1706, %118 : vector<8x16xf32>
      %1708 = arith.addf %1705, %1707 : vector<8x16xf32>
      %cst_660 = arith.constant 0.173109591 : f32
      %1709 = vector.broadcast %cst_660 : f32 to vector<8x16xf32>
      %1710 = arith.mulf %1709, %123 : vector<8x16xf32>
      %1711 = arith.addf %1708, %1710 : vector<8x16xf32>
      %cst_661 = arith.constant -0.0276698675 : f32
      %1712 = vector.broadcast %cst_661 : f32 to vector<8x16xf32>
      %1713 = arith.mulf %1712, %128 : vector<8x16xf32>
      %1714 = arith.addf %1711, %1713 : vector<8x16xf32>
      %cst_662 = arith.constant -5.000000e+00 : f32
      %cst_663 = arith.constant 5.000000e+00 : f32
      %1715 = vector.broadcast %cst_662 : f32 to vector<8x16xf32>
      %1716 = arith.maximumf %1715, %1714 : vector<8x16xf32>
      %1717 = vector.broadcast %cst_663 : f32 to vector<8x16xf32>
      %1718 = arith.minimumf %1717, %1716 : vector<8x16xf32>
      %c0_664 = arith.constant 0 : index
      %c36 = arith.constant 36 : index
      %1719 = arith.index_cast %3 : i32 to index
      %c0_665 = arith.constant 0 : index
      %1720 = vector.load %arg3[%c0_664, %c36, %1719, %c0_665] : memref<1x62x16x16xf32, #tpu.memory_space<vmem>>, vector<1x1x8x16xf32>
      %1721 = vector.shape_cast %1720 : vector<1x1x8x16xf32> to vector<8x16xf32>
      %1722 = vector.shape_cast %1718 : vector<8x16xf32> to vector<1x1x8x16xf32>
      tpu.vector_store %arg3[%c0_664, %c36, %1719, %c0_665], %1722 {strides = array<i32>} : memref<1x62x16x16xf32, #tpu.memory_space<vmem>>, vector<1x1x8x16xf32>,
      %cst_666 = arith.constant 0.00648675672 : f32
      %1723 = vector.broadcast %cst_666 : f32 to vector<8x16xf32>
      %1724 = arith.mulf %1723, %8 : vector<8x16xf32>
      %cst_667 = arith.constant -0.0611243173 : f32
      %1725 = vector.broadcast %cst_667 : f32 to vector<8x16xf32>
      %1726 = arith.mulf %1725, %13 : vector<8x16xf32>
      %1727 = arith.addf %1724, %1726 : vector<8x16xf32>
      %cst_668 = arith.constant 0.211169854 : f32
      %1728 = vector.broadcast %cst_668 : f32 to vector<8x16xf32>
      %1729 = arith.mulf %1728, %18 : vector<8x16xf32>
      %1730 = arith.addf %1727, %1729 : vector<8x16xf32>
      %cst_669 = arith.constant -0.280641079 : f32
      %1731 = vector.broadcast %cst_669 : f32 to vector<8x16xf32>
      %1732 = arith.mulf %1731, %23 : vector<8x16xf32>
      %1733 = arith.addf %1730, %1732 : vector<8x16xf32>
      %cst_670 = arith.constant 0.146648258 : f32
      %1734 = vector.broadcast %cst_670 : f32 to vector<8x16xf32>
      %1735 = arith.mulf %1734, %28 : vector<8x16xf32>
      %1736 = arith.addf %1733, %1735 : vector<8x16xf32>
      %cst_671 = arith.constant 0.0828606039 : f32
      %1737 = vector.broadcast %cst_671 : f32 to vector<8x16xf32>
      %1738 = arith.mulf %1737, %33 : vector<8x16xf32>
      %1739 = arith.addf %1736, %1738 : vector<8x16xf32>
      %cst_672 = arith.constant -0.407869458 : f32
      %1740 = vector.broadcast %cst_672 : f32 to vector<8x16xf32>
      %1741 = arith.mulf %1740, %38 : vector<8x16xf32>
      %1742 = arith.addf %1739, %1741 : vector<8x16xf32>
      %cst_673 = arith.constant 0.814415276 : f32
      %1743 = vector.broadcast %cst_673 : f32 to vector<8x16xf32>
      %1744 = arith.mulf %1743, %43 : vector<8x16xf32>
      %1745 = arith.addf %1742, %1744 : vector<8x16xf32>
      %cst_674 = arith.constant -0.659356833 : f32
      %1746 = vector.broadcast %cst_674 : f32 to vector<8x16xf32>
      %1747 = arith.mulf %1746, %48 : vector<8x16xf32>
      %1748 = arith.addf %1745, %1747 : vector<8x16xf32>
      %cst_675 = arith.constant 0.21626699 : f32
      %1749 = vector.broadcast %cst_675 : f32 to vector<8x16xf32>
      %1750 = arith.mulf %1749, %53 : vector<8x16xf32>
      %1751 = arith.addf %1748, %1750 : vector<8x16xf32>
      %cst_676 = arith.constant 0.0365115628 : f32
      %1752 = vector.broadcast %cst_676 : f32 to vector<8x16xf32>
      %1753 = arith.mulf %1752, %58 : vector<8x16xf32>
      %1754 = arith.addf %1751, %1753 : vector<8x16xf32>
      %cst_677 = arith.constant -0.069804512 : f32
      %1755 = vector.broadcast %cst_677 : f32 to vector<8x16xf32>
      %1756 = arith.mulf %1755, %63 : vector<8x16xf32>
      %1757 = arith.addf %1754, %1756 : vector<8x16xf32>
      %cst_678 = arith.constant 6.12323426E-17 : f32
      %1758 = vector.broadcast %cst_678 : f32 to vector<8x16xf32>
      %1759 = arith.mulf %1758, %68 : vector<8x16xf32>
      %1760 = arith.addf %1757, %1759 : vector<8x16xf32>
      %cst_679 = arith.constant 0.069804512 : f32
      %1761 = vector.broadcast %cst_679 : f32 to vector<8x16xf32>
      %1762 = arith.mulf %1761, %73 : vector<8x16xf32>
      %1763 = arith.addf %1760, %1762 : vector<8x16xf32>
      %cst_680 = arith.constant -0.0365115628 : f32
      %1764 = vector.broadcast %cst_680 : f32 to vector<8x16xf32>
      %1765 = arith.mulf %1764, %78 : vector<8x16xf32>
      %1766 = arith.addf %1763, %1765 : vector<8x16xf32>
      %cst_681 = arith.constant -0.21626699 : f32
      %1767 = vector.broadcast %cst_681 : f32 to vector<8x16xf32>
      %1768 = arith.mulf %1767, %83 : vector<8x16xf32>
      %1769 = arith.addf %1766, %1768 : vector<8x16xf32>
      %cst_682 = arith.constant 0.659356833 : f32
      %1770 = vector.broadcast %cst_682 : f32 to vector<8x16xf32>
      %1771 = arith.mulf %1770, %88 : vector<8x16xf32>
      %1772 = arith.addf %1769, %1771 : vector<8x16xf32>
      %cst_683 = arith.constant -0.814415276 : f32
      %1773 = vector.broadcast %cst_683 : f32 to vector<8x16xf32>
      %1774 = arith.mulf %1773, %93 : vector<8x16xf32>
      %1775 = arith.addf %1772, %1774 : vector<8x16xf32>
      %cst_684 = arith.constant 0.407869458 : f32
      %1776 = vector.broadcast %cst_684 : f32 to vector<8x16xf32>
      %1777 = arith.mulf %1776, %98 : vector<8x16xf32>
      %1778 = arith.addf %1775, %1777 : vector<8x16xf32>
      %cst_685 = arith.constant -0.0828606039 : f32
      %1779 = vector.broadcast %cst_685 : f32 to vector<8x16xf32>
      %1780 = arith.mulf %1779, %103 : vector<8x16xf32>
      %1781 = arith.addf %1778, %1780 : vector<8x16xf32>
      %cst_686 = arith.constant -0.146648258 : f32
      %1782 = vector.broadcast %cst_686 : f32 to vector<8x16xf32>
      %1783 = arith.mulf %1782, %108 : vector<8x16xf32>
      %1784 = arith.addf %1781, %1783 : vector<8x16xf32>
      %cst_687 = arith.constant 0.280641079 : f32
      %1785 = vector.broadcast %cst_687 : f32 to vector<8x16xf32>
      %1786 = arith.mulf %1785, %113 : vector<8x16xf32>
      %1787 = arith.addf %1784, %1786 : vector<8x16xf32>
      %cst_688 = arith.constant -0.211169854 : f32
      %1788 = vector.broadcast %cst_688 : f32 to vector<8x16xf32>
      %1789 = arith.mulf %1788, %118 : vector<8x16xf32>
      %1790 = arith.addf %1787, %1789 : vector<8x16xf32>
      %cst_689 = arith.constant 0.0611243173 : f32
      %1791 = vector.broadcast %cst_689 : f32 to vector<8x16xf32>
      %1792 = arith.mulf %1791, %123 : vector<8x16xf32>
      %1793 = arith.addf %1790, %1792 : vector<8x16xf32>
      %cst_690 = arith.constant -0.00648675672 : f32
      %1794 = vector.broadcast %cst_690 : f32 to vector<8x16xf32>
      %1795 = arith.mulf %1794, %128 : vector<8x16xf32>
      %1796 = arith.addf %1793, %1795 : vector<8x16xf32>
      %cst_691 = arith.constant -5.000000e+00 : f32
      %cst_692 = arith.constant 5.000000e+00 : f32
      %1797 = vector.broadcast %cst_691 : f32 to vector<8x16xf32>
      %1798 = arith.maximumf %1797, %1796 : vector<8x16xf32>
      %1799 = vector.broadcast %cst_692 : f32 to vector<8x16xf32>
      %1800 = arith.minimumf %1799, %1798 : vector<8x16xf32>
      %c0_693 = arith.constant 0 : index
      %c37 = arith.constant 37 : index
      %1801 = arith.index_cast %3 : i32 to index
      %c0_694 = arith.constant 0 : index
      %1802 = vector.load %arg3[%c0_693, %c37, %1801, %c0_694] : memref<1x62x16x16xf32, #tpu.memory_space<vmem>>, vector<1x1x8x16xf32>
      %1803 = vector.shape_cast %1802 : vector<1x1x8x16xf32> to vector<8x16xf32>
      %1804 = vector.shape_cast %1800 : vector<8x16xf32> to vector<1x1x8x16xf32>
      tpu.vector_store %arg3[%c0_693, %c37, %1801, %c0_694], %1804 {strides = array<i32>} : memref<1x62x16x16xf32, #tpu.memory_space<vmem>>, vector<1x1x8x16xf32>,
      %cst_695 = arith.constant 5.5548572E-8 : f32
      %1805 = vector.broadcast %cst_695 : f32 to vector<8x16xf32>
      %1806 = arith.mulf %1805, %8 : vector<8x16xf32>
      %cst_696 = arith.constant -6.83354156E-5 : f32
      %1807 = vector.broadcast %cst_696 : f32 to vector<8x16xf32>
      %1808 = arith.mulf %1807, %13 : vector<8x16xf32>
      %1809 = arith.addf %1806, %1808 : vector<8x16xf32>
      %cst_697 = arith.constant -0.00582279265 : f32
      %1810 = vector.broadcast %cst_697 : f32 to vector<8x16xf32>
      %1811 = arith.mulf %1810, %18 : vector<8x16xf32>
      %1812 = arith.addf %1809, %1811 : vector<8x16xf32>
      %cst_698 = arith.constant 0.0101044197 : f32
      %1813 = vector.broadcast %cst_698 : f32 to vector<8x16xf32>
      %1814 = arith.mulf %1813, %23 : vector<8x16xf32>
      %1815 = arith.addf %1812, %1814 : vector<8x16xf32>
      %cst_699 = arith.constant 0.0183156393 : f32
      %1816 = vector.broadcast %cst_699 : f32 to vector<8x16xf32>
      %1817 = arith.mulf %1816, %28 : vector<8x16xf32>
      %1818 = arith.addf %1815, %1817 : vector<8x16xf32>
      %cst_700 = arith.constant -6.83354156E-5 : f32
      %1819 = vector.broadcast %cst_700 : f32 to vector<8x16xf32>
      %1820 = arith.mulf %1819, %33 : vector<8x16xf32>
      %1821 = arith.addf %1818, %1820 : vector<8x16xf32>
      %cst_701 = arith.constant -0.0158279911 : f32
      %1822 = vector.broadcast %cst_701 : f32 to vector<8x16xf32>
      %1823 = arith.mulf %1822, %38 : vector<8x16xf32>
      %1824 = arith.addf %1821, %1823 : vector<8x16xf32>
      %cst_702 = arith.constant 0.0746621191 : f32
      %1825 = vector.broadcast %cst_702 : f32 to vector<8x16xf32>
      %1826 = arith.mulf %1825, %43 : vector<8x16xf32>
      %1827 = arith.addf %1824, %1826 : vector<8x16xf32>
      %cst_703 = arith.constant 0.36787945 : f32
      %1828 = vector.broadcast %cst_703 : f32 to vector<8x16xf32>
      %1829 = arith.mulf %1828, %48 : vector<8x16xf32>
      %1830 = arith.addf %1827, %1829 : vector<8x16xf32>
      %cst_704 = arith.constant 0.0101044197 : f32
      %1831 = vector.broadcast %cst_704 : f32 to vector<8x16xf32>
      %1832 = arith.mulf %1831, %53 : vector<8x16xf32>
      %1833 = arith.addf %1830, %1832 : vector<8x16xf32>
      %cst_705 = arith.constant -0.00582279265 : f32
      %1834 = vector.broadcast %cst_705 : f32 to vector<8x16xf32>
      %1835 = arith.mulf %1834, %58 : vector<8x16xf32>
      %1836 = arith.addf %1833, %1835 : vector<8x16xf32>
      %cst_706 = arith.constant 0.0746621191 : f32
      %1837 = vector.broadcast %cst_706 : f32 to vector<8x16xf32>
      %1838 = arith.mulf %1837, %63 : vector<8x16xf32>
      %1839 = arith.addf %1836, %1838 : vector<8x16xf32>
      %cst_707 = arith.constant 1.000000e+00 : f32
      %1840 = vector.broadcast %cst_707 : f32 to vector<8x16xf32>
      %1841 = arith.mulf %1840, %68 : vector<8x16xf32>
      %1842 = arith.addf %1839, %1841 : vector<8x16xf32>
      %cst_708 = arith.constant 0.0746621191 : f32
      %1843 = vector.broadcast %cst_708 : f32 to vector<8x16xf32>
      %1844 = arith.mulf %1843, %73 : vector<8x16xf32>
      %1845 = arith.addf %1842, %1844 : vector<8x16xf32>
      %cst_709 = arith.constant -0.00582279265 : f32
      %1846 = vector.broadcast %cst_709 : f32 to vector<8x16xf32>
      %1847 = arith.mulf %1846, %78 : vector<8x16xf32>
      %1848 = arith.addf %1845, %1847 : vector<8x16xf32>
      %cst_710 = arith.constant 0.0101044197 : f32
      %1849 = vector.broadcast %cst_710 : f32 to vector<8x16xf32>
      %1850 = arith.mulf %1849, %83 : vector<8x16xf32>
      %1851 = arith.addf %1848, %1850 : vector<8x16xf32>
      %cst_711 = arith.constant 0.36787945 : f32
      %1852 = vector.broadcast %cst_711 : f32 to vector<8x16xf32>
      %1853 = arith.mulf %1852, %88 : vector<8x16xf32>
      %1854 = arith.addf %1851, %1853 : vector<8x16xf32>
      %cst_712 = arith.constant 0.0746621191 : f32
      %1855 = vector.broadcast %cst_712 : f32 to vector<8x16xf32>
      %1856 = arith.mulf %1855, %93 : vector<8x16xf32>
      %1857 = arith.addf %1854, %1856 : vector<8x16xf32>
      %cst_713 = arith.constant -0.0158279911 : f32
      %1858 = vector.broadcast %cst_713 : f32 to vector<8x16xf32>
      %1859 = arith.mulf %1858, %98 : vector<8x16xf32>
      %1860 = arith.addf %1857, %1859 : vector<8x16xf32>
      %cst_714 = arith.constant -6.83354156E-5 : f32
      %1861 = vector.broadcast %cst_714 : f32 to vector<8x16xf32>
      %1862 = arith.mulf %1861, %103 : vector<8x16xf32>
      %1863 = arith.addf %1860, %1862 : vector<8x16xf32>
      %cst_715 = arith.constant 0.0183156393 : f32
      %1864 = vector.broadcast %cst_715 : f32 to vector<8x16xf32>
      %1865 = arith.mulf %1864, %108 : vector<8x16xf32>
      %1866 = arith.addf %1863, %1865 : vector<8x16xf32>
      %cst_716 = arith.constant 0.0101044197 : f32
      %1867 = vector.broadcast %cst_716 : f32 to vector<8x16xf32>
      %1868 = arith.mulf %1867, %113 : vector<8x16xf32>
      %1869 = arith.addf %1866, %1868 : vector<8x16xf32>
      %cst_717 = arith.constant -0.00582279265 : f32
      %1870 = vector.broadcast %cst_717 : f32 to vector<8x16xf32>
      %1871 = arith.mulf %1870, %118 : vector<8x16xf32>
      %1872 = arith.addf %1869, %1871 : vector<8x16xf32>
      %cst_718 = arith.constant -6.83354156E-5 : f32
      %1873 = vector.broadcast %cst_718 : f32 to vector<8x16xf32>
      %1874 = arith.mulf %1873, %123 : vector<8x16xf32>
      %1875 = arith.addf %1872, %1874 : vector<8x16xf32>
      %cst_719 = arith.constant 5.5548572E-8 : f32
      %1876 = vector.broadcast %cst_719 : f32 to vector<8x16xf32>
      %1877 = arith.mulf %1876, %128 : vector<8x16xf32>
      %1878 = arith.addf %1875, %1877 : vector<8x16xf32>
      %cst_720 = arith.constant -5.000000e+00 : f32
      %cst_721 = arith.constant 5.000000e+00 : f32
      %1879 = vector.broadcast %cst_720 : f32 to vector<8x16xf32>
      %1880 = arith.maximumf %1879, %1878 : vector<8x16xf32>
      %1881 = vector.broadcast %cst_721 : f32 to vector<8x16xf32>
      %1882 = arith.minimumf %1881, %1880 : vector<8x16xf32>
      %c0_722 = arith.constant 0 : index
      %c38 = arith.constant 38 : index
      %1883 = arith.index_cast %3 : i32 to index
      %c0_723 = arith.constant 0 : index
      %1884 = vector.load %arg3[%c0_722, %c38, %1883, %c0_723] : memref<1x62x16x16xf32, #tpu.memory_space<vmem>>, vector<1x1x8x16xf32>
      %1885 = vector.shape_cast %1884 : vector<1x1x8x16xf32> to vector<8x16xf32>
      %1886 = vector.shape_cast %1882 : vector<8x16xf32> to vector<1x1x8x16xf32>
      tpu.vector_store %arg3[%c0_722, %c38, %1883, %c0_723], %1886 {strides = array<i32>} : memref<1x62x16x16xf32, #tpu.memory_space<vmem>>, vector<1x1x8x16xf32>,
      %cst_724 = arith.constant 9.78699219E-8 : f32
      %1887 = vector.broadcast %cst_724 : f32 to vector<8x16xf32>
      %1888 = arith.mulf %1887, %8 : vector<8x16xf32>
      %cst_725 = arith.constant 6.75849151E-5 : f32
      %1889 = vector.broadcast %cst_725 : f32 to vector<8x16xf32>
      %1890 = arith.mulf %1889, %13 : vector<8x16xf32>
      %1891 = arith.addf %1888, %1890 : vector<8x16xf32>
      %cst_726 = arith.constant -0.00339043047 : f32
      %1892 = vector.broadcast %cst_726 : f32 to vector<8x16xf32>
      %1893 = arith.mulf %1892, %18 : vector<8x16xf32>
      %1894 = arith.addf %1891, %1893 : vector<8x16xf32>
      %cst_727 = arith.constant -0.0374344736 : f32
      %1895 = vector.broadcast %cst_727 : f32 to vector<8x16xf32>
      %1896 = arith.mulf %1895, %23 : vector<8x16xf32>
      %1897 = arith.addf %1894, %1896 : vector<8x16xf32>
      %cst_728 = arith.constant -2.73467118E-17 : f32
      %1898 = vector.broadcast %cst_728 : f32 to vector<8x16xf32>
      %1899 = arith.mulf %1898, %28 : vector<8x16xf32>
      %1900 = arith.addf %1897, %1899 : vector<8x16xf32>
      %cst_729 = arith.constant 6.75849151E-5 : f32
      %1901 = vector.broadcast %cst_729 : f32 to vector<8x16xf32>
      %1902 = arith.mulf %1901, %33 : vector<8x16xf32>
      %1903 = arith.addf %1900, %1902 : vector<8x16xf32>
      %cst_730 = arith.constant -0.00921614561 : f32
      %1904 = vector.broadcast %cst_730 : f32 to vector<8x16xf32>
      %1905 = arith.mulf %1904, %38 : vector<8x16xf32>
      %1906 = arith.addf %1903, %1905 : vector<8x16xf32>
      %cst_731 = arith.constant -0.276605427 : f32
      %1907 = vector.broadcast %cst_731 : f32 to vector<8x16xf32>
      %1908 = arith.mulf %1907, %43 : vector<8x16xf32>
      %1909 = arith.addf %1906, %1908 : vector<8x16xf32>
      %cst_732 = arith.constant -3.04216462E-16 : f32
      %1910 = vector.broadcast %cst_732 : f32 to vector<8x16xf32>
      %1911 = arith.mulf %1910, %48 : vector<8x16xf32>
      %1912 = arith.addf %1909, %1911 : vector<8x16xf32>
      %cst_733 = arith.constant 0.0374344736 : f32
      %1913 = vector.broadcast %cst_733 : f32 to vector<8x16xf32>
      %1914 = arith.mulf %1913, %53 : vector<8x16xf32>
      %1915 = arith.addf %1912, %1914 : vector<8x16xf32>
      %cst_734 = arith.constant -0.00339043047 : f32
      %1916 = vector.broadcast %cst_734 : f32 to vector<8x16xf32>
      %1917 = arith.mulf %1916, %58 : vector<8x16xf32>
      %1918 = arith.addf %1915, %1917 : vector<8x16xf32>
      %cst_735 = arith.constant -0.276605427 : f32
      %1919 = vector.broadcast %cst_735 : f32 to vector<8x16xf32>
      %1920 = arith.mulf %1919, %63 : vector<8x16xf32>
      %1921 = arith.addf %1918, %1920 : vector<8x16xf32>
      %cst_736 = arith.constant 6.12323426E-17 : f32
      %1922 = vector.broadcast %cst_736 : f32 to vector<8x16xf32>
      %1923 = arith.mulf %1922, %68 : vector<8x16xf32>
      %1924 = arith.addf %1921, %1923 : vector<8x16xf32>
      %cst_737 = arith.constant 0.276605427 : f32
      %1925 = vector.broadcast %cst_737 : f32 to vector<8x16xf32>
      %1926 = arith.mulf %1925, %73 : vector<8x16xf32>
      %1927 = arith.addf %1924, %1926 : vector<8x16xf32>
      %cst_738 = arith.constant 0.00339043047 : f32
      %1928 = vector.broadcast %cst_738 : f32 to vector<8x16xf32>
      %1929 = arith.mulf %1928, %78 : vector<8x16xf32>
      %1930 = arith.addf %1927, %1929 : vector<8x16xf32>
      %cst_739 = arith.constant -0.0374344736 : f32
      %1931 = vector.broadcast %cst_739 : f32 to vector<8x16xf32>
      %1932 = arith.mulf %1931, %83 : vector<8x16xf32>
      %1933 = arith.addf %1930, %1932 : vector<8x16xf32>
      %cst_740 = arith.constant 3.49268689E-16 : f32
      %1934 = vector.broadcast %cst_740 : f32 to vector<8x16xf32>
      %1935 = arith.mulf %1934, %88 : vector<8x16xf32>
      %1936 = arith.addf %1933, %1935 : vector<8x16xf32>
      %cst_741 = arith.constant 0.276605427 : f32
      %1937 = vector.broadcast %cst_741 : f32 to vector<8x16xf32>
      %1938 = arith.mulf %1937, %93 : vector<8x16xf32>
      %1939 = arith.addf %1936, %1938 : vector<8x16xf32>
      %cst_742 = arith.constant 0.00921614561 : f32
      %1940 = vector.broadcast %cst_742 : f32 to vector<8x16xf32>
      %1941 = arith.mulf %1940, %98 : vector<8x16xf32>
      %1942 = arith.addf %1939, %1941 : vector<8x16xf32>
      %cst_743 = arith.constant -6.75849151E-5 : f32
      %1943 = vector.broadcast %cst_743 : f32 to vector<8x16xf32>
      %1944 = arith.mulf %1943, %103 : vector<8x16xf32>
      %1945 = arith.addf %1942, %1944 : vector<8x16xf32>
      %cst_744 = arith.constant 2.95897295E-17 : f32
      %1946 = vector.broadcast %cst_744 : f32 to vector<8x16xf32>
      %1947 = arith.mulf %1946, %108 : vector<8x16xf32>
      %1948 = arith.addf %1945, %1947 : vector<8x16xf32>
      %cst_745 = arith.constant 0.0374344736 : f32
      %1949 = vector.broadcast %cst_745 : f32 to vector<8x16xf32>
      %1950 = arith.mulf %1949, %113 : vector<8x16xf32>
      %1951 = arith.addf %1948, %1950 : vector<8x16xf32>
      %cst_746 = arith.constant 0.00339043047 : f32
      %1952 = vector.broadcast %cst_746 : f32 to vector<8x16xf32>
      %1953 = arith.mulf %1952, %118 : vector<8x16xf32>
      %1954 = arith.addf %1951, %1953 : vector<8x16xf32>
      %cst_747 = arith.constant -6.75849151E-5 : f32
      %1955 = vector.broadcast %cst_747 : f32 to vector<8x16xf32>
      %1956 = arith.mulf %1955, %123 : vector<8x16xf32>
      %1957 = arith.addf %1954, %1956 : vector<8x16xf32>
      %cst_748 = arith.constant -9.78699219E-8 : f32
      %1958 = vector.broadcast %cst_748 : f32 to vector<8x16xf32>
      %1959 = arith.mulf %1958, %128 : vector<8x16xf32>
      %1960 = arith.addf %1957, %1959 : vector<8x16xf32>
      %cst_749 = arith.constant -5.000000e+00 : f32
      %cst_750 = arith.constant 5.000000e+00 : f32
      %1961 = vector.broadcast %cst_749 : f32 to vector<8x16xf32>
      %1962 = arith.maximumf %1961, %1960 : vector<8x16xf32>
      %1963 = vector.broadcast %cst_750 : f32 to vector<8x16xf32>
      %1964 = arith.minimumf %1963, %1962 : vector<8x16xf32>
      %c0_751 = arith.constant 0 : index
      %c39 = arith.constant 39 : index
      %1965 = arith.index_cast %3 : i32 to index
      %c0_752 = arith.constant 0 : index
      %1966 = vector.load %arg3[%c0_751, %c39, %1965, %c0_752] : memref<1x62x16x16xf32, #tpu.memory_space<vmem>>, vector<1x1x8x16xf32>
      %1967 = vector.shape_cast %1966 : vector<1x1x8x16xf32> to vector<8x16xf32>
      %1968 = vector.shape_cast %1964 : vector<8x16xf32> to vector<1x1x8x16xf32>
      tpu.vector_store %arg3[%c0_751, %c39, %1965, %c0_752], %1968 {strides = array<i32>} : memref<1x62x16x16xf32, #tpu.memory_space<vmem>>, vector<1x1x8x16xf32>,
      %cst_753 = arith.constant -0.0158279911 : f32
      %1969 = vector.broadcast %cst_753 : f32 to vector<8x16xf32>
      %1970 = arith.mulf %1969, %8 : vector<8x16xf32>
      %cst_754 = arith.constant 3.763810e-02 : f32
      %1971 = vector.broadcast %cst_754 : f32 to vector<8x16xf32>
      %1972 = arith.mulf %1971, %13 : vector<8x16xf32>
      %1973 = arith.addf %1970, %1972 : vector<8x16xf32>
      %cst_755 = arith.constant 0.0746621191 : f32
      %1974 = vector.broadcast %cst_755 : f32 to vector<8x16xf32>
      %1975 = arith.mulf %1974, %18 : vector<8x16xf32>
      %1976 = arith.addf %1973, %1975 : vector<8x16xf32>
      %cst_756 = arith.constant -0.352296859 : f32
      %1977 = vector.broadcast %cst_756 : f32 to vector<8x16xf32>
      %1978 = arith.mulf %1977, %23 : vector<8x16xf32>
      %1979 = arith.addf %1976, %1978 : vector<8x16xf32>
      %cst_757 = arith.constant 0.36787945 : f32
      %1980 = vector.broadcast %cst_757 : f32 to vector<8x16xf32>
      %1981 = arith.mulf %1980, %28 : vector<8x16xf32>
      %1982 = arith.addf %1979, %1981 : vector<8x16xf32>
      %cst_758 = arith.constant 3.763810e-02 : f32
      %1983 = vector.broadcast %cst_758 : f32 to vector<8x16xf32>
      %1984 = arith.mulf %1983, %33 : vector<8x16xf32>
      %1985 = arith.addf %1982, %1984 : vector<8x16xf32>
      %cst_759 = arith.constant 0.095868066 : f32
      %1986 = vector.broadcast %cst_759 : f32 to vector<8x16xf32>
      %1987 = arith.mulf %1986, %38 : vector<8x16xf32>
      %1988 = arith.addf %1985, %1987 : vector<8x16xf32>
      %cst_760 = arith.constant -0.580839336 : f32
      %1989 = vector.broadcast %cst_760 : f32 to vector<8x16xf32>
      %1990 = arith.mulf %1989, %43 : vector<8x16xf32>
      %1991 = arith.addf %1988, %1990 : vector<8x16xf32>
      %cst_761 = arith.constant 0.778800785 : f32
      %1992 = vector.broadcast %cst_761 : f32 to vector<8x16xf32>
      %1993 = arith.mulf %1992, %48 : vector<8x16xf32>
      %1994 = arith.addf %1991, %1993 : vector<8x16xf32>
      %cst_762 = arith.constant -0.352296859 : f32
      %1995 = vector.broadcast %cst_762 : f32 to vector<8x16xf32>
      %1996 = arith.mulf %1995, %53 : vector<8x16xf32>
      %1997 = arith.addf %1994, %1996 : vector<8x16xf32>
      %cst_763 = arith.constant 0.0746621191 : f32
      %1998 = vector.broadcast %cst_763 : f32 to vector<8x16xf32>
      %1999 = arith.mulf %1998, %58 : vector<8x16xf32>
      %2000 = arith.addf %1997, %1999 : vector<8x16xf32>
      %cst_764 = arith.constant -0.580839336 : f32
      %2001 = vector.broadcast %cst_764 : f32 to vector<8x16xf32>
      %2002 = arith.mulf %2001, %63 : vector<8x16xf32>
      %2003 = arith.addf %2000, %2002 : vector<8x16xf32>
      %cst_765 = arith.constant 1.000000e+00 : f32
      %2004 = vector.broadcast %cst_765 : f32 to vector<8x16xf32>
      %2005 = arith.mulf %2004, %68 : vector<8x16xf32>
      %2006 = arith.addf %2003, %2005 : vector<8x16xf32>
      %cst_766 = arith.constant -0.580839336 : f32
      %2007 = vector.broadcast %cst_766 : f32 to vector<8x16xf32>
      %2008 = arith.mulf %2007, %73 : vector<8x16xf32>
      %2009 = arith.addf %2006, %2008 : vector<8x16xf32>
      %cst_767 = arith.constant 0.0746621191 : f32
      %2010 = vector.broadcast %cst_767 : f32 to vector<8x16xf32>
      %2011 = arith.mulf %2010, %78 : vector<8x16xf32>
      %2012 = arith.addf %2009, %2011 : vector<8x16xf32>
      %cst_768 = arith.constant -0.352296859 : f32
      %2013 = vector.broadcast %cst_768 : f32 to vector<8x16xf32>
      %2014 = arith.mulf %2013, %83 : vector<8x16xf32>
      %2015 = arith.addf %2012, %2014 : vector<8x16xf32>
      %cst_769 = arith.constant 0.778800785 : f32
      %2016 = vector.broadcast %cst_769 : f32 to vector<8x16xf32>
      %2017 = arith.mulf %2016, %88 : vector<8x16xf32>
      %2018 = arith.addf %2015, %2017 : vector<8x16xf32>
      %cst_770 = arith.constant -0.580839336 : f32
      %2019 = vector.broadcast %cst_770 : f32 to vector<8x16xf32>
      %2020 = arith.mulf %2019, %93 : vector<8x16xf32>
      %2021 = arith.addf %2018, %2020 : vector<8x16xf32>
      %cst_771 = arith.constant 0.095868066 : f32
      %2022 = vector.broadcast %cst_771 : f32 to vector<8x16xf32>
      %2023 = arith.mulf %2022, %98 : vector<8x16xf32>
      %2024 = arith.addf %2021, %2023 : vector<8x16xf32>
      %cst_772 = arith.constant 3.763810e-02 : f32
      %2025 = vector.broadcast %cst_772 : f32 to vector<8x16xf32>
      %2026 = arith.mulf %2025, %103 : vector<8x16xf32>
      %2027 = arith.addf %2024, %2026 : vector<8x16xf32>
      %cst_773 = arith.constant 0.36787945 : f32
      %2028 = vector.broadcast %cst_773 : f32 to vector<8x16xf32>
      %2029 = arith.mulf %2028, %108 : vector<8x16xf32>
      %2030 = arith.addf %2027, %2029 : vector<8x16xf32>
      %cst_774 = arith.constant -0.352296859 : f32
      %2031 = vector.broadcast %cst_774 : f32 to vector<8x16xf32>
      %2032 = arith.mulf %2031, %113 : vector<8x16xf32>
      %2033 = arith.addf %2030, %2032 : vector<8x16xf32>
      %cst_775 = arith.constant 0.0746621191 : f32
      %2034 = vector.broadcast %cst_775 : f32 to vector<8x16xf32>
      %2035 = arith.mulf %2034, %118 : vector<8x16xf32>
      %2036 = arith.addf %2033, %2035 : vector<8x16xf32>
      %cst_776 = arith.constant 3.763810e-02 : f32
      %2037 = vector.broadcast %cst_776 : f32 to vector<8x16xf32>
      %2038 = arith.mulf %2037, %123 : vector<8x16xf32>
      %2039 = arith.addf %2036, %2038 : vector<8x16xf32>
      %cst_777 = arith.constant -0.0158279911 : f32
      %2040 = vector.broadcast %cst_777 : f32 to vector<8x16xf32>
      %2041 = arith.mulf %2040, %128 : vector<8x16xf32>
      %2042 = arith.addf %2039, %2041 : vector<8x16xf32>
      %cst_778 = arith.constant -5.000000e+00 : f32
      %cst_779 = arith.constant 5.000000e+00 : f32
      %2043 = vector.broadcast %cst_778 : f32 to vector<8x16xf32>
      %2044 = arith.maximumf %2043, %2042 : vector<8x16xf32>
      %2045 = vector.broadcast %cst_779 : f32 to vector<8x16xf32>
      %2046 = arith.minimumf %2045, %2044 : vector<8x16xf32>
      %c0_780 = arith.constant 0 : index
      %c40 = arith.constant 40 : index
      %2047 = arith.index_cast %3 : i32 to index
      %c0_781 = arith.constant 0 : index
      %2048 = vector.load %arg3[%c0_780, %c40, %2047, %c0_781] : memref<1x62x16x16xf32, #tpu.memory_space<vmem>>, vector<1x1x8x16xf32>
      %2049 = vector.shape_cast %2048 : vector<1x1x8x16xf32> to vector<8x16xf32>
      %2050 = vector.shape_cast %2046 : vector<8x16xf32> to vector<1x1x8x16xf32>
      tpu.vector_store %arg3[%c0_780, %c40, %2047, %c0_781], %2050 {strides = array<i32>} : memref<1x62x16x16xf32, #tpu.memory_space<vmem>>, vector<1x1x8x16xf32>,
      %cst_782 = arith.constant -0.00921614561 : f32
      %2051 = vector.broadcast %cst_782 : f32 to vector<8x16xf32>
      %2052 = arith.mulf %2051, %8 : vector<8x16xf32>
      %cst_783 = arith.constant 0.0915807187 : f32
      %2053 = vector.broadcast %cst_783 : f32 to vector<8x16xf32>
      %2054 = arith.mulf %2053, %13 : vector<8x16xf32>
      %2055 = arith.addf %2052, %2054 : vector<8x16xf32>
      %cst_784 = arith.constant -0.276605427 : f32
      %2056 = vector.broadcast %cst_784 : f32 to vector<8x16xf32>
      %2057 = arith.mulf %2056, %18 : vector<8x16xf32>
      %2058 = arith.addf %2055, %2057 : vector<8x16xf32>
      %cst_785 = arith.constant 0.269812167 : f32
      %2059 = vector.broadcast %cst_785 : f32 to vector<8x16xf32>
      %2060 = arith.mulf %2059, %23 : vector<8x16xf32>
      %2061 = arith.addf %2058, %2060 : vector<8x16xf32>
      %cst_786 = arith.constant -3.04216462E-16 : f32
      %2062 = vector.broadcast %cst_786 : f32 to vector<8x16xf32>
      %2063 = arith.mulf %2062, %28 : vector<8x16xf32>
      %2064 = arith.addf %2061, %2063 : vector<8x16xf32>
      %cst_787 = arith.constant 0.0915807187 : f32
      %2065 = vector.broadcast %cst_787 : f32 to vector<8x16xf32>
      %2066 = arith.mulf %2065, %33 : vector<8x16xf32>
      %2067 = arith.addf %2064, %2066 : vector<8x16xf32>
      %cst_788 = arith.constant -0.355168402 : f32
      %2068 = vector.broadcast %cst_788 : f32 to vector<8x16xf32>
      %2069 = arith.mulf %2068, %38 : vector<8x16xf32>
      %2070 = arith.addf %2067, %2069 : vector<8x16xf32>
      %cst_789 = arith.constant 0.444845051 : f32
      %2071 = vector.broadcast %cst_789 : f32 to vector<8x16xf32>
      %2072 = arith.mulf %2071, %43 : vector<8x16xf32>
      %2073 = arith.addf %2070, %2072 : vector<8x16xf32>
      %cst_790 = arith.constant -2.98169229E-16 : f32
      %2074 = vector.broadcast %cst_790 : f32 to vector<8x16xf32>
      %2075 = arith.mulf %2074, %48 : vector<8x16xf32>
      %2076 = arith.addf %2073, %2075 : vector<8x16xf32>
      %cst_791 = arith.constant -0.269812167 : f32
      %2077 = vector.broadcast %cst_791 : f32 to vector<8x16xf32>
      %2078 = arith.mulf %2077, %53 : vector<8x16xf32>
      %2079 = arith.addf %2076, %2078 : vector<8x16xf32>
      %cst_792 = arith.constant -0.276605427 : f32
      %2080 = vector.broadcast %cst_792 : f32 to vector<8x16xf32>
      %2081 = arith.mulf %2080, %58 : vector<8x16xf32>
      %2082 = arith.addf %2079, %2081 : vector<8x16xf32>
      %cst_793 = arith.constant 0.444845051 : f32
      %2083 = vector.broadcast %cst_793 : f32 to vector<8x16xf32>
      %2084 = arith.mulf %2083, %63 : vector<8x16xf32>
      %2085 = arith.addf %2082, %2084 : vector<8x16xf32>
      %cst_794 = arith.constant 6.12323426E-17 : f32
      %2086 = vector.broadcast %cst_794 : f32 to vector<8x16xf32>
      %2087 = arith.mulf %2086, %68 : vector<8x16xf32>
      %2088 = arith.addf %2085, %2087 : vector<8x16xf32>
      %cst_795 = arith.constant -0.444845051 : f32
      %2089 = vector.broadcast %cst_795 : f32 to vector<8x16xf32>
      %2090 = arith.mulf %2089, %73 : vector<8x16xf32>
      %2091 = arith.addf %2088, %2090 : vector<8x16xf32>
      %cst_796 = arith.constant 0.276605427 : f32
      %2092 = vector.broadcast %cst_796 : f32 to vector<8x16xf32>
      %2093 = arith.mulf %2092, %78 : vector<8x16xf32>
      %2094 = arith.addf %2091, %2093 : vector<8x16xf32>
      %cst_797 = arith.constant 0.269812167 : f32
      %2095 = vector.broadcast %cst_797 : f32 to vector<8x16xf32>
      %2096 = arith.mulf %2095, %83 : vector<8x16xf32>
      %2097 = arith.addf %2094, %2096 : vector<8x16xf32>
      %cst_798 = arith.constant 3.93544822E-16 : f32
      %2098 = vector.broadcast %cst_798 : f32 to vector<8x16xf32>
      %2099 = arith.mulf %2098, %88 : vector<8x16xf32>
      %2100 = arith.addf %2097, %2099 : vector<8x16xf32>
      %cst_799 = arith.constant -0.444845051 : f32
      %2101 = vector.broadcast %cst_799 : f32 to vector<8x16xf32>
      %2102 = arith.mulf %2101, %93 : vector<8x16xf32>
      %2103 = arith.addf %2100, %2102 : vector<8x16xf32>
      %cst_800 = arith.constant 0.355168402 : f32
      %2104 = vector.broadcast %cst_800 : f32 to vector<8x16xf32>
      %2105 = arith.mulf %2104, %98 : vector<8x16xf32>
      %2106 = arith.addf %2103, %2105 : vector<8x16xf32>
      %cst_801 = arith.constant -0.0915807187 : f32
      %2107 = vector.broadcast %cst_801 : f32 to vector<8x16xf32>
      %2108 = arith.mulf %2107, %103 : vector<8x16xf32>
      %2109 = arith.addf %2106, %2108 : vector<8x16xf32>
      %cst_802 = arith.constant 3.49268689E-16 : f32
      %2110 = vector.broadcast %cst_802 : f32 to vector<8x16xf32>
      %2111 = arith.mulf %2110, %108 : vector<8x16xf32>
      %2112 = arith.addf %2109, %2111 : vector<8x16xf32>
      %cst_803 = arith.constant -0.269812167 : f32
      %2113 = vector.broadcast %cst_803 : f32 to vector<8x16xf32>
      %2114 = arith.mulf %2113, %113 : vector<8x16xf32>
      %2115 = arith.addf %2112, %2114 : vector<8x16xf32>
      %cst_804 = arith.constant 0.276605427 : f32
      %2116 = vector.broadcast %cst_804 : f32 to vector<8x16xf32>
      %2117 = arith.mulf %2116, %118 : vector<8x16xf32>
      %2118 = arith.addf %2115, %2117 : vector<8x16xf32>
      %cst_805 = arith.constant -0.0915807187 : f32
      %2119 = vector.broadcast %cst_805 : f32 to vector<8x16xf32>
      %2120 = arith.mulf %2119, %123 : vector<8x16xf32>
      %2121 = arith.addf %2118, %2120 : vector<8x16xf32>
      %cst_806 = arith.constant 0.00921614561 : f32
      %2122 = vector.broadcast %cst_806 : f32 to vector<8x16xf32>
      %2123 = arith.mulf %2122, %128 : vector<8x16xf32>
      %2124 = arith.addf %2121, %2123 : vector<8x16xf32>
      %cst_807 = arith.constant -5.000000e+00 : f32
      %cst_808 = arith.constant 5.000000e+00 : f32
      %2125 = vector.broadcast %cst_807 : f32 to vector<8x16xf32>
      %2126 = arith.maximumf %2125, %2124 : vector<8x16xf32>
      %2127 = vector.broadcast %cst_808 : f32 to vector<8x16xf32>
      %2128 = arith.minimumf %2127, %2126 : vector<8x16xf32>
      %c0_809 = arith.constant 0 : index
      %c41 = arith.constant 41 : index
      %2129 = arith.index_cast %3 : i32 to index
      %c0_810 = arith.constant 0 : index
      %2130 = vector.load %arg3[%c0_809, %c41, %2129, %c0_810] : memref<1x62x16x16xf32, #tpu.memory_space<vmem>>, vector<1x1x8x16xf32>
      %2131 = vector.shape_cast %2130 : vector<1x1x8x16xf32> to vector<8x16xf32>
      %2132 = vector.shape_cast %2128 : vector<8x16xf32> to vector<1x1x8x16xf32>
      tpu.vector_store %arg3[%c0_809, %c41, %2129, %c0_810], %2132 {strides = array<i32>} : memref<1x62x16x16xf32, #tpu.memory_space<vmem>>, vector<1x1x8x16xf32>,
      %cst_811 = arith.constant 5.84405882E-7 : f32
      %2133 = vector.broadcast %cst_811 : f32 to vector<8x16xf32>
      %2134 = arith.mulf %2133, %8 : vector<8x16xf32>
      %cst_812 = arith.constant -4.71403036E-5 : f32
      %2135 = vector.broadcast %cst_812 : f32 to vector<8x16xf32>
      %2136 = arith.mulf %2135, %13 : vector<8x16xf32>
      %2137 = arith.addf %2134, %2136 : vector<8x16xf32>
      %cst_813 = arith.constant 7.31926353E-4 : f32
      %2138 = vector.broadcast %cst_813 : f32 to vector<8x16xf32>
      %2139 = arith.mulf %2138, %18 : vector<8x16xf32>
      %2140 = arith.addf %2137, %2139 : vector<8x16xf32>
      %cst_814 = arith.constant -0.00207717228 : f32
      %2141 = vector.broadcast %cst_814 : f32 to vector<8x16xf32>
      %2142 = arith.mulf %2141, %23 : vector<8x16xf32>
      %2143 = arith.addf %2140, %2142 : vector<8x16xf32>
      %cst_815 = arith.constant 7.41817581E-4 : f32
      %2144 = vector.broadcast %cst_815 : f32 to vector<8x16xf32>
      %2145 = arith.mulf %2144, %28 : vector<8x16xf32>
      %2146 = arith.addf %2143, %2145 : vector<8x16xf32>
      %cst_816 = arith.constant 8.84057953E-4 : f32
      %2147 = vector.broadcast %cst_816 : f32 to vector<8x16xf32>
      %2148 = arith.mulf %2147, %33 : vector<8x16xf32>
      %2149 = arith.addf %2146, %2148 : vector<8x16xf32>
      %cst_817 = arith.constant -0.0276698675 : f32
      %2150 = vector.broadcast %cst_817 : f32 to vector<8x16xf32>
      %2151 = arith.mulf %2150, %38 : vector<8x16xf32>
      %2152 = arith.addf %2149, %2151 : vector<8x16xf32>
      %cst_818 = arith.constant 0.164581165 : f32
      %2153 = vector.broadcast %cst_818 : f32 to vector<8x16xf32>
      %2154 = arith.mulf %2153, %43 : vector<8x16xf32>
      %2155 = arith.addf %2152, %2154 : vector<8x16xf32>
      %cst_819 = arith.constant -1.862880e-01 : f32
      %2156 = vector.broadcast %cst_819 : f32 to vector<8x16xf32>
      %2157 = arith.mulf %2156, %48 : vector<8x16xf32>
      %2158 = arith.addf %2155, %2157 : vector<8x16xf32>
      %cst_820 = arith.constant 0.0347614326 : f32
      %2159 = vector.broadcast %cst_820 : f32 to vector<8x16xf32>
      %2160 = arith.mulf %2159, %53 : vector<8x16xf32>
      %2161 = arith.addf %2158, %2160 : vector<8x16xf32>
      %cst_821 = arith.constant 0.0350644775 : f32
      %2162 = vector.broadcast %cst_821 : f32 to vector<8x16xf32>
      %2163 = arith.mulf %2162, %58 : vector<8x16xf32>
      %2164 = arith.addf %2161, %2163 : vector<8x16xf32>
      %cst_822 = arith.constant -0.438738555 : f32
      %2165 = vector.broadcast %cst_822 : f32 to vector<8x16xf32>
      %2166 = arith.mulf %2165, %63 : vector<8x16xf32>
      %2167 = arith.addf %2164, %2166 : vector<8x16xf32>
      %cst_823 = arith.constant 1.000000e+00 : f32
      %2168 = vector.broadcast %cst_823 : f32 to vector<8x16xf32>
      %2169 = arith.mulf %2168, %68 : vector<8x16xf32>
      %2170 = arith.addf %2167, %2169 : vector<8x16xf32>
      %cst_824 = arith.constant -0.438738555 : f32
      %2171 = vector.broadcast %cst_824 : f32 to vector<8x16xf32>
      %2172 = arith.mulf %2171, %73 : vector<8x16xf32>
      %2173 = arith.addf %2170, %2172 : vector<8x16xf32>
      %cst_825 = arith.constant 0.0350644775 : f32
      %2174 = vector.broadcast %cst_825 : f32 to vector<8x16xf32>
      %2175 = arith.mulf %2174, %78 : vector<8x16xf32>
      %2176 = arith.addf %2173, %2175 : vector<8x16xf32>
      %cst_826 = arith.constant 0.0347614326 : f32
      %2177 = vector.broadcast %cst_826 : f32 to vector<8x16xf32>
      %2178 = arith.mulf %2177, %83 : vector<8x16xf32>
      %2179 = arith.addf %2176, %2178 : vector<8x16xf32>
      %cst_827 = arith.constant -1.862880e-01 : f32
      %2180 = vector.broadcast %cst_827 : f32 to vector<8x16xf32>
      %2181 = arith.mulf %2180, %88 : vector<8x16xf32>
      %2182 = arith.addf %2179, %2181 : vector<8x16xf32>
      %cst_828 = arith.constant 0.164581165 : f32
      %2183 = vector.broadcast %cst_828 : f32 to vector<8x16xf32>
      %2184 = arith.mulf %2183, %93 : vector<8x16xf32>
      %2185 = arith.addf %2182, %2184 : vector<8x16xf32>
      %cst_829 = arith.constant -0.0276698675 : f32
      %2186 = vector.broadcast %cst_829 : f32 to vector<8x16xf32>
      %2187 = arith.mulf %2186, %98 : vector<8x16xf32>
      %2188 = arith.addf %2185, %2187 : vector<8x16xf32>
      %cst_830 = arith.constant 8.84057953E-4 : f32
      %2189 = vector.broadcast %cst_830 : f32 to vector<8x16xf32>
      %2190 = arith.mulf %2189, %103 : vector<8x16xf32>
      %2191 = arith.addf %2188, %2190 : vector<8x16xf32>
      %cst_831 = arith.constant 7.41817581E-4 : f32
      %2192 = vector.broadcast %cst_831 : f32 to vector<8x16xf32>
      %2193 = arith.mulf %2192, %108 : vector<8x16xf32>
      %2194 = arith.addf %2191, %2193 : vector<8x16xf32>
      %cst_832 = arith.constant -0.00207717228 : f32
      %2195 = vector.broadcast %cst_832 : f32 to vector<8x16xf32>
      %2196 = arith.mulf %2195, %113 : vector<8x16xf32>
      %2197 = arith.addf %2194, %2196 : vector<8x16xf32>
      %cst_833 = arith.constant 7.31926353E-4 : f32
      %2198 = vector.broadcast %cst_833 : f32 to vector<8x16xf32>
      %2199 = arith.mulf %2198, %118 : vector<8x16xf32>
      %2200 = arith.addf %2197, %2199 : vector<8x16xf32>
      %cst_834 = arith.constant -4.71403036E-5 : f32
      %2201 = vector.broadcast %cst_834 : f32 to vector<8x16xf32>
      %2202 = arith.mulf %2201, %123 : vector<8x16xf32>
      %2203 = arith.addf %2200, %2202 : vector<8x16xf32>
      %cst_835 = arith.constant 5.84405882E-7 : f32
      %2204 = vector.broadcast %cst_835 : f32 to vector<8x16xf32>
      %2205 = arith.mulf %2204, %128 : vector<8x16xf32>
      %2206 = arith.addf %2203, %2205 : vector<8x16xf32>
      %cst_836 = arith.constant -5.000000e+00 : f32
      %cst_837 = arith.constant 5.000000e+00 : f32
      %2207 = vector.broadcast %cst_836 : f32 to vector<8x16xf32>
      %2208 = arith.maximumf %2207, %2206 : vector<8x16xf32>
      %2209 = vector.broadcast %cst_837 : f32 to vector<8x16xf32>
      %2210 = arith.minimumf %2209, %2208 : vector<8x16xf32>
      %c0_838 = arith.constant 0 : index
      %c42 = arith.constant 42 : index
      %2211 = arith.index_cast %3 : i32 to index
      %c0_839 = arith.constant 0 : index
      %2212 = vector.load %arg3[%c0_838, %c42, %2211, %c0_839] : memref<1x62x16x16xf32, #tpu.memory_space<vmem>>, vector<1x1x8x16xf32>
      %2213 = vector.shape_cast %2212 : vector<1x1x8x16xf32> to vector<8x16xf32>
      %2214 = vector.shape_cast %2210 : vector<8x16xf32> to vector<1x1x8x16xf32>
      tpu.vector_store %arg3[%c0_838, %c42, %2211, %c0_839], %2214 {strides = array<i32>} : memref<1x62x16x16xf32, #tpu.memory_space<vmem>>, vector<1x1x8x16xf32>,
      %cst_840 = arith.constant -2.89944296E-7 : f32
      %2215 = vector.broadcast %cst_840 : f32 to vector<8x16xf32>
      %2216 = arith.mulf %2215, %8 : vector<8x16xf32>
      %cst_841 = arith.constant 5.64094421E-7 : f32
      %2217 = vector.broadcast %cst_841 : f32 to vector<8x16xf32>
      %2218 = arith.mulf %2217, %13 : vector<8x16xf32>
      %2219 = arith.addf %2216, %2218 : vector<8x16xf32>
      %cst_842 = arith.constant 3.41558829E-4 : f32
      %2220 = vector.broadcast %cst_842 : f32 to vector<8x16xf32>
      %2221 = arith.mulf %2220, %18 : vector<8x16xf32>
      %2222 = arith.addf %2219, %2221 : vector<8x16xf32>
      %cst_843 = arith.constant -0.0025394808 : f32
      %2223 = vector.broadcast %cst_843 : f32 to vector<8x16xf32>
      %2224 = arith.mulf %2223, %23 : vector<8x16xf32>
      %2225 = arith.addf %2222, %2224 : vector<8x16xf32>
      %cst_844 = arith.constant 0.0030711221 : f32
      %2226 = vector.broadcast %cst_844 : f32 to vector<8x16xf32>
      %2227 = arith.mulf %2226, %28 : vector<8x16xf32>
      %2228 = arith.addf %2225, %2227 : vector<8x16xf32>
      %cst_845 = arith.constant -7.13239191E-4 : f32
      %2229 = vector.broadcast %cst_845 : f32 to vector<8x16xf32>
      %2230 = arith.mulf %2229, %33 : vector<8x16xf32>
      %2231 = arith.addf %2228, %2230 : vector<8x16xf32>
      %cst_846 = arith.constant 0.00648675672 : f32
      %2232 = vector.broadcast %cst_846 : f32 to vector<8x16xf32>
      %2233 = arith.mulf %2232, %38 : vector<8x16xf32>
      %2234 = arith.addf %2231, %2233 : vector<8x16xf32>
      %cst_847 = arith.constant 0.0365115628 : f32
      %2235 = vector.broadcast %cst_847 : f32 to vector<8x16xf32>
      %2236 = arith.mulf %2235, %43 : vector<8x16xf32>
      %2237 = arith.addf %2234, %2236 : vector<8x16xf32>
      %cst_848 = arith.constant -0.146648258 : f32
      %2238 = vector.broadcast %cst_848 : f32 to vector<8x16xf32>
      %2239 = arith.mulf %2238, %48 : vector<8x16xf32>
      %2240 = arith.addf %2237, %2239 : vector<8x16xf32>
      %cst_849 = arith.constant 0.0709955096 : f32
      %2241 = vector.broadcast %cst_849 : f32 to vector<8x16xf32>
      %2242 = arith.mulf %2241, %53 : vector<8x16xf32>
      %2243 = arith.addf %2240, %2242 : vector<8x16xf32>
      %cst_850 = arith.constant -0.0439309254 : f32
      %2244 = vector.broadcast %cst_850 : f32 to vector<8x16xf32>
      %2245 = arith.mulf %2244, %58 : vector<8x16xf32>
      %2246 = arith.addf %2243, %2245 : vector<8x16xf32>
      %cst_851 = arith.constant 0.211169854 : f32
      %2247 = vector.broadcast %cst_851 : f32 to vector<8x16xf32>
      %2248 = arith.mulf %2247, %63 : vector<8x16xf32>
      %2249 = arith.addf %2246, %2248 : vector<8x16xf32>
      %cst_852 = arith.constant 6.12323426E-17 : f32
      %2250 = vector.broadcast %cst_852 : f32 to vector<8x16xf32>
      %2251 = arith.mulf %2250, %68 : vector<8x16xf32>
      %2252 = arith.addf %2249, %2251 : vector<8x16xf32>
      %cst_853 = arith.constant -0.211169854 : f32
      %2253 = vector.broadcast %cst_853 : f32 to vector<8x16xf32>
      %2254 = arith.mulf %2253, %73 : vector<8x16xf32>
      %2255 = arith.addf %2252, %2254 : vector<8x16xf32>
      %cst_854 = arith.constant 0.0439309254 : f32
      %2256 = vector.broadcast %cst_854 : f32 to vector<8x16xf32>
      %2257 = arith.mulf %2256, %78 : vector<8x16xf32>
      %2258 = arith.addf %2255, %2257 : vector<8x16xf32>
      %cst_855 = arith.constant -0.0709955096 : f32
      %2259 = vector.broadcast %cst_855 : f32 to vector<8x16xf32>
      %2260 = arith.mulf %2259, %83 : vector<8x16xf32>
      %2261 = arith.addf %2258, %2260 : vector<8x16xf32>
      %cst_856 = arith.constant 0.146648258 : f32
      %2262 = vector.broadcast %cst_856 : f32 to vector<8x16xf32>
      %2263 = arith.mulf %2262, %88 : vector<8x16xf32>
      %2264 = arith.addf %2261, %2263 : vector<8x16xf32>
      %cst_857 = arith.constant -0.0365115628 : f32
      %2265 = vector.broadcast %cst_857 : f32 to vector<8x16xf32>
      %2266 = arith.mulf %2265, %93 : vector<8x16xf32>
      %2267 = arith.addf %2264, %2266 : vector<8x16xf32>
      %cst_858 = arith.constant -0.00648675672 : f32
      %2268 = vector.broadcast %cst_858 : f32 to vector<8x16xf32>
      %2269 = arith.mulf %2268, %98 : vector<8x16xf32>
      %2270 = arith.addf %2267, %2269 : vector<8x16xf32>
      %cst_859 = arith.constant 7.13239191E-4 : f32
      %2271 = vector.broadcast %cst_859 : f32 to vector<8x16xf32>
      %2272 = arith.mulf %2271, %103 : vector<8x16xf32>
      %2273 = arith.addf %2270, %2272 : vector<8x16xf32>
      %cst_860 = arith.constant -0.0030711221 : f32
      %2274 = vector.broadcast %cst_860 : f32 to vector<8x16xf32>
      %2275 = arith.mulf %2274, %108 : vector<8x16xf32>
      %2276 = arith.addf %2273, %2275 : vector<8x16xf32>
      %cst_861 = arith.constant 0.0025394808 : f32
      %2277 = vector.broadcast %cst_861 : f32 to vector<8x16xf32>
      %2278 = arith.mulf %2277, %113 : vector<8x16xf32>
      %2279 = arith.addf %2276, %2278 : vector<8x16xf32>
      %cst_862 = arith.constant -3.41558829E-4 : f32
      %2280 = vector.broadcast %cst_862 : f32 to vector<8x16xf32>
      %2281 = arith.mulf %2280, %118 : vector<8x16xf32>
      %2282 = arith.addf %2279, %2281 : vector<8x16xf32>
      %cst_863 = arith.constant -5.64094421E-7 : f32
      %2283 = vector.broadcast %cst_863 : f32 to vector<8x16xf32>
      %2284 = arith.mulf %2283, %123 : vector<8x16xf32>
      %2285 = arith.addf %2282, %2284 : vector<8x16xf32>
      %cst_864 = arith.constant 2.89944296E-7 : f32
      %2286 = vector.broadcast %cst_864 : f32 to vector<8x16xf32>
      %2287 = arith.mulf %2286, %128 : vector<8x16xf32>
      %2288 = arith.addf %2285, %2287 : vector<8x16xf32>
      %cst_865 = arith.constant -5.000000e+00 : f32
      %cst_866 = arith.constant 5.000000e+00 : f32
      %2289 = vector.broadcast %cst_865 : f32 to vector<8x16xf32>
      %2290 = arith.maximumf %2289, %2288 : vector<8x16xf32>
      %2291 = vector.broadcast %cst_866 : f32 to vector<8x16xf32>
      %2292 = arith.minimumf %2291, %2290 : vector<8x16xf32>
      %c0_867 = arith.constant 0 : index
      %c43 = arith.constant 43 : index
      %2293 = arith.index_cast %3 : i32 to index
      %c0_868 = arith.constant 0 : index
      %2294 = vector.load %arg3[%c0_867, %c43, %2293, %c0_868] : memref<1x62x16x16xf32, #tpu.memory_space<vmem>>, vector<1x1x8x16xf32>
      %2295 = vector.shape_cast %2294 : vector<1x1x8x16xf32> to vector<8x16xf32>
      %2296 = vector.shape_cast %2292 : vector<8x16xf32> to vector<1x1x8x16xf32>
      tpu.vector_store %arg3[%c0_867, %c43, %2293, %c0_868], %2296 {strides = array<i32>} : memref<1x62x16x16xf32, #tpu.memory_space<vmem>>, vector<1x1x8x16xf32>,
      %cst_869 = arith.constant -0.0276698675 : f32
      %2297 = vector.broadcast %cst_869 : f32 to vector<8x16xf32>
      %2298 = arith.mulf %2297, %8 : vector<8x16xf32>
      %cst_870 = arith.constant 4.95749176E-4 : f32
      %2299 = vector.broadcast %cst_870 : f32 to vector<8x16xf32>
      %2300 = arith.mulf %2299, %13 : vector<8x16xf32>
      %2301 = arith.addf %2298, %2300 : vector<8x16xf32>
      %cst_871 = arith.constant 0.164581165 : f32
      %2302 = vector.broadcast %cst_871 : f32 to vector<8x16xf32>
      %2303 = arith.mulf %2302, %18 : vector<8x16xf32>
      %2304 = arith.addf %2301, %2303 : vector<8x16xf32>
      %cst_872 = arith.constant 0.102502681 : f32
      %2305 = vector.broadcast %cst_872 : f32 to vector<8x16xf32>
      %2306 = arith.mulf %2305, %23 : vector<8x16xf32>
      %2307 = arith.addf %2304, %2306 : vector<8x16xf32>
      %cst_873 = arith.constant -1.862880e-01 : f32
      %2308 = vector.broadcast %cst_873 : f32 to vector<8x16xf32>
      %2309 = arith.mulf %2308, %28 : vector<8x16xf32>
      %2310 = arith.addf %2307, %2309 : vector<8x16xf32>
      %cst_874 = arith.constant 0.173109591 : f32
      %2311 = vector.broadcast %cst_874 : f32 to vector<8x16xf32>
      %2312 = arith.mulf %2311, %33 : vector<8x16xf32>
      %2313 = arith.addf %2310, %2312 : vector<8x16xf32>
      %cst_875 = arith.constant -0.0471697897 : f32
      %2314 = vector.broadcast %cst_875 : f32 to vector<8x16xf32>
      %2315 = arith.mulf %2314, %38 : vector<8x16xf32>
      %2316 = arith.addf %2313, %2315 : vector<8x16xf32>
      %cst_876 = arith.constant -0.636957884 : f32
      %2317 = vector.broadcast %cst_876 : f32 to vector<8x16xf32>
      %2318 = arith.mulf %2317, %43 : vector<8x16xf32>
      %2319 = arith.addf %2316, %2318 : vector<8x16xf32>
      %cst_877 = arith.constant -0.22838895 : f32
      %2320 = vector.broadcast %cst_877 : f32 to vector<8x16xf32>
      %2321 = arith.mulf %2320, %48 : vector<8x16xf32>
      %2322 = arith.addf %2319, %2321 : vector<8x16xf32>
      %cst_878 = arith.constant 0.449885368 : f32
      %2323 = vector.broadcast %cst_878 : f32 to vector<8x16xf32>
      %2324 = arith.mulf %2323, %53 : vector<8x16xf32>
      %2325 = arith.addf %2322, %2324 : vector<8x16xf32>
      %cst_879 = arith.constant -0.438738555 : f32
      %2326 = vector.broadcast %cst_879 : f32 to vector<8x16xf32>
      %2327 = arith.mulf %2326, %58 : vector<8x16xf32>
      %2328 = arith.addf %2325, %2327 : vector<8x16xf32>
      %cst_880 = arith.constant 0.185793415 : f32
      %2329 = vector.broadcast %cst_880 : f32 to vector<8x16xf32>
      %2330 = arith.mulf %2329, %63 : vector<8x16xf32>
      %2331 = arith.addf %2328, %2330 : vector<8x16xf32>
      %cst_881 = arith.constant 1.000000e+00 : f32
      %2332 = vector.broadcast %cst_881 : f32 to vector<8x16xf32>
      %2333 = arith.mulf %2332, %68 : vector<8x16xf32>
      %2334 = arith.addf %2331, %2333 : vector<8x16xf32>
      %cst_882 = arith.constant 0.185793415 : f32
      %2335 = vector.broadcast %cst_882 : f32 to vector<8x16xf32>
      %2336 = arith.mulf %2335, %73 : vector<8x16xf32>
      %2337 = arith.addf %2334, %2336 : vector<8x16xf32>
      %cst_883 = arith.constant -0.438738555 : f32
      %2338 = vector.broadcast %cst_883 : f32 to vector<8x16xf32>
      %2339 = arith.mulf %2338, %78 : vector<8x16xf32>
      %2340 = arith.addf %2337, %2339 : vector<8x16xf32>
      %cst_884 = arith.constant 0.449885368 : f32
      %2341 = vector.broadcast %cst_884 : f32 to vector<8x16xf32>
      %2342 = arith.mulf %2341, %83 : vector<8x16xf32>
      %2343 = arith.addf %2340, %2342 : vector<8x16xf32>
      %cst_885 = arith.constant -0.22838895 : f32
      %2344 = vector.broadcast %cst_885 : f32 to vector<8x16xf32>
      %2345 = arith.mulf %2344, %88 : vector<8x16xf32>
      %2346 = arith.addf %2343, %2345 : vector<8x16xf32>
      %cst_886 = arith.constant -0.636957884 : f32
      %2347 = vector.broadcast %cst_886 : f32 to vector<8x16xf32>
      %2348 = arith.mulf %2347, %93 : vector<8x16xf32>
      %2349 = arith.addf %2346, %2348 : vector<8x16xf32>
      %cst_887 = arith.constant -0.0471697897 : f32
      %2350 = vector.broadcast %cst_887 : f32 to vector<8x16xf32>
      %2351 = arith.mulf %2350, %98 : vector<8x16xf32>
      %2352 = arith.addf %2349, %2351 : vector<8x16xf32>
      %cst_888 = arith.constant 0.173109591 : f32
      %2353 = vector.broadcast %cst_888 : f32 to vector<8x16xf32>
      %2354 = arith.mulf %2353, %103 : vector<8x16xf32>
      %2355 = arith.addf %2352, %2354 : vector<8x16xf32>
      %cst_889 = arith.constant -1.862880e-01 : f32
      %2356 = vector.broadcast %cst_889 : f32 to vector<8x16xf32>
      %2357 = arith.mulf %2356, %108 : vector<8x16xf32>
      %2358 = arith.addf %2355, %2357 : vector<8x16xf32>
      %cst_890 = arith.constant 0.102502681 : f32
      %2359 = vector.broadcast %cst_890 : f32 to vector<8x16xf32>
      %2360 = arith.mulf %2359, %113 : vector<8x16xf32>
      %2361 = arith.addf %2358, %2360 : vector<8x16xf32>
      %cst_891 = arith.constant 0.164581165 : f32
      %2362 = vector.broadcast %cst_891 : f32 to vector<8x16xf32>
      %2363 = arith.mulf %2362, %118 : vector<8x16xf32>
      %2364 = arith.addf %2361, %2363 : vector<8x16xf32>
      %cst_892 = arith.constant 4.95749176E-4 : f32
      %2365 = vector.broadcast %cst_892 : f32 to vector<8x16xf32>
      %2366 = arith.mulf %2365, %123 : vector<8x16xf32>
      %2367 = arith.addf %2364, %2366 : vector<8x16xf32>
      %cst_893 = arith.constant -0.0276698675 : f32
      %2368 = vector.broadcast %cst_893 : f32 to vector<8x16xf32>
      %2369 = arith.mulf %2368, %128 : vector<8x16xf32>
      %2370 = arith.addf %2367, %2369 : vector<8x16xf32>
      %cst_894 = arith.constant -5.000000e+00 : f32
      %cst_895 = arith.constant 5.000000e+00 : f32
      %2371 = vector.broadcast %cst_894 : f32 to vector<8x16xf32>
      %2372 = arith.maximumf %2371, %2370 : vector<8x16xf32>
      %2373 = vector.broadcast %cst_895 : f32 to vector<8x16xf32>
      %2374 = arith.minimumf %2373, %2372 : vector<8x16xf32>
      %c0_896 = arith.constant 0 : index
      %c44 = arith.constant 44 : index
      %2375 = arith.index_cast %3 : i32 to index
      %c0_897 = arith.constant 0 : index
      %2376 = vector.load %arg3[%c0_896, %c44, %2375, %c0_897] : memref<1x62x16x16xf32, #tpu.memory_space<vmem>>, vector<1x1x8x16xf32>
      %2377 = vector.shape_cast %2376 : vector<1x1x8x16xf32> to vector<8x16xf32>
      %2378 = vector.shape_cast %2374 : vector<8x16xf32> to vector<1x1x8x16xf32>
      tpu.vector_store %arg3[%c0_896, %c44, %2375, %c0_897], %2378 {strides = array<i32>} : memref<1x62x16x16xf32, #tpu.memory_space<vmem>>, vector<1x1x8x16xf32>,
      %cst_898 = arith.constant 0.00648675672 : f32
      %2379 = vector.broadcast %cst_898 : f32 to vector<8x16xf32>
      %2380 = arith.mulf %2379, %8 : vector<8x16xf32>
      %cst_899 = arith.constant 0.0828606039 : f32
      %2381 = vector.broadcast %cst_899 : f32 to vector<8x16xf32>
      %2382 = arith.mulf %2381, %13 : vector<8x16xf32>
      %2383 = arith.addf %2380, %2382 : vector<8x16xf32>
      %cst_900 = arith.constant 0.0365115628 : f32
      %2384 = vector.broadcast %cst_900 : f32 to vector<8x16xf32>
      %2385 = arith.mulf %2384, %18 : vector<8x16xf32>
      %2386 = arith.addf %2383, %2385 : vector<8x16xf32>
      %cst_901 = arith.constant -0.21626699 : f32
      %2387 = vector.broadcast %cst_901 : f32 to vector<8x16xf32>
      %2388 = arith.mulf %2387, %23 : vector<8x16xf32>
      %2389 = arith.addf %2386, %2388 : vector<8x16xf32>
      %cst_902 = arith.constant -0.146648258 : f32
      %2390 = vector.broadcast %cst_902 : f32 to vector<8x16xf32>
      %2391 = arith.mulf %2390, %28 : vector<8x16xf32>
      %2392 = arith.addf %2389, %2391 : vector<8x16xf32>
      %cst_903 = arith.constant -0.0611243173 : f32
      %2393 = vector.broadcast %cst_903 : f32 to vector<8x16xf32>
      %2394 = arith.mulf %2393, %33 : vector<8x16xf32>
      %2395 = arith.addf %2392, %2394 : vector<8x16xf32>
      %cst_904 = arith.constant -0.407869458 : f32
      %2396 = vector.broadcast %cst_904 : f32 to vector<8x16xf32>
      %2397 = arith.mulf %2396, %38 : vector<8x16xf32>
      %2398 = arith.addf %2395, %2397 : vector<8x16xf32>
      %cst_905 = arith.constant -0.069804512 : f32
      %2399 = vector.broadcast %cst_905 : f32 to vector<8x16xf32>
      %2400 = arith.mulf %2399, %43 : vector<8x16xf32>
      %2401 = arith.addf %2398, %2400 : vector<8x16xf32>
      %cst_906 = arith.constant 0.659356833 : f32
      %2402 = vector.broadcast %cst_906 : f32 to vector<8x16xf32>
      %2403 = arith.mulf %2402, %48 : vector<8x16xf32>
      %2404 = arith.addf %2401, %2403 : vector<8x16xf32>
      %cst_907 = arith.constant 0.280641079 : f32
      %2405 = vector.broadcast %cst_907 : f32 to vector<8x16xf32>
      %2406 = arith.mulf %2405, %53 : vector<8x16xf32>
      %2407 = arith.addf %2404, %2406 : vector<8x16xf32>
      %cst_908 = arith.constant 0.211169854 : f32
      %2408 = vector.broadcast %cst_908 : f32 to vector<8x16xf32>
      %2409 = arith.mulf %2408, %58 : vector<8x16xf32>
      %2410 = arith.addf %2407, %2409 : vector<8x16xf32>
      %cst_909 = arith.constant 0.814415276 : f32
      %2411 = vector.broadcast %cst_909 : f32 to vector<8x16xf32>
      %2412 = arith.mulf %2411, %63 : vector<8x16xf32>
      %2413 = arith.addf %2410, %2412 : vector<8x16xf32>
      %cst_910 = arith.constant 6.12323426E-17 : f32
      %2414 = vector.broadcast %cst_910 : f32 to vector<8x16xf32>
      %2415 = arith.mulf %2414, %68 : vector<8x16xf32>
      %2416 = arith.addf %2413, %2415 : vector<8x16xf32>
      %cst_911 = arith.constant -0.814415276 : f32
      %2417 = vector.broadcast %cst_911 : f32 to vector<8x16xf32>
      %2418 = arith.mulf %2417, %73 : vector<8x16xf32>
      %2419 = arith.addf %2416, %2418 : vector<8x16xf32>
      %cst_912 = arith.constant -0.211169854 : f32
      %2420 = vector.broadcast %cst_912 : f32 to vector<8x16xf32>
      %2421 = arith.mulf %2420, %78 : vector<8x16xf32>
      %2422 = arith.addf %2419, %2421 : vector<8x16xf32>
      %cst_913 = arith.constant -0.280641079 : f32
      %2423 = vector.broadcast %cst_913 : f32 to vector<8x16xf32>
      %2424 = arith.mulf %2423, %83 : vector<8x16xf32>
      %2425 = arith.addf %2422, %2424 : vector<8x16xf32>
      %cst_914 = arith.constant -0.659356833 : f32
      %2426 = vector.broadcast %cst_914 : f32 to vector<8x16xf32>
      %2427 = arith.mulf %2426, %88 : vector<8x16xf32>
      %2428 = arith.addf %2425, %2427 : vector<8x16xf32>
      %cst_915 = arith.constant 0.069804512 : f32
      %2429 = vector.broadcast %cst_915 : f32 to vector<8x16xf32>
      %2430 = arith.mulf %2429, %93 : vector<8x16xf32>
      %2431 = arith.addf %2428, %2430 : vector<8x16xf32>
      %cst_916 = arith.constant 0.407869458 : f32
      %2432 = vector.broadcast %cst_916 : f32 to vector<8x16xf32>
      %2433 = arith.mulf %2432, %98 : vector<8x16xf32>
      %2434 = arith.addf %2431, %2433 : vector<8x16xf32>
      %cst_917 = arith.constant 0.0611243173 : f32
      %2435 = vector.broadcast %cst_917 : f32 to vector<8x16xf32>
      %2436 = arith.mulf %2435, %103 : vector<8x16xf32>
      %2437 = arith.addf %2434, %2436 : vector<8x16xf32>
      %cst_918 = arith.constant 0.146648258 : f32
      %2438 = vector.broadcast %cst_918 : f32 to vector<8x16xf32>
      %2439 = arith.mulf %2438, %108 : vector<8x16xf32>
      %2440 = arith.addf %2437, %2439 : vector<8x16xf32>
      %cst_919 = arith.constant 0.21626699 : f32
      %2441 = vector.broadcast %cst_919 : f32 to vector<8x16xf32>
      %2442 = arith.mulf %2441, %113 : vector<8x16xf32>
      %2443 = arith.addf %2440, %2442 : vector<8x16xf32>
      %cst_920 = arith.constant -0.0365115628 : f32
      %2444 = vector.broadcast %cst_920 : f32 to vector<8x16xf32>
      %2445 = arith.mulf %2444, %118 : vector<8x16xf32>
      %2446 = arith.addf %2443, %2445 : vector<8x16xf32>
      %cst_921 = arith.constant -0.0828606039 : f32
      %2447 = vector.broadcast %cst_921 : f32 to vector<8x16xf32>
      %2448 = arith.mulf %2447, %123 : vector<8x16xf32>
      %2449 = arith.addf %2446, %2448 : vector<8x16xf32>
      %cst_922 = arith.constant -0.00648675672 : f32
      %2450 = vector.broadcast %cst_922 : f32 to vector<8x16xf32>
      %2451 = arith.mulf %2450, %128 : vector<8x16xf32>
      %2452 = arith.addf %2449, %2451 : vector<8x16xf32>
      %cst_923 = arith.constant -5.000000e+00 : f32
      %cst_924 = arith.constant 5.000000e+00 : f32
      %2453 = vector.broadcast %cst_923 : f32 to vector<8x16xf32>
      %2454 = arith.maximumf %2453, %2452 : vector<8x16xf32>
      %2455 = vector.broadcast %cst_924 : f32 to vector<8x16xf32>
      %2456 = arith.minimumf %2455, %2454 : vector<8x16xf32>
      %c0_925 = arith.constant 0 : index
      %c45 = arith.constant 45 : index
      %2457 = arith.index_cast %3 : i32 to index
      %c0_926 = arith.constant 0 : index
      %2458 = vector.load %arg3[%c0_925, %c45, %2457, %c0_926] : memref<1x62x16x16xf32, #tpu.memory_space<vmem>>, vector<1x1x8x16xf32>
      %2459 = vector.shape_cast %2458 : vector<1x1x8x16xf32> to vector<8x16xf32>
      %2460 = vector.shape_cast %2456 : vector<8x16xf32> to vector<1x1x8x16xf32>
      tpu.vector_store %arg3[%c0_925, %c45, %2457, %c0_926], %2460 {strides = array<i32>} : memref<1x62x16x16xf32, #tpu.memory_space<vmem>>, vector<1x1x8x16xf32>,
      %cst_927 = arith.constant 2.85068518E-6 : f32
      %2461 = vector.broadcast %cst_927 : f32 to vector<8x16xf32>
      %2462 = arith.mulf %2461, %8 : vector<8x16xf32>
      %cst_928 = arith.constant 1.27758849E-5 : f32
      %2463 = vector.broadcast %cst_928 : f32 to vector<8x16xf32>
      %2464 = arith.mulf %2463, %13 : vector<8x16xf32>
      %2465 = arith.addf %2462, %2464 : vector<8x16xf32>
      %cst_929 = arith.constant 2.10638718E-5 : f32
      %2466 = vector.broadcast %cst_929 : f32 to vector<8x16xf32>
      %2467 = arith.mulf %2466, %18 : vector<8x16xf32>
      %2468 = arith.addf %2465, %2467 : vector<8x16xf32>
      %cst_930 = arith.constant 1.27758849E-5 : f32
      %2469 = vector.broadcast %cst_930 : f32 to vector<8x16xf32>
      %2470 = arith.mulf %2469, %23 : vector<8x16xf32>
      %2471 = arith.addf %2468, %2470 : vector<8x16xf32>
      %cst_931 = arith.constant 2.85068518E-6 : f32
      %2472 = vector.broadcast %cst_931 : f32 to vector<8x16xf32>
      %2473 = arith.mulf %2472, %28 : vector<8x16xf32>
      %2474 = arith.addf %2471, %2473 : vector<8x16xf32>
      %cst_932 = arith.constant 0.0133515261 : f32
      %2475 = vector.broadcast %cst_932 : f32 to vector<8x16xf32>
      %2476 = arith.mulf %2475, %33 : vector<8x16xf32>
      %2477 = arith.addf %2474, %2476 : vector<8x16xf32>
      %cst_933 = arith.constant 0.0598373897 : f32
      %2478 = vector.broadcast %cst_933 : f32 to vector<8x16xf32>
      %2479 = arith.mulf %2478, %38 : vector<8x16xf32>
      %2480 = arith.addf %2477, %2479 : vector<8x16xf32>
      %cst_934 = arith.constant 0.0986551791 : f32
      %2481 = vector.broadcast %cst_934 : f32 to vector<8x16xf32>
      %2482 = arith.mulf %2481, %43 : vector<8x16xf32>
      %2483 = arith.addf %2480, %2482 : vector<8x16xf32>
      %cst_935 = arith.constant 0.0598373897 : f32
      %2484 = vector.broadcast %cst_935 : f32 to vector<8x16xf32>
      %2485 = arith.mulf %2484, %48 : vector<8x16xf32>
      %2486 = arith.addf %2483, %2485 : vector<8x16xf32>
      %cst_936 = arith.constant 0.0133515261 : f32
      %2487 = vector.broadcast %cst_936 : f32 to vector<8x16xf32>
      %2488 = arith.mulf %2487, %53 : vector<8x16xf32>
      %2489 = arith.addf %2486, %2488 : vector<8x16xf32>
      %cst_937 = arith.constant 0.135335281 : f32
      %2490 = vector.broadcast %cst_937 : f32 to vector<8x16xf32>
      %2491 = arith.mulf %2490, %58 : vector<8x16xf32>
      %2492 = arith.addf %2489, %2491 : vector<8x16xf32>
      %cst_938 = arith.constant 0.606530666 : f32
      %2493 = vector.broadcast %cst_938 : f32 to vector<8x16xf32>
      %2494 = arith.mulf %2493, %63 : vector<8x16xf32>
      %2495 = arith.addf %2492, %2494 : vector<8x16xf32>
      %cst_939 = arith.constant 1.000000e+00 : f32
      %2496 = vector.broadcast %cst_939 : f32 to vector<8x16xf32>
      %2497 = arith.mulf %2496, %68 : vector<8x16xf32>
      %2498 = arith.addf %2495, %2497 : vector<8x16xf32>
      %cst_940 = arith.constant 0.606530666 : f32
      %2499 = vector.broadcast %cst_940 : f32 to vector<8x16xf32>
      %2500 = arith.mulf %2499, %73 : vector<8x16xf32>
      %2501 = arith.addf %2498, %2500 : vector<8x16xf32>
      %cst_941 = arith.constant 0.135335281 : f32
      %2502 = vector.broadcast %cst_941 : f32 to vector<8x16xf32>
      %2503 = arith.mulf %2502, %78 : vector<8x16xf32>
      %2504 = arith.addf %2501, %2503 : vector<8x16xf32>
      %cst_942 = arith.constant 0.0133515261 : f32
      %2505 = vector.broadcast %cst_942 : f32 to vector<8x16xf32>
      %2506 = arith.mulf %2505, %83 : vector<8x16xf32>
      %2507 = arith.addf %2504, %2506 : vector<8x16xf32>
      %cst_943 = arith.constant 0.0598373897 : f32
      %2508 = vector.broadcast %cst_943 : f32 to vector<8x16xf32>
      %2509 = arith.mulf %2508, %88 : vector<8x16xf32>
      %2510 = arith.addf %2507, %2509 : vector<8x16xf32>
      %cst_944 = arith.constant 0.0986551791 : f32
      %2511 = vector.broadcast %cst_944 : f32 to vector<8x16xf32>
      %2512 = arith.mulf %2511, %93 : vector<8x16xf32>
      %2513 = arith.addf %2510, %2512 : vector<8x16xf32>
      %cst_945 = arith.constant 0.0598373897 : f32
      %2514 = vector.broadcast %cst_945 : f32 to vector<8x16xf32>
      %2515 = arith.mulf %2514, %98 : vector<8x16xf32>
      %2516 = arith.addf %2513, %2515 : vector<8x16xf32>
      %cst_946 = arith.constant 0.0133515261 : f32
      %2517 = vector.broadcast %cst_946 : f32 to vector<8x16xf32>
      %2518 = arith.mulf %2517, %103 : vector<8x16xf32>
      %2519 = arith.addf %2516, %2518 : vector<8x16xf32>
      %cst_947 = arith.constant 2.85068518E-6 : f32
      %2520 = vector.broadcast %cst_947 : f32 to vector<8x16xf32>
      %2521 = arith.mulf %2520, %108 : vector<8x16xf32>
      %2522 = arith.addf %2519, %2521 : vector<8x16xf32>
      %cst_948 = arith.constant 1.27758849E-5 : f32
      %2523 = vector.broadcast %cst_948 : f32 to vector<8x16xf32>
      %2524 = arith.mulf %2523, %113 : vector<8x16xf32>
      %2525 = arith.addf %2522, %2524 : vector<8x16xf32>
      %cst_949 = arith.constant 2.10638718E-5 : f32
      %2526 = vector.broadcast %cst_949 : f32 to vector<8x16xf32>
      %2527 = arith.mulf %2526, %118 : vector<8x16xf32>
      %2528 = arith.addf %2525, %2527 : vector<8x16xf32>
      %cst_950 = arith.constant 1.27758849E-5 : f32
      %2529 = vector.broadcast %cst_950 : f32 to vector<8x16xf32>
      %2530 = arith.mulf %2529, %123 : vector<8x16xf32>
      %2531 = arith.addf %2528, %2530 : vector<8x16xf32>
      %cst_951 = arith.constant 2.85068518E-6 : f32
      %2532 = vector.broadcast %cst_951 : f32 to vector<8x16xf32>
      %2533 = arith.mulf %2532, %128 : vector<8x16xf32>
      %2534 = arith.addf %2531, %2533 : vector<8x16xf32>
      %cst_952 = arith.constant -5.000000e+00 : f32
      %cst_953 = arith.constant 5.000000e+00 : f32
      %2535 = vector.broadcast %cst_952 : f32 to vector<8x16xf32>
      %2536 = arith.maximumf %2535, %2534 : vector<8x16xf32>
      %2537 = vector.broadcast %cst_953 : f32 to vector<8x16xf32>
      %2538 = arith.minimumf %2537, %2536 : vector<8x16xf32>
      %c0_954 = arith.constant 0 : index
      %c46 = arith.constant 46 : index
      %2539 = arith.index_cast %3 : i32 to index
      %c0_955 = arith.constant 0 : index
      %2540 = vector.load %arg3[%c0_954, %c46, %2539, %c0_955] : memref<1x62x16x16xf32, #tpu.memory_space<vmem>>, vector<1x1x8x16xf32>
      %2541 = vector.shape_cast %2540 : vector<1x1x8x16xf32> to vector<8x16xf32>
      %2542 = vector.shape_cast %2538 : vector<8x16xf32> to vector<1x1x8x16xf32>
      tpu.vector_store %arg3[%c0_954, %c46, %2539, %c0_955], %2542 {strides = array<i32>} : memref<1x62x16x16xf32, #tpu.memory_space<vmem>>, vector<1x1x8x16xf32>,
      %cst_956 = arith.constant 4.53103421E-5 : f32
      %2543 = vector.broadcast %cst_956 : f32 to vector<8x16xf32>
      %2544 = arith.mulf %2543, %8 : vector<8x16xf32>
      %cst_957 = arith.constant 2.03066869E-4 : f32
      %2545 = vector.broadcast %cst_957 : f32 to vector<8x16xf32>
      %2546 = arith.mulf %2545, %13 : vector<8x16xf32>
      %2547 = arith.addf %2544, %2546 : vector<8x16xf32>
      %cst_958 = arith.constant 3.34800658E-4 : f32
      %2548 = vector.broadcast %cst_958 : f32 to vector<8x16xf32>
      %2549 = arith.mulf %2548, %18 : vector<8x16xf32>
      %2550 = arith.addf %2547, %2549 : vector<8x16xf32>
      %cst_959 = arith.constant 2.03066869E-4 : f32
      %2551 = vector.broadcast %cst_959 : f32 to vector<8x16xf32>
      %2552 = arith.mulf %2551, %23 : vector<8x16xf32>
      %2553 = arith.addf %2550, %2552 : vector<8x16xf32>
      %cst_960 = arith.constant 4.53103421E-5 : f32
      %2554 = vector.broadcast %cst_960 : f32 to vector<8x16xf32>
      %2555 = arith.mulf %2554, %28 : vector<8x16xf32>
      %2556 = arith.addf %2553, %2555 : vector<8x16xf32>
      %cst_961 = arith.constant 0.0125379181 : f32
      %2557 = vector.broadcast %cst_961 : f32 to vector<8x16xf32>
      %2558 = arith.mulf %2557, %33 : vector<8x16xf32>
      %2559 = arith.addf %2556, %2558 : vector<8x16xf32>
      %cst_962 = arith.constant 0.0561910495 : f32
      %2560 = vector.broadcast %cst_962 : f32 to vector<8x16xf32>
      %2561 = arith.mulf %2560, %38 : vector<8x16xf32>
      %2562 = arith.addf %2559, %2561 : vector<8x16xf32>
      %cst_963 = arith.constant 0.0926433802 : f32
      %2563 = vector.broadcast %cst_963 : f32 to vector<8x16xf32>
      %2564 = arith.mulf %2563, %43 : vector<8x16xf32>
      %2565 = arith.addf %2562, %2564 : vector<8x16xf32>
      %cst_964 = arith.constant 0.0561910495 : f32
      %2566 = vector.broadcast %cst_964 : f32 to vector<8x16xf32>
      %2567 = arith.mulf %2566, %48 : vector<8x16xf32>
      %2568 = arith.addf %2565, %2567 : vector<8x16xf32>
      %cst_965 = arith.constant 0.0125379181 : f32
      %2569 = vector.broadcast %cst_965 : f32 to vector<8x16xf32>
      %2570 = arith.mulf %2569, %53 : vector<8x16xf32>
      %2571 = arith.addf %2568, %2570 : vector<8x16xf32>
      %cst_966 = arith.constant 1.2848877E-16 : f32
      %2572 = vector.broadcast %cst_966 : f32 to vector<8x16xf32>
      %2573 = arith.mulf %2572, %58 : vector<8x16xf32>
      %2574 = arith.addf %2571, %2573 : vector<8x16xf32>
      %cst_967 = arith.constant 3.06493022E-16 : f32
      %2575 = vector.broadcast %cst_967 : f32 to vector<8x16xf32>
      %2576 = arith.mulf %2575, %63 : vector<8x16xf32>
      %2577 = arith.addf %2574, %2576 : vector<8x16xf32>
      %cst_968 = arith.constant 6.12323426E-17 : f32
      %2578 = vector.broadcast %cst_968 : f32 to vector<8x16xf32>
      %2579 = arith.mulf %2578, %68 : vector<8x16xf32>
      %2580 = arith.addf %2577, %2579 : vector<8x16xf32>
      %cst_969 = arith.constant -2.32214427E-16 : f32
      %2581 = vector.broadcast %cst_969 : f32 to vector<8x16xf32>
      %2582 = arith.mulf %2581, %73 : vector<8x16xf32>
      %2583 = arith.addf %2580, %2582 : vector<8x16xf32>
      %cst_970 = arith.constant -1.11914983E-16 : f32
      %2584 = vector.broadcast %cst_970 : f32 to vector<8x16xf32>
      %2585 = arith.mulf %2584, %78 : vector<8x16xf32>
      %2586 = arith.addf %2583, %2585 : vector<8x16xf32>
      %cst_971 = arith.constant -0.0125379181 : f32
      %2587 = vector.broadcast %cst_971 : f32 to vector<8x16xf32>
      %2588 = arith.mulf %2587, %83 : vector<8x16xf32>
      %2589 = arith.addf %2586, %2588 : vector<8x16xf32>
      %cst_972 = arith.constant -0.0561910495 : f32
      %2590 = vector.broadcast %cst_972 : f32 to vector<8x16xf32>
      %2591 = arith.mulf %2590, %88 : vector<8x16xf32>
      %2592 = arith.addf %2589, %2591 : vector<8x16xf32>
      %cst_973 = arith.constant -0.0926433802 : f32
      %2593 = vector.broadcast %cst_973 : f32 to vector<8x16xf32>
      %2594 = arith.mulf %2593, %93 : vector<8x16xf32>
      %2595 = arith.addf %2592, %2594 : vector<8x16xf32>
      %cst_974 = arith.constant -0.0561910495 : f32
      %2596 = vector.broadcast %cst_974 : f32 to vector<8x16xf32>
      %2597 = arith.mulf %2596, %98 : vector<8x16xf32>
      %2598 = arith.addf %2595, %2597 : vector<8x16xf32>
      %cst_975 = arith.constant -0.0125379181 : f32
      %2599 = vector.broadcast %cst_975 : f32 to vector<8x16xf32>
      %2600 = arith.mulf %2599, %103 : vector<8x16xf32>
      %2601 = arith.addf %2598, %2600 : vector<8x16xf32>
      %cst_976 = arith.constant -4.53103421E-5 : f32
      %2602 = vector.broadcast %cst_976 : f32 to vector<8x16xf32>
      %2603 = arith.mulf %2602, %108 : vector<8x16xf32>
      %2604 = arith.addf %2601, %2603 : vector<8x16xf32>
      %cst_977 = arith.constant -2.03066869E-4 : f32
      %2605 = vector.broadcast %cst_977 : f32 to vector<8x16xf32>
      %2606 = arith.mulf %2605, %113 : vector<8x16xf32>
      %2607 = arith.addf %2604, %2606 : vector<8x16xf32>
      %cst_978 = arith.constant -3.34800658E-4 : f32
      %2608 = vector.broadcast %cst_978 : f32 to vector<8x16xf32>
      %2609 = arith.mulf %2608, %118 : vector<8x16xf32>
      %2610 = arith.addf %2607, %2609 : vector<8x16xf32>
      %cst_979 = arith.constant -2.03066869E-4 : f32
      %2611 = vector.broadcast %cst_979 : f32 to vector<8x16xf32>
      %2612 = arith.mulf %2611, %123 : vector<8x16xf32>
      %2613 = arith.addf %2610, %2612 : vector<8x16xf32>
      %cst_980 = arith.constant -4.53103421E-5 : f32
      %2614 = vector.broadcast %cst_980 : f32 to vector<8x16xf32>
      %2615 = arith.mulf %2614, %128 : vector<8x16xf32>
      %2616 = arith.addf %2613, %2615 : vector<8x16xf32>
      %cst_981 = arith.constant -5.000000e+00 : f32
      %cst_982 = arith.constant 5.000000e+00 : f32
      %2617 = vector.broadcast %cst_981 : f32 to vector<8x16xf32>
      %2618 = arith.maximumf %2617, %2616 : vector<8x16xf32>
      %2619 = vector.broadcast %cst_982 : f32 to vector<8x16xf32>
      %2620 = arith.minimumf %2619, %2618 : vector<8x16xf32>
      %c0_983 = arith.constant 0 : index
      %c47 = arith.constant 47 : index
      %2621 = arith.index_cast %3 : i32 to index
      %c0_984 = arith.constant 0 : index
      %2622 = vector.load %arg3[%c0_983, %c47, %2621, %c0_984] : memref<1x62x16x16xf32, #tpu.memory_space<vmem>>, vector<1x1x8x16xf32>
      %2623 = vector.shape_cast %2622 : vector<1x1x8x16xf32> to vector<8x16xf32>
      %2624 = vector.shape_cast %2620 : vector<8x16xf32> to vector<1x1x8x16xf32>
      tpu.vector_store %arg3[%c0_983, %c47, %2621, %c0_984], %2624 {strides = array<i32>} : memref<1x62x16x16xf32, #tpu.memory_space<vmem>>, vector<1x1x8x16xf32>,
      %cst_985 = arith.constant 0.0598373897 : f32
      %2625 = vector.broadcast %cst_985 : f32 to vector<8x16xf32>
      %2626 = arith.mulf %2625, %8 : vector<8x16xf32>
      %cst_986 = arith.constant 0.0870628878 : f32
      %2627 = vector.broadcast %cst_986 : f32 to vector<8x16xf32>
      %2628 = arith.mulf %2627, %13 : vector<8x16xf32>
      %2629 = arith.addf %2626, %2628 : vector<8x16xf32>
      %cst_987 = arith.constant 0.0986551791 : f32
      %2630 = vector.broadcast %cst_987 : f32 to vector<8x16xf32>
      %2631 = arith.mulf %2630, %18 : vector<8x16xf32>
      %2632 = arith.addf %2629, %2631 : vector<8x16xf32>
      %cst_988 = arith.constant 0.0870628878 : f32
      %2633 = vector.broadcast %cst_988 : f32 to vector<8x16xf32>
      %2634 = arith.mulf %2633, %23 : vector<8x16xf32>
      %2635 = arith.addf %2632, %2634 : vector<8x16xf32>
      %cst_989 = arith.constant 0.0598373897 : f32
      %2636 = vector.broadcast %cst_989 : f32 to vector<8x16xf32>
      %2637 = arith.mulf %2636, %28 : vector<8x16xf32>
      %2638 = arith.addf %2635, %2637 : vector<8x16xf32>
      %cst_990 = arith.constant -0.342045665 : f32
      %2639 = vector.broadcast %cst_990 : f32 to vector<8x16xf32>
      %2640 = arith.mulf %2639, %33 : vector<8x16xf32>
      %2641 = arith.addf %2638, %2640 : vector<8x16xf32>
      %cst_991 = arith.constant -0.497673482 : f32
      %2642 = vector.broadcast %cst_991 : f32 to vector<8x16xf32>
      %2643 = arith.mulf %2642, %38 : vector<8x16xf32>
      %2644 = arith.addf %2641, %2643 : vector<8x16xf32>
      %cst_992 = arith.constant -0.563937962 : f32
      %2645 = vector.broadcast %cst_992 : f32 to vector<8x16xf32>
      %2646 = arith.mulf %2645, %43 : vector<8x16xf32>
      %2647 = arith.addf %2644, %2646 : vector<8x16xf32>
      %cst_993 = arith.constant -0.497673482 : f32
      %2648 = vector.broadcast %cst_993 : f32 to vector<8x16xf32>
      %2649 = arith.mulf %2648, %48 : vector<8x16xf32>
      %2650 = arith.addf %2647, %2649 : vector<8x16xf32>
      %cst_994 = arith.constant -0.342045665 : f32
      %2651 = vector.broadcast %cst_994 : f32 to vector<8x16xf32>
      %2652 = arith.mulf %2651, %53 : vector<8x16xf32>
      %2653 = arith.addf %2650, %2652 : vector<8x16xf32>
      %cst_995 = arith.constant 0.606530666 : f32
      %2654 = vector.broadcast %cst_995 : f32 to vector<8x16xf32>
      %2655 = arith.mulf %2654, %58 : vector<8x16xf32>
      %2656 = arith.addf %2653, %2655 : vector<8x16xf32>
      %cst_996 = arith.constant 0.882496893 : f32
      %2657 = vector.broadcast %cst_996 : f32 to vector<8x16xf32>
      %2658 = arith.mulf %2657, %63 : vector<8x16xf32>
      %2659 = arith.addf %2656, %2658 : vector<8x16xf32>
      %cst_997 = arith.constant 1.000000e+00 : f32
      %2660 = vector.broadcast %cst_997 : f32 to vector<8x16xf32>
      %2661 = arith.mulf %2660, %68 : vector<8x16xf32>
      %2662 = arith.addf %2659, %2661 : vector<8x16xf32>
      %cst_998 = arith.constant 0.882496893 : f32
      %2663 = vector.broadcast %cst_998 : f32 to vector<8x16xf32>
      %2664 = arith.mulf %2663, %73 : vector<8x16xf32>
      %2665 = arith.addf %2662, %2664 : vector<8x16xf32>
      %cst_999 = arith.constant 0.606530666 : f32
      %2666 = vector.broadcast %cst_999 : f32 to vector<8x16xf32>
      %2667 = arith.mulf %2666, %78 : vector<8x16xf32>
      %2668 = arith.addf %2665, %2667 : vector<8x16xf32>
      %cst_1000 = arith.constant -0.342045665 : f32
      %2669 = vector.broadcast %cst_1000 : f32 to vector<8x16xf32>
      %2670 = arith.mulf %2669, %83 : vector<8x16xf32>
      %2671 = arith.addf %2668, %2670 : vector<8x16xf32>
      %cst_1001 = arith.constant -0.497673482 : f32
      %2672 = vector.broadcast %cst_1001 : f32 to vector<8x16xf32>
      %2673 = arith.mulf %2672, %88 : vector<8x16xf32>
      %2674 = arith.addf %2671, %2673 : vector<8x16xf32>
      %cst_1002 = arith.constant -0.563937962 : f32
      %2675 = vector.broadcast %cst_1002 : f32 to vector<8x16xf32>
      %2676 = arith.mulf %2675, %93 : vector<8x16xf32>
      %2677 = arith.addf %2674, %2676 : vector<8x16xf32>
      %cst_1003 = arith.constant -0.497673482 : f32
      %2678 = vector.broadcast %cst_1003 : f32 to vector<8x16xf32>
      %2679 = arith.mulf %2678, %98 : vector<8x16xf32>
      %2680 = arith.addf %2677, %2679 : vector<8x16xf32>
      %cst_1004 = arith.constant -0.342045665 : f32
      %2681 = vector.broadcast %cst_1004 : f32 to vector<8x16xf32>
      %2682 = arith.mulf %2681, %103 : vector<8x16xf32>
      %2683 = arith.addf %2680, %2682 : vector<8x16xf32>
      %cst_1005 = arith.constant 0.0598373897 : f32
      %2684 = vector.broadcast %cst_1005 : f32 to vector<8x16xf32>
      %2685 = arith.mulf %2684, %108 : vector<8x16xf32>
      %2686 = arith.addf %2683, %2685 : vector<8x16xf32>
      %cst_1006 = arith.constant 0.0870628878 : f32
      %2687 = vector.broadcast %cst_1006 : f32 to vector<8x16xf32>
      %2688 = arith.mulf %2687, %113 : vector<8x16xf32>
      %2689 = arith.addf %2686, %2688 : vector<8x16xf32>
      %cst_1007 = arith.constant 0.0986551791 : f32
      %2690 = vector.broadcast %cst_1007 : f32 to vector<8x16xf32>
      %2691 = arith.mulf %2690, %118 : vector<8x16xf32>
      %2692 = arith.addf %2689, %2691 : vector<8x16xf32>
      %cst_1008 = arith.constant 0.0870628878 : f32
      %2693 = vector.broadcast %cst_1008 : f32 to vector<8x16xf32>
      %2694 = arith.mulf %2693, %123 : vector<8x16xf32>
      %2695 = arith.addf %2692, %2694 : vector<8x16xf32>
      %cst_1009 = arith.constant 0.0598373897 : f32
      %2696 = vector.broadcast %cst_1009 : f32 to vector<8x16xf32>
      %2697 = arith.mulf %2696, %128 : vector<8x16xf32>
      %2698 = arith.addf %2695, %2697 : vector<8x16xf32>
      %cst_1010 = arith.constant -5.000000e+00 : f32
      %cst_1011 = arith.constant 5.000000e+00 : f32
      %2699 = vector.broadcast %cst_1010 : f32 to vector<8x16xf32>
      %2700 = arith.maximumf %2699, %2698 : vector<8x16xf32>
      %2701 = vector.broadcast %cst_1011 : f32 to vector<8x16xf32>
      %2702 = arith.minimumf %2701, %2700 : vector<8x16xf32>
      %c0_1012 = arith.constant 0 : index
      %c48 = arith.constant 48 : index
      %2703 = arith.index_cast %3 : i32 to index
      %c0_1013 = arith.constant 0 : index
      %2704 = vector.load %arg3[%c0_1012, %c48, %2703, %c0_1013] : memref<1x62x16x16xf32, #tpu.memory_space<vmem>>, vector<1x1x8x16xf32>
      %2705 = vector.shape_cast %2704 : vector<1x1x8x16xf32> to vector<8x16xf32>
      %2706 = vector.shape_cast %2702 : vector<8x16xf32> to vector<1x1x8x16xf32>
      tpu.vector_store %arg3[%c0_1012, %c48, %2703, %c0_1013], %2706 {strides = array<i32>} : memref<1x62x16x16xf32, #tpu.memory_space<vmem>>, vector<1x1x8x16xf32>,
      %cst_1014 = arith.constant 0.0561910495 : f32
      %2707 = vector.broadcast %cst_1014 : f32 to vector<8x16xf32>
      %2708 = arith.mulf %2707, %8 : vector<8x16xf32>
      %cst_1015 = arith.constant 0.0817574933 : f32
      %2709 = vector.broadcast %cst_1015 : f32 to vector<8x16xf32>
      %2710 = arith.mulf %2709, %13 : vector<8x16xf32>
      %2711 = arith.addf %2708, %2710 : vector<8x16xf32>
      %cst_1016 = arith.constant 0.0926433802 : f32
      %2712 = vector.broadcast %cst_1016 : f32 to vector<8x16xf32>
      %2713 = arith.mulf %2712, %18 : vector<8x16xf32>
      %2714 = arith.addf %2711, %2713 : vector<8x16xf32>
      %cst_1017 = arith.constant 0.0817574933 : f32
      %2715 = vector.broadcast %cst_1017 : f32 to vector<8x16xf32>
      %2716 = arith.mulf %2715, %23 : vector<8x16xf32>
      %2717 = arith.addf %2714, %2716 : vector<8x16xf32>
      %cst_1018 = arith.constant 0.0561910495 : f32
      %2718 = vector.broadcast %cst_1018 : f32 to vector<8x16xf32>
      %2719 = arith.mulf %2718, %28 : vector<8x16xf32>
      %2720 = arith.addf %2717, %2719 : vector<8x16xf32>
      %cst_1019 = arith.constant -0.135425448 : f32
      %2721 = vector.broadcast %cst_1019 : f32 to vector<8x16xf32>
      %2722 = arith.mulf %2721, %33 : vector<8x16xf32>
      %2723 = arith.addf %2720, %2722 : vector<8x16xf32>
      %cst_1020 = arith.constant -0.197042868 : f32
      %2724 = vector.broadcast %cst_1020 : f32 to vector<8x16xf32>
      %2725 = arith.mulf %2724, %38 : vector<8x16xf32>
      %2726 = arith.addf %2723, %2725 : vector<8x16xf32>
      %cst_1021 = arith.constant -0.223278821 : f32
      %2727 = vector.broadcast %cst_1021 : f32 to vector<8x16xf32>
      %2728 = arith.mulf %2727, %43 : vector<8x16xf32>
      %2729 = arith.addf %2726, %2728 : vector<8x16xf32>
      %cst_1022 = arith.constant -0.197042868 : f32
      %2730 = vector.broadcast %cst_1022 : f32 to vector<8x16xf32>
      %2731 = arith.mulf %2730, %48 : vector<8x16xf32>
      %2732 = arith.addf %2729, %2731 : vector<8x16xf32>
      %cst_1023 = arith.constant -0.135425448 : f32
      %2733 = vector.broadcast %cst_1023 : f32 to vector<8x16xf32>
      %2734 = arith.mulf %2733, %53 : vector<8x16xf32>
      %2735 = arith.addf %2732, %2734 : vector<8x16xf32>
      %cst_1024 = arith.constant 3.06493022E-16 : f32
      %2736 = vector.broadcast %cst_1024 : f32 to vector<8x16xf32>
      %2737 = arith.mulf %2736, %58 : vector<8x16xf32>
      %2738 = arith.addf %2735, %2737 : vector<8x16xf32>
      %cst_1025 = arith.constant 2.49991028E-16 : f32
      %2739 = vector.broadcast %cst_1025 : f32 to vector<8x16xf32>
      %2740 = arith.mulf %2739, %63 : vector<8x16xf32>
      %2741 = arith.addf %2738, %2740 : vector<8x16xf32>
      %cst_1026 = arith.constant 6.12323426E-17 : f32
      %2742 = vector.broadcast %cst_1026 : f32 to vector<8x16xf32>
      %2743 = arith.mulf %2742, %68 : vector<8x16xf32>
      %2744 = arith.addf %2741, %2743 : vector<8x16xf32>
      %cst_1027 = arith.constant -1.4191632E-16 : f32
      %2745 = vector.broadcast %cst_1027 : f32 to vector<8x16xf32>
      %2746 = arith.mulf %2745, %73 : vector<8x16xf32>
      %2747 = arith.addf %2744, %2746 : vector<8x16xf32>
      %cst_1028 = arith.constant -2.32214427E-16 : f32
      %2748 = vector.broadcast %cst_1028 : f32 to vector<8x16xf32>
      %2749 = arith.mulf %2748, %78 : vector<8x16xf32>
      %2750 = arith.addf %2747, %2749 : vector<8x16xf32>
      %cst_1029 = arith.constant 0.135425448 : f32
      %2751 = vector.broadcast %cst_1029 : f32 to vector<8x16xf32>
      %2752 = arith.mulf %2751, %83 : vector<8x16xf32>
      %2753 = arith.addf %2750, %2752 : vector<8x16xf32>
      %cst_1030 = arith.constant 0.197042868 : f32
      %2754 = vector.broadcast %cst_1030 : f32 to vector<8x16xf32>
      %2755 = arith.mulf %2754, %88 : vector<8x16xf32>
      %2756 = arith.addf %2753, %2755 : vector<8x16xf32>
      %cst_1031 = arith.constant 0.223278821 : f32
      %2757 = vector.broadcast %cst_1031 : f32 to vector<8x16xf32>
      %2758 = arith.mulf %2757, %93 : vector<8x16xf32>
      %2759 = arith.addf %2756, %2758 : vector<8x16xf32>
      %cst_1032 = arith.constant 0.197042868 : f32
      %2760 = vector.broadcast %cst_1032 : f32 to vector<8x16xf32>
      %2761 = arith.mulf %2760, %98 : vector<8x16xf32>
      %2762 = arith.addf %2759, %2761 : vector<8x16xf32>
      %cst_1033 = arith.constant 0.135425448 : f32
      %2763 = vector.broadcast %cst_1033 : f32 to vector<8x16xf32>
      %2764 = arith.mulf %2763, %103 : vector<8x16xf32>
      %2765 = arith.addf %2762, %2764 : vector<8x16xf32>
      %cst_1034 = arith.constant -0.0561910495 : f32
      %2766 = vector.broadcast %cst_1034 : f32 to vector<8x16xf32>
      %2767 = arith.mulf %2766, %108 : vector<8x16xf32>
      %2768 = arith.addf %2765, %2767 : vector<8x16xf32>
      %cst_1035 = arith.constant -0.0817574933 : f32
      %2769 = vector.broadcast %cst_1035 : f32 to vector<8x16xf32>
      %2770 = arith.mulf %2769, %113 : vector<8x16xf32>
      %2771 = arith.addf %2768, %2770 : vector<8x16xf32>
      %cst_1036 = arith.constant -0.0926433802 : f32
      %2772 = vector.broadcast %cst_1036 : f32 to vector<8x16xf32>
      %2773 = arith.mulf %2772, %118 : vector<8x16xf32>
      %2774 = arith.addf %2771, %2773 : vector<8x16xf32>
      %cst_1037 = arith.constant -0.0817574933 : f32
      %2775 = vector.broadcast %cst_1037 : f32 to vector<8x16xf32>
      %2776 = arith.mulf %2775, %123 : vector<8x16xf32>
      %2777 = arith.addf %2774, %2776 : vector<8x16xf32>
      %cst_1038 = arith.constant -0.0561910495 : f32
      %2778 = vector.broadcast %cst_1038 : f32 to vector<8x16xf32>
      %2779 = arith.mulf %2778, %128 : vector<8x16xf32>
      %2780 = arith.addf %2777, %2779 : vector<8x16xf32>
      %cst_1039 = arith.constant -5.000000e+00 : f32
      %cst_1040 = arith.constant 5.000000e+00 : f32
      %2781 = vector.broadcast %cst_1039 : f32 to vector<8x16xf32>
      %2782 = arith.maximumf %2781, %2780 : vector<8x16xf32>
      %2783 = vector.broadcast %cst_1040 : f32 to vector<8x16xf32>
      %2784 = arith.minimumf %2783, %2782 : vector<8x16xf32>
      %c0_1041 = arith.constant 0 : index
      %c49 = arith.constant 49 : index
      %2785 = arith.index_cast %3 : i32 to index
      %c0_1042 = arith.constant 0 : index
      %2786 = vector.load %arg3[%c0_1041, %c49, %2785, %c0_1042] : memref<1x62x16x16xf32, #tpu.memory_space<vmem>>, vector<1x1x8x16xf32>
      %2787 = vector.shape_cast %2786 : vector<1x1x8x16xf32> to vector<8x16xf32>
      %2788 = vector.shape_cast %2784 : vector<8x16xf32> to vector<1x1x8x16xf32>
      tpu.vector_store %arg3[%c0_1041, %c49, %2785, %c0_1042], %2788 {strides = array<i32>} : memref<1x62x16x16xf32, #tpu.memory_space<vmem>>, vector<1x1x8x16xf32>,
      %cst_1043 = arith.constant 7.41817581E-4 : f32
      %2789 = vector.broadcast %cst_1043 : f32 to vector<8x16xf32>
      %2790 = arith.mulf %2789, %8 : vector<8x16xf32>
      %cst_1044 = arith.constant -0.00207717228 : f32
      %2791 = vector.broadcast %cst_1044 : f32 to vector<8x16xf32>
      %2792 = arith.mulf %2791, %13 : vector<8x16xf32>
      %2793 = arith.addf %2790, %2792 : vector<8x16xf32>
      %cst_1045 = arith.constant 7.31926353E-4 : f32
      %2794 = vector.broadcast %cst_1045 : f32 to vector<8x16xf32>
      %2795 = arith.mulf %2794, %18 : vector<8x16xf32>
      %2796 = arith.addf %2793, %2795 : vector<8x16xf32>
      %cst_1046 = arith.constant -4.71403036E-5 : f32
      %2797 = vector.broadcast %cst_1046 : f32 to vector<8x16xf32>
      %2798 = arith.mulf %2797, %23 : vector<8x16xf32>
      %2799 = arith.addf %2796, %2798 : vector<8x16xf32>
      %cst_1047 = arith.constant 5.84405882E-7 : f32
      %2800 = vector.broadcast %cst_1047 : f32 to vector<8x16xf32>
      %2801 = arith.mulf %2800, %28 : vector<8x16xf32>
      %2802 = arith.addf %2799, %2801 : vector<8x16xf32>
      %cst_1048 = arith.constant 0.0347614326 : f32
      %2803 = vector.broadcast %cst_1048 : f32 to vector<8x16xf32>
      %2804 = arith.mulf %2803, %33 : vector<8x16xf32>
      %2805 = arith.addf %2802, %2804 : vector<8x16xf32>
      %cst_1049 = arith.constant -1.862880e-01 : f32
      %2806 = vector.broadcast %cst_1049 : f32 to vector<8x16xf32>
      %2807 = arith.mulf %2806, %38 : vector<8x16xf32>
      %2808 = arith.addf %2805, %2807 : vector<8x16xf32>
      %cst_1050 = arith.constant 0.164581165 : f32
      %2809 = vector.broadcast %cst_1050 : f32 to vector<8x16xf32>
      %2810 = arith.mulf %2809, %43 : vector<8x16xf32>
      %2811 = arith.addf %2808, %2810 : vector<8x16xf32>
      %cst_1051 = arith.constant -0.0276698675 : f32
      %2812 = vector.broadcast %cst_1051 : f32 to vector<8x16xf32>
      %2813 = arith.mulf %2812, %48 : vector<8x16xf32>
      %2814 = arith.addf %2811, %2813 : vector<8x16xf32>
      %cst_1052 = arith.constant 8.84057953E-4 : f32
      %2815 = vector.broadcast %cst_1052 : f32 to vector<8x16xf32>
      %2816 = arith.mulf %2815, %53 : vector<8x16xf32>
      %2817 = arith.addf %2814, %2816 : vector<8x16xf32>
      %cst_1053 = arith.constant 0.0350644775 : f32
      %2818 = vector.broadcast %cst_1053 : f32 to vector<8x16xf32>
      %2819 = arith.mulf %2818, %58 : vector<8x16xf32>
      %2820 = arith.addf %2817, %2819 : vector<8x16xf32>
      %cst_1054 = arith.constant -0.438738555 : f32
      %2821 = vector.broadcast %cst_1054 : f32 to vector<8x16xf32>
      %2822 = arith.mulf %2821, %63 : vector<8x16xf32>
      %2823 = arith.addf %2820, %2822 : vector<8x16xf32>
      %cst_1055 = arith.constant 1.000000e+00 : f32
      %2824 = vector.broadcast %cst_1055 : f32 to vector<8x16xf32>
      %2825 = arith.mulf %2824, %68 : vector<8x16xf32>
      %2826 = arith.addf %2823, %2825 : vector<8x16xf32>
      %cst_1056 = arith.constant -0.438738555 : f32
      %2827 = vector.broadcast %cst_1056 : f32 to vector<8x16xf32>
      %2828 = arith.mulf %2827, %73 : vector<8x16xf32>
      %2829 = arith.addf %2826, %2828 : vector<8x16xf32>
      %cst_1057 = arith.constant 0.0350644775 : f32
      %2830 = vector.broadcast %cst_1057 : f32 to vector<8x16xf32>
      %2831 = arith.mulf %2830, %78 : vector<8x16xf32>
      %2832 = arith.addf %2829, %2831 : vector<8x16xf32>
      %cst_1058 = arith.constant 8.84057953E-4 : f32
      %2833 = vector.broadcast %cst_1058 : f32 to vector<8x16xf32>
      %2834 = arith.mulf %2833, %83 : vector<8x16xf32>
      %2835 = arith.addf %2832, %2834 : vector<8x16xf32>
      %cst_1059 = arith.constant -0.0276698675 : f32
      %2836 = vector.broadcast %cst_1059 : f32 to vector<8x16xf32>
      %2837 = arith.mulf %2836, %88 : vector<8x16xf32>
      %2838 = arith.addf %2835, %2837 : vector<8x16xf32>
      %cst_1060 = arith.constant 0.164581165 : f32
      %2839 = vector.broadcast %cst_1060 : f32 to vector<8x16xf32>
      %2840 = arith.mulf %2839, %93 : vector<8x16xf32>
      %2841 = arith.addf %2838, %2840 : vector<8x16xf32>
      %cst_1061 = arith.constant -1.862880e-01 : f32
      %2842 = vector.broadcast %cst_1061 : f32 to vector<8x16xf32>
      %2843 = arith.mulf %2842, %98 : vector<8x16xf32>
      %2844 = arith.addf %2841, %2843 : vector<8x16xf32>
      %cst_1062 = arith.constant 0.0347614326 : f32
      %2845 = vector.broadcast %cst_1062 : f32 to vector<8x16xf32>
      %2846 = arith.mulf %2845, %103 : vector<8x16xf32>
      %2847 = arith.addf %2844, %2846 : vector<8x16xf32>
      %cst_1063 = arith.constant 5.84405882E-7 : f32
      %2848 = vector.broadcast %cst_1063 : f32 to vector<8x16xf32>
      %2849 = arith.mulf %2848, %108 : vector<8x16xf32>
      %2850 = arith.addf %2847, %2849 : vector<8x16xf32>
      %cst_1064 = arith.constant -4.71403036E-5 : f32
      %2851 = vector.broadcast %cst_1064 : f32 to vector<8x16xf32>
      %2852 = arith.mulf %2851, %113 : vector<8x16xf32>
      %2853 = arith.addf %2850, %2852 : vector<8x16xf32>
      %cst_1065 = arith.constant 7.31926353E-4 : f32
      %2854 = vector.broadcast %cst_1065 : f32 to vector<8x16xf32>
      %2855 = arith.mulf %2854, %118 : vector<8x16xf32>
      %2856 = arith.addf %2853, %2855 : vector<8x16xf32>
      %cst_1066 = arith.constant -0.00207717228 : f32
      %2857 = vector.broadcast %cst_1066 : f32 to vector<8x16xf32>
      %2858 = arith.mulf %2857, %123 : vector<8x16xf32>
      %2859 = arith.addf %2856, %2858 : vector<8x16xf32>
      %cst_1067 = arith.constant 7.41817581E-4 : f32
      %2860 = vector.broadcast %cst_1067 : f32 to vector<8x16xf32>
      %2861 = arith.mulf %2860, %128 : vector<8x16xf32>
      %2862 = arith.addf %2859, %2861 : vector<8x16xf32>
      %cst_1068 = arith.constant -5.000000e+00 : f32
      %cst_1069 = arith.constant 5.000000e+00 : f32
      %2863 = vector.broadcast %cst_1068 : f32 to vector<8x16xf32>
      %2864 = arith.maximumf %2863, %2862 : vector<8x16xf32>
      %2865 = vector.broadcast %cst_1069 : f32 to vector<8x16xf32>
      %2866 = arith.minimumf %2865, %2864 : vector<8x16xf32>
      %c0_1070 = arith.constant 0 : index
      %c50 = arith.constant 50 : index
      %2867 = arith.index_cast %3 : i32 to index
      %c0_1071 = arith.constant 0 : index
      %2868 = vector.load %arg3[%c0_1070, %c50, %2867, %c0_1071] : memref<1x62x16x16xf32, #tpu.memory_space<vmem>>, vector<1x1x8x16xf32>
      %2869 = vector.shape_cast %2868 : vector<1x1x8x16xf32> to vector<8x16xf32>
      %2870 = vector.shape_cast %2866 : vector<8x16xf32> to vector<1x1x8x16xf32>
      tpu.vector_store %arg3[%c0_1070, %c50, %2867, %c0_1071], %2870 {strides = array<i32>} : memref<1x62x16x16xf32, #tpu.memory_space<vmem>>, vector<1x1x8x16xf32>,
      %cst_1072 = arith.constant 0.0030711221 : f32
      %2871 = vector.broadcast %cst_1072 : f32 to vector<8x16xf32>
      %2872 = arith.mulf %2871, %8 : vector<8x16xf32>
      %cst_1073 = arith.constant -0.0025394808 : f32
      %2873 = vector.broadcast %cst_1073 : f32 to vector<8x16xf32>
      %2874 = arith.mulf %2873, %13 : vector<8x16xf32>
      %2875 = arith.addf %2872, %2874 : vector<8x16xf32>
      %cst_1074 = arith.constant 3.41558829E-4 : f32
      %2876 = vector.broadcast %cst_1074 : f32 to vector<8x16xf32>
      %2877 = arith.mulf %2876, %18 : vector<8x16xf32>
      %2878 = arith.addf %2875, %2877 : vector<8x16xf32>
      %cst_1075 = arith.constant 5.64094421E-7 : f32
      %2879 = vector.broadcast %cst_1075 : f32 to vector<8x16xf32>
      %2880 = arith.mulf %2879, %23 : vector<8x16xf32>
      %2881 = arith.addf %2878, %2880 : vector<8x16xf32>
      %cst_1076 = arith.constant -2.89944296E-7 : f32
      %2882 = vector.broadcast %cst_1076 : f32 to vector<8x16xf32>
      %2883 = arith.mulf %2882, %28 : vector<8x16xf32>
      %2884 = arith.addf %2881, %2883 : vector<8x16xf32>
      %cst_1077 = arith.constant 0.0709955096 : f32
      %2885 = vector.broadcast %cst_1077 : f32 to vector<8x16xf32>
      %2886 = arith.mulf %2885, %33 : vector<8x16xf32>
      %2887 = arith.addf %2884, %2886 : vector<8x16xf32>
      %cst_1078 = arith.constant -0.146648258 : f32
      %2888 = vector.broadcast %cst_1078 : f32 to vector<8x16xf32>
      %2889 = arith.mulf %2888, %38 : vector<8x16xf32>
      %2890 = arith.addf %2887, %2889 : vector<8x16xf32>
      %cst_1079 = arith.constant 0.0365115628 : f32
      %2891 = vector.broadcast %cst_1079 : f32 to vector<8x16xf32>
      %2892 = arith.mulf %2891, %43 : vector<8x16xf32>
      %2893 = arith.addf %2890, %2892 : vector<8x16xf32>
      %cst_1080 = arith.constant 0.00648675672 : f32
      %2894 = vector.broadcast %cst_1080 : f32 to vector<8x16xf32>
      %2895 = arith.mulf %2894, %48 : vector<8x16xf32>
      %2896 = arith.addf %2893, %2895 : vector<8x16xf32>
      %cst_1081 = arith.constant -7.13239191E-4 : f32
      %2897 = vector.broadcast %cst_1081 : f32 to vector<8x16xf32>
      %2898 = arith.mulf %2897, %53 : vector<8x16xf32>
      %2899 = arith.addf %2896, %2898 : vector<8x16xf32>
      %cst_1082 = arith.constant 0.0439309254 : f32
      %2900 = vector.broadcast %cst_1082 : f32 to vector<8x16xf32>
      %2901 = arith.mulf %2900, %58 : vector<8x16xf32>
      %2902 = arith.addf %2899, %2901 : vector<8x16xf32>
      %cst_1083 = arith.constant -0.211169854 : f32
      %2903 = vector.broadcast %cst_1083 : f32 to vector<8x16xf32>
      %2904 = arith.mulf %2903, %63 : vector<8x16xf32>
      %2905 = arith.addf %2902, %2904 : vector<8x16xf32>
      %cst_1084 = arith.constant 6.12323426E-17 : f32
      %2906 = vector.broadcast %cst_1084 : f32 to vector<8x16xf32>
      %2907 = arith.mulf %2906, %68 : vector<8x16xf32>
      %2908 = arith.addf %2905, %2907 : vector<8x16xf32>
      %cst_1085 = arith.constant 0.211169854 : f32
      %2909 = vector.broadcast %cst_1085 : f32 to vector<8x16xf32>
      %2910 = arith.mulf %2909, %73 : vector<8x16xf32>
      %2911 = arith.addf %2908, %2910 : vector<8x16xf32>
      %cst_1086 = arith.constant -0.0439309254 : f32
      %2912 = vector.broadcast %cst_1086 : f32 to vector<8x16xf32>
      %2913 = arith.mulf %2912, %78 : vector<8x16xf32>
      %2914 = arith.addf %2911, %2913 : vector<8x16xf32>
      %cst_1087 = arith.constant 7.13239191E-4 : f32
      %2915 = vector.broadcast %cst_1087 : f32 to vector<8x16xf32>
      %2916 = arith.mulf %2915, %83 : vector<8x16xf32>
      %2917 = arith.addf %2914, %2916 : vector<8x16xf32>
      %cst_1088 = arith.constant -0.00648675672 : f32
      %2918 = vector.broadcast %cst_1088 : f32 to vector<8x16xf32>
      %2919 = arith.mulf %2918, %88 : vector<8x16xf32>
      %2920 = arith.addf %2917, %2919 : vector<8x16xf32>
      %cst_1089 = arith.constant -0.0365115628 : f32
      %2921 = vector.broadcast %cst_1089 : f32 to vector<8x16xf32>
      %2922 = arith.mulf %2921, %93 : vector<8x16xf32>
      %2923 = arith.addf %2920, %2922 : vector<8x16xf32>
      %cst_1090 = arith.constant 0.146648258 : f32
      %2924 = vector.broadcast %cst_1090 : f32 to vector<8x16xf32>
      %2925 = arith.mulf %2924, %98 : vector<8x16xf32>
      %2926 = arith.addf %2923, %2925 : vector<8x16xf32>
      %cst_1091 = arith.constant -0.0709955096 : f32
      %2927 = vector.broadcast %cst_1091 : f32 to vector<8x16xf32>
      %2928 = arith.mulf %2927, %103 : vector<8x16xf32>
      %2929 = arith.addf %2926, %2928 : vector<8x16xf32>
      %cst_1092 = arith.constant 2.89944296E-7 : f32
      %2930 = vector.broadcast %cst_1092 : f32 to vector<8x16xf32>
      %2931 = arith.mulf %2930, %108 : vector<8x16xf32>
      %2932 = arith.addf %2929, %2931 : vector<8x16xf32>
      %cst_1093 = arith.constant -5.64094421E-7 : f32
      %2933 = vector.broadcast %cst_1093 : f32 to vector<8x16xf32>
      %2934 = arith.mulf %2933, %113 : vector<8x16xf32>
      %2935 = arith.addf %2932, %2934 : vector<8x16xf32>
      %cst_1094 = arith.constant -3.41558829E-4 : f32
      %2936 = vector.broadcast %cst_1094 : f32 to vector<8x16xf32>
      %2937 = arith.mulf %2936, %118 : vector<8x16xf32>
      %2938 = arith.addf %2935, %2937 : vector<8x16xf32>
      %cst_1095 = arith.constant 0.0025394808 : f32
      %2939 = vector.broadcast %cst_1095 : f32 to vector<8x16xf32>
      %2940 = arith.mulf %2939, %123 : vector<8x16xf32>
      %2941 = arith.addf %2938, %2940 : vector<8x16xf32>
      %cst_1096 = arith.constant -0.0030711221 : f32
      %2942 = vector.broadcast %cst_1096 : f32 to vector<8x16xf32>
      %2943 = arith.mulf %2942, %128 : vector<8x16xf32>
      %2944 = arith.addf %2941, %2943 : vector<8x16xf32>
      %cst_1097 = arith.constant -5.000000e+00 : f32
      %cst_1098 = arith.constant 5.000000e+00 : f32
      %2945 = vector.broadcast %cst_1097 : f32 to vector<8x16xf32>
      %2946 = arith.maximumf %2945, %2944 : vector<8x16xf32>
      %2947 = vector.broadcast %cst_1098 : f32 to vector<8x16xf32>
      %2948 = arith.minimumf %2947, %2946 : vector<8x16xf32>
      %c0_1099 = arith.constant 0 : index
      %c51 = arith.constant 51 : index
      %2949 = arith.index_cast %3 : i32 to index
      %c0_1100 = arith.constant 0 : index
      %2950 = vector.load %arg3[%c0_1099, %c51, %2949, %c0_1100] : memref<1x62x16x16xf32, #tpu.memory_space<vmem>>, vector<1x1x8x16xf32>
      %2951 = vector.shape_cast %2950 : vector<1x1x8x16xf32> to vector<8x16xf32>
      %2952 = vector.shape_cast %2948 : vector<8x16xf32> to vector<1x1x8x16xf32>
      tpu.vector_store %arg3[%c0_1099, %c51, %2949, %c0_1100], %2952 {strides = array<i32>} : memref<1x62x16x16xf32, #tpu.memory_space<vmem>>, vector<1x1x8x16xf32>,
      %cst_1101 = arith.constant -1.862880e-01 : f32
      %2953 = vector.broadcast %cst_1101 : f32 to vector<8x16xf32>
      %2954 = arith.mulf %2953, %8 : vector<8x16xf32>
      %cst_1102 = arith.constant 0.102502681 : f32
      %2955 = vector.broadcast %cst_1102 : f32 to vector<8x16xf32>
      %2956 = arith.mulf %2955, %13 : vector<8x16xf32>
      %2957 = arith.addf %2954, %2956 : vector<8x16xf32>
      %cst_1103 = arith.constant 0.164581165 : f32
      %2958 = vector.broadcast %cst_1103 : f32 to vector<8x16xf32>
      %2959 = arith.mulf %2958, %18 : vector<8x16xf32>
      %2960 = arith.addf %2957, %2959 : vector<8x16xf32>
      %cst_1104 = arith.constant 4.95749176E-4 : f32
      %2961 = vector.broadcast %cst_1104 : f32 to vector<8x16xf32>
      %2962 = arith.mulf %2961, %23 : vector<8x16xf32>
      %2963 = arith.addf %2960, %2962 : vector<8x16xf32>
      %cst_1105 = arith.constant -0.0276698675 : f32
      %2964 = vector.broadcast %cst_1105 : f32 to vector<8x16xf32>
      %2965 = arith.mulf %2964, %28 : vector<8x16xf32>
      %2966 = arith.addf %2963, %2965 : vector<8x16xf32>
      %cst_1106 = arith.constant 0.449885368 : f32
      %2967 = vector.broadcast %cst_1106 : f32 to vector<8x16xf32>
      %2968 = arith.mulf %2967, %33 : vector<8x16xf32>
      %2969 = arith.addf %2966, %2968 : vector<8x16xf32>
      %cst_1107 = arith.constant -0.22838895 : f32
      %2970 = vector.broadcast %cst_1107 : f32 to vector<8x16xf32>
      %2971 = arith.mulf %2970, %38 : vector<8x16xf32>
      %2972 = arith.addf %2969, %2971 : vector<8x16xf32>
      %cst_1108 = arith.constant -0.636957884 : f32
      %2973 = vector.broadcast %cst_1108 : f32 to vector<8x16xf32>
      %2974 = arith.mulf %2973, %43 : vector<8x16xf32>
      %2975 = arith.addf %2972, %2974 : vector<8x16xf32>
      %cst_1109 = arith.constant -0.0471697897 : f32
      %2976 = vector.broadcast %cst_1109 : f32 to vector<8x16xf32>
      %2977 = arith.mulf %2976, %48 : vector<8x16xf32>
      %2978 = arith.addf %2975, %2977 : vector<8x16xf32>
      %cst_1110 = arith.constant 0.173109591 : f32
      %2979 = vector.broadcast %cst_1110 : f32 to vector<8x16xf32>
      %2980 = arith.mulf %2979, %53 : vector<8x16xf32>
      %2981 = arith.addf %2978, %2980 : vector<8x16xf32>
      %cst_1111 = arith.constant -0.438738555 : f32
      %2982 = vector.broadcast %cst_1111 : f32 to vector<8x16xf32>
      %2983 = arith.mulf %2982, %58 : vector<8x16xf32>
      %2984 = arith.addf %2981, %2983 : vector<8x16xf32>
      %cst_1112 = arith.constant 0.185793415 : f32
      %2985 = vector.broadcast %cst_1112 : f32 to vector<8x16xf32>
      %2986 = arith.mulf %2985, %63 : vector<8x16xf32>
      %2987 = arith.addf %2984, %2986 : vector<8x16xf32>
      %cst_1113 = arith.constant 1.000000e+00 : f32
      %2988 = vector.broadcast %cst_1113 : f32 to vector<8x16xf32>
      %2989 = arith.mulf %2988, %68 : vector<8x16xf32>
      %2990 = arith.addf %2987, %2989 : vector<8x16xf32>
      %cst_1114 = arith.constant 0.185793415 : f32
      %2991 = vector.broadcast %cst_1114 : f32 to vector<8x16xf32>
      %2992 = arith.mulf %2991, %73 : vector<8x16xf32>
      %2993 = arith.addf %2990, %2992 : vector<8x16xf32>
      %cst_1115 = arith.constant -0.438738555 : f32
      %2994 = vector.broadcast %cst_1115 : f32 to vector<8x16xf32>
      %2995 = arith.mulf %2994, %78 : vector<8x16xf32>
      %2996 = arith.addf %2993, %2995 : vector<8x16xf32>
      %cst_1116 = arith.constant 0.173109591 : f32
      %2997 = vector.broadcast %cst_1116 : f32 to vector<8x16xf32>
      %2998 = arith.mulf %2997, %83 : vector<8x16xf32>
      %2999 = arith.addf %2996, %2998 : vector<8x16xf32>
      %cst_1117 = arith.constant -0.0471697897 : f32
      %3000 = vector.broadcast %cst_1117 : f32 to vector<8x16xf32>
      %3001 = arith.mulf %3000, %88 : vector<8x16xf32>
      %3002 = arith.addf %2999, %3001 : vector<8x16xf32>
      %cst_1118 = arith.constant -0.636957884 : f32
      %3003 = vector.broadcast %cst_1118 : f32 to vector<8x16xf32>
      %3004 = arith.mulf %3003, %93 : vector<8x16xf32>
      %3005 = arith.addf %3002, %3004 : vector<8x16xf32>
      %cst_1119 = arith.constant -0.22838895 : f32
      %3006 = vector.broadcast %cst_1119 : f32 to vector<8x16xf32>
      %3007 = arith.mulf %3006, %98 : vector<8x16xf32>
      %3008 = arith.addf %3005, %3007 : vector<8x16xf32>
      %cst_1120 = arith.constant 0.449885368 : f32
      %3009 = vector.broadcast %cst_1120 : f32 to vector<8x16xf32>
      %3010 = arith.mulf %3009, %103 : vector<8x16xf32>
      %3011 = arith.addf %3008, %3010 : vector<8x16xf32>
      %cst_1121 = arith.constant -0.0276698675 : f32
      %3012 = vector.broadcast %cst_1121 : f32 to vector<8x16xf32>
      %3013 = arith.mulf %3012, %108 : vector<8x16xf32>
      %3014 = arith.addf %3011, %3013 : vector<8x16xf32>
      %cst_1122 = arith.constant 4.95749176E-4 : f32
      %3015 = vector.broadcast %cst_1122 : f32 to vector<8x16xf32>
      %3016 = arith.mulf %3015, %113 : vector<8x16xf32>
      %3017 = arith.addf %3014, %3016 : vector<8x16xf32>
      %cst_1123 = arith.constant 0.164581165 : f32
      %3018 = vector.broadcast %cst_1123 : f32 to vector<8x16xf32>
      %3019 = arith.mulf %3018, %118 : vector<8x16xf32>
      %3020 = arith.addf %3017, %3019 : vector<8x16xf32>
      %cst_1124 = arith.constant 0.102502681 : f32
      %3021 = vector.broadcast %cst_1124 : f32 to vector<8x16xf32>
      %3022 = arith.mulf %3021, %123 : vector<8x16xf32>
      %3023 = arith.addf %3020, %3022 : vector<8x16xf32>
      %cst_1125 = arith.constant -1.862880e-01 : f32
      %3024 = vector.broadcast %cst_1125 : f32 to vector<8x16xf32>
      %3025 = arith.mulf %3024, %128 : vector<8x16xf32>
      %3026 = arith.addf %3023, %3025 : vector<8x16xf32>
      %cst_1126 = arith.constant -5.000000e+00 : f32
      %cst_1127 = arith.constant 5.000000e+00 : f32
      %3027 = vector.broadcast %cst_1126 : f32 to vector<8x16xf32>
      %3028 = arith.maximumf %3027, %3026 : vector<8x16xf32>
      %3029 = vector.broadcast %cst_1127 : f32 to vector<8x16xf32>
      %3030 = arith.minimumf %3029, %3028 : vector<8x16xf32>
      %c0_1128 = arith.constant 0 : index
      %c52 = arith.constant 52 : index
      %3031 = arith.index_cast %3 : i32 to index
      %c0_1129 = arith.constant 0 : index
      %3032 = vector.load %arg3[%c0_1128, %c52, %3031, %c0_1129] : memref<1x62x16x16xf32, #tpu.memory_space<vmem>>, vector<1x1x8x16xf32>
      %3033 = vector.shape_cast %3032 : vector<1x1x8x16xf32> to vector<8x16xf32>
      %3034 = vector.shape_cast %3030 : vector<8x16xf32> to vector<1x1x8x16xf32>
      tpu.vector_store %arg3[%c0_1128, %c52, %3031, %c0_1129], %3034 {strides = array<i32>} : memref<1x62x16x16xf32, #tpu.memory_space<vmem>>, vector<1x1x8x16xf32>,
      %cst_1130 = arith.constant -0.146648258 : f32
      %3035 = vector.broadcast %cst_1130 : f32 to vector<8x16xf32>
      %3036 = arith.mulf %3035, %8 : vector<8x16xf32>
      %cst_1131 = arith.constant -0.21626699 : f32
      %3037 = vector.broadcast %cst_1131 : f32 to vector<8x16xf32>
      %3038 = arith.mulf %3037, %13 : vector<8x16xf32>
      %3039 = arith.addf %3036, %3038 : vector<8x16xf32>
      %cst_1132 = arith.constant 0.0365115628 : f32
      %3040 = vector.broadcast %cst_1132 : f32 to vector<8x16xf32>
      %3041 = arith.mulf %3040, %18 : vector<8x16xf32>
      %3042 = arith.addf %3039, %3041 : vector<8x16xf32>
      %cst_1133 = arith.constant 0.0828606039 : f32
      %3043 = vector.broadcast %cst_1133 : f32 to vector<8x16xf32>
      %3044 = arith.mulf %3043, %23 : vector<8x16xf32>
      %3045 = arith.addf %3042, %3044 : vector<8x16xf32>
      %cst_1134 = arith.constant 0.00648675672 : f32
      %3046 = vector.broadcast %cst_1134 : f32 to vector<8x16xf32>
      %3047 = arith.mulf %3046, %28 : vector<8x16xf32>
      %3048 = arith.addf %3045, %3047 : vector<8x16xf32>
      %cst_1135 = arith.constant 0.280641079 : f32
      %3049 = vector.broadcast %cst_1135 : f32 to vector<8x16xf32>
      %3050 = arith.mulf %3049, %33 : vector<8x16xf32>
      %3051 = arith.addf %3048, %3050 : vector<8x16xf32>
      %cst_1136 = arith.constant 0.659356833 : f32
      %3052 = vector.broadcast %cst_1136 : f32 to vector<8x16xf32>
      %3053 = arith.mulf %3052, %38 : vector<8x16xf32>
      %3054 = arith.addf %3051, %3053 : vector<8x16xf32>
      %cst_1137 = arith.constant -0.069804512 : f32
      %3055 = vector.broadcast %cst_1137 : f32 to vector<8x16xf32>
      %3056 = arith.mulf %3055, %43 : vector<8x16xf32>
      %3057 = arith.addf %3054, %3056 : vector<8x16xf32>
      %cst_1138 = arith.constant -0.407869458 : f32
      %3058 = vector.broadcast %cst_1138 : f32 to vector<8x16xf32>
      %3059 = arith.mulf %3058, %48 : vector<8x16xf32>
      %3060 = arith.addf %3057, %3059 : vector<8x16xf32>
      %cst_1139 = arith.constant -0.0611243173 : f32
      %3061 = vector.broadcast %cst_1139 : f32 to vector<8x16xf32>
      %3062 = arith.mulf %3061, %53 : vector<8x16xf32>
      %3063 = arith.addf %3060, %3062 : vector<8x16xf32>
      %cst_1140 = arith.constant -0.211169854 : f32
      %3064 = vector.broadcast %cst_1140 : f32 to vector<8x16xf32>
      %3065 = arith.mulf %3064, %58 : vector<8x16xf32>
      %3066 = arith.addf %3063, %3065 : vector<8x16xf32>
      %cst_1141 = arith.constant -0.814415276 : f32
      %3067 = vector.broadcast %cst_1141 : f32 to vector<8x16xf32>
      %3068 = arith.mulf %3067, %63 : vector<8x16xf32>
      %3069 = arith.addf %3066, %3068 : vector<8x16xf32>
      %cst_1142 = arith.constant 6.12323426E-17 : f32
      %3070 = vector.broadcast %cst_1142 : f32 to vector<8x16xf32>
      %3071 = arith.mulf %3070, %68 : vector<8x16xf32>
      %3072 = arith.addf %3069, %3071 : vector<8x16xf32>
      %cst_1143 = arith.constant 0.814415276 : f32
      %3073 = vector.broadcast %cst_1143 : f32 to vector<8x16xf32>
      %3074 = arith.mulf %3073, %73 : vector<8x16xf32>
      %3075 = arith.addf %3072, %3074 : vector<8x16xf32>
      %cst_1144 = arith.constant 0.211169854 : f32
      %3076 = vector.broadcast %cst_1144 : f32 to vector<8x16xf32>
      %3077 = arith.mulf %3076, %78 : vector<8x16xf32>
      %3078 = arith.addf %3075, %3077 : vector<8x16xf32>
      %cst_1145 = arith.constant 0.0611243173 : f32
      %3079 = vector.broadcast %cst_1145 : f32 to vector<8x16xf32>
      %3080 = arith.mulf %3079, %83 : vector<8x16xf32>
      %3081 = arith.addf %3078, %3080 : vector<8x16xf32>
      %cst_1146 = arith.constant 0.407869458 : f32
      %3082 = vector.broadcast %cst_1146 : f32 to vector<8x16xf32>
      %3083 = arith.mulf %3082, %88 : vector<8x16xf32>
      %3084 = arith.addf %3081, %3083 : vector<8x16xf32>
      %cst_1147 = arith.constant 0.069804512 : f32
      %3085 = vector.broadcast %cst_1147 : f32 to vector<8x16xf32>
      %3086 = arith.mulf %3085, %93 : vector<8x16xf32>
      %3087 = arith.addf %3084, %3086 : vector<8x16xf32>
      %cst_1148 = arith.constant -0.659356833 : f32
      %3088 = vector.broadcast %cst_1148 : f32 to vector<8x16xf32>
      %3089 = arith.mulf %3088, %98 : vector<8x16xf32>
      %3090 = arith.addf %3087, %3089 : vector<8x16xf32>
      %cst_1149 = arith.constant -0.280641079 : f32
      %3091 = vector.broadcast %cst_1149 : f32 to vector<8x16xf32>
      %3092 = arith.mulf %3091, %103 : vector<8x16xf32>
      %3093 = arith.addf %3090, %3092 : vector<8x16xf32>
      %cst_1150 = arith.constant -0.00648675672 : f32
      %3094 = vector.broadcast %cst_1150 : f32 to vector<8x16xf32>
      %3095 = arith.mulf %3094, %108 : vector<8x16xf32>
      %3096 = arith.addf %3093, %3095 : vector<8x16xf32>
      %cst_1151 = arith.constant -0.0828606039 : f32
      %3097 = vector.broadcast %cst_1151 : f32 to vector<8x16xf32>
      %3098 = arith.mulf %3097, %113 : vector<8x16xf32>
      %3099 = arith.addf %3096, %3098 : vector<8x16xf32>
      %cst_1152 = arith.constant -0.0365115628 : f32
      %3100 = vector.broadcast %cst_1152 : f32 to vector<8x16xf32>
      %3101 = arith.mulf %3100, %118 : vector<8x16xf32>
      %3102 = arith.addf %3099, %3101 : vector<8x16xf32>
      %cst_1153 = arith.constant 0.21626699 : f32
      %3103 = vector.broadcast %cst_1153 : f32 to vector<8x16xf32>
      %3104 = arith.mulf %3103, %123 : vector<8x16xf32>
      %3105 = arith.addf %3102, %3104 : vector<8x16xf32>
      %cst_1154 = arith.constant 0.146648258 : f32
      %3106 = vector.broadcast %cst_1154 : f32 to vector<8x16xf32>
      %3107 = arith.mulf %3106, %128 : vector<8x16xf32>
      %3108 = arith.addf %3105, %3107 : vector<8x16xf32>
      %cst_1155 = arith.constant -5.000000e+00 : f32
      %cst_1156 = arith.constant 5.000000e+00 : f32
      %3109 = vector.broadcast %cst_1155 : f32 to vector<8x16xf32>
      %3110 = arith.maximumf %3109, %3108 : vector<8x16xf32>
      %3111 = vector.broadcast %cst_1156 : f32 to vector<8x16xf32>
      %3112 = arith.minimumf %3111, %3110 : vector<8x16xf32>
      %c0_1157 = arith.constant 0 : index
      %c53 = arith.constant 53 : index
      %3113 = arith.index_cast %3 : i32 to index
      %c0_1158 = arith.constant 0 : index
      %3114 = vector.load %arg3[%c0_1157, %c53, %3113, %c0_1158] : memref<1x62x16x16xf32, #tpu.memory_space<vmem>>, vector<1x1x8x16xf32>
      %3115 = vector.shape_cast %3114 : vector<1x1x8x16xf32> to vector<8x16xf32>
      %3116 = vector.shape_cast %3112 : vector<8x16xf32> to vector<1x1x8x16xf32>
      tpu.vector_store %arg3[%c0_1157, %c53, %3113, %c0_1158], %3116 {strides = array<i32>} : memref<1x62x16x16xf32, #tpu.memory_space<vmem>>, vector<1x1x8x16xf32>,
      %cst_1159 = arith.constant 0.0183156393 : f32
      %3117 = vector.broadcast %cst_1159 : f32 to vector<8x16xf32>
      %3118 = arith.mulf %3117, %8 : vector<8x16xf32>
      %cst_1160 = arith.constant 0.0101044197 : f32
      %3119 = vector.broadcast %cst_1160 : f32 to vector<8x16xf32>
      %3120 = arith.mulf %3119, %13 : vector<8x16xf32>
      %3121 = arith.addf %3118, %3120 : vector<8x16xf32>
      %cst_1161 = arith.constant -0.00582279265 : f32
      %3122 = vector.broadcast %cst_1161 : f32 to vector<8x16xf32>
      %3123 = arith.mulf %3122, %18 : vector<8x16xf32>
      %3124 = arith.addf %3121, %3123 : vector<8x16xf32>
      %cst_1162 = arith.constant -6.83354156E-5 : f32
      %3125 = vector.broadcast %cst_1162 : f32 to vector<8x16xf32>
      %3126 = arith.mulf %3125, %23 : vector<8x16xf32>
      %3127 = arith.addf %3124, %3126 : vector<8x16xf32>
      %cst_1163 = arith.constant 5.5548572E-8 : f32
      %3128 = vector.broadcast %cst_1163 : f32 to vector<8x16xf32>
      %3129 = arith.mulf %3128, %28 : vector<8x16xf32>
      %3130 = arith.addf %3127, %3129 : vector<8x16xf32>
      %cst_1164 = arith.constant 0.0101044197 : f32
      %3131 = vector.broadcast %cst_1164 : f32 to vector<8x16xf32>
      %3132 = arith.mulf %3131, %33 : vector<8x16xf32>
      %3133 = arith.addf %3130, %3132 : vector<8x16xf32>
      %cst_1165 = arith.constant 0.36787945 : f32
      %3134 = vector.broadcast %cst_1165 : f32 to vector<8x16xf32>
      %3135 = arith.mulf %3134, %38 : vector<8x16xf32>
      %3136 = arith.addf %3133, %3135 : vector<8x16xf32>
      %cst_1166 = arith.constant 0.0746621191 : f32
      %3137 = vector.broadcast %cst_1166 : f32 to vector<8x16xf32>
      %3138 = arith.mulf %3137, %43 : vector<8x16xf32>
      %3139 = arith.addf %3136, %3138 : vector<8x16xf32>
      %cst_1167 = arith.constant -0.0158279911 : f32
      %3140 = vector.broadcast %cst_1167 : f32 to vector<8x16xf32>
      %3141 = arith.mulf %3140, %48 : vector<8x16xf32>
      %3142 = arith.addf %3139, %3141 : vector<8x16xf32>
      %cst_1168 = arith.constant -6.83354156E-5 : f32
      %3143 = vector.broadcast %cst_1168 : f32 to vector<8x16xf32>
      %3144 = arith.mulf %3143, %53 : vector<8x16xf32>
      %3145 = arith.addf %3142, %3144 : vector<8x16xf32>
      %cst_1169 = arith.constant -0.00582279265 : f32
      %3146 = vector.broadcast %cst_1169 : f32 to vector<8x16xf32>
      %3147 = arith.mulf %3146, %58 : vector<8x16xf32>
      %3148 = arith.addf %3145, %3147 : vector<8x16xf32>
      %cst_1170 = arith.constant 0.0746621191 : f32
      %3149 = vector.broadcast %cst_1170 : f32 to vector<8x16xf32>
      %3150 = arith.mulf %3149, %63 : vector<8x16xf32>
      %3151 = arith.addf %3148, %3150 : vector<8x16xf32>
      %cst_1171 = arith.constant 1.000000e+00 : f32
      %3152 = vector.broadcast %cst_1171 : f32 to vector<8x16xf32>
      %3153 = arith.mulf %3152, %68 : vector<8x16xf32>
      %3154 = arith.addf %3151, %3153 : vector<8x16xf32>
      %cst_1172 = arith.constant 0.0746621191 : f32
      %3155 = vector.broadcast %cst_1172 : f32 to vector<8x16xf32>
      %3156 = arith.mulf %3155, %73 : vector<8x16xf32>
      %3157 = arith.addf %3154, %3156 : vector<8x16xf32>
      %cst_1173 = arith.constant -0.00582279265 : f32
      %3158 = vector.broadcast %cst_1173 : f32 to vector<8x16xf32>
      %3159 = arith.mulf %3158, %78 : vector<8x16xf32>
      %3160 = arith.addf %3157, %3159 : vector<8x16xf32>
      %cst_1174 = arith.constant -6.83354156E-5 : f32
      %3161 = vector.broadcast %cst_1174 : f32 to vector<8x16xf32>
      %3162 = arith.mulf %3161, %83 : vector<8x16xf32>
      %3163 = arith.addf %3160, %3162 : vector<8x16xf32>
      %cst_1175 = arith.constant -0.0158279911 : f32
      %3164 = vector.broadcast %cst_1175 : f32 to vector<8x16xf32>
      %3165 = arith.mulf %3164, %88 : vector<8x16xf32>
      %3166 = arith.addf %3163, %3165 : vector<8x16xf32>
      %cst_1176 = arith.constant 0.0746621191 : f32
      %3167 = vector.broadcast %cst_1176 : f32 to vector<8x16xf32>
      %3168 = arith.mulf %3167, %93 : vector<8x16xf32>
      %3169 = arith.addf %3166, %3168 : vector<8x16xf32>
      %cst_1177 = arith.constant 0.36787945 : f32
      %3170 = vector.broadcast %cst_1177 : f32 to vector<8x16xf32>
      %3171 = arith.mulf %3170, %98 : vector<8x16xf32>
      %3172 = arith.addf %3169, %3171 : vector<8x16xf32>
      %cst_1178 = arith.constant 0.0101044197 : f32
      %3173 = vector.broadcast %cst_1178 : f32 to vector<8x16xf32>
      %3174 = arith.mulf %3173, %103 : vector<8x16xf32>
      %3175 = arith.addf %3172, %3174 : vector<8x16xf32>
      %cst_1179 = arith.constant 5.5548572E-8 : f32
      %3176 = vector.broadcast %cst_1179 : f32 to vector<8x16xf32>
      %3177 = arith.mulf %3176, %108 : vector<8x16xf32>
      %3178 = arith.addf %3175, %3177 : vector<8x16xf32>
      %cst_1180 = arith.constant -6.83354156E-5 : f32
      %3179 = vector.broadcast %cst_1180 : f32 to vector<8x16xf32>
      %3180 = arith.mulf %3179, %113 : vector<8x16xf32>
      %3181 = arith.addf %3178, %3180 : vector<8x16xf32>
      %cst_1181 = arith.constant -0.00582279265 : f32
      %3182 = vector.broadcast %cst_1181 : f32 to vector<8x16xf32>
      %3183 = arith.mulf %3182, %118 : vector<8x16xf32>
      %3184 = arith.addf %3181, %3183 : vector<8x16xf32>
      %cst_1182 = arith.constant 0.0101044197 : f32
      %3185 = vector.broadcast %cst_1182 : f32 to vector<8x16xf32>
      %3186 = arith.mulf %3185, %123 : vector<8x16xf32>
      %3187 = arith.addf %3184, %3186 : vector<8x16xf32>
      %cst_1183 = arith.constant 0.0183156393 : f32
      %3188 = vector.broadcast %cst_1183 : f32 to vector<8x16xf32>
      %3189 = arith.mulf %3188, %128 : vector<8x16xf32>
      %3190 = arith.addf %3187, %3189 : vector<8x16xf32>
      %cst_1184 = arith.constant -5.000000e+00 : f32
      %cst_1185 = arith.constant 5.000000e+00 : f32
      %3191 = vector.broadcast %cst_1184 : f32 to vector<8x16xf32>
      %3192 = arith.maximumf %3191, %3190 : vector<8x16xf32>
      %3193 = vector.broadcast %cst_1185 : f32 to vector<8x16xf32>
      %3194 = arith.minimumf %3193, %3192 : vector<8x16xf32>
      %c0_1186 = arith.constant 0 : index
      %c54 = arith.constant 54 : index
      %3195 = arith.index_cast %3 : i32 to index
      %c0_1187 = arith.constant 0 : index
      %3196 = vector.load %arg3[%c0_1186, %c54, %3195, %c0_1187] : memref<1x62x16x16xf32, #tpu.memory_space<vmem>>, vector<1x1x8x16xf32>
      %3197 = vector.shape_cast %3196 : vector<1x1x8x16xf32> to vector<8x16xf32>
      %3198 = vector.shape_cast %3194 : vector<8x16xf32> to vector<1x1x8x16xf32>
      tpu.vector_store %arg3[%c0_1186, %c54, %3195, %c0_1187], %3198 {strides = array<i32>} : memref<1x62x16x16xf32, #tpu.memory_space<vmem>>, vector<1x1x8x16xf32>,
      %cst_1188 = arith.constant 2.95897295E-17 : f32
      %3199 = vector.broadcast %cst_1188 : f32 to vector<8x16xf32>
      %3200 = arith.mulf %3199, %8 : vector<8x16xf32>
      %cst_1189 = arith.constant -0.0374344736 : f32
      %3201 = vector.broadcast %cst_1189 : f32 to vector<8x16xf32>
      %3202 = arith.mulf %3201, %13 : vector<8x16xf32>
      %3203 = arith.addf %3200, %3202 : vector<8x16xf32>
      %cst_1190 = arith.constant -0.00339043047 : f32
      %3204 = vector.broadcast %cst_1190 : f32 to vector<8x16xf32>
      %3205 = arith.mulf %3204, %18 : vector<8x16xf32>
      %3206 = arith.addf %3203, %3205 : vector<8x16xf32>
      %cst_1191 = arith.constant 6.75849151E-5 : f32
      %3207 = vector.broadcast %cst_1191 : f32 to vector<8x16xf32>
      %3208 = arith.mulf %3207, %23 : vector<8x16xf32>
      %3209 = arith.addf %3206, %3208 : vector<8x16xf32>
      %cst_1192 = arith.constant 9.78699219E-8 : f32
      %3210 = vector.broadcast %cst_1192 : f32 to vector<8x16xf32>
      %3211 = arith.mulf %3210, %28 : vector<8x16xf32>
      %3212 = arith.addf %3209, %3211 : vector<8x16xf32>
      %cst_1193 = arith.constant 0.0374344736 : f32
      %3213 = vector.broadcast %cst_1193 : f32 to vector<8x16xf32>
      %3214 = arith.mulf %3213, %33 : vector<8x16xf32>
      %3215 = arith.addf %3212, %3214 : vector<8x16xf32>
      %cst_1194 = arith.constant 3.49268689E-16 : f32
      %3216 = vector.broadcast %cst_1194 : f32 to vector<8x16xf32>
      %3217 = arith.mulf %3216, %38 : vector<8x16xf32>
      %3218 = arith.addf %3215, %3217 : vector<8x16xf32>
      %cst_1195 = arith.constant -0.276605427 : f32
      %3219 = vector.broadcast %cst_1195 : f32 to vector<8x16xf32>
      %3220 = arith.mulf %3219, %43 : vector<8x16xf32>
      %3221 = arith.addf %3218, %3220 : vector<8x16xf32>
      %cst_1196 = arith.constant -0.00921614561 : f32
      %3222 = vector.broadcast %cst_1196 : f32 to vector<8x16xf32>
      %3223 = arith.mulf %3222, %48 : vector<8x16xf32>
      %3224 = arith.addf %3221, %3223 : vector<8x16xf32>
      %cst_1197 = arith.constant 6.75849151E-5 : f32
      %3225 = vector.broadcast %cst_1197 : f32 to vector<8x16xf32>
      %3226 = arith.mulf %3225, %53 : vector<8x16xf32>
      %3227 = arith.addf %3224, %3226 : vector<8x16xf32>
      %cst_1198 = arith.constant 0.00339043047 : f32
      %3228 = vector.broadcast %cst_1198 : f32 to vector<8x16xf32>
      %3229 = arith.mulf %3228, %58 : vector<8x16xf32>
      %3230 = arith.addf %3227, %3229 : vector<8x16xf32>
      %cst_1199 = arith.constant 0.276605427 : f32
      %3231 = vector.broadcast %cst_1199 : f32 to vector<8x16xf32>
      %3232 = arith.mulf %3231, %63 : vector<8x16xf32>
      %3233 = arith.addf %3230, %3232 : vector<8x16xf32>
      %cst_1200 = arith.constant 6.12323426E-17 : f32
      %3234 = vector.broadcast %cst_1200 : f32 to vector<8x16xf32>
      %3235 = arith.mulf %3234, %68 : vector<8x16xf32>
      %3236 = arith.addf %3233, %3235 : vector<8x16xf32>
      %cst_1201 = arith.constant -0.276605427 : f32
      %3237 = vector.broadcast %cst_1201 : f32 to vector<8x16xf32>
      %3238 = arith.mulf %3237, %73 : vector<8x16xf32>
      %3239 = arith.addf %3236, %3238 : vector<8x16xf32>
      %cst_1202 = arith.constant -0.00339043047 : f32
      %3240 = vector.broadcast %cst_1202 : f32 to vector<8x16xf32>
      %3241 = arith.mulf %3240, %78 : vector<8x16xf32>
      %3242 = arith.addf %3239, %3241 : vector<8x16xf32>
      %cst_1203 = arith.constant -6.75849151E-5 : f32
      %3243 = vector.broadcast %cst_1203 : f32 to vector<8x16xf32>
      %3244 = arith.mulf %3243, %83 : vector<8x16xf32>
      %3245 = arith.addf %3242, %3244 : vector<8x16xf32>
      %cst_1204 = arith.constant 0.00921614561 : f32
      %3246 = vector.broadcast %cst_1204 : f32 to vector<8x16xf32>
      %3247 = arith.mulf %3246, %88 : vector<8x16xf32>
      %3248 = arith.addf %3245, %3247 : vector<8x16xf32>
      %cst_1205 = arith.constant 0.276605427 : f32
      %3249 = vector.broadcast %cst_1205 : f32 to vector<8x16xf32>
      %3250 = arith.mulf %3249, %93 : vector<8x16xf32>
      %3251 = arith.addf %3248, %3250 : vector<8x16xf32>
      %cst_1206 = arith.constant -3.04216462E-16 : f32
      %3252 = vector.broadcast %cst_1206 : f32 to vector<8x16xf32>
      %3253 = arith.mulf %3252, %98 : vector<8x16xf32>
      %3254 = arith.addf %3251, %3253 : vector<8x16xf32>
      %cst_1207 = arith.constant -0.0374344736 : f32
      %3255 = vector.broadcast %cst_1207 : f32 to vector<8x16xf32>
      %3256 = arith.mulf %3255, %103 : vector<8x16xf32>
      %3257 = arith.addf %3254, %3256 : vector<8x16xf32>
      %cst_1208 = arith.constant -9.78699219E-8 : f32
      %3258 = vector.broadcast %cst_1208 : f32 to vector<8x16xf32>
      %3259 = arith.mulf %3258, %108 : vector<8x16xf32>
      %3260 = arith.addf %3257, %3259 : vector<8x16xf32>
      %cst_1209 = arith.constant -6.75849151E-5 : f32
      %3261 = vector.broadcast %cst_1209 : f32 to vector<8x16xf32>
      %3262 = arith.mulf %3261, %113 : vector<8x16xf32>
      %3263 = arith.addf %3260, %3262 : vector<8x16xf32>
      %cst_1210 = arith.constant 0.00339043047 : f32
      %3264 = vector.broadcast %cst_1210 : f32 to vector<8x16xf32>
      %3265 = arith.mulf %3264, %118 : vector<8x16xf32>
      %3266 = arith.addf %3263, %3265 : vector<8x16xf32>
      %cst_1211 = arith.constant 0.0374344736 : f32
      %3267 = vector.broadcast %cst_1211 : f32 to vector<8x16xf32>
      %3268 = arith.mulf %3267, %123 : vector<8x16xf32>
      %3269 = arith.addf %3266, %3268 : vector<8x16xf32>
      %cst_1212 = arith.constant -2.73467118E-17 : f32
      %3270 = vector.broadcast %cst_1212 : f32 to vector<8x16xf32>
      %3271 = arith.mulf %3270, %128 : vector<8x16xf32>
      %3272 = arith.addf %3269, %3271 : vector<8x16xf32>
      %cst_1213 = arith.constant -5.000000e+00 : f32
      %cst_1214 = arith.constant 5.000000e+00 : f32
      %3273 = vector.broadcast %cst_1213 : f32 to vector<8x16xf32>
      %3274 = arith.maximumf %3273, %3272 : vector<8x16xf32>
      %3275 = vector.broadcast %cst_1214 : f32 to vector<8x16xf32>
      %3276 = arith.minimumf %3275, %3274 : vector<8x16xf32>
      %c0_1215 = arith.constant 0 : index
      %c55 = arith.constant 55 : index
      %3277 = arith.index_cast %3 : i32 to index
      %c0_1216 = arith.constant 0 : index
      %3278 = vector.load %arg3[%c0_1215, %c55, %3277, %c0_1216] : memref<1x62x16x16xf32, #tpu.memory_space<vmem>>, vector<1x1x8x16xf32>
      %3279 = vector.shape_cast %3278 : vector<1x1x8x16xf32> to vector<8x16xf32>
      %3280 = vector.shape_cast %3276 : vector<8x16xf32> to vector<1x1x8x16xf32>
      tpu.vector_store %arg3[%c0_1215, %c55, %3277, %c0_1216], %3280 {strides = array<i32>} : memref<1x62x16x16xf32, #tpu.memory_space<vmem>>, vector<1x1x8x16xf32>,
      %cst_1217 = arith.constant 0.36787945 : f32
      %3281 = vector.broadcast %cst_1217 : f32 to vector<8x16xf32>
      %3282 = arith.mulf %3281, %8 : vector<8x16xf32>
      %cst_1218 = arith.constant -0.352296859 : f32
      %3283 = vector.broadcast %cst_1218 : f32 to vector<8x16xf32>
      %3284 = arith.mulf %3283, %13 : vector<8x16xf32>
      %3285 = arith.addf %3282, %3284 : vector<8x16xf32>
      %cst_1219 = arith.constant 0.0746621191 : f32
      %3286 = vector.broadcast %cst_1219 : f32 to vector<8x16xf32>
      %3287 = arith.mulf %3286, %18 : vector<8x16xf32>
      %3288 = arith.addf %3285, %3287 : vector<8x16xf32>
      %cst_1220 = arith.constant 3.763810e-02 : f32
      %3289 = vector.broadcast %cst_1220 : f32 to vector<8x16xf32>
      %3290 = arith.mulf %3289, %23 : vector<8x16xf32>
      %3291 = arith.addf %3288, %3290 : vector<8x16xf32>
      %cst_1221 = arith.constant -0.0158279911 : f32
      %3292 = vector.broadcast %cst_1221 : f32 to vector<8x16xf32>
      %3293 = arith.mulf %3292, %28 : vector<8x16xf32>
      %3294 = arith.addf %3291, %3293 : vector<8x16xf32>
      %cst_1222 = arith.constant -0.352296859 : f32
      %3295 = vector.broadcast %cst_1222 : f32 to vector<8x16xf32>
      %3296 = arith.mulf %3295, %33 : vector<8x16xf32>
      %3297 = arith.addf %3294, %3296 : vector<8x16xf32>
      %cst_1223 = arith.constant 0.778800785 : f32
      %3298 = vector.broadcast %cst_1223 : f32 to vector<8x16xf32>
      %3299 = arith.mulf %3298, %38 : vector<8x16xf32>
      %3300 = arith.addf %3297, %3299 : vector<8x16xf32>
      %cst_1224 = arith.constant -0.580839336 : f32
      %3301 = vector.broadcast %cst_1224 : f32 to vector<8x16xf32>
      %3302 = arith.mulf %3301, %43 : vector<8x16xf32>
      %3303 = arith.addf %3300, %3302 : vector<8x16xf32>
      %cst_1225 = arith.constant 0.095868066 : f32
      %3304 = vector.broadcast %cst_1225 : f32 to vector<8x16xf32>
      %3305 = arith.mulf %3304, %48 : vector<8x16xf32>
      %3306 = arith.addf %3303, %3305 : vector<8x16xf32>
      %cst_1226 = arith.constant 3.763810e-02 : f32
      %3307 = vector.broadcast %cst_1226 : f32 to vector<8x16xf32>
      %3308 = arith.mulf %3307, %53 : vector<8x16xf32>
      %3309 = arith.addf %3306, %3308 : vector<8x16xf32>
      %cst_1227 = arith.constant 0.0746621191 : f32
      %3310 = vector.broadcast %cst_1227 : f32 to vector<8x16xf32>
      %3311 = arith.mulf %3310, %58 : vector<8x16xf32>
      %3312 = arith.addf %3309, %3311 : vector<8x16xf32>
      %cst_1228 = arith.constant -0.580839336 : f32
      %3313 = vector.broadcast %cst_1228 : f32 to vector<8x16xf32>
      %3314 = arith.mulf %3313, %63 : vector<8x16xf32>
      %3315 = arith.addf %3312, %3314 : vector<8x16xf32>
      %cst_1229 = arith.constant 1.000000e+00 : f32
      %3316 = vector.broadcast %cst_1229 : f32 to vector<8x16xf32>
      %3317 = arith.mulf %3316, %68 : vector<8x16xf32>
      %3318 = arith.addf %3315, %3317 : vector<8x16xf32>
      %cst_1230 = arith.constant -0.580839336 : f32
      %3319 = vector.broadcast %cst_1230 : f32 to vector<8x16xf32>
      %3320 = arith.mulf %3319, %73 : vector<8x16xf32>
      %3321 = arith.addf %3318, %3320 : vector<8x16xf32>
      %cst_1231 = arith.constant 0.0746621191 : f32
      %3322 = vector.broadcast %cst_1231 : f32 to vector<8x16xf32>
      %3323 = arith.mulf %3322, %78 : vector<8x16xf32>
      %3324 = arith.addf %3321, %3323 : vector<8x16xf32>
      %cst_1232 = arith.constant 3.763810e-02 : f32
      %3325 = vector.broadcast %cst_1232 : f32 to vector<8x16xf32>
      %3326 = arith.mulf %3325, %83 : vector<8x16xf32>
      %3327 = arith.addf %3324, %3326 : vector<8x16xf32>
      %cst_1233 = arith.constant 0.095868066 : f32
      %3328 = vector.broadcast %cst_1233 : f32 to vector<8x16xf32>
      %3329 = arith.mulf %3328, %88 : vector<8x16xf32>
      %3330 = arith.addf %3327, %3329 : vector<8x16xf32>
      %cst_1234 = arith.constant -0.580839336 : f32
      %3331 = vector.broadcast %cst_1234 : f32 to vector<8x16xf32>
      %3332 = arith.mulf %3331, %93 : vector<8x16xf32>
      %3333 = arith.addf %3330, %3332 : vector<8x16xf32>
      %cst_1235 = arith.constant 0.778800785 : f32
      %3334 = vector.broadcast %cst_1235 : f32 to vector<8x16xf32>
      %3335 = arith.mulf %3334, %98 : vector<8x16xf32>
      %3336 = arith.addf %3333, %3335 : vector<8x16xf32>
      %cst_1236 = arith.constant -0.352296859 : f32
      %3337 = vector.broadcast %cst_1236 : f32 to vector<8x16xf32>
      %3338 = arith.mulf %3337, %103 : vector<8x16xf32>
      %3339 = arith.addf %3336, %3338 : vector<8x16xf32>
      %cst_1237 = arith.constant -0.0158279911 : f32
      %3340 = vector.broadcast %cst_1237 : f32 to vector<8x16xf32>
      %3341 = arith.mulf %3340, %108 : vector<8x16xf32>
      %3342 = arith.addf %3339, %3341 : vector<8x16xf32>
      %cst_1238 = arith.constant 3.763810e-02 : f32
      %3343 = vector.broadcast %cst_1238 : f32 to vector<8x16xf32>
      %3344 = arith.mulf %3343, %113 : vector<8x16xf32>
      %3345 = arith.addf %3342, %3344 : vector<8x16xf32>
      %cst_1239 = arith.constant 0.0746621191 : f32
      %3346 = vector.broadcast %cst_1239 : f32 to vector<8x16xf32>
      %3347 = arith.mulf %3346, %118 : vector<8x16xf32>
      %3348 = arith.addf %3345, %3347 : vector<8x16xf32>
      %cst_1240 = arith.constant -0.352296859 : f32
      %3349 = vector.broadcast %cst_1240 : f32 to vector<8x16xf32>
      %3350 = arith.mulf %3349, %123 : vector<8x16xf32>
      %3351 = arith.addf %3348, %3350 : vector<8x16xf32>
      %cst_1241 = arith.constant 0.36787945 : f32
      %3352 = vector.broadcast %cst_1241 : f32 to vector<8x16xf32>
      %3353 = arith.mulf %3352, %128 : vector<8x16xf32>
      %3354 = arith.addf %3351, %3353 : vector<8x16xf32>
      %cst_1242 = arith.constant -5.000000e+00 : f32
      %cst_1243 = arith.constant 5.000000e+00 : f32
      %3355 = vector.broadcast %cst_1242 : f32 to vector<8x16xf32>
      %3356 = arith.maximumf %3355, %3354 : vector<8x16xf32>
      %3357 = vector.broadcast %cst_1243 : f32 to vector<8x16xf32>
      %3358 = arith.minimumf %3357, %3356 : vector<8x16xf32>
      %c0_1244 = arith.constant 0 : index
      %c56 = arith.constant 56 : index
      %3359 = arith.index_cast %3 : i32 to index
      %c0_1245 = arith.constant 0 : index
      %3360 = vector.load %arg3[%c0_1244, %c56, %3359, %c0_1245] : memref<1x62x16x16xf32, #tpu.memory_space<vmem>>, vector<1x1x8x16xf32>
      %3361 = vector.shape_cast %3360 : vector<1x1x8x16xf32> to vector<8x16xf32>
      %3362 = vector.shape_cast %3358 : vector<8x16xf32> to vector<1x1x8x16xf32>
      tpu.vector_store %arg3[%c0_1244, %c56, %3359, %c0_1245], %3362 {strides = array<i32>} : memref<1x62x16x16xf32, #tpu.memory_space<vmem>>, vector<1x1x8x16xf32>,
      %cst_1246 = arith.constant 3.49268689E-16 : f32
      %3363 = vector.broadcast %cst_1246 : f32 to vector<8x16xf32>
      %3364 = arith.mulf %3363, %8 : vector<8x16xf32>
      %cst_1247 = arith.constant 0.269812167 : f32
      %3365 = vector.broadcast %cst_1247 : f32 to vector<8x16xf32>
      %3366 = arith.mulf %3365, %13 : vector<8x16xf32>
      %3367 = arith.addf %3364, %3366 : vector<8x16xf32>
      %cst_1248 = arith.constant -0.276605427 : f32
      %3368 = vector.broadcast %cst_1248 : f32 to vector<8x16xf32>
      %3369 = arith.mulf %3368, %18 : vector<8x16xf32>
      %3370 = arith.addf %3367, %3369 : vector<8x16xf32>
      %cst_1249 = arith.constant 0.0915807187 : f32
      %3371 = vector.broadcast %cst_1249 : f32 to vector<8x16xf32>
      %3372 = arith.mulf %3371, %23 : vector<8x16xf32>
      %3373 = arith.addf %3370, %3372 : vector<8x16xf32>
      %cst_1250 = arith.constant -0.00921614561 : f32
      %3374 = vector.broadcast %cst_1250 : f32 to vector<8x16xf32>
      %3375 = arith.mulf %3374, %28 : vector<8x16xf32>
      %3376 = arith.addf %3373, %3375 : vector<8x16xf32>
      %cst_1251 = arith.constant -0.269812167 : f32
      %3377 = vector.broadcast %cst_1251 : f32 to vector<8x16xf32>
      %3378 = arith.mulf %3377, %33 : vector<8x16xf32>
      %3379 = arith.addf %3376, %3378 : vector<8x16xf32>
      %cst_1252 = arith.constant 3.93544822E-16 : f32
      %3380 = vector.broadcast %cst_1252 : f32 to vector<8x16xf32>
      %3381 = arith.mulf %3380, %38 : vector<8x16xf32>
      %3382 = arith.addf %3379, %3381 : vector<8x16xf32>
      %cst_1253 = arith.constant 0.444845051 : f32
      %3383 = vector.broadcast %cst_1253 : f32 to vector<8x16xf32>
      %3384 = arith.mulf %3383, %43 : vector<8x16xf32>
      %3385 = arith.addf %3382, %3384 : vector<8x16xf32>
      %cst_1254 = arith.constant -0.355168402 : f32
      %3386 = vector.broadcast %cst_1254 : f32 to vector<8x16xf32>
      %3387 = arith.mulf %3386, %48 : vector<8x16xf32>
      %3388 = arith.addf %3385, %3387 : vector<8x16xf32>
      %cst_1255 = arith.constant 0.0915807187 : f32
      %3389 = vector.broadcast %cst_1255 : f32 to vector<8x16xf32>
      %3390 = arith.mulf %3389, %53 : vector<8x16xf32>
      %3391 = arith.addf %3388, %3390 : vector<8x16xf32>
      %cst_1256 = arith.constant 0.276605427 : f32
      %3392 = vector.broadcast %cst_1256 : f32 to vector<8x16xf32>
      %3393 = arith.mulf %3392, %58 : vector<8x16xf32>
      %3394 = arith.addf %3391, %3393 : vector<8x16xf32>
      %cst_1257 = arith.constant -0.444845051 : f32
      %3395 = vector.broadcast %cst_1257 : f32 to vector<8x16xf32>
      %3396 = arith.mulf %3395, %63 : vector<8x16xf32>
      %3397 = arith.addf %3394, %3396 : vector<8x16xf32>
      %cst_1258 = arith.constant 6.12323426E-17 : f32
      %3398 = vector.broadcast %cst_1258 : f32 to vector<8x16xf32>
      %3399 = arith.mulf %3398, %68 : vector<8x16xf32>
      %3400 = arith.addf %3397, %3399 : vector<8x16xf32>
      %cst_1259 = arith.constant 0.444845051 : f32
      %3401 = vector.broadcast %cst_1259 : f32 to vector<8x16xf32>
      %3402 = arith.mulf %3401, %73 : vector<8x16xf32>
      %3403 = arith.addf %3400, %3402 : vector<8x16xf32>
      %cst_1260 = arith.constant -0.276605427 : f32
      %3404 = vector.broadcast %cst_1260 : f32 to vector<8x16xf32>
      %3405 = arith.mulf %3404, %78 : vector<8x16xf32>
      %3406 = arith.addf %3403, %3405 : vector<8x16xf32>
      %cst_1261 = arith.constant -0.0915807187 : f32
      %3407 = vector.broadcast %cst_1261 : f32 to vector<8x16xf32>
      %3408 = arith.mulf %3407, %83 : vector<8x16xf32>
      %3409 = arith.addf %3406, %3408 : vector<8x16xf32>
      %cst_1262 = arith.constant 0.355168402 : f32
      %3410 = vector.broadcast %cst_1262 : f32 to vector<8x16xf32>
      %3411 = arith.mulf %3410, %88 : vector<8x16xf32>
      %3412 = arith.addf %3409, %3411 : vector<8x16xf32>
      %cst_1263 = arith.constant -0.444845051 : f32
      %3413 = vector.broadcast %cst_1263 : f32 to vector<8x16xf32>
      %3414 = arith.mulf %3413, %93 : vector<8x16xf32>
      %3415 = arith.addf %3412, %3414 : vector<8x16xf32>
      %cst_1264 = arith.constant -2.98169229E-16 : f32
      %3416 = vector.broadcast %cst_1264 : f32 to vector<8x16xf32>
      %3417 = arith.mulf %3416, %98 : vector<8x16xf32>
      %3418 = arith.addf %3415, %3417 : vector<8x16xf32>
      %cst_1265 = arith.constant 0.269812167 : f32
      %3419 = vector.broadcast %cst_1265 : f32 to vector<8x16xf32>
      %3420 = arith.mulf %3419, %103 : vector<8x16xf32>
      %3421 = arith.addf %3418, %3420 : vector<8x16xf32>
      %cst_1266 = arith.constant 0.00921614561 : f32
      %3422 = vector.broadcast %cst_1266 : f32 to vector<8x16xf32>
      %3423 = arith.mulf %3422, %108 : vector<8x16xf32>
      %3424 = arith.addf %3421, %3423 : vector<8x16xf32>
      %cst_1267 = arith.constant -0.0915807187 : f32
      %3425 = vector.broadcast %cst_1267 : f32 to vector<8x16xf32>
      %3426 = arith.mulf %3425, %113 : vector<8x16xf32>
      %3427 = arith.addf %3424, %3426 : vector<8x16xf32>
      %cst_1268 = arith.constant 0.276605427 : f32
      %3428 = vector.broadcast %cst_1268 : f32 to vector<8x16xf32>
      %3429 = arith.mulf %3428, %118 : vector<8x16xf32>
      %3430 = arith.addf %3427, %3429 : vector<8x16xf32>
      %cst_1269 = arith.constant -0.269812167 : f32
      %3431 = vector.broadcast %cst_1269 : f32 to vector<8x16xf32>
      %3432 = arith.mulf %3431, %123 : vector<8x16xf32>
      %3433 = arith.addf %3430, %3432 : vector<8x16xf32>
      %cst_1270 = arith.constant -3.04216462E-16 : f32
      %3434 = vector.broadcast %cst_1270 : f32 to vector<8x16xf32>
      %3435 = arith.mulf %3434, %128 : vector<8x16xf32>
      %3436 = arith.addf %3433, %3435 : vector<8x16xf32>
      %cst_1271 = arith.constant -5.000000e+00 : f32
      %cst_1272 = arith.constant 5.000000e+00 : f32
      %3437 = vector.broadcast %cst_1271 : f32 to vector<8x16xf32>
      %3438 = arith.maximumf %3437, %3436 : vector<8x16xf32>
      %3439 = vector.broadcast %cst_1272 : f32 to vector<8x16xf32>
      %3440 = arith.minimumf %3439, %3438 : vector<8x16xf32>
      %c0_1273 = arith.constant 0 : index
      %c57 = arith.constant 57 : index
      %3441 = arith.index_cast %3 : i32 to index
      %c0_1274 = arith.constant 0 : index
      %3442 = vector.load %arg3[%c0_1273, %c57, %3441, %c0_1274] : memref<1x62x16x16xf32, #tpu.memory_space<vmem>>, vector<1x1x8x16xf32>
      %3443 = vector.shape_cast %3442 : vector<1x1x8x16xf32> to vector<8x16xf32>
      %3444 = vector.shape_cast %3440 : vector<8x16xf32> to vector<1x1x8x16xf32>
      tpu.vector_store %arg3[%c0_1273, %c57, %3441, %c0_1274], %3444 {strides = array<i32>} : memref<1x62x16x16xf32, #tpu.memory_space<vmem>>, vector<1x1x8x16xf32>,
      %cst_1275 = arith.constant 7.41817581E-4 : f32
      %3445 = vector.broadcast %cst_1275 : f32 to vector<8x16xf32>
      %3446 = arith.mulf %3445, %8 : vector<8x16xf32>
      %cst_1276 = arith.constant 0.0347614326 : f32
      %3447 = vector.broadcast %cst_1276 : f32 to vector<8x16xf32>
      %3448 = arith.mulf %3447, %13 : vector<8x16xf32>
      %3449 = arith.addf %3446, %3448 : vector<8x16xf32>
      %cst_1277 = arith.constant 0.0350644775 : f32
      %3450 = vector.broadcast %cst_1277 : f32 to vector<8x16xf32>
      %3451 = arith.mulf %3450, %18 : vector<8x16xf32>
      %3452 = arith.addf %3449, %3451 : vector<8x16xf32>
      %cst_1278 = arith.constant 8.84057953E-4 : f32
      %3453 = vector.broadcast %cst_1278 : f32 to vector<8x16xf32>
      %3454 = arith.mulf %3453, %23 : vector<8x16xf32>
      %3455 = arith.addf %3452, %3454 : vector<8x16xf32>
      %cst_1279 = arith.constant 5.84405882E-7 : f32
      %3456 = vector.broadcast %cst_1279 : f32 to vector<8x16xf32>
      %3457 = arith.mulf %3456, %28 : vector<8x16xf32>
      %3458 = arith.addf %3455, %3457 : vector<8x16xf32>
      %cst_1280 = arith.constant -0.00207717228 : f32
      %3459 = vector.broadcast %cst_1280 : f32 to vector<8x16xf32>
      %3460 = arith.mulf %3459, %33 : vector<8x16xf32>
      %3461 = arith.addf %3458, %3460 : vector<8x16xf32>
      %cst_1281 = arith.constant -1.862880e-01 : f32
      %3462 = vector.broadcast %cst_1281 : f32 to vector<8x16xf32>
      %3463 = arith.mulf %3462, %38 : vector<8x16xf32>
      %3464 = arith.addf %3461, %3463 : vector<8x16xf32>
      %cst_1282 = arith.constant -0.438738555 : f32
      %3465 = vector.broadcast %cst_1282 : f32 to vector<8x16xf32>
      %3466 = arith.mulf %3465, %43 : vector<8x16xf32>
      %3467 = arith.addf %3464, %3466 : vector<8x16xf32>
      %cst_1283 = arith.constant -0.0276698675 : f32
      %3468 = vector.broadcast %cst_1283 : f32 to vector<8x16xf32>
      %3469 = arith.mulf %3468, %48 : vector<8x16xf32>
      %3470 = arith.addf %3467, %3469 : vector<8x16xf32>
      %cst_1284 = arith.constant -4.71403036E-5 : f32
      %3471 = vector.broadcast %cst_1284 : f32 to vector<8x16xf32>
      %3472 = arith.mulf %3471, %53 : vector<8x16xf32>
      %3473 = arith.addf %3470, %3472 : vector<8x16xf32>
      %cst_1285 = arith.constant 7.31926353E-4 : f32
      %3474 = vector.broadcast %cst_1285 : f32 to vector<8x16xf32>
      %3475 = arith.mulf %3474, %58 : vector<8x16xf32>
      %3476 = arith.addf %3473, %3475 : vector<8x16xf32>
      %cst_1286 = arith.constant 0.164581165 : f32
      %3477 = vector.broadcast %cst_1286 : f32 to vector<8x16xf32>
      %3478 = arith.mulf %3477, %63 : vector<8x16xf32>
      %3479 = arith.addf %3476, %3478 : vector<8x16xf32>
      %cst_1287 = arith.constant 1.000000e+00 : f32
      %3480 = vector.broadcast %cst_1287 : f32 to vector<8x16xf32>
      %3481 = arith.mulf %3480, %68 : vector<8x16xf32>
      %3482 = arith.addf %3479, %3481 : vector<8x16xf32>
      %cst_1288 = arith.constant 0.164581165 : f32
      %3483 = vector.broadcast %cst_1288 : f32 to vector<8x16xf32>
      %3484 = arith.mulf %3483, %73 : vector<8x16xf32>
      %3485 = arith.addf %3482, %3484 : vector<8x16xf32>
      %cst_1289 = arith.constant 7.31926353E-4 : f32
      %3486 = vector.broadcast %cst_1289 : f32 to vector<8x16xf32>
      %3487 = arith.mulf %3486, %78 : vector<8x16xf32>
      %3488 = arith.addf %3485, %3487 : vector<8x16xf32>
      %cst_1290 = arith.constant -4.71403036E-5 : f32
      %3489 = vector.broadcast %cst_1290 : f32 to vector<8x16xf32>
      %3490 = arith.mulf %3489, %83 : vector<8x16xf32>
      %3491 = arith.addf %3488, %3490 : vector<8x16xf32>
      %cst_1291 = arith.constant -0.0276698675 : f32
      %3492 = vector.broadcast %cst_1291 : f32 to vector<8x16xf32>
      %3493 = arith.mulf %3492, %88 : vector<8x16xf32>
      %3494 = arith.addf %3491, %3493 : vector<8x16xf32>
      %cst_1292 = arith.constant -0.438738555 : f32
      %3495 = vector.broadcast %cst_1292 : f32 to vector<8x16xf32>
      %3496 = arith.mulf %3495, %93 : vector<8x16xf32>
      %3497 = arith.addf %3494, %3496 : vector<8x16xf32>
      %cst_1293 = arith.constant -1.862880e-01 : f32
      %3498 = vector.broadcast %cst_1293 : f32 to vector<8x16xf32>
      %3499 = arith.mulf %3498, %98 : vector<8x16xf32>
      %3500 = arith.addf %3497, %3499 : vector<8x16xf32>
      %cst_1294 = arith.constant -0.00207717228 : f32
      %3501 = vector.broadcast %cst_1294 : f32 to vector<8x16xf32>
      %3502 = arith.mulf %3501, %103 : vector<8x16xf32>
      %3503 = arith.addf %3500, %3502 : vector<8x16xf32>
      %cst_1295 = arith.constant 5.84405882E-7 : f32
      %3504 = vector.broadcast %cst_1295 : f32 to vector<8x16xf32>
      %3505 = arith.mulf %3504, %108 : vector<8x16xf32>
      %3506 = arith.addf %3503, %3505 : vector<8x16xf32>
      %cst_1296 = arith.constant 8.84057953E-4 : f32
      %3507 = vector.broadcast %cst_1296 : f32 to vector<8x16xf32>
      %3508 = arith.mulf %3507, %113 : vector<8x16xf32>
      %3509 = arith.addf %3506, %3508 : vector<8x16xf32>
      %cst_1297 = arith.constant 0.0350644775 : f32
      %3510 = vector.broadcast %cst_1297 : f32 to vector<8x16xf32>
      %3511 = arith.mulf %3510, %118 : vector<8x16xf32>
      %3512 = arith.addf %3509, %3511 : vector<8x16xf32>
      %cst_1298 = arith.constant 0.0347614326 : f32
      %3513 = vector.broadcast %cst_1298 : f32 to vector<8x16xf32>
      %3514 = arith.mulf %3513, %123 : vector<8x16xf32>
      %3515 = arith.addf %3512, %3514 : vector<8x16xf32>
      %cst_1299 = arith.constant 7.41817581E-4 : f32
      %3516 = vector.broadcast %cst_1299 : f32 to vector<8x16xf32>
      %3517 = arith.mulf %3516, %128 : vector<8x16xf32>
      %3518 = arith.addf %3515, %3517 : vector<8x16xf32>
      %cst_1300 = arith.constant -5.000000e+00 : f32
      %cst_1301 = arith.constant 5.000000e+00 : f32
      %3519 = vector.broadcast %cst_1300 : f32 to vector<8x16xf32>
      %3520 = arith.maximumf %3519, %3518 : vector<8x16xf32>
      %3521 = vector.broadcast %cst_1301 : f32 to vector<8x16xf32>
      %3522 = arith.minimumf %3521, %3520 : vector<8x16xf32>
      %c0_1302 = arith.constant 0 : index
      %c58 = arith.constant 58 : index
      %3523 = arith.index_cast %3 : i32 to index
      %c0_1303 = arith.constant 0 : index
      %3524 = vector.load %arg3[%c0_1302, %c58, %3523, %c0_1303] : memref<1x62x16x16xf32, #tpu.memory_space<vmem>>, vector<1x1x8x16xf32>
      %3525 = vector.shape_cast %3524 : vector<1x1x8x16xf32> to vector<8x16xf32>
      %3526 = vector.shape_cast %3522 : vector<8x16xf32> to vector<1x1x8x16xf32>
      tpu.vector_store %arg3[%c0_1302, %c58, %3523, %c0_1303], %3526 {strides = array<i32>} : memref<1x62x16x16xf32, #tpu.memory_space<vmem>>, vector<1x1x8x16xf32>,
      %cst_1304 = arith.constant -0.0030711221 : f32
      %3527 = vector.broadcast %cst_1304 : f32 to vector<8x16xf32>
      %3528 = arith.mulf %3527, %8 : vector<8x16xf32>
      %cst_1305 = arith.constant -0.0709955096 : f32
      %3529 = vector.broadcast %cst_1305 : f32 to vector<8x16xf32>
      %3530 = arith.mulf %3529, %13 : vector<8x16xf32>
      %3531 = arith.addf %3528, %3530 : vector<8x16xf32>
      %cst_1306 = arith.constant -0.0439309254 : f32
      %3532 = vector.broadcast %cst_1306 : f32 to vector<8x16xf32>
      %3533 = arith.mulf %3532, %18 : vector<8x16xf32>
      %3534 = arith.addf %3531, %3533 : vector<8x16xf32>
      %cst_1307 = arith.constant -7.13239191E-4 : f32
      %3535 = vector.broadcast %cst_1307 : f32 to vector<8x16xf32>
      %3536 = arith.mulf %3535, %23 : vector<8x16xf32>
      %3537 = arith.addf %3534, %3536 : vector<8x16xf32>
      %cst_1308 = arith.constant -2.89944296E-7 : f32
      %3538 = vector.broadcast %cst_1308 : f32 to vector<8x16xf32>
      %3539 = arith.mulf %3538, %28 : vector<8x16xf32>
      %3540 = arith.addf %3537, %3539 : vector<8x16xf32>
      %cst_1309 = arith.constant 0.0025394808 : f32
      %3541 = vector.broadcast %cst_1309 : f32 to vector<8x16xf32>
      %3542 = arith.mulf %3541, %33 : vector<8x16xf32>
      %3543 = arith.addf %3540, %3542 : vector<8x16xf32>
      %cst_1310 = arith.constant 0.146648258 : f32
      %3544 = vector.broadcast %cst_1310 : f32 to vector<8x16xf32>
      %3545 = arith.mulf %3544, %38 : vector<8x16xf32>
      %3546 = arith.addf %3543, %3545 : vector<8x16xf32>
      %cst_1311 = arith.constant 0.211169854 : f32
      %3547 = vector.broadcast %cst_1311 : f32 to vector<8x16xf32>
      %3548 = arith.mulf %3547, %43 : vector<8x16xf32>
      %3549 = arith.addf %3546, %3548 : vector<8x16xf32>
      %cst_1312 = arith.constant 0.00648675672 : f32
      %3550 = vector.broadcast %cst_1312 : f32 to vector<8x16xf32>
      %3551 = arith.mulf %3550, %48 : vector<8x16xf32>
      %3552 = arith.addf %3549, %3551 : vector<8x16xf32>
      %cst_1313 = arith.constant 5.64094421E-7 : f32
      %3553 = vector.broadcast %cst_1313 : f32 to vector<8x16xf32>
      %3554 = arith.mulf %3553, %53 : vector<8x16xf32>
      %3555 = arith.addf %3552, %3554 : vector<8x16xf32>
      %cst_1314 = arith.constant -3.41558829E-4 : f32
      %3556 = vector.broadcast %cst_1314 : f32 to vector<8x16xf32>
      %3557 = arith.mulf %3556, %58 : vector<8x16xf32>
      %3558 = arith.addf %3555, %3557 : vector<8x16xf32>
      %cst_1315 = arith.constant -0.0365115628 : f32
      %3559 = vector.broadcast %cst_1315 : f32 to vector<8x16xf32>
      %3560 = arith.mulf %3559, %63 : vector<8x16xf32>
      %3561 = arith.addf %3558, %3560 : vector<8x16xf32>
      %cst_1316 = arith.constant 6.12323426E-17 : f32
      %3562 = vector.broadcast %cst_1316 : f32 to vector<8x16xf32>
      %3563 = arith.mulf %3562, %68 : vector<8x16xf32>
      %3564 = arith.addf %3561, %3563 : vector<8x16xf32>
      %cst_1317 = arith.constant 0.0365115628 : f32
      %3565 = vector.broadcast %cst_1317 : f32 to vector<8x16xf32>
      %3566 = arith.mulf %3565, %73 : vector<8x16xf32>
      %3567 = arith.addf %3564, %3566 : vector<8x16xf32>
      %cst_1318 = arith.constant 3.41558829E-4 : f32
      %3568 = vector.broadcast %cst_1318 : f32 to vector<8x16xf32>
      %3569 = arith.mulf %3568, %78 : vector<8x16xf32>
      %3570 = arith.addf %3567, %3569 : vector<8x16xf32>
      %cst_1319 = arith.constant -5.64094421E-7 : f32
      %3571 = vector.broadcast %cst_1319 : f32 to vector<8x16xf32>
      %3572 = arith.mulf %3571, %83 : vector<8x16xf32>
      %3573 = arith.addf %3570, %3572 : vector<8x16xf32>
      %cst_1320 = arith.constant -0.00648675672 : f32
      %3574 = vector.broadcast %cst_1320 : f32 to vector<8x16xf32>
      %3575 = arith.mulf %3574, %88 : vector<8x16xf32>
      %3576 = arith.addf %3573, %3575 : vector<8x16xf32>
      %cst_1321 = arith.constant -0.211169854 : f32
      %3577 = vector.broadcast %cst_1321 : f32 to vector<8x16xf32>
      %3578 = arith.mulf %3577, %93 : vector<8x16xf32>
      %3579 = arith.addf %3576, %3578 : vector<8x16xf32>
      %cst_1322 = arith.constant -0.146648258 : f32
      %3580 = vector.broadcast %cst_1322 : f32 to vector<8x16xf32>
      %3581 = arith.mulf %3580, %98 : vector<8x16xf32>
      %3582 = arith.addf %3579, %3581 : vector<8x16xf32>
      %cst_1323 = arith.constant -0.0025394808 : f32
      %3583 = vector.broadcast %cst_1323 : f32 to vector<8x16xf32>
      %3584 = arith.mulf %3583, %103 : vector<8x16xf32>
      %3585 = arith.addf %3582, %3584 : vector<8x16xf32>
      %cst_1324 = arith.constant 2.89944296E-7 : f32
      %3586 = vector.broadcast %cst_1324 : f32 to vector<8x16xf32>
      %3587 = arith.mulf %3586, %108 : vector<8x16xf32>
      %3588 = arith.addf %3585, %3587 : vector<8x16xf32>
      %cst_1325 = arith.constant 7.13239191E-4 : f32
      %3589 = vector.broadcast %cst_1325 : f32 to vector<8x16xf32>
      %3590 = arith.mulf %3589, %113 : vector<8x16xf32>
      %3591 = arith.addf %3588, %3590 : vector<8x16xf32>
      %cst_1326 = arith.constant 0.0439309254 : f32
      %3592 = vector.broadcast %cst_1326 : f32 to vector<8x16xf32>
      %3593 = arith.mulf %3592, %118 : vector<8x16xf32>
      %3594 = arith.addf %3591, %3593 : vector<8x16xf32>
      %cst_1327 = arith.constant 0.0709955096 : f32
      %3595 = vector.broadcast %cst_1327 : f32 to vector<8x16xf32>
      %3596 = arith.mulf %3595, %123 : vector<8x16xf32>
      %3597 = arith.addf %3594, %3596 : vector<8x16xf32>
      %cst_1328 = arith.constant 0.0030711221 : f32
      %3598 = vector.broadcast %cst_1328 : f32 to vector<8x16xf32>
      %3599 = arith.mulf %3598, %128 : vector<8x16xf32>
      %3600 = arith.addf %3597, %3599 : vector<8x16xf32>
      %cst_1329 = arith.constant -5.000000e+00 : f32
      %cst_1330 = arith.constant 5.000000e+00 : f32
      %3601 = vector.broadcast %cst_1329 : f32 to vector<8x16xf32>
      %3602 = arith.maximumf %3601, %3600 : vector<8x16xf32>
      %3603 = vector.broadcast %cst_1330 : f32 to vector<8x16xf32>
      %3604 = arith.minimumf %3603, %3602 : vector<8x16xf32>
      %c0_1331 = arith.constant 0 : index
      %c59 = arith.constant 59 : index
      %3605 = arith.index_cast %3 : i32 to index
      %c0_1332 = arith.constant 0 : index
      %3606 = vector.load %arg3[%c0_1331, %c59, %3605, %c0_1332] : memref<1x62x16x16xf32, #tpu.memory_space<vmem>>, vector<1x1x8x16xf32>
      %3607 = vector.shape_cast %3606 : vector<1x1x8x16xf32> to vector<8x16xf32>
      %3608 = vector.shape_cast %3604 : vector<8x16xf32> to vector<1x1x8x16xf32>
      tpu.vector_store %arg3[%c0_1331, %c59, %3605, %c0_1332], %3608 {strides = array<i32>} : memref<1x62x16x16xf32, #tpu.memory_space<vmem>>, vector<1x1x8x16xf32>,
      %cst_1333 = arith.constant -1.862880e-01 : f32
      %3609 = vector.broadcast %cst_1333 : f32 to vector<8x16xf32>
      %3610 = arith.mulf %3609, %8 : vector<8x16xf32>
      %cst_1334 = arith.constant 0.449885368 : f32
      %3611 = vector.broadcast %cst_1334 : f32 to vector<8x16xf32>
      %3612 = arith.mulf %3611, %13 : vector<8x16xf32>
      %3613 = arith.addf %3610, %3612 : vector<8x16xf32>
      %cst_1335 = arith.constant -0.438738555 : f32
      %3614 = vector.broadcast %cst_1335 : f32 to vector<8x16xf32>
      %3615 = arith.mulf %3614, %18 : vector<8x16xf32>
      %3616 = arith.addf %3613, %3615 : vector<8x16xf32>
      %cst_1336 = arith.constant 0.173109591 : f32
      %3617 = vector.broadcast %cst_1336 : f32 to vector<8x16xf32>
      %3618 = arith.mulf %3617, %23 : vector<8x16xf32>
      %3619 = arith.addf %3616, %3618 : vector<8x16xf32>
      %cst_1337 = arith.constant -0.0276698675 : f32
      %3620 = vector.broadcast %cst_1337 : f32 to vector<8x16xf32>
      %3621 = arith.mulf %3620, %28 : vector<8x16xf32>
      %3622 = arith.addf %3619, %3621 : vector<8x16xf32>
      %cst_1338 = arith.constant 0.102502681 : f32
      %3623 = vector.broadcast %cst_1338 : f32 to vector<8x16xf32>
      %3624 = arith.mulf %3623, %33 : vector<8x16xf32>
      %3625 = arith.addf %3622, %3624 : vector<8x16xf32>
      %cst_1339 = arith.constant -0.22838895 : f32
      %3626 = vector.broadcast %cst_1339 : f32 to vector<8x16xf32>
      %3627 = arith.mulf %3626, %38 : vector<8x16xf32>
      %3628 = arith.addf %3625, %3627 : vector<8x16xf32>
      %cst_1340 = arith.constant 0.185793415 : f32
      %3629 = vector.broadcast %cst_1340 : f32 to vector<8x16xf32>
      %3630 = arith.mulf %3629, %43 : vector<8x16xf32>
      %3631 = arith.addf %3628, %3630 : vector<8x16xf32>
      %cst_1341 = arith.constant -0.0471697897 : f32
      %3632 = vector.broadcast %cst_1341 : f32 to vector<8x16xf32>
      %3633 = arith.mulf %3632, %48 : vector<8x16xf32>
      %3634 = arith.addf %3631, %3633 : vector<8x16xf32>
      %cst_1342 = arith.constant 4.95749176E-4 : f32
      %3635 = vector.broadcast %cst_1342 : f32 to vector<8x16xf32>
      %3636 = arith.mulf %3635, %53 : vector<8x16xf32>
      %3637 = arith.addf %3634, %3636 : vector<8x16xf32>
      %cst_1343 = arith.constant 0.164581165 : f32
      %3638 = vector.broadcast %cst_1343 : f32 to vector<8x16xf32>
      %3639 = arith.mulf %3638, %58 : vector<8x16xf32>
      %3640 = arith.addf %3637, %3639 : vector<8x16xf32>
      %cst_1344 = arith.constant -0.636957884 : f32
      %3641 = vector.broadcast %cst_1344 : f32 to vector<8x16xf32>
      %3642 = arith.mulf %3641, %63 : vector<8x16xf32>
      %3643 = arith.addf %3640, %3642 : vector<8x16xf32>
      %cst_1345 = arith.constant 1.000000e+00 : f32
      %3644 = vector.broadcast %cst_1345 : f32 to vector<8x16xf32>
      %3645 = arith.mulf %3644, %68 : vector<8x16xf32>
      %3646 = arith.addf %3643, %3645 : vector<8x16xf32>
      %cst_1346 = arith.constant -0.636957884 : f32
      %3647 = vector.broadcast %cst_1346 : f32 to vector<8x16xf32>
      %3648 = arith.mulf %3647, %73 : vector<8x16xf32>
      %3649 = arith.addf %3646, %3648 : vector<8x16xf32>
      %cst_1347 = arith.constant 0.164581165 : f32
      %3650 = vector.broadcast %cst_1347 : f32 to vector<8x16xf32>
      %3651 = arith.mulf %3650, %78 : vector<8x16xf32>
      %3652 = arith.addf %3649, %3651 : vector<8x16xf32>
      %cst_1348 = arith.constant 4.95749176E-4 : f32
      %3653 = vector.broadcast %cst_1348 : f32 to vector<8x16xf32>
      %3654 = arith.mulf %3653, %83 : vector<8x16xf32>
      %3655 = arith.addf %3652, %3654 : vector<8x16xf32>
      %cst_1349 = arith.constant -0.0471697897 : f32
      %3656 = vector.broadcast %cst_1349 : f32 to vector<8x16xf32>
      %3657 = arith.mulf %3656, %88 : vector<8x16xf32>
      %3658 = arith.addf %3655, %3657 : vector<8x16xf32>
      %cst_1350 = arith.constant 0.185793415 : f32
      %3659 = vector.broadcast %cst_1350 : f32 to vector<8x16xf32>
      %3660 = arith.mulf %3659, %93 : vector<8x16xf32>
      %3661 = arith.addf %3658, %3660 : vector<8x16xf32>
      %cst_1351 = arith.constant -0.22838895 : f32
      %3662 = vector.broadcast %cst_1351 : f32 to vector<8x16xf32>
      %3663 = arith.mulf %3662, %98 : vector<8x16xf32>
      %3664 = arith.addf %3661, %3663 : vector<8x16xf32>
      %cst_1352 = arith.constant 0.102502681 : f32
      %3665 = vector.broadcast %cst_1352 : f32 to vector<8x16xf32>
      %3666 = arith.mulf %3665, %103 : vector<8x16xf32>
      %3667 = arith.addf %3664, %3666 : vector<8x16xf32>
      %cst_1353 = arith.constant -0.0276698675 : f32
      %3668 = vector.broadcast %cst_1353 : f32 to vector<8x16xf32>
      %3669 = arith.mulf %3668, %108 : vector<8x16xf32>
      %3670 = arith.addf %3667, %3669 : vector<8x16xf32>
      %cst_1354 = arith.constant 0.173109591 : f32
      %3671 = vector.broadcast %cst_1354 : f32 to vector<8x16xf32>
      %3672 = arith.mulf %3671, %113 : vector<8x16xf32>
      %3673 = arith.addf %3670, %3672 : vector<8x16xf32>
      %cst_1355 = arith.constant -0.438738555 : f32
      %3674 = vector.broadcast %cst_1355 : f32 to vector<8x16xf32>
      %3675 = arith.mulf %3674, %118 : vector<8x16xf32>
      %3676 = arith.addf %3673, %3675 : vector<8x16xf32>
      %cst_1356 = arith.constant 0.449885368 : f32
      %3677 = vector.broadcast %cst_1356 : f32 to vector<8x16xf32>
      %3678 = arith.mulf %3677, %123 : vector<8x16xf32>
      %3679 = arith.addf %3676, %3678 : vector<8x16xf32>
      %cst_1357 = arith.constant -1.862880e-01 : f32
      %3680 = vector.broadcast %cst_1357 : f32 to vector<8x16xf32>
      %3681 = arith.mulf %3680, %128 : vector<8x16xf32>
      %3682 = arith.addf %3679, %3681 : vector<8x16xf32>
      %cst_1358 = arith.constant -5.000000e+00 : f32
      %cst_1359 = arith.constant 5.000000e+00 : f32
      %3683 = vector.broadcast %cst_1358 : f32 to vector<8x16xf32>
      %3684 = arith.maximumf %3683, %3682 : vector<8x16xf32>
      %3685 = vector.broadcast %cst_1359 : f32 to vector<8x16xf32>
      %3686 = arith.minimumf %3685, %3684 : vector<8x16xf32>
      %c0_1360 = arith.constant 0 : index
      %c60 = arith.constant 60 : index
      %3687 = arith.index_cast %3 : i32 to index
      %c0_1361 = arith.constant 0 : index
      %3688 = vector.load %arg3[%c0_1360, %c60, %3687, %c0_1361] : memref<1x62x16x16xf32, #tpu.memory_space<vmem>>, vector<1x1x8x16xf32>
      %3689 = vector.shape_cast %3688 : vector<1x1x8x16xf32> to vector<8x16xf32>
      %3690 = vector.shape_cast %3686 : vector<8x16xf32> to vector<1x1x8x16xf32>
      tpu.vector_store %arg3[%c0_1360, %c60, %3687, %c0_1361], %3690 {strides = array<i32>} : memref<1x62x16x16xf32, #tpu.memory_space<vmem>>, vector<1x1x8x16xf32>,
      %cst_1362 = arith.constant 0.146648258 : f32
      %3691 = vector.broadcast %cst_1362 : f32 to vector<8x16xf32>
      %3692 = arith.mulf %3691, %8 : vector<8x16xf32>
      %cst_1363 = arith.constant -0.280641079 : f32
      %3693 = vector.broadcast %cst_1363 : f32 to vector<8x16xf32>
      %3694 = arith.mulf %3693, %13 : vector<8x16xf32>
      %3695 = arith.addf %3692, %3694 : vector<8x16xf32>
      %cst_1364 = arith.constant 0.211169854 : f32
      %3696 = vector.broadcast %cst_1364 : f32 to vector<8x16xf32>
      %3697 = arith.mulf %3696, %18 : vector<8x16xf32>
      %3698 = arith.addf %3695, %3697 : vector<8x16xf32>
      %cst_1365 = arith.constant -0.0611243173 : f32
      %3699 = vector.broadcast %cst_1365 : f32 to vector<8x16xf32>
      %3700 = arith.mulf %3699, %23 : vector<8x16xf32>
      %3701 = arith.addf %3698, %3700 : vector<8x16xf32>
      %cst_1366 = arith.constant 0.00648675672 : f32
      %3702 = vector.broadcast %cst_1366 : f32 to vector<8x16xf32>
      %3703 = arith.mulf %3702, %28 : vector<8x16xf32>
      %3704 = arith.addf %3701, %3703 : vector<8x16xf32>
      %cst_1367 = arith.constant 0.21626699 : f32
      %3705 = vector.broadcast %cst_1367 : f32 to vector<8x16xf32>
      %3706 = arith.mulf %3705, %33 : vector<8x16xf32>
      %3707 = arith.addf %3704, %3706 : vector<8x16xf32>
      %cst_1368 = arith.constant -0.659356833 : f32
      %3708 = vector.broadcast %cst_1368 : f32 to vector<8x16xf32>
      %3709 = arith.mulf %3708, %38 : vector<8x16xf32>
      %3710 = arith.addf %3707, %3709 : vector<8x16xf32>
      %cst_1369 = arith.constant 0.814415276 : f32
      %3711 = vector.broadcast %cst_1369 : f32 to vector<8x16xf32>
      %3712 = arith.mulf %3711, %43 : vector<8x16xf32>
      %3713 = arith.addf %3710, %3712 : vector<8x16xf32>
      %cst_1370 = arith.constant -0.407869458 : f32
      %3714 = vector.broadcast %cst_1370 : f32 to vector<8x16xf32>
      %3715 = arith.mulf %3714, %48 : vector<8x16xf32>
      %3716 = arith.addf %3713, %3715 : vector<8x16xf32>
      %cst_1371 = arith.constant 0.0828606039 : f32
      %3717 = vector.broadcast %cst_1371 : f32 to vector<8x16xf32>
      %3718 = arith.mulf %3717, %53 : vector<8x16xf32>
      %3719 = arith.addf %3716, %3718 : vector<8x16xf32>
      %cst_1372 = arith.constant -0.0365115628 : f32
      %3720 = vector.broadcast %cst_1372 : f32 to vector<8x16xf32>
      %3721 = arith.mulf %3720, %58 : vector<8x16xf32>
      %3722 = arith.addf %3719, %3721 : vector<8x16xf32>
      %cst_1373 = arith.constant 0.069804512 : f32
      %3723 = vector.broadcast %cst_1373 : f32 to vector<8x16xf32>
      %3724 = arith.mulf %3723, %63 : vector<8x16xf32>
      %3725 = arith.addf %3722, %3724 : vector<8x16xf32>
      %cst_1374 = arith.constant 6.12323426E-17 : f32
      %3726 = vector.broadcast %cst_1374 : f32 to vector<8x16xf32>
      %3727 = arith.mulf %3726, %68 : vector<8x16xf32>
      %3728 = arith.addf %3725, %3727 : vector<8x16xf32>
      %cst_1375 = arith.constant -0.069804512 : f32
      %3729 = vector.broadcast %cst_1375 : f32 to vector<8x16xf32>
      %3730 = arith.mulf %3729, %73 : vector<8x16xf32>
      %3731 = arith.addf %3728, %3730 : vector<8x16xf32>
      %cst_1376 = arith.constant 0.0365115628 : f32
      %3732 = vector.broadcast %cst_1376 : f32 to vector<8x16xf32>
      %3733 = arith.mulf %3732, %78 : vector<8x16xf32>
      %3734 = arith.addf %3731, %3733 : vector<8x16xf32>
      %cst_1377 = arith.constant -0.0828606039 : f32
      %3735 = vector.broadcast %cst_1377 : f32 to vector<8x16xf32>
      %3736 = arith.mulf %3735, %83 : vector<8x16xf32>
      %3737 = arith.addf %3734, %3736 : vector<8x16xf32>
      %cst_1378 = arith.constant 0.407869458 : f32
      %3738 = vector.broadcast %cst_1378 : f32 to vector<8x16xf32>
      %3739 = arith.mulf %3738, %88 : vector<8x16xf32>
      %3740 = arith.addf %3737, %3739 : vector<8x16xf32>
      %cst_1379 = arith.constant -0.814415276 : f32
      %3741 = vector.broadcast %cst_1379 : f32 to vector<8x16xf32>
      %3742 = arith.mulf %3741, %93 : vector<8x16xf32>
      %3743 = arith.addf %3740, %3742 : vector<8x16xf32>
      %cst_1380 = arith.constant 0.659356833 : f32
      %3744 = vector.broadcast %cst_1380 : f32 to vector<8x16xf32>
      %3745 = arith.mulf %3744, %98 : vector<8x16xf32>
      %3746 = arith.addf %3743, %3745 : vector<8x16xf32>
      %cst_1381 = arith.constant -0.21626699 : f32
      %3747 = vector.broadcast %cst_1381 : f32 to vector<8x16xf32>
      %3748 = arith.mulf %3747, %103 : vector<8x16xf32>
      %3749 = arith.addf %3746, %3748 : vector<8x16xf32>
      %cst_1382 = arith.constant -0.00648675672 : f32
      %3750 = vector.broadcast %cst_1382 : f32 to vector<8x16xf32>
      %3751 = arith.mulf %3750, %108 : vector<8x16xf32>
      %3752 = arith.addf %3749, %3751 : vector<8x16xf32>
      %cst_1383 = arith.constant 0.0611243173 : f32
      %3753 = vector.broadcast %cst_1383 : f32 to vector<8x16xf32>
      %3754 = arith.mulf %3753, %113 : vector<8x16xf32>
      %3755 = arith.addf %3752, %3754 : vector<8x16xf32>
      %cst_1384 = arith.constant -0.211169854 : f32
      %3756 = vector.broadcast %cst_1384 : f32 to vector<8x16xf32>
      %3757 = arith.mulf %3756, %118 : vector<8x16xf32>
      %3758 = arith.addf %3755, %3757 : vector<8x16xf32>
      %cst_1385 = arith.constant 0.280641079 : f32
      %3759 = vector.broadcast %cst_1385 : f32 to vector<8x16xf32>
      %3760 = arith.mulf %3759, %123 : vector<8x16xf32>
      %3761 = arith.addf %3758, %3760 : vector<8x16xf32>
      %cst_1386 = arith.constant -0.146648258 : f32
      %3762 = vector.broadcast %cst_1386 : f32 to vector<8x16xf32>
      %3763 = arith.mulf %3762, %128 : vector<8x16xf32>
      %3764 = arith.addf %3761, %3763 : vector<8x16xf32>
      %cst_1387 = arith.constant -5.000000e+00 : f32
      %cst_1388 = arith.constant 5.000000e+00 : f32
      %3765 = vector.broadcast %cst_1387 : f32 to vector<8x16xf32>
      %3766 = arith.maximumf %3765, %3764 : vector<8x16xf32>
      %3767 = vector.broadcast %cst_1388 : f32 to vector<8x16xf32>
      %3768 = arith.minimumf %3767, %3766 : vector<8x16xf32>
      %c0_1389 = arith.constant 0 : index
      %c61 = arith.constant 61 : index
      %3769 = arith.index_cast %3 : i32 to index
      %c0_1390 = arith.constant 0 : index
      %3770 = vector.load %arg3[%c0_1389, %c61, %3769, %c0_1390] : memref<1x62x16x16xf32, #tpu.memory_space<vmem>>, vector<1x1x8x16xf32>
      %3771 = vector.shape_cast %3770 : vector<1x1x8x16xf32> to vector<8x16xf32>
      %3772 = vector.shape_cast %3768 : vector<8x16xf32> to vector<1x1x8x16xf32>
      tpu.vector_store %arg3[%c0_1389, %c61, %3769, %c0_1390], %3772 {strides = array<i32>} : memref<1x62x16x16xf32, #tpu.memory_space<vmem>>, vector<1x1x8x16xf32>,
    }
    %c2_i32_0 = arith.constant 2 : i32
    return
  }
  func.func @transform_0(%arg0: i32, %arg1: i32) -> (i32, i32, i32) {
    %c0_i32 = arith.constant 0 : i32
    %c0_i32_0 = arith.constant 0 : i32
    %c0_i32_1 = arith.constant 0 : i32
    return %arg0, %c0_i32, %c0_i32_0 : i32, i32, i32
  }
  func.func @transform_1(%arg0: i32, %arg1: i32) -> (i32, i32, i32, i32) {
    %c0_i32 = arith.constant 0 : i32
    %c0_i32_0 = arith.constant 0 : i32
    %c0_i32_1 = arith.constant 0 : i32
    return %arg0, %c0_i32, %arg1, %c0_i32_0 : i32, i32, i32, i32
  }
}

</mosaic_0001>

<llo_original>
// kernel: tpu_custom_call.1
$region0: #{tpu_custom_call.1}
  #allocation0 [shape = 'u32[]', space=smem, size = 0x4, offset = 0x4, fixed_abs, tag = 'smem constant byte address 0x4 - core index']
  #allocation1 [shape = 'u32[144,128]{1,0:T(1,128)}', space=vmem, size = 0x12000, scoped, tag = 'internal scratch']
  %s0 = inlined_call_operand.hbm [shape: f32[2,20,20], index: 0, kind: input, shape index: {}]
  %s1 = inlined_call_operand.hbm [shape: f32[2,62,16,16], index: 1, kind: output, shape index: {}]
  %s2 = sld [smem:[#allocation0]]
  $region48: #{tpu_custom_call.1} parent=0
    _
  %s4 = ssub.s32 1, %s2
  %s5 = scalar_select 0, %s4, %s2
  $region1: #{tpu_custom_call.1} parent=0
    #allocation2 [shape = 'u8[24576]{0}', space=vmem, size = 0x6000, scoped, tag = 'input window, operand 0']
    #allocation3 [shape = 's32[2]{0}', space=sflag, size = 0x8, scoped, tag = 'scoped memory for tpu_custom_call.1']
    #allocation4 [shape = 's32[2]{0}', space=sflag, size = 0x8, scoped, tag = 'scoped memory for tpu_custom_call.1']
    #allocation5 [shape = 'u8[1015808]{0}', space=vmem, size = 0xf8000, scoped, tag = 'output window, operand 0']
    %6 = vsyncpa [#allocation3], 0
    %s7 = scalar_lea.sflag [#allocation3], 1
    %8 = vsyncpa %s7, 0
    %9 = vsyncpa [#allocation4], 0
    %s10 = scalar_lea.sflag [#allocation4], 1
    %11 = vsyncpa %s10, 0
    loop: start=0, step=1, limit=4
    $region2: #{tpu_custom_call.1} parent=1 // loop_pre_header
      _
    $region3: #{tpu_custom_call.1} parent=1 // loop_header
      %s13 = sphi 0, %s17
      %p14 = scmp.ge.s32.totalorder %s13, 4
      %s20 = sphi 0, %s32
      %s21 = sphi 0, %s28
      %s22 = sphi 0, %s20
      %s23 = sphi 0, %s21
      %s24 = sphi 0, %s22
      %s25 = sphi 0, %s23
      %s35 = sphi 0, %s37
      %s38 = sphi 0, %s35
      %s39 = sphi 0, %s38
      %s55 = sphi 0, %s39
      %s63 = sphi 0, %s65
      %s66 = sphi 0, %s63
      %s67 = sphi 0, %s66
      %s83 = sphi 0, %s67
    $region4: #{tpu_custom_call.1} parent=1 // loop_header_branch
      %16 = sbr.rel (%p14) target = $region8
    $region5: #{tpu_custom_call.1} parent=1 // loop_body
      %s18 = ssub.s32 %s13, 1
      %s19 = ssub.s32 %s13, 2
      %s26 = sadd.s32 1, %s21
      %p27 = scmp.ge.s32.totalorder %s26, 1
      %s28 = scalar_select %p27, 0, %s26
      %s29 = sadd.s32 1, %s20
      %s30 = scalar_select %p27, %s29, %s20
      %p31 = scmp.ge.s32.totalorder %s30, 2
      %s32 = scalar_select %p31, 0, %s30
      %s33 = ssub.s32 %s20, %s32
      %p34 = scmp.eq.s32.totalorder %s33, 0
      %s36 = sadd.s32 %s35, 1
      %s37 = scalar_select %p34, %s35, %s36
      %p40 = pneg %p34
      %p41 = scmp.eq.s32.totalorder %s13, 1
      %p42 = por %p40, %p41
      %p43 = scmp.ne.s32.totalorder %s35, %s38
      %p44 = scmp.eq.s32.totalorder %s13, 0
      %p45 = por %p43, %p44
      %p46 = scmp.ne.s32.totalorder %s35, %s38
      %p47 = scmp.eq.s32.totalorder %s18, 1
      %p48 = por %p46, %p47
      %p49 = scmp.ne.s32.totalorder %s38, %s39
      %p50 = scmp.eq.s32.totalorder %s18, 0
      %p51 = por %p49, %p50
      %p52 = scmp.ne.s32.totalorder %s38, %s39
      %p53 = scmp.eq.s32.totalorder %s19, 1
      %p54 = por %p52, %p53
      %p56 = scmp.ne.s32.totalorder %s39, %s55
      %p57 = scmp.eq.s32.totalorder %s19, 0
      %p58 = por %p56, %p57
      %s59 = ssub.s32 %s20, %s32
      %s60 = ssub.s32 %s21, %s28
      %s61 = sor.u32 %s59, %s60
      %p62 = scmp.eq.s32.totalorder %s61, 0
      %s64 = sadd.s32 %s63, 1
      %s65 = scalar_select %p62, %s63, %s64
      %p68 = pneg %p62
      %p69 = scmp.eq.s32.totalorder %s13, 1
      %p70 = por %p68, %p69
      %p71 = scmp.ne.s32.totalorder %s63, %s66
      %p72 = scmp.eq.s32.totalorder %s13, 0
      %p73 = por %p71, %p72
      %p74 = scmp.ne.s32.totalorder %s63, %s66
      %p75 = scmp.eq.s32.totalorder %s18, 1
      %p76 = por %p74, %p75
      %p77 = scmp.ne.s32.totalorder %s66, %s67
      %p78 = scmp.eq.s32.totalorder %s18, 0
      %p79 = por %p77, %p78
      %p80 = scmp.ne.s32.totalorder %s66, %s67
      %p81 = scmp.eq.s32.totalorder %s19, 1
      %p82 = por %p80, %p81
      %p84 = scmp.ne.s32.totalorder %s67, %s83
      %p85 = scmp.eq.s32.totalorder %s19, 0
      %p86 = por %p84, %p85
      %p87 = scmp.le.s32.totalorder 1, %s13
      %p88 = scmp.lt.s32.totalorder %s13, 3
      %p89 = pnand %p87, %p88
      %p90 = pneg %p89
      // Predicated region
      $region9: #{tpu_custom_call.1} parent=5 // pred_check
        _
      $region10: #{tpu_custom_call.1} parent=5 // pred_check_branch
        %92 = sbr.rel (%p89) target = $region12
      $region11: #{tpu_custom_call.1} parent=5 // pred_region
        %s93 = ssub.s32 %s13, 1
      $region12: #{tpu_custom_call.1} parent=5 // pred_fallthru
        _
      %p94 = scmp.lt.s32.totalorder %s13, 2
      // Predicated region
      $region13: #{tpu_custom_call.1} parent=5 // pred_check
        %p95 = pneg %p94
      $region14: #{tpu_custom_call.1} parent=5 // pred_check_branch
        %97 = sbr.rel (%p95) target = $region16
      $region15: #{tpu_custom_call.1} parent=5 // pred_region
        // Predicated region
        $region17: #{tpu_custom_call.1} parent=15 // pred_check
          %p98 = pneg %p45
        $region18: #{tpu_custom_call.1} parent=15 // pred_check_branch
          %100 = sbr.rel (%p98) target = $region20
        $region19: #{tpu_custom_call.1} parent=15 // pred_region
          %s101 = sand.u32 %s35, 1
          %s102 = scalar_lea.sflag [#allocation3], %s101
          %s103 = sand.u32 %s35, 1
          %s104 = smul.addr %s103, 24
          %s105 = scalar_lea.vmem [#allocation2], %s104
          %s107 = ssub.s32 384, 384
          %108 = vsyncadd %s102, %s107
          %s109 = smul.addr %s20, 3
          %s110 = smul.addr %s109, 128
          %s111 = scalar_lea.hbm %s0, %s110
          %s112 = sshll.u32 %s105, 4
          %s113 = int_to_ptr.vmem [resolvable:$true] %s112
          %118 = dma.hbm_to_vmem [thread:$0]  %s111, 384, %s113, %s102, 128, 128, 8
        $region20: #{tpu_custom_call.1} parent=15 // pred_fallthru
          _
      $region16: #{tpu_custom_call.1} parent=5 // pred_fallthru
        _
      %p119 = scmp.le.s32.totalorder 1, %s13
      %p120 = scmp.lt.s32.totalorder %s13, 3
      %p121 = pnand %p119, %p120
      %p122 = pneg %p121
      // Predicated region
      $region21: #{tpu_custom_call.1} parent=5 // pred_check
        _
      $region22: #{tpu_custom_call.1} parent=5 // pred_check_branch
        %124 = sbr.rel (%p121) target = $region24
      $region23: #{tpu_custom_call.1} parent=5 // pred_region
        %s125 = ssub.s32 %s13, 1
        %s126 = sand.u32 %s38, 1
        %s127 = scalar_lea.sflag [#allocation3], %s126
        %s128 = sand.u32 %s38, 1
        %s129 = smul.addr %s128, 24
        %s130 = scalar_lea.vmem [#allocation2], %s129
        // Predicated region
        $region25: #{tpu_custom_call.1} parent=23 // pred_check
          %p131 = pneg %p51
        $region26: #{tpu_custom_call.1} parent=23 // pred_check_branch
          %133 = sbr.rel (%p131) target = $region28
        $region27: #{tpu_custom_call.1} parent=23 // pred_region
          %134 = dma.done %s127, 384
        $region28: #{tpu_custom_call.1} parent=23 // pred_fallthru
          _
        %s135 = sand.u32 %s38, 1
        %s136 = scalar_lea.sflag [#allocation3], %s135
        %s137 = sand.u32 %s38, 1
        %s138 = smul.addr %s137, 24
        %s139 = scalar_lea.vmem [#allocation2], %s138
        %p140 = pneg %p51
        %p141 = pneg %p48
        %p142 = pneg %p79
        %p143 = pneg %p76
        %s144 = sand.u32 %s66, 1
        %s145 = scalar_lea.sflag [#allocation4], %s144
        %s146 = sand.u32 %s66, 1
        %s147 = smul.addr %s146, 992
        %s148 = scalar_lea.vmem [#allocation5], %s147
        %s149 = smul.u32 2, %s23
        %s150 = smul.u32 %s23, 16
        loop: start=0, step=1, limit=2
        $region29: #{tpu_custom_call.1} parent=23 // loop_pre_header
          _
        $region30: #{tpu_custom_call.1} parent=23 // loop_header
          %s152 = sphi 0, %s156
          %p153 = scmp.ge.s32.totalorder %s152, 2
        $region31: #{tpu_custom_call.1} parent=23 // loop_header_branch
          %155 = sbr.rel (%p153) target = $region35
        $region32: #{tpu_custom_call.1} parent=23 // loop_body
          %s157 = smul.u32 %s152, 8
          %s158 = sadd.s32 %s150, %s157
          %s159 = scalar_lea.vmem %s130, %s158 [#allocation2]
          %v160 = vld [vmem:[%s159] sm:$0xff]
          %s161 = sadd.s32 %s158, 1
          %s162 = scalar_lea.vmem %s130, %s161 [#allocation2]
          %v163 = vld [vmem:[%s162] sm:$0xff]
          %s164 = sadd.s32 %s158, 2
          %s165 = scalar_lea.vmem %s130, %s164 [#allocation2]
          %v166 = vld [vmem:[%s165] sm:$0xff]
          %s167 = sadd.s32 %s158, 3
          %s168 = scalar_lea.vmem %s130, %s167 [#allocation2]
          %v169 = vld [vmem:[%s168] sm:$0xff]
          %s170 = sadd.s32 %s158, 4
          %s171 = scalar_lea.vmem %s130, %s170 [#allocation2]
          %v172 = vld [vmem:[%s171] sm:$0xff]
          %v173 = vmul.f32 %v163, 0.5649706
          %v174 = vmul.f32 %v163, -0.21364984
          %176 = vrot.lane.b32.xlu0 %v174, 127
          %v177 = vpop.permute.xlu0 %176
          %v179 = vadd.f32 %v173, %v177
          %v180 = vmul.f32 %v163, 0.116650365
          %182 = vrot.lane.b32.xlu0 %v180, 126
          %v183 = vpop.permute.xlu0 %182
          %v185 = vadd.f32 %v179, %v183
          %v186 = vmul.f32 %v166, 0.83718956
          %v187 = vadd.f32 %v185, %v186
          %v188 = vmul.f32 %v166, 0.6240599
          %190 = vrot.lane.b32.xlu0 %v188, 127
          %v191 = vpop.permute.xlu0 %190
          %v193 = vadd.f32 %v187, %v191
          %v194 = vmul.f32 %v166, -1.0
          %196 = vrot.lane.b32.xlu0 %v194, 126
          %v197 = vpop.permute.xlu0 %196
          %v199 = vadd.f32 %v193, %v197
          %v200 = vmul.f32 %v169, 0.1002949
          %v201 = vadd.f32 %v199, %v200
          %v202 = vmul.f32 %v169, -0.5284984
          %204 = vrot.lane.b32.xlu0 %v202, 127
          %v205 = vpop.permute.xlu0 %204
          %v207 = vadd.f32 %v201, %v205
          %v208 = vmul.f32 %v169, -0.50101715
          %210 = vrot.lane.b32.xlu0 %v208, 126
          %v211 = vpop.permute.xlu0 %210
          %v213 = vadd.f32 %v207, %v211
          %v214 = vmax.f32 %v213, -5.0
          %v215 = vmin.f32 %v214, 5.0
          %217 = vrot.lane.b32.xlu0 %v215, 127
          %v218 = vpop.permute.xlu0 %217
          %s220 = scalar_lea.vmem %s148, %s157 [#allocation5]
          %vm221 = vcmask 130048
          %222 = vst.msk [vmem:[%s220] sm:$0xff] %vm221, %v218
          %v223 = vmul.f32 %v163, -0.14875203
          %v224 = vmul.f32 %v163, -0.43136486
          %226 = vrot.lane.b32.xlu0 %v224, 127
          %v227 = vpop.permute.xlu0 %226
          %v229 = vadd.f32 %v223, %v227
          %v230 = vmul.f32 %v163, 0.95779645
          %232 = vrot.lane.b32.xlu0 %v230, 126
          %v233 = vpop.permute.xlu0 %232
          %v235 = vadd.f32 %v229, %v233
          %v236 = vmul.f32 %v166, 0.2227985
          %v237 = vadd.f32 %v235, %v236
          %v238 = vmul.f32 %v166, -0.45508096
          %240 = vrot.lane.b32.xlu0 %v238, 127
          %v241 = vpop.permute.xlu0 %240
          %v243 = vadd.f32 %v237, %v241
          %v244 = vmul.f32 %v166, -0.11348335
          %246 = vrot.lane.b32.xlu0 %v244, 126
          %v247 = vpop.permute.xlu0 %246
          %v249 = vadd.f32 %v243, %v247
          %v250 = vmul.f32 %v169, -0.23031029
          %v251 = vadd.f32 %v249, %v250
          %253 = vrot.lane.b32.xlu0 %v169, 127
          %v254 = vpop.permute.xlu0 %253
          %v256 = vadd.f32 %v251, %v254
          %v257 = vmul.f32 %v169, -0.80160344
          %259 = vrot.lane.b32.xlu0 %v257, 126
          %v260 = vpop.permute.xlu0 %259
          %v262 = vadd.f32 %v256, %v260
          %v263 = vmax.f32 %v262, -5.0
          %v264 = vmin.f32 %v263, 5.0
          %266 = vrot.lane.b32.xlu0 %v264, 127
          %v267 = vpop.permute.xlu0 %266
          %s269 = sadd.s32 %s157, 16
          %s270 = scalar_lea.vmem %s148, %s269 [#allocation5]
          %271 = vst.msk [vmem:[%s270] sm:$0xff] %vm221, %v267
          %v272 = vmul.f32 %v163, 0.19532257
          %v273 = vmul.f32 %v163, -0.2846674
          %275 = vrot.lane.b32.xlu0 %v273, 127
          %v276 = vpop.permute.xlu0 %275
          %v278 = vadd.f32 %v272, %v276
          %v279 = vmul.f32 %v163, -0.9833288
          %281 = vrot.lane.b32.xlu0 %v279, 126
          %v282 = vpop.permute.xlu0 %281
          %v284 = vadd.f32 %v278, %v282
          %v285 = vmul.f32 %v166, 0.33537236
          %v286 = vadd.f32 %v284, %v285
          %v287 = vmul.f32 %v166, 0.42207003
          %289 = vrot.lane.b32.xlu0 %v287, 127
          %v290 = vpop.permute.xlu0 %289
          %v292 = vadd.f32 %v286, %v290
          %v293 = vmul.f32 %v166, -0.23863646
          %295 = vrot.lane.b32.xlu0 %v293, 126
          %v296 = vpop.permute.xlu0 %295
          %v298 = vadd.f32 %v292, %v296
          %v299 = vadd.f32 %v298, %v169
          %v300 = vmul.f32 %v169, -0.5315253
          %302 = vrot.lane.b32.xlu0 %v300, 127
          %v303 = vpop.permute.xlu0 %302
          %v305 = vadd.f32 %v299, %v303
          %v306 = vmul.f32 %v169, 0.08539304
          %308 = vrot.lane.b32.xlu0 %v306, 126
          %v309 = vpop.permute.xlu0 %308
          %v311 = vadd.f32 %v305, %v309
          %v312 = vmax.f32 %v311, -5.0
          %v313 = vmin.f32 %v312, 5.0
          %315 = vrot.lane.b32.xlu0 %v313, 127
          %v316 = vpop.permute.xlu0 %315
          %s318 = sadd.s32 %s157, 32
          %s319 = scalar_lea.vmem %s148, %s318 [#allocation5]
          %320 = vst.msk [vmem:[%s319] sm:$0xff] %vm221, %v316
          %v321 = vmul.f32 %v163, -0.10889119
          %v322 = vmul.f32 %v163, 0.7456268
          %324 = vrot.lane.b32.xlu0 %v322, 127
          %v325 = vpop.permute.xlu0 %324
          %v327 = vadd.f32 %v321, %v325
          %v328 = vmul.f32 %v163, 0.71411806
          %330 = vrot.lane.b32.xlu0 %v328, 126
          %v331 = vpop.permute.xlu0 %330
          %v333 = vadd.f32 %v327, %v331
          %v334 = vmul.f32 %v166, 0.061087653
          %v335 = vadd.f32 %v333, %v334
          %v336 = vmul.f32 %v166, 0.17198615
          %338 = vrot.lane.b32.xlu0 %v336, 127
          %v339 = vpop.permute.xlu0 %338
          %v341 = vadd.f32 %v335, %v339
          %v342 = vmul.f32 %v166, -0.45696664
          %344 = vrot.lane.b32.xlu0 %v342, 126
          %v345 = vpop.permute.xlu0 %344
          %v347 = vadd.f32 %v341, %v345
          %v348 = vmul.f32 %v169, -1.0
          %v349 = vadd.f32 %v347, %v348
          %v350 = vmul.f32 %v169, -0.18874478
          %352 = vrot.lane.b32.xlu0 %v350, 127
          %v353 = vpop.permute.xlu0 %352
          %v355 = vadd.f32 %v349, %v353
          %v356 = vmul.f32 %v169, 0.061783973
          %358 = vrot.lane.b32.xlu0 %v356, 126
          %v359 = vpop.permute.xlu0 %358
          %v361 = vadd.f32 %v355, %v359
          %v362 = vmax.f32 %v361, -5.0
          %v363 = vmin.f32 %v362, 5.0
          %365 = vrot.lane.b32.xlu0 %v363, 127
          %v366 = vpop.permute.xlu0 %365
          %s368 = sadd.s32 %s157, 48
          %s369 = scalar_lea.vmem %s148, %s368 [#allocation5]
          %370 = vst.msk [vmem:[%s369] sm:$0xff] %vm221, %v366
          %v371 = vmul.f32 %v163, 0.6503945
          %v372 = vmul.f32 %v163, 0.63685113
          %374 = vrot.lane.b32.xlu0 %v372, 127
          %v375 = vpop.permute.xlu0 %374
          %v377 = vadd.f32 %v371, %v375
          %v378 = vmul.f32 %v163, -0.1345326
          %380 = vrot.lane.b32.xlu0 %v378, 126
          %v381 = vpop.permute.xlu0 %380
          %v383 = vadd.f32 %v377, %v381
          %v384 = vmul.f32 %v166, -0.09327582
          %v385 = vadd.f32 %v383, %v384
          %v386 = vmul.f32 %v166, -0.4553837
          %388 = vrot.lane.b32.xlu0 %v386, 127
          %v389 = vpop.permute.xlu0 %388
          %v391 = vadd.f32 %v385, %v389
          %v392 = vmul.f32 %v166, -0.63563204
          %394 = vrot.lane.b32.xlu0 %v392, 126
          %v395 = vpop.permute.xlu0 %394
          %v397 = vadd.f32 %v391, %v395
          %v398 = vmul.f32 %v169, -0.77453214
          %v399 = vadd.f32 %v397, %v398
          %v400 = vadd.f32 %v399, %v254
          %v401 = vmul.f32 %v169, -0.19388933
          %403 = vrot.lane.b32.xlu0 %v401, 126
          %v404 = vpop.permute.xlu0 %403
          %v406 = vadd.f32 %v400, %v404
          %v407 = vmax.f32 %v406, -5.0
          %v408 = vmin.f32 %v407, 5.0
          %410 = vrot.lane.b32.xlu0 %v408, 127
          %v411 = vpop.permute.xlu0 %410
          %s413 = sadd.s32 %s157, 64
          %s414 = scalar_lea.vmem %s148, %s413 [#allocation5]
          %415 = vst.msk [vmem:[%s414] sm:$0xff] %vm221, %v411
          %v416 = vmul.f32 %v163, 0.08354813
          %v417 = vmul.f32 %v163, -0.5306953
          %419 = vrot.lane.b32.xlu0 %v417, 127
          %v420 = vpop.permute.xlu0 %419
          %v422 = vadd.f32 %v416, %v420
          %424 = vrot.lane.b32.xlu0 %v163, 126
          %v425 = vpop.permute.xlu0 %424
          %v427 = vadd.f32 %v422, %v425
          %v428 = vmul.f32 %v166, -0.8029417
          %v429 = vadd.f32 %v427, %v428
          %v430 = vmul.f32 %v166, 0.25343442
          %432 = vrot.lane.b32.xlu0 %v430, 127
          %v433 = vpop.permute.xlu0 %432
          %v435 = vadd.f32 %v429, %v433
          %v436 = vmul.f32 %v166, -0.26129407
          %438 = vrot.lane.b32.xlu0 %v436, 126
          %v439 = vpop.permute.xlu0 %438
          %v441 = vadd.f32 %v435, %v439
          %v442 = vmul.f32 %v169, 0.7055237
          %v443 = vadd.f32 %v441, %v442
          %v444 = vmul.f32 %v169, 0.028714096
          %446 = vrot.lane.b32.xlu0 %v444, 127
          %v447 = vpop.permute.xlu0 %446
          %v449 = vadd.f32 %v443, %v447
          %v450 = vmul.f32 %v169, -0.47628927
          %452 = vrot.lane.b32.xlu0 %v450, 126
          %v453 = vpop.permute.xlu0 %452
          %v455 = vadd.f32 %v449, %v453
          %v456 = vmax.f32 %v455, -5.0
          %v457 = vmin.f32 %v456, 5.0
          %459 = vrot.lane.b32.xlu0 %v457, 127
          %v460 = vpop.permute.xlu0 %459
          %s462 = sadd.s32 %s157, 80
          %s463 = scalar_lea.vmem %s148, %s462 [#allocation5]
          %464 = vst.msk [vmem:[%s463] sm:$0xff] %vm221, %v460
          %v465 = vmul.f32 %v163, 0.3069201
          %466 = vrot.lane.b32.xlu0 %v163, 127
          %v467 = vpop.permute.xlu0 %466
          %v469 = vadd.f32 %v465, %v467
          %v470 = vmul.f32 %v163, 0.45069286
          %472 = vrot.lane.b32.xlu0 %v470, 126
          %v473 = vpop.permute.xlu0 %472
          %v475 = vadd.f32 %v469, %v473
          %v476 = vmul.f32 %v166, 0.80891937
          %v477 = vadd.f32 %v475, %v476
          %v478 = vmul.f32 %v166, -0.61332166
          %480 = vrot.lane.b32.xlu0 %v478, 127
          %v481 = vpop.permute.xlu0 %480
          %v483 = vadd.f32 %v477, %v481
          %v484 = vmul.f32 %v166, -0.20100738
          %486 = vrot.lane.b32.xlu0 %v484, 126
          %v487 = vpop.permute.xlu0 %486
          %v489 = vadd.f32 %v483, %v487
          %v490 = vmul.f32 %v169, -0.67122334
          %v491 = vadd.f32 %v489, %v490
          %v492 = vmul.f32 %v169, -0.19616735
          %494 = vrot.lane.b32.xlu0 %v492, 127
          %v495 = vpop.permute.xlu0 %494
          %v497 = vadd.f32 %v491, %v495
          %v498 = vmul.f32 %v169, -0.8848126
          %500 = vrot.lane.b32.xlu0 %v498, 126
          %v501 = vpop.permute.xlu0 %500
          %v503 = vadd.f32 %v497, %v501
          %v504 = vmax.f32 %v503, -5.0
          %v505 = vmin.f32 %v504, 5.0
          %507 = vrot.lane.b32.xlu0 %v505, 127
          %v508 = vpop.permute.xlu0 %507
          %s510 = sadd.s32 %s157, 96
          %s511 = scalar_lea.vmem %s148, %s510 [#allocation5]
          %512 = vst.msk [vmem:[%s511] sm:$0xff] %vm221, %v508
          %v513 = vmul.f32 %v163, -1.0
          %v514 = vmul.f32 %v163, 0.37936467
          %516 = vrot.lane.b32.xlu0 %v514, 127
          %v517 = vpop.permute.xlu0 %516
          %v519 = vadd.f32 %v513, %v517
          %v520 = vmul.f32 %v163, -0.040309716
          %522 = vrot.lane.b32.xlu0 %v520, 126
          %v523 = vpop.permute.xlu0 %522
          %v525 = vadd.f32 %v519, %v523
          %v526 = vmul.f32 %v166, -0.9303805
          %v527 = vadd.f32 %v525, %v526
          %v528 = vmul.f32 %v166, 0.5861243
          %530 = vrot.lane.b32.xlu0 %v528, 127
          %v531 = vpop.permute.xlu0 %530
          %v533 = vadd.f32 %v527, %v531
          %v534 = vmul.f32 %v166, -0.406591
          %536 = vrot.lane.b32.xlu0 %v534, 126
          %v537 = vpop.permute.xlu0 %536
          %v539 = vadd.f32 %v533, %v537
          %v540 = vmul.f32 %v169, 0.28844544
          %v541 = vadd.f32 %v539, %v540
          %v542 = vmul.f32 %v169, 0.77908254
          %544 = vrot.lane.b32.xlu0 %v542, 127
          %v545 = vpop.permute.xlu0 %544
          %v547 = vadd.f32 %v541, %v545
          %v548 = vmul.f32 %v169, 0.3442643
          %550 = vrot.lane.b32.xlu0 %v548, 126
          %v551 = vpop.permute.xlu0 %550
          %v553 = vadd.f32 %v547, %v551
          %v554 = vmax.f32 %v553, -5.0
          %v555 = vmin.f32 %v554, 5.0
          %557 = vrot.lane.b32.xlu0 %v555, 127
          %v558 = vpop.permute.xlu0 %557
          %s560 = sadd.s32 %s157, 112
          %s561 = scalar_lea.vmem %s148, %s560 [#allocation5]
          %562 = vst.msk [vmem:[%s561] sm:$0xff] %vm221, %v558
          %v563 = vmul.f32 %v163, -0.5825031
          %565 = vrot.lane.b32.xlu0 %v563, 127
          %v566 = vpop.permute.xlu0 %565
          %v568 = vadd.f32 %v163, %v566
          %v569 = vmul.f32 %v163, 0.508725
          %571 = vrot.lane.b32.xlu0 %v569, 126
          %v572 = vpop.permute.xlu0 %571
          %v574 = vadd.f32 %v568, %v572
          %v575 = vmul.f32 %v166, -0.21589881
          %v576 = vadd.f32 %v574, %v575
          %v577 = vmul.f32 %v166, -0.33986554
          %579 = vrot.lane.b32.xlu0 %v577, 127
          %v580 = vpop.permute.xlu0 %579
          %v582 = vadd.f32 %v576, %v580
          %v583 = vmul.f32 %v166, -0.14527257
          %585 = vrot.lane.b32.xlu0 %v583, 126
          %v586 = vpop.permute.xlu0 %585
          %v588 = vadd.f32 %v582, %v586
          %v589 = vmul.f32 %v169, 0.032890104
          %v590 = vadd.f32 %v588, %v589
          %v591 = vmul.f32 %v169, 0.27798662
          %593 = vrot.lane.b32.xlu0 %v591, 127
          %v594 = vpop.permute.xlu0 %593
          %v596 = vadd.f32 %v590, %v594
          %v597 = vmul.f32 %v169, -0.53606164
          %599 = vrot.lane.b32.xlu0 %v597, 126
          %v600 = vpop.permute.xlu0 %599
          %v602 = vadd.f32 %v596, %v600
          %v603 = vmax.f32 %v602, -5.0
          %v604 = vmin.f32 %v603, 5.0
          %606 = vrot.lane.b32.xlu0 %v604, 127
          %v607 = vpop.permute.xlu0 %606
          %s609 = sadd.s32 %s157, 128
          %s610 = scalar_lea.vmem %s148, %s609 [#allocation5]
          %611 = vst.msk [vmem:[%s610] sm:$0xff] %vm221, %v607
          %v612 = vmul.f32 %v163, 0.21697104
          %v613 = vmul.f32 %v163, -0.00033171222
          %615 = vrot.lane.b32.xlu0 %v613, 127
          %v616 = vpop.permute.xlu0 %615
          %v618 = vadd.f32 %v612, %v616
          %620 = vrot.lane.b32.xlu0 %v513, 126
          %v621 = vpop.permute.xlu0 %620
          %v623 = vadd.f32 %v618, %v621
          %v624 = vmul.f32 %v166, 0.5103069
          %v625 = vadd.f32 %v623, %v624
          %v626 = vmul.f32 %v166, 0.7138638
          %628 = vrot.lane.b32.xlu0 %v626, 127
          %v629 = vpop.permute.xlu0 %628
          %v631 = vadd.f32 %v625, %v629
          %v632 = vmul.f32 %v166, 0.3557692
          %634 = vrot.lane.b32.xlu0 %v632, 126
          %v635 = vpop.permute.xlu0 %634
          %v637 = vadd.f32 %v631, %v635
          %v638 = vmul.f32 %v169, -0.32271102
          %v639 = vadd.f32 %v637, %v638
          %v640 = vmul.f32 %v169, -0.7675532
          %642 = vrot.lane.b32.xlu0 %v640, 127
          %v643 = vpop.permute.xlu0 %642
          %v645 = vadd.f32 %v639, %v643
          %v646 = vmul.f32 %v169, 0.29368505
          %648 = vrot.lane.b32.xlu0 %v646, 126
          %v649 = vpop.permute.xlu0 %648
          %v651 = vadd.f32 %v645, %v649
          %v652 = vmax.f32 %v651, -5.0
          %v653 = vmin.f32 %v652, 5.0
          %655 = vrot.lane.b32.xlu0 %v653, 127
          %v656 = vpop.permute.xlu0 %655
          %s658 = sadd.s32 %s157, 144
          %s659 = scalar_lea.vmem %s148, %s658 [#allocation5]
          %660 = vst.msk [vmem:[%s659] sm:$0xff] %vm221, %v656
          %v661 = vmul.f32 %v163, -0.77771723
          %v662 = vmul.f32 %v163, 0.54244435
          %664 = vrot.lane.b32.xlu0 %v662, 127
          %v665 = vpop.permute.xlu0 %664
          %v667 = vadd.f32 %v661, %v665
          %v668 = vmul.f32 %v163, -0.2811594
          %670 = vrot.lane.b32.xlu0 %v668, 126
          %v671 = vpop.permute.xlu0 %670
          %v673 = vadd.f32 %v667, %v671
          %v674 = vmul.f32 %v166, 0.34282616
          %v675 = vadd.f32 %v673, %v674
          %v676 = vmul.f32 %v166, -0.16089492
          %678 = vrot.lane.b32.xlu0 %v676, 127
          %v679 = vpop.permute.xlu0 %678
          %v681 = vadd.f32 %v675, %v679
          %v682 = vmul.f32 %v166, 0.12350669
          %684 = vrot.lane.b32.xlu0 %v682, 126
          %v685 = vpop.permute.xlu0 %684
          %v687 = vadd.f32 %v681, %v685
          %v688 = vmul.f32 %v169, -0.44177172
          %v689 = vadd.f32 %v687, %v688
          %v690 = vadd.f32 %v689, %v254
          %v691 = vmul.f32 %v169, -0.3472339
          %693 = vrot.lane.b32.xlu0 %v691, 126
          %v694 = vpop.permute.xlu0 %693
          %v696 = vadd.f32 %v690, %v694
          %v697 = vmax.f32 %v696, -5.0
          %v698 = vmin.f32 %v697, 5.0
          %700 = vrot.lane.b32.xlu0 %v698, 127
          %v701 = vpop.permute.xlu0 %700
          %s703 = sadd.s32 %s157, 160
          %s704 = scalar_lea.vmem %s148, %s703 [#allocation5]
          %705 = vst.msk [vmem:[%s704] sm:$0xff] %vm221, %v701
          %v706 = vmul.f32 %v163, 0.19552457
          %v707 = vmul.f32 %v163, 0.96844447
          %709 = vrot.lane.b32.xlu0 %v707, 127
          %v710 = vpop.permute.xlu0 %709
          %v712 = vadd.f32 %v706, %v710
          %v713 = vmul.f32 %v163, -0.71755314
          %715 = vrot.lane.b32.xlu0 %v713, 126
          %v716 = vpop.permute.xlu0 %715
          %v718 = vadd.f32 %v712, %v716
          %v719 = vmul.f32 %v166, -0.6772289
          %v720 = vadd.f32 %v718, %v719
          %v721 = vmul.f32 %v166, 0.49161685
          %723 = vrot.lane.b32.xlu0 %v721, 127
          %v724 = vpop.permute.xlu0 %723
          %v726 = vadd.f32 %v720, %v724
          %v727 = vmul.f32 %v166, -0.62642235
          %729 = vrot.lane.b32.xlu0 %v727, 126
          %v730 = vpop.permute.xlu0 %729
          %v732 = vadd.f32 %v726, %v730
          %v733 = vadd.f32 %v732, %v169
          %v734 = vmul.f32 %v169, -0.23008735
          %736 = vrot.lane.b32.xlu0 %v734, 127
          %v737 = vpop.permute.xlu0 %736
          %v739 = vadd.f32 %v733, %v737
          %v740 = vmul.f32 %v169, -0.40429413
          %742 = vrot.lane.b32.xlu0 %v740, 126
          %v743 = vpop.permute.xlu0 %742
          %v745 = vadd.f32 %v739, %v743
          %v746 = vmax.f32 %v745, -5.0
          %v747 = vmin.f32 %v746, 5.0
          %749 = vrot.lane.b32.xlu0 %v747, 127
          %v750 = vpop.permute.xlu0 %749
          %s752 = sadd.s32 %s157, 176
          %s753 = scalar_lea.vmem %s148, %s752 [#allocation5]
          %754 = vst.msk [vmem:[%s753] sm:$0xff] %vm221, %v750
          %v755 = vmul.f32 %v163, 0.5224536
          %v756 = vmul.f32 %v163, 0.28052315
          %758 = vrot.lane.b32.xlu0 %v756, 127
          %v759 = vpop.permute.xlu0 %758
          %v761 = vadd.f32 %v755, %v759
          %v762 = vmul.f32 %v163, 0.49216872
          %764 = vrot.lane.b32.xlu0 %v762, 126
          %v765 = vpop.permute.xlu0 %764
          %v767 = vadd.f32 %v761, %v765
          %v768 = vmul.f32 %v166, -0.033611704
          %v769 = vadd.f32 %v767, %v768
          %770 = vrot.lane.b32.xlu0 %v194, 127
          %v771 = vpop.permute.xlu0 %770
          %v773 = vadd.f32 %v769, %v771
          %v774 = vmul.f32 %v166, 0.5154121
          %776 = vrot.lane.b32.xlu0 %v774, 126
          %v777 = vpop.permute.xlu0 %776
          %v779 = vadd.f32 %v773, %v777
          %v780 = vmul.f32 %v169, -0.67561096
          %v781 = vadd.f32 %v779, %v780
          %v782 = vmul.f32 %v169, -0.09025639
          %784 = vrot.lane.b32.xlu0 %v782, 127
          %v785 = vpop.permute.xlu0 %784
          %v787 = vadd.f32 %v781, %v785
          %v788 = vmul.f32 %v169, -0.011078499
          %790 = vrot.lane.b32.xlu0 %v788, 126
          %v791 = vpop.permute.xlu0 %790
          %v793 = vadd.f32 %v787, %v791
          %v794 = vmax.f32 %v793, -5.0
          %v795 = vmin.f32 %v794, 5.0
          %797 = vrot.lane.b32.xlu0 %v795, 127
          %v798 = vpop.permute.xlu0 %797
          %s800 = sadd.s32 %s157, 192
          %s801 = scalar_lea.vmem %s148, %s800 [#allocation5]
          %802 = vst.msk [vmem:[%s801] sm:$0xff] %vm221, %v798
          %v803 = vmul.f32 %v163, -0.25004244
          %v804 = vmul.f32 %v163, 0.3607053
          %806 = vrot.lane.b32.xlu0 %v804, 127
          %v807 = vpop.permute.xlu0 %806
          %v809 = vadd.f32 %v803, %v807
          %v810 = vmul.f32 %v163, 0.6053947
          %812 = vrot.lane.b32.xlu0 %v810, 126
          %v813 = vpop.permute.xlu0 %812
          %v815 = vadd.f32 %v809, %v813
          %v816 = vmul.f32 %v166, 0.17198013
          %v817 = vadd.f32 %v815, %v816
          %v818 = vadd.f32 %v817, %v771
          %v819 = vmul.f32 %v166, 0.10989014
          %821 = vrot.lane.b32.xlu0 %v819, 126
          %v822 = vpop.permute.xlu0 %821
          %v824 = vadd.f32 %v818, %v822
          %v825 = vmul.f32 %v169, 0.92636067
          %v826 = vadd.f32 %v824, %v825
          %v827 = vmul.f32 %v169, -0.6785149
          %829 = vrot.lane.b32.xlu0 %v827, 127
          %v830 = vpop.permute.xlu0 %829
          %v832 = vadd.f32 %v826, %v830
          %v833 = vmul.f32 %v169, -0.2457736
          %835 = vrot.lane.b32.xlu0 %v833, 126
          %v836 = vpop.permute.xlu0 %835
          %v838 = vadd.f32 %v832, %v836
          %v839 = vmax.f32 %v838, -5.0
          %v840 = vmin.f32 %v839, 5.0
          %842 = vrot.lane.b32.xlu0 %v840, 127
          %v843 = vpop.permute.xlu0 %842
          %s845 = sadd.s32 %s157, 208
          %s846 = scalar_lea.vmem %s148, %s845 [#allocation5]
          %847 = vst.msk [vmem:[%s846] sm:$0xff] %vm221, %v843
          %v848 = vmul.f32 %v163, -0.31300744
          %v849 = vadd.f32 %v848, %v467
          %v850 = vmul.f32 %v163, 0.3235172
          %852 = vrot.lane.b32.xlu0 %v850, 126
          %v853 = vpop.permute.xlu0 %852
          %v855 = vadd.f32 %v849, %v853
          %v856 = vmul.f32 %v166, 0.17130001
          %v857 = vadd.f32 %v855, %v856
          %v858 = vmul.f32 %v166, -0.5054178
          %860 = vrot.lane.b32.xlu0 %v858, 127
          %v861 = vpop.permute.xlu0 %860
          %v863 = vadd.f32 %v857, %v861
          %v864 = vmul.f32 %v166, 0.247047
          %866 = vrot.lane.b32.xlu0 %v864, 126
          %v867 = vpop.permute.xlu0 %866
          %v869 = vadd.f32 %v863, %v867
          %v870 = vmul.f32 %v169, -0.45047966
          %v871 = vadd.f32 %v869, %v870
          %v872 = vmul.f32 %v169, -0.044600423
          %874 = vrot.lane.b32.xlu0 %v872, 127
          %v875 = vpop.permute.xlu0 %874
          %v877 = vadd.f32 %v871, %v875
          %v878 = vmul.f32 %v169, -0.42835885
          %880 = vrot.lane.b32.xlu0 %v878, 126
          %v881 = vpop.permute.xlu0 %880
          %v883 = vadd.f32 %v877, %v881
          %v884 = vmax.f32 %v883, -5.0
          %v885 = vmin.f32 %v884, 5.0
          %887 = vrot.lane.b32.xlu0 %v885, 127
          %v888 = vpop.permute.xlu0 %887
          %s890 = sadd.s32 %s157, 224
          %s891 = scalar_lea.vmem %s148, %s890 [#allocation5]
          %892 = vst.msk [vmem:[%s891] sm:$0xff] %vm221, %v888
          %v893 = vmul.f32 %v163, 0.4431146
          %v894 = vmul.f32 %v163, 0.37664565
          %896 = vrot.lane.b32.xlu0 %v894, 127
          %v897 = vpop.permute.xlu0 %896
          %v899 = vadd.f32 %v893, %v897
          %v900 = vmul.f32 %v163, -0.1458853
          %902 = vrot.lane.b32.xlu0 %v900, 126
          %v903 = vpop.permute.xlu0 %902
          %v905 = vadd.f32 %v899, %v903
          %v906 = vmul.f32 %v166, 0.25642392
          %v907 = vadd.f32 %v905, %v906
          %v908 = vmul.f32 %v166, -0.73490566
          %910 = vrot.lane.b32.xlu0 %v908, 127
          %v911 = vpop.permute.xlu0 %910
          %v913 = vadd.f32 %v907, %v911
          %v914 = vadd.f32 %v913, %v197
          %v915 = vmul.f32 %v169, 0.28530696
          %v916 = vadd.f32 %v914, %v915
          %v917 = vmul.f32 %v169, 0.10374804
          %919 = vrot.lane.b32.xlu0 %v917, 127
          %v920 = vpop.permute.xlu0 %919
          %v922 = vadd.f32 %v916, %v920
          %v923 = vmul.f32 %v169, 0.4155518
          %925 = vrot.lane.b32.xlu0 %v923, 126
          %v926 = vpop.permute.xlu0 %925
          %v928 = vadd.f32 %v922, %v926
          %v929 = vmax.f32 %v928, -5.0
          %v930 = vmin.f32 %v929, 5.0
          %932 = vrot.lane.b32.xlu0 %v930, 127
          %v933 = vpop.permute.xlu0 %932
          %s935 = sadd.s32 %s157, 240
          %s936 = scalar_lea.vmem %s148, %s935 [#allocation5]
          %937 = vst.msk [vmem:[%s936] sm:$0xff] %vm221, %v933
          %v938 = vmul.f32 %v163, 0.31104383
          %940 = vrot.lane.b32.xlu0 %v938, 127
          %v941 = vpop.permute.xlu0 %940
          %v943 = vadd.f32 %v163, %v941
          %v944 = vmul.f32 %v163, -0.5783913
          %946 = vrot.lane.b32.xlu0 %v944, 126
          %v947 = vpop.permute.xlu0 %946
          %v949 = vadd.f32 %v943, %v947
          %v950 = vmul.f32 %v166, 0.39366922
          %v951 = vadd.f32 %v949, %v950
          %v952 = vmul.f32 %v166, -0.77142304
          %954 = vrot.lane.b32.xlu0 %v952, 127
          %v955 = vpop.permute.xlu0 %954
          %v957 = vadd.f32 %v951, %v955
          %v958 = vmul.f32 %v166, -0.3623001
          %960 = vrot.lane.b32.xlu0 %v958, 126
          %v961 = vpop.permute.xlu0 %960
          %v963 = vadd.f32 %v957, %v961
          %v964 = vmul.f32 %v169, -0.17393377
          %v965 = vadd.f32 %v963, %v964
          %v966 = vmul.f32 %v169, 0.6792414
          %968 = vrot.lane.b32.xlu0 %v966, 127
          %v969 = vpop.permute.xlu0 %968
          %v971 = vadd.f32 %v965, %v969
          %v972 = vmul.f32 %v169, -0.49790624
          %974 = vrot.lane.b32.xlu0 %v972, 126
          %v975 = vpop.permute.xlu0 %974
          %v977 = vadd.f32 %v971, %v975
          %v978 = vmax.f32 %v977, -5.0
          %v979 = vmin.f32 %v978, 5.0
          %981 = vrot.lane.b32.xlu0 %v979, 127
          %v982 = vpop.permute.xlu0 %981
          %s984 = sadd.s32 %s157, 256
          %s985 = scalar_lea.vmem %s148, %s984 [#allocation5]
          %986 = vst.msk [vmem:[%s985] sm:$0xff] %vm221, %v982
          %v987 = vmul.f32 %v163, -0.3012654
          %v988 = vmul.f32 %v163, 0.042462148
          %990 = vrot.lane.b32.xlu0 %v988, 127
          %v991 = vpop.permute.xlu0 %990
          %v993 = vadd.f32 %v987, %v991
          %v994 = vmul.f32 %v163, -0.22432171
          %996 = vrot.lane.b32.xlu0 %v994, 126
          %v997 = vpop.permute.xlu0 %996
          %v999 = vadd.f32 %v993, %v997
          %v1000 = vmul.f32 %v166, 0.6209027
          %v1001 = vadd.f32 %v999, %v1000
          %v1002 = vmul.f32 %v166, -0.4209552
          %1004 = vrot.lane.b32.xlu0 %v1002, 127
          %v1005 = vpop.permute.xlu0 %1004
          %v1007 = vadd.f32 %v1001, %v1005
          %v1008 = vmul.f32 %v166, -0.45284373
          %1010 = vrot.lane.b32.xlu0 %v1008, 126
          %v1011 = vpop.permute.xlu0 %1010
          %v1013 = vadd.f32 %v1007, %v1011
          %v1014 = vmul.f32 %v169, -0.1177744
          %v1015 = vadd.f32 %v1013, %v1014
          %v1016 = vmul.f32 %v169, -0.14620443
          %1018 = vrot.lane.b32.xlu0 %v1016, 127
          %v1019 = vpop.permute.xlu0 %1018
          %v1021 = vadd.f32 %v1015, %v1019
          %1022 = vrot.lane.b32.xlu0 %v169, 126
          %v1023 = vpop.permute.xlu0 %1022
          %v1025 = vadd.f32 %v1021, %v1023
          %v1026 = vmax.f32 %v1025, -5.0
          %v1027 = vmin.f32 %v1026, 5.0
          %1029 = vrot.lane.b32.xlu0 %v1027, 127
          %v1030 = vpop.permute.xlu0 %1029
          %s1032 = sadd.s32 %s157, 272
          %s1033 = scalar_lea.vmem %s148, %s1032 [#allocation5]
          %1034 = vst.msk [vmem:[%s1033] sm:$0xff] %vm221, %v1030
          %v1035 = vmul.f32 %v163, 0.55458575
          %v1036 = vmul.f32 %v163, 0.017397672
          %1038 = vrot.lane.b32.xlu0 %v1036, 127
          %v1039 = vpop.permute.xlu0 %1038
          %v1041 = vadd.f32 %v1035, %v1039
          %v1042 = vmul.f32 %v163, -0.80096376
          %1044 = vrot.lane.b32.xlu0 %v1042, 126
          %v1045 = vpop.permute.xlu0 %1044
          %v1047 = vadd.f32 %v1041, %v1045
          %v1048 = vmul.f32 %v166, 0.48910505
          %v1049 = vadd.f32 %v1047, %v1048
          %v1050 = vmul.f32 %v166, -0.660588
          %1052 = vrot.lane.b32.xlu0 %v1050, 127
          %v1053 = vpop.permute.xlu0 %1052
          %v1055 = vadd.f32 %v1049, %v1053
          %v1056 = vadd.f32 %v1055, %v197
          %v1057 = vmul.f32 %v169, 0.7033065
          %v1058 = vadd.f32 %v1056, %v1057
          %v1059 = vmul.f32 %v169, 0.16037326
          %1061 = vrot.lane.b32.xlu0 %v1059, 127
          %v1062 = vpop.permute.xlu0 %1061
          %v1064 = vadd.f32 %v1058, %v1062
          %v1065 = vmul.f32 %v169, 0.5367836
          %1067 = vrot.lane.b32.xlu0 %v1065, 126
          %v1068 = vpop.permute.xlu0 %1067
          %v1070 = vadd.f32 %v1064, %v1068
          %v1071 = vmax.f32 %v1070, -5.0
          %v1072 = vmin.f32 %v1071, 5.0
          %1074 = vrot.lane.b32.xlu0 %v1072, 127
          %v1075 = vpop.permute.xlu0 %1074
          %s1077 = sadd.s32 %s157, 288
          %s1078 = scalar_lea.vmem %s148, %s1077 [#allocation5]
          %1079 = vst.msk [vmem:[%s1078] sm:$0xff] %vm221, %v1075
          %v1080 = vmul.f32 %v163, 0.48863593
          %v1081 = vadd.f32 %v1080, %v467
          %v1082 = vmul.f32 %v163, -0.4329293
          %1084 = vrot.lane.b32.xlu0 %v1082, 126
          %v1085 = vpop.permute.xlu0 %1084
          %v1087 = vadd.f32 %v1081, %v1085
          %v1088 = vmul.f32 %v166, -0.79710406
          %v1089 = vadd.f32 %v1087, %v1088
          %v1090 = vmul.f32 %v166, 0.83347154
          %1092 = vrot.lane.b32.xlu0 %v1090, 127
          %v1093 = vpop.permute.xlu0 %1092
          %v1095 = vadd.f32 %v1089, %v1093
          %v1096 = vmul.f32 %v166, -0.57774127
          %1098 = vrot.lane.b32.xlu0 %v1096, 126
          %v1099 = vpop.permute.xlu0 %1098
          %v1101 = vadd.f32 %v1095, %v1099
          %v1102 = vmul.f32 %v169, -0.46953917
          %v1103 = vadd.f32 %v1101, %v1102
          %v1104 = vmul.f32 %v169, -0.24715045
          %1106 = vrot.lane.b32.xlu0 %v1104, 127
          %v1107 = vpop.permute.xlu0 %1106
          %v1109 = vadd.f32 %v1103, %v1107
          %v1110 = vmul.f32 %v169, 0.20235677
          %1112 = vrot.lane.b32.xlu0 %v1110, 126
          %v1113 = vpop.permute.xlu0 %1112
          %v1115 = vadd.f32 %v1109, %v1113
          %v1116 = vmax.f32 %v1115, -5.0
          %v1117 = vmin.f32 %v1116, 5.0
          %1119 = vrot.lane.b32.xlu0 %v1117, 127
          %v1120 = vpop.permute.xlu0 %1119
          %s1122 = sadd.s32 %s157, 304
          %s1123 = scalar_lea.vmem %s148, %s1122 [#allocation5]
          %1124 = vst.msk [vmem:[%s1123] sm:$0xff] %vm221, %v1120
          %v1125 = vmul.f32 %v163, 0.32163942
          %v1126 = vmul.f32 %v163, -0.3856311
          %1128 = vrot.lane.b32.xlu0 %v1126, 127
          %v1129 = vpop.permute.xlu0 %1128
          %v1131 = vadd.f32 %v1125, %v1129
          %v1132 = vmul.f32 %v163, 0.12100139
          %1134 = vrot.lane.b32.xlu0 %v1132, 126
          %v1135 = vpop.permute.xlu0 %1134
          %v1137 = vadd.f32 %v1131, %v1135
          %v1138 = vmul.f32 %v166, -0.9733981
          %v1139 = vadd.f32 %v1137, %v1138
          %1141 = vrot.lane.b32.xlu0 %v166, 127
          %v1142 = vpop.permute.xlu0 %1141
          %v1144 = vadd.f32 %v1139, %v1142
          %v1145 = vmul.f32 %v166, -0.5429596
          %1147 = vrot.lane.b32.xlu0 %v1145, 126
          %v1148 = vpop.permute.xlu0 %1147
          %v1150 = vadd.f32 %v1144, %v1148
          %v1151 = vmul.f32 %v169, -0.19819456
          %v1152 = vadd.f32 %v1150, %v1151
          %v1153 = vmul.f32 %v169, 0.60300696
          %1155 = vrot.lane.b32.xlu0 %v1153, 127
          %v1156 = vpop.permute.xlu0 %1155
          %v1158 = vadd.f32 %v1152, %v1156
          %v1159 = vmul.f32 %v169, 0.054535557
          %1161 = vrot.lane.b32.xlu0 %v1159, 126
          %v1162 = vpop.permute.xlu0 %1161
          %v1164 = vadd.f32 %v1158, %v1162
          %v1165 = vmax.f32 %v1164, -5.0
          %v1166 = vmin.f32 %v1165, 5.0
          %1168 = vrot.lane.b32.xlu0 %v1166, 127
          %v1169 = vpop.permute.xlu0 %1168
          %s1171 = sadd.s32 %s157, 320
          %s1172 = scalar_lea.vmem %s148, %s1171 [#allocation5]
          %1173 = vst.msk [vmem:[%s1172] sm:$0xff] %vm221, %v1169
          %v1174 = vmul.f32 %v163, 0.9796553
          %1175 = vrot.lane.b32.xlu0 %v513, 127
          %v1176 = vpop.permute.xlu0 %1175
          %v1178 = vadd.f32 %v1174, %v1176
          %v1179 = vmul.f32 %v163, 0.08893499
          %1181 = vrot.lane.b32.xlu0 %v1179, 126
          %v1182 = vpop.permute.xlu0 %1181
          %v1184 = vadd.f32 %v1178, %v1182
          %v1185 = vmul.f32 %v166, -0.12490936
          %v1186 = vadd.f32 %v1184, %v1185
          %v1187 = vmul.f32 %v166, -0.9129056
          %1189 = vrot.lane.b32.xlu0 %v1187, 127
          %v1190 = vpop.permute.xlu0 %1189
          %v1192 = vadd.f32 %v1186, %v1190
          %v1193 = vmul.f32 %v166, 0.2678002
          %1195 = vrot.lane.b32.xlu0 %v1193, 126
          %v1196 = vpop.permute.xlu0 %1195
          %v1198 = vadd.f32 %v1192, %v1196
          %v1199 = vmul.f32 %v169, -0.21723941
          %v1200 = vadd.f32 %v1198, %v1199
          %v1201 = vmul.f32 %v169, 0.4412819
          %1203 = vrot.lane.b32.xlu0 %v1201, 127
          %v1204 = vpop.permute.xlu0 %1203
          %v1206 = vadd.f32 %v1200, %v1204
          %v1207 = vmul.f32 %v169, 0.47738197
          %1209 = vrot.lane.b32.xlu0 %v1207, 126
          %v1210 = vpop.permute.xlu0 %1209
          %v1212 = vadd.f32 %v1206, %v1210
          %v1213 = vmax.f32 %v1212, -5.0
          %v1214 = vmin.f32 %v1213, 5.0
          %1216 = vrot.lane.b32.xlu0 %v1214, 127
          %v1217 = vpop.permute.xlu0 %1216
          %s1219 = sadd.s32 %s157, 336
          %s1220 = scalar_lea.vmem %s148, %s1219 [#allocation5]
          %1221 = vst.msk [vmem:[%s1220] sm:$0xff] %vm221, %v1217
          %v1222 = vmul.f32 %v163, 0.8695743
          %v1223 = vmul.f32 %v163, 0.4607083
          %1225 = vrot.lane.b32.xlu0 %v1223, 127
          %v1226 = vpop.permute.xlu0 %1225
          %v1228 = vadd.f32 %v1222, %v1226
          %v1229 = vmul.f32 %v163, -0.38288674
          %1231 = vrot.lane.b32.xlu0 %v1229, 126
          %v1232 = vpop.permute.xlu0 %1231
          %v1234 = vadd.f32 %v1228, %v1232
          %v1235 = vmul.f32 %v166, -0.3186901
          %v1236 = vadd.f32 %v1234, %v1235
          %v1237 = vmul.f32 %v166, 0.34356
          %1239 = vrot.lane.b32.xlu0 %v1237, 127
          %v1240 = vpop.permute.xlu0 %1239
          %v1242 = vadd.f32 %v1236, %v1240
          %v1243 = vmul.f32 %v166, 0.12377459
          %1245 = vrot.lane.b32.xlu0 %v1243, 126
          %v1246 = vpop.permute.xlu0 %1245
          %v1248 = vadd.f32 %v1242, %v1246
          %v1249 = vmul.f32 %v169, 0.11629064
          %v1250 = vadd.f32 %v1248, %v1249
          %1252 = vrot.lane.b32.xlu0 %v348, 127
          %v1253 = vpop.permute.xlu0 %1252
          %v1255 = vadd.f32 %v1250, %v1253
          %v1256 = vmul.f32 %v169, -0.21233101
          %1258 = vrot.lane.b32.xlu0 %v1256, 126
          %v1259 = vpop.permute.xlu0 %1258
          %v1261 = vadd.f32 %v1255, %v1259
          %v1262 = vmax.f32 %v1261, -5.0
          %v1263 = vmin.f32 %v1262, 5.0
          %1265 = vrot.lane.b32.xlu0 %v1263, 127
          %v1266 = vpop.permute.xlu0 %1265
          %s1268 = sadd.s32 %s157, 352
          %s1269 = scalar_lea.vmem %s148, %s1268 [#allocation5]
          %1270 = vst.msk [vmem:[%s1269] sm:$0xff] %vm221, %v1266
          %v1271 = vmul.f32 %v163, -0.7339322
          %v1272 = vmul.f32 %v163, 0.33696654
          %1274 = vrot.lane.b32.xlu0 %v1272, 127
          %v1275 = vpop.permute.xlu0 %1274
          %v1277 = vadd.f32 %v1271, %v1275
          %v1278 = vmul.f32 %v163, -0.060771875
          %1280 = vrot.lane.b32.xlu0 %v1278, 126
          %v1281 = vpop.permute.xlu0 %1280
          %v1283 = vadd.f32 %v1277, %v1281
          %v1284 = vadd.f32 %v1283, %v166
          %v1285 = vmul.f32 %v166, 0.37619978
          %1287 = vrot.lane.b32.xlu0 %v1285, 127
          %v1288 = vpop.permute.xlu0 %1287
          %v1290 = vadd.f32 %v1284, %v1288
          %v1291 = vmul.f32 %v166, 0.86970764
          %1293 = vrot.lane.b32.xlu0 %v1291, 126
          %v1294 = vpop.permute.xlu0 %1293
          %v1296 = vadd.f32 %v1290, %v1294
          %v1297 = vmul.f32 %v169, -0.448194
          %v1298 = vadd.f32 %v1296, %v1297
          %v1299 = vmul.f32 %v169, -0.95108306
          %1301 = vrot.lane.b32.xlu0 %v1299, 127
          %v1302 = vpop.permute.xlu0 %1301
          %v1304 = vadd.f32 %v1298, %v1302
          %v1305 = vmul.f32 %v169, -0.38889286
          %1307 = vrot.lane.b32.xlu0 %v1305, 126
          %v1308 = vpop.permute.xlu0 %1307
          %v1310 = vadd.f32 %v1304, %v1308
          %v1311 = vmax.f32 %v1310, -5.0
          %v1312 = vmin.f32 %v1311, 5.0
          %1314 = vrot.lane.b32.xlu0 %v1312, 127
          %v1315 = vpop.permute.xlu0 %1314
          %s1317 = sadd.s32 %s157, 368
          %s1318 = scalar_lea.vmem %s148, %s1317 [#allocation5]
          %1319 = vst.msk [vmem:[%s1318] sm:$0xff] %vm221, %v1315
          %v1320 = vmul.f32 %v163, 0.0044933907
          %v1321 = vmul.f32 %v163, 0.17775127
          %1323 = vrot.lane.b32.xlu0 %v1321, 127
          %v1324 = vpop.permute.xlu0 %1323
          %v1326 = vadd.f32 %v1320, %v1324
          %v1327 = vadd.f32 %v1326, %v425
          %v1328 = vmul.f32 %v166, -0.0065433863
          %v1329 = vadd.f32 %v1327, %v1328
          %v1330 = vmul.f32 %v166, -0.4061263
          %1332 = vrot.lane.b32.xlu0 %v1330, 127
          %v1333 = vpop.permute.xlu0 %1332
          %v1335 = vadd.f32 %v1329, %v1333
          %v1336 = vmul.f32 %v166, -0.1393712
          %1338 = vrot.lane.b32.xlu0 %v1336, 126
          %v1339 = vpop.permute.xlu0 %1338
          %v1341 = vadd.f32 %v1335, %v1339
          %v1342 = vmul.f32 %v169, -0.1908074
          %v1343 = vadd.f32 %v1341, %v1342
          %v1344 = vmul.f32 %v169, 0.22250311
          %1346 = vrot.lane.b32.xlu0 %v1344, 127
          %v1347 = vpop.permute.xlu0 %1346
          %v1349 = vadd.f32 %v1343, %v1347
          %v1350 = vmul.f32 %v169, -0.6618995
          %1352 = vrot.lane.b32.xlu0 %v1350, 126
          %v1353 = vpop.permute.xlu0 %1352
          %v1355 = vadd.f32 %v1349, %v1353
          %v1356 = vmax.f32 %v1355, -5.0
          %v1357 = vmin.f32 %v1356, 5.0
          %1359 = vrot.lane.b32.xlu0 %v1357, 127
          %v1360 = vpop.permute.xlu0 %1359
          %s1362 = sadd.s32 %s157, 384
          %s1363 = scalar_lea.vmem %s148, %s1362 [#allocation5]
          %1364 = vst.msk [vmem:[%s1363] sm:$0xff] %vm221, %v1360
          %v1365 = vmul.f32 %v163, 0.28846076
          %v1366 = vmul.f32 %v163, 0.36923808
          %1368 = vrot.lane.b32.xlu0 %v1366, 127
          %v1369 = vpop.permute.xlu0 %1368
          %v1371 = vadd.f32 %v1365, %v1369
          %v1372 = vmul.f32 %v163, 0.43479452
          %1374 = vrot.lane.b32.xlu0 %v1372, 126
          %v1375 = vpop.permute.xlu0 %1374
          %v1377 = vadd.f32 %v1371, %v1375
          %v1378 = vmul.f32 %v166, -0.28379488
          %v1379 = vadd.f32 %v1377, %v1378
          %v1380 = vmul.f32 %v166, 0.027546734
          %1382 = vrot.lane.b32.xlu0 %v1380, 127
          %v1383 = vpop.permute.xlu0 %1382
          %v1385 = vadd.f32 %v1379, %v1383
          %v1386 = vadd.f32 %v1385, %v197
          %v1387 = vmul.f32 %v169, -0.19370347
          %v1388 = vadd.f32 %v1386, %v1387
          %v1389 = vmul.f32 %v169, -0.23662111
          %1391 = vrot.lane.b32.xlu0 %v1389, 127
          %v1392 = vpop.permute.xlu0 %1391
          %v1394 = vadd.f32 %v1388, %v1392
          %v1395 = vmul.f32 %v169, 0.5940794
          %1397 = vrot.lane.b32.xlu0 %v1395, 126
          %v1398 = vpop.permute.xlu0 %1397
          %v1400 = vadd.f32 %v1394, %v1398
          %v1401 = vmax.f32 %v1400, -5.0
          %v1402 = vmin.f32 %v1401, 5.0
          %1404 = vrot.lane.b32.xlu0 %v1402, 127
          %v1405 = vpop.permute.xlu0 %1404
          %s1407 = sadd.s32 %s157, 400
          %s1408 = scalar_lea.vmem %s148, %s1407 [#allocation5]
          %1409 = vst.msk [vmem:[%s1408] sm:$0xff] %vm221, %v1405
          %v1410 = vmul.f32 %v163, -0.5331114
          %v1411 = vmul.f32 %v163, 0.4567533
          %1413 = vrot.lane.b32.xlu0 %v1411, 127
          %v1414 = vpop.permute.xlu0 %1413
          %v1416 = vadd.f32 %v1410, %v1414
          %v1417 = vmul.f32 %v163, 0.8211923
          %1419 = vrot.lane.b32.xlu0 %v1417, 126
          %v1420 = vpop.permute.xlu0 %1419
          %v1422 = vadd.f32 %v1416, %v1420
          %v1423 = vadd.f32 %v1422, %v194
          %v1424 = vmul.f32 %v166, 0.27540436
          %1426 = vrot.lane.b32.xlu0 %v1424, 127
          %v1427 = vpop.permute.xlu0 %1426
          %v1429 = vadd.f32 %v1423, %v1427
          %v1430 = vmul.f32 %v166, 0.40346846
          %1432 = vrot.lane.b32.xlu0 %v1430, 126
          %v1433 = vpop.permute.xlu0 %1432
          %v1435 = vadd.f32 %v1429, %v1433
          %v1436 = vmul.f32 %v169, -0.2680691
          %v1437 = vadd.f32 %v1435, %v1436
          %v1438 = vmul.f32 %v169, -0.14536162
          %1440 = vrot.lane.b32.xlu0 %v1438, 127
          %v1441 = vpop.permute.xlu0 %1440
          %v1443 = vadd.f32 %v1437, %v1441
          %v1444 = vmul.f32 %v169, -0.010276365
          %1446 = vrot.lane.b32.xlu0 %v1444, 126
          %v1447 = vpop.permute.xlu0 %1446
          %v1449 = vadd.f32 %v1443, %v1447
          %v1450 = vmax.f32 %v1449, -5.0
          %v1451 = vmin.f32 %v1450, 5.0
          %1453 = vrot.lane.b32.xlu0 %v1451, 127
          %v1454 = vpop.permute.xlu0 %1453
          %s1456 = sadd.s32 %s157, 416
          %s1457 = scalar_lea.vmem %s148, %s1456 [#allocation5]
          %1458 = vst.msk [vmem:[%s1457] sm:$0xff] %vm221, %v1454
          %v1459 = vmul.f32 %v163, -0.023106035
          %v1460 = vmul.f32 %v163, -0.031023564
          %1462 = vrot.lane.b32.xlu0 %v1460, 127
          %v1463 = vpop.permute.xlu0 %1462
          %v1465 = vadd.f32 %v1459, %v1463
          %v1466 = vmul.f32 %v163, -0.9954777
          %1468 = vrot.lane.b32.xlu0 %v1466, 126
          %v1469 = vpop.permute.xlu0 %1468
          %v1471 = vadd.f32 %v1465, %v1469
          %v1472 = vadd.f32 %v1471, %v166
          %v1473 = vmul.f32 %v166, 0.94869876
          %1475 = vrot.lane.b32.xlu0 %v1473, 127
          %v1476 = vpop.permute.xlu0 %1475
          %v1478 = vadd.f32 %v1472, %v1476
          %v1479 = vmul.f32 %v166, -0.38685894
          %1481 = vrot.lane.b32.xlu0 %v1479, 126
          %v1482 = vpop.permute.xlu0 %1481
          %v1484 = vadd.f32 %v1478, %v1482
          %v1485 = vmul.f32 %v169, -0.8476129
          %v1486 = vadd.f32 %v1484, %v1485
          %v1487 = vmul.f32 %v169, 0.55462193
          %1489 = vrot.lane.b32.xlu0 %v1487, 127
          %v1490 = vpop.permute.xlu0 %1489
          %v1492 = vadd.f32 %v1486, %v1490
          %v1493 = vmul.f32 %v169, -0.21924154
          %1495 = vrot.lane.b32.xlu0 %v1493, 126
          %v1496 = vpop.permute.xlu0 %1495
          %v1498 = vadd.f32 %v1492, %v1496
          %v1499 = vmax.f32 %v1498, -5.0
          %v1500 = vmin.f32 %v1499, 5.0
          %1502 = vrot.lane.b32.xlu0 %v1500, 127
          %v1503 = vpop.permute.xlu0 %1502
          %s1505 = sadd.s32 %s157, 432
          %s1506 = scalar_lea.vmem %s148, %s1505 [#allocation5]
          %1507 = vst.msk [vmem:[%s1506] sm:$0xff] %vm221, %v1503
          %v1508 = vmul.f32 %v163, 0.38793507
          %v1509 = vmul.f32 %v163, 0.016764557
          %1511 = vrot.lane.b32.xlu0 %v1509, 127
          %v1512 = vpop.permute.xlu0 %1511
          %v1514 = vadd.f32 %v1508, %v1512
          %v1515 = vmul.f32 %v163, 0.8301594
          %1517 = vrot.lane.b32.xlu0 %v1515, 126
          %v1518 = vpop.permute.xlu0 %1517
          %v1520 = vadd.f32 %v1514, %v1518
          %v1521 = vmul.f32 %v166, 0.8327427
          %v1522 = vadd.f32 %v1520, %v1521
          %v1523 = vmul.f32 %v166, -0.31014
          %1525 = vrot.lane.b32.xlu0 %v1523, 127
          %v1526 = vpop.permute.xlu0 %1525
          %v1528 = vadd.f32 %v1522, %v1526
          %v1529 = vmul.f32 %v166, -0.8394123
          %1531 = vrot.lane.b32.xlu0 %v1529, 126
          %v1532 = vpop.permute.xlu0 %1531
          %v1534 = vadd.f32 %v1528, %v1532
          %v1535 = vadd.f32 %v1534, %v348
          %v1536 = vmul.f32 %v169, 0.7648545
          %1538 = vrot.lane.b32.xlu0 %v1536, 127
          %v1539 = vpop.permute.xlu0 %1538
          %v1541 = vadd.f32 %v1535, %v1539
          %v1542 = vmul.f32 %v169, -0.68290395
          %1544 = vrot.lane.b32.xlu0 %v1542, 126
          %v1545 = vpop.permute.xlu0 %1544
          %v1547 = vadd.f32 %v1541, %v1545
          %v1548 = vmax.f32 %v1547, -5.0
          %v1549 = vmin.f32 %v1548, 5.0
          %1551 = vrot.lane.b32.xlu0 %v1549, 127
          %v1552 = vpop.permute.xlu0 %1551
          %s1554 = sadd.s32 %s157, 448
          %s1555 = scalar_lea.vmem %s148, %s1554 [#allocation5]
          %1556 = vst.msk [vmem:[%s1555] sm:$0xff] %vm221, %v1552
          %v1557 = vmul.f32 %v163, -0.13784716
          %v1558 = vmul.f32 %v163, -0.19182593
          %1560 = vrot.lane.b32.xlu0 %v1558, 127
          %v1561 = vpop.permute.xlu0 %1560
          %v1563 = vadd.f32 %v1557, %v1561
          %v1564 = vmul.f32 %v163, 0.13612425
          %1566 = vrot.lane.b32.xlu0 %v1564, 126
          %v1567 = vpop.permute.xlu0 %1566
          %v1569 = vadd.f32 %v1563, %v1567
          %v1570 = vadd.f32 %v1569, %v194
          %v1571 = vmul.f32 %v166, 0.2816873
          %1573 = vrot.lane.b32.xlu0 %v1571, 127
          %v1574 = vpop.permute.xlu0 %1573
          %v1576 = vadd.f32 %v1570, %v1574
          %v1577 = vmul.f32 %v166, 0.48380378
          %1579 = vrot.lane.b32.xlu0 %v1577, 126
          %v1580 = vpop.permute.xlu0 %1579
          %v1582 = vadd.f32 %v1576, %v1580
          %v1583 = vmul.f32 %v169, 0.22115923
          %v1584 = vadd.f32 %v1582, %v1583
          %v1585 = vmul.f32 %v169, -0.019675706
          %1587 = vrot.lane.b32.xlu0 %v1585, 127
          %v1588 = vpop.permute.xlu0 %1587
          %v1590 = vadd.f32 %v1584, %v1588
          %v1591 = vmul.f32 %v169, 0.2265742
          %1593 = vrot.lane.b32.xlu0 %v1591, 126
          %v1594 = vpop.permute.xlu0 %1593
          %v1596 = vadd.f32 %v1590, %v1594
          %v1597 = vmax.f32 %v1596, -5.0
          %v1598 = vmin.f32 %v1597, 5.0
          %1600 = vrot.lane.b32.xlu0 %v1598, 127
          %v1601 = vpop.permute.xlu0 %1600
          %s1603 = sadd.s32 %s157, 464
          %s1604 = scalar_lea.vmem %s148, %s1603 [#allocation5]
          %1605 = vst.msk [vmem:[%s1604] sm:$0xff] %vm221, %v1601
          %v1606 = vmul.f32 %v160, 2.8506852e-06
          %v1607 = vmul.f32 %v160, 0.013351526
          %1609 = vrot.lane.b32.xlu0 %v1607, 127
          %v1610 = vpop.permute.xlu0 %1609
          %v1612 = vadd.f32 %v1606, %v1610
          %v1613 = vmul.f32 %v160, 0.13533528
          %1615 = vrot.lane.b32.xlu0 %v1613, 126
          %v1616 = vpop.permute.xlu0 %1615
          %v1618 = vadd.f32 %v1612, %v1616
          %1619 = vrot.lane.b32.xlu0 %v1607, 125
          %v1620 = vpop.permute.xlu0 %1619
          %v1622 = vadd.f32 %v1618, %v1620
          %1624 = vrot.lane.b32.xlu0 %v1606, 124
          %v1625 = vpop.permute.xlu0 %1624
          %v1627 = vadd.f32 %v1622, %v1625
          %v1628 = vmul.f32 %v163, 1.2775885e-05
          %v1629 = vadd.f32 %v1627, %v1628
          %v1630 = vmul.f32 %v163, 0.05983739
          %1632 = vrot.lane.b32.xlu0 %v1630, 127
          %v1633 = vpop.permute.xlu0 %1632
          %v1635 = vadd.f32 %v1629, %v1633
          %v1636 = vmul.f32 %v163, 0.60653067
          %1638 = vrot.lane.b32.xlu0 %v1636, 126
          %v1639 = vpop.permute.xlu0 %1638
          %v1641 = vadd.f32 %v1635, %v1639
          %1642 = vrot.lane.b32.xlu0 %v1630, 125
          %v1643 = vpop.permute.xlu0 %1642
          %v1645 = vadd.f32 %v1641, %v1643
          %1647 = vrot.lane.b32.xlu0 %v1628, 124
          %v1648 = vpop.permute.xlu0 %1647
          %v1650 = vadd.f32 %v1645, %v1648
          %v1651 = vmul.f32 %v166, 2.1063872e-05
          %v1652 = vadd.f32 %v1650, %v1651
          %v1653 = vmul.f32 %v166, 0.09865518
          %1655 = vrot.lane.b32.xlu0 %v1653, 127
          %v1656 = vpop.permute.xlu0 %1655
          %v1658 = vadd.f32 %v1652, %v1656
          %1659 = vrot.lane.b32.xlu0 %v166, 126
          %v1660 = vpop.permute.xlu0 %1659
          %v1662 = vadd.f32 %v1658, %v1660
          %1663 = vrot.lane.b32.xlu0 %v1653, 125
          %v1664 = vpop.permute.xlu0 %1663
          %v1666 = vadd.f32 %v1662, %v1664
          %1668 = vrot.lane.b32.xlu0 %v1651, 124
          %v1669 = vpop.permute.xlu0 %1668
          %v1671 = vadd.f32 %v1666, %v1669
          %v1672 = vmul.f32 %v169, 1.2775885e-05
          %v1673 = vadd.f32 %v1671, %v1672
          %v1674 = vmul.f32 %v169, 0.05983739
          %1676 = vrot.lane.b32.xlu0 %v1674, 127
          %v1677 = vpop.permute.xlu0 %1676
          %v1679 = vadd.f32 %v1673, %v1677
          %v1680 = vmul.f32 %v169, 0.60653067
          %1682 = vrot.lane.b32.xlu0 %v1680, 126
          %v1683 = vpop.permute.xlu0 %1682
          %v1685 = vadd.f32 %v1679, %v1683
          %1686 = vrot.lane.b32.xlu0 %v1674, 125
          %v1687 = vpop.permute.xlu0 %1686
          %v1689 = vadd.f32 %v1685, %v1687
          %1691 = vrot.lane.b32.xlu0 %v1672, 124
          %v1692 = vpop.permute.xlu0 %1691
          %v1694 = vadd.f32 %v1689, %v1692
          %v1695 = vmul.f32 %v172, 2.8506852e-06
          %v1696 = vadd.f32 %v1694, %v1695
          %v1697 = vmul.f32 %v172, 0.013351526
          %1699 = vrot.lane.b32.xlu0 %v1697, 127
          %v1700 = vpop.permute.xlu0 %1699
          %v1702 = vadd.f32 %v1696, %v1700
          %v1703 = vmul.f32 %v172, 0.13533528
          %1705 = vrot.lane.b32.xlu0 %v1703, 126
          %v1706 = vpop.permute.xlu0 %1705
          %v1708 = vadd.f32 %v1702, %v1706
          %1709 = vrot.lane.b32.xlu0 %v1697, 125
          %v1710 = vpop.permute.xlu0 %1709
          %v1712 = vadd.f32 %v1708, %v1710
          %1714 = vrot.lane.b32.xlu0 %v1695, 124
          %v1715 = vpop.permute.xlu0 %1714
          %v1717 = vadd.f32 %v1712, %v1715
          %v1718 = vmax.f32 %v1717, -5.0
          %v1719 = vmin.f32 %v1718, 5.0
          %s1720 = sadd.s32 %s157, 480
          %s1721 = scalar_lea.vmem %s148, %s1720 [#allocation5]
          %1722 = vst.msk [vmem:[%s1721] sm:$0xff] %vm221, %v1719
          %v1723 = vmul.f32 %v160, 4.5310342e-05
          %v1724 = vmul.f32 %v160, 0.012537918
          %1726 = vrot.lane.b32.xlu0 %v1724, 127
          %v1727 = vpop.permute.xlu0 %1726
          %v1729 = vadd.f32 %v1723, %v1727
          %v1730 = vmul.f32 %v160, 8.286896e-18
          %1732 = vrot.lane.b32.xlu0 %v1730, 126
          %v1733 = vpop.permute.xlu0 %1732
          %v1735 = vadd.f32 %v1729, %v1733
          %v1736 = vmul.f32 %v160, -0.012537918
          %1738 = vrot.lane.b32.xlu0 %v1736, 125
          %v1739 = vpop.permute.xlu0 %1738
          %v1741 = vadd.f32 %v1735, %v1739
          %v1742 = vmul.f32 %v160, -4.5310342e-05
          %1744 = vrot.lane.b32.xlu0 %v1742, 124
          %v1745 = vpop.permute.xlu0 %1744
          %v1747 = vadd.f32 %v1741, %v1745
          %v1748 = vmul.f32 %v163, 0.00020306687
          %v1749 = vadd.f32 %v1747, %v1748
          %v1750 = vmul.f32 %v163, 0.05619105
          %1752 = vrot.lane.b32.xlu0 %v1750, 127
          %v1753 = vpop.permute.xlu0 %1752
          %v1755 = vadd.f32 %v1749, %v1753
          %v1756 = vmul.f32 %v163, 3.713929e-17
          %1758 = vrot.lane.b32.xlu0 %v1756, 126
          %v1759 = vpop.permute.xlu0 %1758
          %v1761 = vadd.f32 %v1755, %v1759
          %v1762 = vmul.f32 %v163, -0.05619105
          %1764 = vrot.lane.b32.xlu0 %v1762, 125
          %v1765 = vpop.permute.xlu0 %1764
          %v1767 = vadd.f32 %v1761, %v1765
          %v1768 = vmul.f32 %v163, -0.00020306687
          %1770 = vrot.lane.b32.xlu0 %v1768, 124
          %v1771 = vpop.permute.xlu0 %1770
          %v1773 = vadd.f32 %v1767, %v1771
          %v1774 = vmul.f32 %v166, 0.00033480066
          %v1775 = vadd.f32 %v1773, %v1774
          %v1776 = vmul.f32 %v166, 0.09264338
          %1778 = vrot.lane.b32.xlu0 %v1776, 127
          %v1779 = vpop.permute.xlu0 %1778
          %v1781 = vadd.f32 %v1775, %v1779
          %v1782 = vmul.f32 %v166, 6.123234e-17
          %1784 = vrot.lane.b32.xlu0 %v1782, 126
          %v1785 = vpop.permute.xlu0 %1784
          %v1787 = vadd.f32 %v1781, %v1785
          %v1788 = vmul.f32 %v166, -0.09264338
          %1790 = vrot.lane.b32.xlu0 %v1788, 125
          %v1791 = vpop.permute.xlu0 %1790
          %v1793 = vadd.f32 %v1787, %v1791
          %v1794 = vmul.f32 %v166, -0.00033480066
          %1796 = vrot.lane.b32.xlu0 %v1794, 124
          %v1797 = vpop.permute.xlu0 %1796
          %v1799 = vadd.f32 %v1793, %v1797
          %v1800 = vmul.f32 %v169, 0.00020306687
          %v1801 = vadd.f32 %v1799, %v1800
          %v1802 = vmul.f32 %v169, 0.05619105
          %1804 = vrot.lane.b32.xlu0 %v1802, 127
          %v1805 = vpop.permute.xlu0 %1804
          %v1807 = vadd.f32 %v1801, %v1805
          %v1808 = vmul.f32 %v169, 3.713929e-17
          %1810 = vrot.lane.b32.xlu0 %v1808, 126
          %v1811 = vpop.permute.xlu0 %1810
          %v1813 = vadd.f32 %v1807, %v1811
          %v1814 = vmul.f32 %v169, -0.05619105
          %1816 = vrot.lane.b32.xlu0 %v1814, 125
          %v1817 = vpop.permute.xlu0 %1816
          %v1819 = vadd.f32 %v1813, %v1817
          %v1820 = vmul.f32 %v169, -0.00020306687
          %1822 = vrot.lane.b32.xlu0 %v1820, 124
          %v1823 = vpop.permute.xlu0 %1822
          %v1825 = vadd.f32 %v1819, %v1823
          %v1826 = vmul.f32 %v172, 4.5310342e-05
          %v1827 = vadd.f32 %v1825, %v1826
          %v1828 = vmul.f32 %v172, 0.012537918
          %1830 = vrot.lane.b32.xlu0 %v1828, 127
          %v1831 = vpop.permute.xlu0 %1830
          %v1833 = vadd.f32 %v1827, %v1831
          %v1834 = vmul.f32 %v172, 8.286896e-18
          %1836 = vrot.lane.b32.xlu0 %v1834, 126
          %v1837 = vpop.permute.xlu0 %1836
          %v1839 = vadd.f32 %v1833, %v1837
          %v1840 = vmul.f32 %v172, -0.012537918
          %1842 = vrot.lane.b32.xlu0 %v1840, 125
          %v1843 = vpop.permute.xlu0 %1842
          %v1845 = vadd.f32 %v1839, %v1843
          %v1846 = vmul.f32 %v172, -4.5310342e-05
          %1848 = vrot.lane.b32.xlu0 %v1846, 124
          %v1849 = vpop.permute.xlu0 %1848
          %v1851 = vadd.f32 %v1845, %v1849
          %v1852 = vmax.f32 %v1851, -5.0
          %v1853 = vmin.f32 %v1852, 5.0
          %s1854 = sadd.s32 %s157, 496
          %s1855 = scalar_lea.vmem %s148, %s1854 [#allocation5]
          %1856 = vst.msk [vmem:[%s1855] sm:$0xff] %vm221, %v1853
          %v1857 = vmul.f32 %v160, 0.05983739
          %v1858 = vmul.f32 %v160, -0.34204566
          %1860 = vrot.lane.b32.xlu0 %v1858, 127
          %v1861 = vpop.permute.xlu0 %1860
          %v1863 = vadd.f32 %v1857, %v1861
          %v1864 = vmul.f32 %v160, 0.60653067
          %1866 = vrot.lane.b32.xlu0 %v1864, 126
          %v1867 = vpop.permute.xlu0 %1866
          %v1869 = vadd.f32 %v1863, %v1867
          %1870 = vrot.lane.b32.xlu0 %v1858, 125
          %v1871 = vpop.permute.xlu0 %1870
          %v1873 = vadd.f32 %v1869, %v1871
          %1875 = vrot.lane.b32.xlu0 %v1857, 124
          %v1876 = vpop.permute.xlu0 %1875
          %v1878 = vadd.f32 %v1873, %v1876
          %v1879 = vmul.f32 %v163, 0.08706289
          %v1880 = vadd.f32 %v1878, %v1879
          %v1881 = vmul.f32 %v163, -0.49767348
          %1883 = vrot.lane.b32.xlu0 %v1881, 127
          %v1884 = vpop.permute.xlu0 %1883
          %v1886 = vadd.f32 %v1880, %v1884
          %v1887 = vmul.f32 %v163, 0.8824969
          %1889 = vrot.lane.b32.xlu0 %v1887, 126
          %v1890 = vpop.permute.xlu0 %1889
          %v1892 = vadd.f32 %v1886, %v1890
          %1893 = vrot.lane.b32.xlu0 %v1881, 125
          %v1894 = vpop.permute.xlu0 %1893
          %v1896 = vadd.f32 %v1892, %v1894
          %1898 = vrot.lane.b32.xlu0 %v1879, 124
          %v1899 = vpop.permute.xlu0 %1898
          %v1901 = vadd.f32 %v1896, %v1899
          %v1902 = vadd.f32 %v1901, %v1653
          %v1903 = vmul.f32 %v166, -0.56393796
          %1905 = vrot.lane.b32.xlu0 %v1903, 127
          %v1906 = vpop.permute.xlu0 %1905
          %v1908 = vadd.f32 %v1902, %v1906
          %v1909 = vadd.f32 %v1908, %v1660
          %1910 = vrot.lane.b32.xlu0 %v1903, 125
          %v1911 = vpop.permute.xlu0 %1910
          %v1913 = vadd.f32 %v1909, %v1911
          %1914 = vrot.lane.b32.xlu0 %v1653, 124
          %v1915 = vpop.permute.xlu0 %1914
          %v1917 = vadd.f32 %v1913, %v1915
          %v1918 = vmul.f32 %v169, 0.08706289
          %v1919 = vadd.f32 %v1917, %v1918
          %v1920 = vmul.f32 %v169, -0.49767348
          %1922 = vrot.lane.b32.xlu0 %v1920, 127
          %v1923 = vpop.permute.xlu0 %1922
          %v1925 = vadd.f32 %v1919, %v1923
          %v1926 = vmul.f32 %v169, 0.8824969
          %1928 = vrot.lane.b32.xlu0 %v1926, 126
          %v1929 = vpop.permute.xlu0 %1928
          %v1931 = vadd.f32 %v1925, %v1929
          %1932 = vrot.lane.b32.xlu0 %v1920, 125
          %v1933 = vpop.permute.xlu0 %1932
          %v1935 = vadd.f32 %v1931, %v1933
          %1937 = vrot.lane.b32.xlu0 %v1918, 124
          %v1938 = vpop.permute.xlu0 %1937
          %v1940 = vadd.f32 %v1935, %v1938
          %v1941 = vmul.f32 %v172, 0.05983739
          %v1942 = vadd.f32 %v1940, %v1941
          %v1943 = vmul.f32 %v172, -0.34204566
          %1945 = vrot.lane.b32.xlu0 %v1943, 127
          %v1946 = vpop.permute.xlu0 %1945
          %v1948 = vadd.f32 %v1942, %v1946
          %v1949 = vmul.f32 %v172, 0.60653067
          %1951 = vrot.lane.b32.xlu0 %v1949, 126
          %v1952 = vpop.permute.xlu0 %1951
          %v1954 = vadd.f32 %v1948, %v1952
          %1955 = vrot.lane.b32.xlu0 %v1943, 125
          %v1956 = vpop.permute.xlu0 %1955
          %v1958 = vadd.f32 %v1954, %v1956
          %1960 = vrot.lane.b32.xlu0 %v1941, 124
          %v1961 = vpop.permute.xlu0 %1960
          %v1963 = vadd.f32 %v1958, %v1961
          %v1964 = vmax.f32 %v1963, -5.0
          %v1965 = vmin.f32 %v1964, 5.0
          %s1966 = sadd.s32 %s157, 512
          %s1967 = scalar_lea.vmem %s148, %s1966 [#allocation5]
          %1968 = vst.msk [vmem:[%s1967] sm:$0xff] %vm221, %v1965
          %v1969 = vmul.f32 %v160, 0.05619105
          %v1970 = vmul.f32 %v160, -0.13542545
          %1972 = vrot.lane.b32.xlu0 %v1970, 127
          %v1973 = vpop.permute.xlu0 %1972
          %v1975 = vadd.f32 %v1969, %v1973
          %v1976 = vmul.f32 %v160, 3.713929e-17
          %1978 = vrot.lane.b32.xlu0 %v1976, 126
          %v1979 = vpop.permute.xlu0 %1978
          %v1981 = vadd.f32 %v1975, %v1979
          %v1982 = vmul.f32 %v160, 0.13542545
          %1984 = vrot.lane.b32.xlu0 %v1982, 125
          %v1985 = vpop.permute.xlu0 %1984
          %v1987 = vadd.f32 %v1981, %v1985
          %v1988 = vmul.f32 %v160, -0.05619105
          %1990 = vrot.lane.b32.xlu0 %v1988, 124
          %v1991 = vpop.permute.xlu0 %1990
          %v1993 = vadd.f32 %v1987, %v1991
          %v1994 = vmul.f32 %v163, 0.08175749
          %v1995 = vadd.f32 %v1993, %v1994
          %v1996 = vmul.f32 %v163, -0.19704287
          %1998 = vrot.lane.b32.xlu0 %v1996, 127
          %v1999 = vpop.permute.xlu0 %1998
          %v2001 = vadd.f32 %v1995, %v1999
          %v2002 = vmul.f32 %v163, 5.403735e-17
          %2004 = vrot.lane.b32.xlu0 %v2002, 126
          %v2005 = vpop.permute.xlu0 %2004
          %v2007 = vadd.f32 %v2001, %v2005
          %v2008 = vmul.f32 %v163, 0.19704287
          %2010 = vrot.lane.b32.xlu0 %v2008, 125
          %v2011 = vpop.permute.xlu0 %2010
          %v2013 = vadd.f32 %v2007, %v2011
          %v2014 = vmul.f32 %v163, -0.08175749
          %2016 = vrot.lane.b32.xlu0 %v2014, 124
          %v2017 = vpop.permute.xlu0 %2016
          %v2019 = vadd.f32 %v2013, %v2017
          %v2020 = vadd.f32 %v2019, %v1776
          %v2021 = vmul.f32 %v166, -0.22327882
          %2023 = vrot.lane.b32.xlu0 %v2021, 127
          %v2024 = vpop.permute.xlu0 %2023
          %v2026 = vadd.f32 %v2020, %v2024
          %v2027 = vadd.f32 %v2026, %v1785
          %v2028 = vmul.f32 %v166, 0.22327882
          %2030 = vrot.lane.b32.xlu0 %v2028, 125
          %v2031 = vpop.permute.xlu0 %2030
          %v2033 = vadd.f32 %v2027, %v2031
          %2034 = vrot.lane.b32.xlu0 %v1788, 124
          %v2035 = vpop.permute.xlu0 %2034
          %v2037 = vadd.f32 %v2033, %v2035
          %v2038 = vmul.f32 %v169, 0.08175749
          %v2039 = vadd.f32 %v2037, %v2038
          %v2040 = vmul.f32 %v169, -0.19704287
          %2042 = vrot.lane.b32.xlu0 %v2040, 127
          %v2043 = vpop.permute.xlu0 %2042
          %v2045 = vadd.f32 %v2039, %v2043
          %v2046 = vmul.f32 %v169, 5.403735e-17
          %2048 = vrot.lane.b32.xlu0 %v2046, 126
          %v2049 = vpop.permute.xlu0 %2048
          %v2051 = vadd.f32 %v2045, %v2049
          %v2052 = vmul.f32 %v169, 0.19704287
          %2054 = vrot.lane.b32.xlu0 %v2052, 125
          %v2055 = vpop.permute.xlu0 %2054
          %v2057 = vadd.f32 %v2051, %v2055
          %v2058 = vmul.f32 %v169, -0.08175749
          %2060 = vrot.lane.b32.xlu0 %v2058, 124
          %v2061 = vpop.permute.xlu0 %2060
          %v2063 = vadd.f32 %v2057, %v2061
          %v2064 = vmul.f32 %v172, 0.05619105
          %v2065 = vadd.f32 %v2063, %v2064
          %v2066 = vmul.f32 %v172, -0.13542545
          %2068 = vrot.lane.b32.xlu0 %v2066, 127
          %v2069 = vpop.permute.xlu0 %2068
          %v2071 = vadd.f32 %v2065, %v2069
          %v2072 = vmul.f32 %v172, 3.713929e-17
          %2074 = vrot.lane.b32.xlu0 %v2072, 126
          %v2075 = vpop.permute.xlu0 %2074
          %v2077 = vadd.f32 %v2071, %v2075
          %v2078 = vmul.f32 %v172, 0.13542545
          %2080 = vrot.lane.b32.xlu0 %v2078, 125
          %v2081 = vpop.permute.xlu0 %2080
          %v2083 = vadd.f32 %v2077, %v2081
          %v2084 = vmul.f32 %v172, -0.05619105
          %2086 = vrot.lane.b32.xlu0 %v2084, 124
          %v2087 = vpop.permute.xlu0 %2086
          %v2089 = vadd.f32 %v2083, %v2087
          %v2090 = vmax.f32 %v2089, -5.0
          %v2091 = vmin.f32 %v2090, 5.0
          %s2092 = sadd.s32 %s157, 528
          %s2093 = scalar_lea.vmem %s148, %s2092 [#allocation5]
          %2094 = vst.msk [vmem:[%s2093] sm:$0xff] %vm221, %v2091
          %v2095 = vmul.f32 %v160, 5.844059e-07
          %v2096 = vmul.f32 %v160, 0.00088405795
          %2098 = vrot.lane.b32.xlu0 %v2096, 127
          %v2099 = vpop.permute.xlu0 %2098
          %v2101 = vadd.f32 %v2095, %v2099
          %v2102 = vmul.f32 %v160, 0.035064477
          %2104 = vrot.lane.b32.xlu0 %v2102, 126
          %v2105 = vpop.permute.xlu0 %2104
          %v2107 = vadd.f32 %v2101, %v2105
          %v2108 = vmul.f32 %v160, 0.034761433
          %2110 = vrot.lane.b32.xlu0 %v2108, 125
          %v2111 = vpop.permute.xlu0 %2110
          %v2113 = vadd.f32 %v2107, %v2111
          %v2114 = vmul.f32 %v160, 0.0007418176
          %2116 = vrot.lane.b32.xlu0 %v2114, 124
          %v2117 = vpop.permute.xlu0 %2116
          %v2119 = vadd.f32 %v2113, %v2117
          %v2120 = vmul.f32 %v163, -4.7140304e-05
          %v2121 = vadd.f32 %v2119, %v2120
          %v2122 = vmul.f32 %v163, -0.027669868
          %2124 = vrot.lane.b32.xlu0 %v2122, 127
          %v2125 = vpop.permute.xlu0 %2124
          %v2127 = vadd.f32 %v2121, %v2125
          %v2128 = vmul.f32 %v163, -0.43873855
          %2130 = vrot.lane.b32.xlu0 %v2128, 126
          %v2131 = vpop.permute.xlu0 %2130
          %v2133 = vadd.f32 %v2127, %v2131
          %v2134 = vmul.f32 %v163, -0.186288
          %2136 = vrot.lane.b32.xlu0 %v2134, 125
          %v2137 = vpop.permute.xlu0 %2136
          %v2139 = vadd.f32 %v2133, %v2137
          %v2140 = vmul.f32 %v163, -0.0020771723
          %2142 = vrot.lane.b32.xlu0 %v2140, 124
          %v2143 = vpop.permute.xlu0 %2142
          %v2145 = vadd.f32 %v2139, %v2143
          %v2146 = vmul.f32 %v166, 0.00073192635
          %v2147 = vadd.f32 %v2145, %v2146
          %v2148 = vmul.f32 %v166, 0.16458116
          %2150 = vrot.lane.b32.xlu0 %v2148, 127
          %v2151 = vpop.permute.xlu0 %2150
          %v2153 = vadd.f32 %v2147, %v2151
          %v2154 = vadd.f32 %v2153, %v1660
          %2155 = vrot.lane.b32.xlu0 %v2148, 125
          %v2156 = vpop.permute.xlu0 %2155
          %v2158 = vadd.f32 %v2154, %v2156
          %2160 = vrot.lane.b32.xlu0 %v2146, 124
          %v2161 = vpop.permute.xlu0 %2160
          %v2163 = vadd.f32 %v2158, %v2161
          %v2164 = vmul.f32 %v169, -0.0020771723
          %v2165 = vadd.f32 %v2163, %v2164
          %v2166 = vmul.f32 %v169, -0.186288
          %2168 = vrot.lane.b32.xlu0 %v2166, 127
          %v2169 = vpop.permute.xlu0 %2168
          %v2171 = vadd.f32 %v2165, %v2169
          %v2172 = vmul.f32 %v169, -0.43873855
          %2174 = vrot.lane.b32.xlu0 %v2172, 126
          %v2175 = vpop.permute.xlu0 %2174
          %v2177 = vadd.f32 %v2171, %v2175
          %v2178 = vmul.f32 %v169, -0.027669868
          %2180 = vrot.lane.b32.xlu0 %v2178, 125
          %v2181 = vpop.permute.xlu0 %2180
          %v2183 = vadd.f32 %v2177, %v2181
          %v2184 = vmul.f32 %v169, -4.7140304e-05
          %2186 = vrot.lane.b32.xlu0 %v2184, 124
          %v2187 = vpop.permute.xlu0 %2186
          %v2189 = vadd.f32 %v2183, %v2187
          %v2190 = vmul.f32 %v172, 0.0007418176
          %v2191 = vadd.f32 %v2189, %v2190
          %v2192 = vmul.f32 %v172, 0.034761433
          %2194 = vrot.lane.b32.xlu0 %v2192, 127
          %v2195 = vpop.permute.xlu0 %2194
          %v2197 = vadd.f32 %v2191, %v2195
          %v2198 = vmul.f32 %v172, 0.035064477
          %2200 = vrot.lane.b32.xlu0 %v2198, 126
          %v2201 = vpop.permute.xlu0 %2200
          %v2203 = vadd.f32 %v2197, %v2201
          %v2204 = vmul.f32 %v172, 0.00088405795
          %2206 = vrot.lane.b32.xlu0 %v2204, 125
          %v2207 = vpop.permute.xlu0 %2206
          %v2209 = vadd.f32 %v2203, %v2207
          %v2210 = vmul.f32 %v172, 5.844059e-07
          %2212 = vrot.lane.b32.xlu0 %v2210, 124
          %v2213 = vpop.permute.xlu0 %2212
          %v2215 = vadd.f32 %v2209, %v2213
          %v2216 = vmax.f32 %v2215, -5.0
          %v2217 = vmin.f32 %v2216, 5.0
          %s2218 = sadd.s32 %s157, 544
          %s2219 = scalar_lea.vmem %s148, %s2218 [#allocation5]
          %2220 = vst.msk [vmem:[%s2219] sm:$0xff] %vm221, %v2217
          %v2221 = vmul.f32 %v160, -2.899443e-07
          %v2222 = vmul.f32 %v160, -0.0007132392
          %2224 = vrot.lane.b32.xlu0 %v2222, 127
          %v2225 = vpop.permute.xlu0 %2224
          %v2227 = vadd.f32 %v2221, %v2225
          %v2228 = vmul.f32 %v160, -0.043930925
          %2230 = vrot.lane.b32.xlu0 %v2228, 126
          %v2231 = vpop.permute.xlu0 %2230
          %v2233 = vadd.f32 %v2227, %v2231
          %v2234 = vmul.f32 %v160, -0.07099551
          %2236 = vrot.lane.b32.xlu0 %v2234, 125
          %v2237 = vpop.permute.xlu0 %2236
          %v2239 = vadd.f32 %v2233, %v2237
          %v2240 = vmul.f32 %v160, -0.003071122
          %2242 = vrot.lane.b32.xlu0 %v2240, 124
          %v2243 = vpop.permute.xlu0 %2242
          %v2245 = vadd.f32 %v2239, %v2243
          %v2246 = vmul.f32 %v163, 5.640944e-07
          %v2247 = vadd.f32 %v2245, %v2246
          %v2248 = vmul.f32 %v163, 0.0064867567
          %2250 = vrot.lane.b32.xlu0 %v2248, 127
          %v2251 = vpop.permute.xlu0 %2250
          %v2253 = vadd.f32 %v2247, %v2251
          %v2254 = vmul.f32 %v163, 0.21116985
          %2256 = vrot.lane.b32.xlu0 %v2254, 126
          %v2257 = vpop.permute.xlu0 %2256
          %v2259 = vadd.f32 %v2253, %v2257
          %v2260 = vmul.f32 %v163, 0.14664826
          %2262 = vrot.lane.b32.xlu0 %v2260, 125
          %v2263 = vpop.permute.xlu0 %2262
          %v2265 = vadd.f32 %v2259, %v2263
          %v2266 = vmul.f32 %v163, 0.0025394808
          %2268 = vrot.lane.b32.xlu0 %v2266, 124
          %v2269 = vpop.permute.xlu0 %2268
          %v2271 = vadd.f32 %v2265, %v2269
          %v2272 = vmul.f32 %v166, 0.00034155883
          %v2273 = vadd.f32 %v2271, %v2272
          %v2274 = vmul.f32 %v166, 0.036511563
          %2276 = vrot.lane.b32.xlu0 %v2274, 127
          %v2277 = vpop.permute.xlu0 %2276
          %v2279 = vadd.f32 %v2273, %v2277
          %v2280 = vadd.f32 %v2279, %v1785
          %v2281 = vmul.f32 %v166, -0.036511563
          %2283 = vrot.lane.b32.xlu0 %v2281, 125
          %v2284 = vpop.permute.xlu0 %2283
          %v2286 = vadd.f32 %v2280, %v2284
          %v2287 = vmul.f32 %v166, -0.00034155883
          %2289 = vrot.lane.b32.xlu0 %v2287, 124
          %v2290 = vpop.permute.xlu0 %2289
          %v2292 = vadd.f32 %v2286, %v2290
          %v2293 = vmul.f32 %v169, -0.0025394808
          %v2294 = vadd.f32 %v2292, %v2293
          %v2295 = vmul.f32 %v169, -0.14664826
          %2297 = vrot.lane.b32.xlu0 %v2295, 127
          %v2298 = vpop.permute.xlu0 %2297
          %v2300 = vadd.f32 %v2294, %v2298
          %v2301 = vmul.f32 %v169, -0.21116985
          %2303 = vrot.lane.b32.xlu0 %v2301, 126
          %v2304 = vpop.permute.xlu0 %2303
          %v2306 = vadd.f32 %v2300, %v2304
          %v2307 = vmul.f32 %v169, -0.0064867567
          %2309 = vrot.lane.b32.xlu0 %v2307, 125
          %v2310 = vpop.permute.xlu0 %2309
          %v2312 = vadd.f32 %v2306, %v2310
          %v2313 = vmul.f32 %v169, -5.640944e-07
          %2315 = vrot.lane.b32.xlu0 %v2313, 124
          %v2316 = vpop.permute.xlu0 %2315
          %v2318 = vadd.f32 %v2312, %v2316
          %v2319 = vmul.f32 %v172, 0.003071122
          %v2320 = vadd.f32 %v2318, %v2319
          %v2321 = vmul.f32 %v172, 0.07099551
          %2323 = vrot.lane.b32.xlu0 %v2321, 127
          %v2324 = vpop.permute.xlu0 %2323
          %v2326 = vadd.f32 %v2320, %v2324
          %v2327 = vmul.f32 %v172, 0.043930925
          %2329 = vrot.lane.b32.xlu0 %v2327, 126
          %v2330 = vpop.permute.xlu0 %2329
          %v2332 = vadd.f32 %v2326, %v2330
          %v2333 = vmul.f32 %v172, 0.0007132392
          %2335 = vrot.lane.b32.xlu0 %v2333, 125
          %v2336 = vpop.permute.xlu0 %2335
          %v2338 = vadd.f32 %v2332, %v2336
          %v2339 = vmul.f32 %v172, 2.899443e-07
          %2341 = vrot.lane.b32.xlu0 %v2339, 124
          %v2342 = vpop.permute.xlu0 %2341
          %v2344 = vadd.f32 %v2338, %v2342
          %v2345 = vmax.f32 %v2344, -5.0
          %v2346 = vmin.f32 %v2345, 5.0
          %s2347 = sadd.s32 %s157, 560
          %s2348 = scalar_lea.vmem %s148, %s2347 [#allocation5]
          %2349 = vst.msk [vmem:[%s2348] sm:$0xff] %vm221, %v2346
          %v2350 = vmul.f32 %v160, -0.027669868
          %v2351 = vmul.f32 %v160, 0.17310959
          %2353 = vrot.lane.b32.xlu0 %v2351, 127
          %v2354 = vpop.permute.xlu0 %2353
          %v2356 = vadd.f32 %v2350, %v2354
          %v2357 = vmul.f32 %v160, -0.43873855
          %2359 = vrot.lane.b32.xlu0 %v2357, 126
          %v2360 = vpop.permute.xlu0 %2359
          %v2362 = vadd.f32 %v2356, %v2360
          %v2363 = vmul.f32 %v160, 0.44988537
          %2365 = vrot.lane.b32.xlu0 %v2363, 125
          %v2366 = vpop.permute.xlu0 %2365
          %v2368 = vadd.f32 %v2362, %v2366
          %v2369 = vmul.f32 %v160, -0.186288
          %2371 = vrot.lane.b32.xlu0 %v2369, 124
          %v2372 = vpop.permute.xlu0 %2371
          %v2374 = vadd.f32 %v2368, %v2372
          %v2375 = vmul.f32 %v163, 0.0004957492
          %v2376 = vadd.f32 %v2374, %v2375
          %v2377 = vmul.f32 %v163, -0.04716979
          %2379 = vrot.lane.b32.xlu0 %v2377, 127
          %v2380 = vpop.permute.xlu0 %2379
          %v2382 = vadd.f32 %v2376, %v2380
          %v2383 = vmul.f32 %v163, 0.18579341
          %2385 = vrot.lane.b32.xlu0 %v2383, 126
          %v2386 = vpop.permute.xlu0 %2385
          %v2388 = vadd.f32 %v2382, %v2386
          %v2389 = vmul.f32 %v163, -0.22838895
          %2391 = vrot.lane.b32.xlu0 %v2389, 125
          %v2392 = vpop.permute.xlu0 %2391
          %v2394 = vadd.f32 %v2388, %v2392
          %v2395 = vmul.f32 %v163, 0.10250268
          %2397 = vrot.lane.b32.xlu0 %v2395, 124
          %v2398 = vpop.permute.xlu0 %2397
          %v2400 = vadd.f32 %v2394, %v2398
          %v2401 = vadd.f32 %v2400, %v2148
          %v2402 = vmul.f32 %v166, -0.6369579
          %2404 = vrot.lane.b32.xlu0 %v2402, 127
          %v2405 = vpop.permute.xlu0 %2404
          %v2407 = vadd.f32 %v2401, %v2405
          %v2408 = vadd.f32 %v2407, %v1660
          %2409 = vrot.lane.b32.xlu0 %v2402, 125
          %v2410 = vpop.permute.xlu0 %2409
          %v2412 = vadd.f32 %v2408, %v2410
          %2413 = vrot.lane.b32.xlu0 %v2148, 124
          %v2414 = vpop.permute.xlu0 %2413
          %v2416 = vadd.f32 %v2412, %v2414
          %v2417 = vmul.f32 %v169, 0.10250268
          %v2418 = vadd.f32 %v2416, %v2417
          %v2419 = vmul.f32 %v169, -0.22838895
          %2421 = vrot.lane.b32.xlu0 %v2419, 127
          %v2422 = vpop.permute.xlu0 %2421
          %v2424 = vadd.f32 %v2418, %v2422
          %v2425 = vmul.f32 %v169, 0.18579341
          %2427 = vrot.lane.b32.xlu0 %v2425, 126
          %v2428 = vpop.permute.xlu0 %2427
          %v2430 = vadd.f32 %v2424, %v2428
          %v2431 = vmul.f32 %v169, -0.04716979
          %2433 = vrot.lane.b32.xlu0 %v2431, 125
          %v2434 = vpop.permute.xlu0 %2433
          %v2436 = vadd.f32 %v2430, %v2434
          %v2437 = vmul.f32 %v169, 0.0004957492
          %2439 = vrot.lane.b32.xlu0 %v2437, 124
          %v2440 = vpop.permute.xlu0 %2439
          %v2442 = vadd.f32 %v2436, %v2440
          %v2443 = vmul.f32 %v172, -0.186288
          %v2444 = vadd.f32 %v2442, %v2443
          %v2445 = vmul.f32 %v172, 0.44988537
          %2447 = vrot.lane.b32.xlu0 %v2445, 127
          %v2448 = vpop.permute.xlu0 %2447
          %v2450 = vadd.f32 %v2444, %v2448
          %v2451 = vmul.f32 %v172, -0.43873855
          %2453 = vrot.lane.b32.xlu0 %v2451, 126
          %v2454 = vpop.permute.xlu0 %2453
          %v2456 = vadd.f32 %v2450, %v2454
          %v2457 = vmul.f32 %v172, 0.17310959
          %2459 = vrot.lane.b32.xlu0 %v2457, 125
          %v2460 = vpop.permute.xlu0 %2459
          %v2462 = vadd.f32 %v2456, %v2460
          %v2463 = vmul.f32 %v172, -0.027669868
          %2465 = vrot.lane.b32.xlu0 %v2463, 124
          %v2466 = vpop.permute.xlu0 %2465
          %v2468 = vadd.f32 %v2462, %v2466
          %v2469 = vmax.f32 %v2468, -5.0
          %v2470 = vmin.f32 %v2469, 5.0
          %s2471 = sadd.s32 %s157, 576
          %s2472 = scalar_lea.vmem %s148, %s2471 [#allocation5]
          %2473 = vst.msk [vmem:[%s2472] sm:$0xff] %vm221, %v2470
          %v2474 = vmul.f32 %v160, 0.0064867567
          %v2475 = vmul.f32 %v160, -0.061124317
          %2477 = vrot.lane.b32.xlu0 %v2475, 127
          %v2478 = vpop.permute.xlu0 %2477
          %v2480 = vadd.f32 %v2474, %v2478
          %v2481 = vmul.f32 %v160, 0.21116985
          %2483 = vrot.lane.b32.xlu0 %v2481, 126
          %v2484 = vpop.permute.xlu0 %2483
          %v2486 = vadd.f32 %v2480, %v2484
          %v2487 = vmul.f32 %v160, -0.28064108
          %2489 = vrot.lane.b32.xlu0 %v2487, 125
          %v2490 = vpop.permute.xlu0 %2489
          %v2492 = vadd.f32 %v2486, %v2490
          %v2493 = vmul.f32 %v160, 0.14664826
          %2495 = vrot.lane.b32.xlu0 %v2493, 124
          %v2496 = vpop.permute.xlu0 %2495
          %v2498 = vadd.f32 %v2492, %v2496
          %v2499 = vmul.f32 %v163, 0.082860604
          %v2500 = vadd.f32 %v2498, %v2499
          %v2501 = vmul.f32 %v163, -0.40786946
          %2503 = vrot.lane.b32.xlu0 %v2501, 127
          %v2504 = vpop.permute.xlu0 %2503
          %v2506 = vadd.f32 %v2500, %v2504
          %v2507 = vmul.f32 %v163, 0.8144153
          %2509 = vrot.lane.b32.xlu0 %v2507, 126
          %v2510 = vpop.permute.xlu0 %2509
          %v2512 = vadd.f32 %v2506, %v2510
          %v2513 = vmul.f32 %v163, -0.65935683
          %2515 = vrot.lane.b32.xlu0 %v2513, 125
          %v2516 = vpop.permute.xlu0 %2515
          %v2518 = vadd.f32 %v2512, %v2516
          %v2519 = vmul.f32 %v163, 0.21626699
          %2521 = vrot.lane.b32.xlu0 %v2519, 124
          %v2522 = vpop.permute.xlu0 %2521
          %v2524 = vadd.f32 %v2518, %v2522
          %v2525 = vadd.f32 %v2524, %v2274
          %v2526 = vmul.f32 %v166, -0.06980451
          %2528 = vrot.lane.b32.xlu0 %v2526, 127
          %v2529 = vpop.permute.xlu0 %2528
          %v2531 = vadd.f32 %v2525, %v2529
          %v2532 = vadd.f32 %v2531, %v1785
          %v2533 = vmul.f32 %v166, 0.06980451
          %2535 = vrot.lane.b32.xlu0 %v2533, 125
          %v2536 = vpop.permute.xlu0 %2535
          %v2538 = vadd.f32 %v2532, %v2536
          %2539 = vrot.lane.b32.xlu0 %v2281, 124
          %v2540 = vpop.permute.xlu0 %2539
          %v2542 = vadd.f32 %v2538, %v2540
          %v2543 = vmul.f32 %v169, -0.21626699
          %v2544 = vadd.f32 %v2542, %v2543
          %v2545 = vmul.f32 %v169, 0.65935683
          %2547 = vrot.lane.b32.xlu0 %v2545, 127
          %v2548 = vpop.permute.xlu0 %2547
          %v2550 = vadd.f32 %v2544, %v2548
          %v2551 = vmul.f32 %v169, -0.8144153
          %2553 = vrot.lane.b32.xlu0 %v2551, 126
          %v2554 = vpop.permute.xlu0 %2553
          %v2556 = vadd.f32 %v2550, %v2554
          %v2557 = vmul.f32 %v169, 0.40786946
          %2559 = vrot.lane.b32.xlu0 %v2557, 125
          %v2560 = vpop.permute.xlu0 %2559
          %v2562 = vadd.f32 %v2556, %v2560
          %v2563 = vmul.f32 %v169, -0.082860604
          %2565 = vrot.lane.b32.xlu0 %v2563, 124
          %v2566 = vpop.permute.xlu0 %2565
          %v2568 = vadd.f32 %v2562, %v2566
          %v2569 = vmul.f32 %v172, -0.14664826
          %v2570 = vadd.f32 %v2568, %v2569
          %v2571 = vmul.f32 %v172, 0.28064108
          %2573 = vrot.lane.b32.xlu0 %v2571, 127
          %v2574 = vpop.permute.xlu0 %2573
          %v2576 = vadd.f32 %v2570, %v2574
          %v2577 = vmul.f32 %v172, -0.21116985
          %2579 = vrot.lane.b32.xlu0 %v2577, 126
          %v2580 = vpop.permute.xlu0 %2579
          %v2582 = vadd.f32 %v2576, %v2580
          %v2583 = vmul.f32 %v172, 0.061124317
          %2585 = vrot.lane.b32.xlu0 %v2583, 125
          %v2586 = vpop.permute.xlu0 %2585
          %v2588 = vadd.f32 %v2582, %v2586
          %v2589 = vmul.f32 %v172, -0.0064867567
          %2591 = vrot.lane.b32.xlu0 %v2589, 124
          %v2592 = vpop.permute.xlu0 %2591
          %v2594 = vadd.f32 %v2588, %v2592
          %v2595 = vmax.f32 %v2594, -5.0
          %v2596 = vmin.f32 %v2595, 5.0
          %s2597 = sadd.s32 %s157, 592
          %s2598 = scalar_lea.vmem %s148, %s2597 [#allocation5]
          %2599 = vst.msk [vmem:[%s2598] sm:$0xff] %vm221, %v2596
          %v2600 = vmul.f32 %v160, 5.5548572e-08
          %v2601 = vmul.f32 %v160, -6.8335416e-05
          %2603 = vrot.lane.b32.xlu0 %v2601, 127
          %v2604 = vpop.permute.xlu0 %2603
          %v2606 = vadd.f32 %v2600, %v2604
          %v2607 = vmul.f32 %v160, -0.0058227926
          %2609 = vrot.lane.b32.xlu0 %v2607, 126
          %v2610 = vpop.permute.xlu0 %2609
          %v2612 = vadd.f32 %v2606, %v2610
          %v2613 = vmul.f32 %v160, 0.01010442
          %2615 = vrot.lane.b32.xlu0 %v2613, 125
          %v2616 = vpop.permute.xlu0 %2615
          %v2618 = vadd.f32 %v2612, %v2616
          %v2619 = vmul.f32 %v160, 0.01831564
          %2621 = vrot.lane.b32.xlu0 %v2619, 124
          %v2622 = vpop.permute.xlu0 %2621
          %v2624 = vadd.f32 %v2618, %v2622
          %v2625 = vmul.f32 %v163, -6.8335416e-05
          %v2626 = vadd.f32 %v2624, %v2625
          %v2627 = vmul.f32 %v163, -0.015827991
          %2629 = vrot.lane.b32.xlu0 %v2627, 127
          %v2630 = vpop.permute.xlu0 %2629
          %v2632 = vadd.f32 %v2626, %v2630
          %v2633 = vmul.f32 %v163, 0.07466212
          %2635 = vrot.lane.b32.xlu0 %v2633, 126
          %v2636 = vpop.permute.xlu0 %2635
          %v2638 = vadd.f32 %v2632, %v2636
          %v2639 = vmul.f32 %v163, 0.36787945
          %2641 = vrot.lane.b32.xlu0 %v2639, 125
          %v2642 = vpop.permute.xlu0 %2641
          %v2644 = vadd.f32 %v2638, %v2642
          %v2645 = vmul.f32 %v163, 0.01010442
          %2647 = vrot.lane.b32.xlu0 %v2645, 124
          %v2648 = vpop.permute.xlu0 %2647
          %v2650 = vadd.f32 %v2644, %v2648
          %v2651 = vmul.f32 %v166, -0.0058227926
          %v2652 = vadd.f32 %v2650, %v2651
          %v2653 = vmul.f32 %v166, 0.07466212
          %2655 = vrot.lane.b32.xlu0 %v2653, 127
          %v2656 = vpop.permute.xlu0 %2655
          %v2658 = vadd.f32 %v2652, %v2656
          %v2659 = vadd.f32 %v2658, %v1660
          %2660 = vrot.lane.b32.xlu0 %v2653, 125
          %v2661 = vpop.permute.xlu0 %2660
          %v2663 = vadd.f32 %v2659, %v2661
          %2665 = vrot.lane.b32.xlu0 %v2651, 124
          %v2666 = vpop.permute.xlu0 %2665
          %v2668 = vadd.f32 %v2663, %v2666
          %v2669 = vmul.f32 %v169, 0.01010442
          %v2670 = vadd.f32 %v2668, %v2669
          %v2671 = vmul.f32 %v169, 0.36787945
          %2673 = vrot.lane.b32.xlu0 %v2671, 127
          %v2674 = vpop.permute.xlu0 %2673
          %v2676 = vadd.f32 %v2670, %v2674
          %v2677 = vmul.f32 %v169, 0.07466212
          %2679 = vrot.lane.b32.xlu0 %v2677, 126
          %v2680 = vpop.permute.xlu0 %2679
          %v2682 = vadd.f32 %v2676, %v2680
          %v2683 = vmul.f32 %v169, -0.015827991
          %2685 = vrot.lane.b32.xlu0 %v2683, 125
          %v2686 = vpop.permute.xlu0 %2685
          %v2688 = vadd.f32 %v2682, %v2686
          %v2689 = vmul.f32 %v169, -6.8335416e-05
          %2691 = vrot.lane.b32.xlu0 %v2689, 124
          %v2692 = vpop.permute.xlu0 %2691
          %v2694 = vadd.f32 %v2688, %v2692
          %v2695 = vmul.f32 %v172, 0.01831564
          %v2696 = vadd.f32 %v2694, %v2695
          %v2697 = vmul.f32 %v172, 0.01010442
          %2699 = vrot.lane.b32.xlu0 %v2697, 127
          %v2700 = vpop.permute.xlu0 %2699
          %v2702 = vadd.f32 %v2696, %v2700
          %v2703 = vmul.f32 %v172, -0.0058227926
          %2705 = vrot.lane.b32.xlu0 %v2703, 126
          %v2706 = vpop.permute.xlu0 %2705
          %v2708 = vadd.f32 %v2702, %v2706
          %v2709 = vmul.f32 %v172, -6.8335416e-05
          %2711 = vrot.lane.b32.xlu0 %v2709, 125
          %v2712 = vpop.permute.xlu0 %2711
          %v2714 = vadd.f32 %v2708, %v2712
          %v2715 = vmul.f32 %v172, 5.5548572e-08
          %2717 = vrot.lane.b32.xlu0 %v2715, 124
          %v2718 = vpop.permute.xlu0 %2717
          %v2720 = vadd.f32 %v2714, %v2718
          %v2721 = vmax.f32 %v2720, -5.0
          %v2722 = vmin.f32 %v2721, 5.0
          %s2723 = sadd.s32 %s157, 608
          %s2724 = scalar_lea.vmem %s148, %s2723 [#allocation5]
          %2725 = vst.msk [vmem:[%s2724] sm:$0xff] %vm221, %v2722
          %v2726 = vmul.f32 %v160, 9.786992e-08
          %v2727 = vmul.f32 %v160, 6.7584915e-05
          %2729 = vrot.lane.b32.xlu0 %v2727, 127
          %v2730 = vpop.permute.xlu0 %2729
          %v2732 = vadd.f32 %v2726, %v2730
          %v2733 = vmul.f32 %v160, -0.0033904305
          %2735 = vrot.lane.b32.xlu0 %v2733, 126
          %v2736 = vpop.permute.xlu0 %2735
          %v2738 = vadd.f32 %v2732, %v2736
          %v2739 = vmul.f32 %v160, -0.037434474
          %2741 = vrot.lane.b32.xlu0 %v2739, 125
          %v2742 = vpop.permute.xlu0 %2741
          %v2744 = vadd.f32 %v2738, %v2742
          %v2745 = vmul.f32 %v160, -2.7346712e-17
          %2747 = vrot.lane.b32.xlu0 %v2745, 124
          %v2748 = vpop.permute.xlu0 %2747
          %v2750 = vadd.f32 %v2744, %v2748
          %v2751 = vmul.f32 %v163, 6.7584915e-05
          %v2752 = vadd.f32 %v2750, %v2751
          %v2753 = vmul.f32 %v163, -0.009216146
          %2755 = vrot.lane.b32.xlu0 %v2753, 127
          %v2756 = vpop.permute.xlu0 %2755
          %v2758 = vadd.f32 %v2752, %v2756
          %v2759 = vmul.f32 %v163, -0.27660543
          %2761 = vrot.lane.b32.xlu0 %v2759, 126
          %v2762 = vpop.permute.xlu0 %2761
          %v2764 = vadd.f32 %v2758, %v2762
          %v2765 = vmul.f32 %v163, -3.0421646e-16
          %2767 = vrot.lane.b32.xlu0 %v2765, 125
          %v2768 = vpop.permute.xlu0 %2767
          %v2770 = vadd.f32 %v2764, %v2768
          %v2771 = vmul.f32 %v163, 0.037434474
          %2773 = vrot.lane.b32.xlu0 %v2771, 124
          %v2774 = vpop.permute.xlu0 %2773
          %v2776 = vadd.f32 %v2770, %v2774
          %v2777 = vmul.f32 %v166, -0.0033904305
          %v2778 = vadd.f32 %v2776, %v2777
          %v2779 = vmul.f32 %v166, -0.27660543
          %2781 = vrot.lane.b32.xlu0 %v2779, 127
          %v2782 = vpop.permute.xlu0 %2781
          %v2784 = vadd.f32 %v2778, %v2782
          %v2785 = vadd.f32 %v2784, %v1785
          %v2786 = vmul.f32 %v166, 0.27660543
          %2788 = vrot.lane.b32.xlu0 %v2786, 125
          %v2789 = vpop.permute.xlu0 %2788
          %v2791 = vadd.f32 %v2785, %v2789
          %v2792 = vmul.f32 %v166, 0.0033904305
          %2794 = vrot.lane.b32.xlu0 %v2792, 124
          %v2795 = vpop.permute.xlu0 %2794
          %v2797 = vadd.f32 %v2791, %v2795
          %v2798 = vmul.f32 %v169, -0.037434474
          %v2799 = vadd.f32 %v2797, %v2798
          %v2800 = vmul.f32 %v169, 3.492687e-16
          %2802 = vrot.lane.b32.xlu0 %v2800, 127
          %v2803 = vpop.permute.xlu0 %2802
          %v2805 = vadd.f32 %v2799, %v2803
          %v2806 = vmul.f32 %v169, 0.27660543
          %2808 = vrot.lane.b32.xlu0 %v2806, 126
          %v2809 = vpop.permute.xlu0 %2808
          %v2811 = vadd.f32 %v2805, %v2809
          %v2812 = vmul.f32 %v169, 0.009216146
          %2814 = vrot.lane.b32.xlu0 %v2812, 125
          %v2815 = vpop.permute.xlu0 %2814
          %v2817 = vadd.f32 %v2811, %v2815
          %v2818 = vmul.f32 %v169, -6.7584915e-05
          %2820 = vrot.lane.b32.xlu0 %v2818, 124
          %v2821 = vpop.permute.xlu0 %2820
          %v2823 = vadd.f32 %v2817, %v2821
          %v2824 = vmul.f32 %v172, 2.958973e-17
          %v2825 = vadd.f32 %v2823, %v2824
          %v2826 = vmul.f32 %v172, 0.037434474
          %2828 = vrot.lane.b32.xlu0 %v2826, 127
          %v2829 = vpop.permute.xlu0 %2828
          %v2831 = vadd.f32 %v2825, %v2829
          %v2832 = vmul.f32 %v172, 0.0033904305
          %2834 = vrot.lane.b32.xlu0 %v2832, 126
          %v2835 = vpop.permute.xlu0 %2834
          %v2837 = vadd.f32 %v2831, %v2835
          %v2838 = vmul.f32 %v172, -6.7584915e-05
          %2840 = vrot.lane.b32.xlu0 %v2838, 125
          %v2841 = vpop.permute.xlu0 %2840
          %v2843 = vadd.f32 %v2837, %v2841
          %v2844 = vmul.f32 %v172, -9.786992e-08
          %2846 = vrot.lane.b32.xlu0 %v2844, 124
          %v2847 = vpop.permute.xlu0 %2846
          %v2849 = vadd.f32 %v2843, %v2847
          %v2850 = vmax.f32 %v2849, -5.0
          %v2851 = vmin.f32 %v2850, 5.0
          %s2852 = sadd.s32 %s157, 624
          %s2853 = scalar_lea.vmem %s148, %s2852 [#allocation5]
          %2854 = vst.msk [vmem:[%s2853] sm:$0xff] %vm221, %v2851
          %v2855 = vmul.f32 %v160, -0.015827991
          %v2856 = vmul.f32 %v160, 0.0376381
          %2858 = vrot.lane.b32.xlu0 %v2856, 127
          %v2859 = vpop.permute.xlu0 %2858
          %v2861 = vadd.f32 %v2855, %v2859
          %v2862 = vmul.f32 %v160, 0.07466212
          %2864 = vrot.lane.b32.xlu0 %v2862, 126
          %v2865 = vpop.permute.xlu0 %2864
          %v2867 = vadd.f32 %v2861, %v2865
          %v2868 = vmul.f32 %v160, -0.35229686
          %2870 = vrot.lane.b32.xlu0 %v2868, 125
          %v2871 = vpop.permute.xlu0 %2870
          %v2873 = vadd.f32 %v2867, %v2871
          %v2874 = vmul.f32 %v160, 0.36787945
          %2876 = vrot.lane.b32.xlu0 %v2874, 124
          %v2877 = vpop.permute.xlu0 %2876
          %v2879 = vadd.f32 %v2873, %v2877
          %v2880 = vmul.f32 %v163, 0.0376381
          %v2881 = vadd.f32 %v2879, %v2880
          %v2882 = vmul.f32 %v163, 0.095868066
          %2884 = vrot.lane.b32.xlu0 %v2882, 127
          %v2885 = vpop.permute.xlu0 %2884
          %v2887 = vadd.f32 %v2881, %v2885
          %v2888 = vmul.f32 %v163, -0.58083934
          %2890 = vrot.lane.b32.xlu0 %v2888, 126
          %v2891 = vpop.permute.xlu0 %2890
          %v2893 = vadd.f32 %v2887, %v2891
          %v2894 = vmul.f32 %v163, 0.7788008
          %2896 = vrot.lane.b32.xlu0 %v2894, 125
          %v2897 = vpop.permute.xlu0 %2896
          %v2899 = vadd.f32 %v2893, %v2897
          %v2900 = vmul.f32 %v163, -0.35229686
          %2902 = vrot.lane.b32.xlu0 %v2900, 124
          %v2903 = vpop.permute.xlu0 %2902
          %v2905 = vadd.f32 %v2899, %v2903
          %v2906 = vadd.f32 %v2905, %v2653
          %v2907 = vmul.f32 %v166, -0.58083934
          %2909 = vrot.lane.b32.xlu0 %v2907, 127
          %v2910 = vpop.permute.xlu0 %2909
          %v2912 = vadd.f32 %v2906, %v2910
          %v2913 = vadd.f32 %v2912, %v1660
          %2914 = vrot.lane.b32.xlu0 %v2907, 125
          %v2915 = vpop.permute.xlu0 %2914
          %v2917 = vadd.f32 %v2913, %v2915
          %2918 = vrot.lane.b32.xlu0 %v2653, 124
          %v2919 = vpop.permute.xlu0 %2918
          %v2921 = vadd.f32 %v2917, %v2919
          %v2922 = vmul.f32 %v169, -0.35229686
          %v2923 = vadd.f32 %v2921, %v2922
          %v2924 = vmul.f32 %v169, 0.7788008
          %2926 = vrot.lane.b32.xlu0 %v2924, 127
          %v2927 = vpop.permute.xlu0 %2926
          %v2929 = vadd.f32 %v2923, %v2927
          %v2930 = vmul.f32 %v169, -0.58083934
          %2932 = vrot.lane.b32.xlu0 %v2930, 126
          %v2933 = vpop.permute.xlu0 %2932
          %v2935 = vadd.f32 %v2929, %v2933
          %v2936 = vmul.f32 %v169, 0.095868066
          %2938 = vrot.lane.b32.xlu0 %v2936, 125
          %v2939 = vpop.permute.xlu0 %2938
          %v2941 = vadd.f32 %v2935, %v2939
          %v2942 = vmul.f32 %v169, 0.0376381
          %2944 = vrot.lane.b32.xlu0 %v2942, 124
          %v2945 = vpop.permute.xlu0 %2944
          %v2947 = vadd.f32 %v2941, %v2945
          %v2948 = vmul.f32 %v172, 0.36787945
          %v2949 = vadd.f32 %v2947, %v2948
          %v2950 = vmul.f32 %v172, -0.35229686
          %2952 = vrot.lane.b32.xlu0 %v2950, 127
          %v2953 = vpop.permute.xlu0 %2952
          %v2955 = vadd.f32 %v2949, %v2953
          %v2956 = vmul.f32 %v172, 0.07466212
          %2958 = vrot.lane.b32.xlu0 %v2956, 126
          %v2959 = vpop.permute.xlu0 %2958
          %v2961 = vadd.f32 %v2955, %v2959
          %v2962 = vmul.f32 %v172, 0.0376381
          %2964 = vrot.lane.b32.xlu0 %v2962, 125
          %v2965 = vpop.permute.xlu0 %2964
          %v2967 = vadd.f32 %v2961, %v2965
          %v2968 = vmul.f32 %v172, -0.015827991
          %2970 = vrot.lane.b32.xlu0 %v2968, 124
          %v2971 = vpop.permute.xlu0 %2970
          %v2973 = vadd.f32 %v2967, %v2971
          %v2974 = vmax.f32 %v2973, -5.0
          %v2975 = vmin.f32 %v2974, 5.0
          %s2976 = sadd.s32 %s157, 640
          %s2977 = scalar_lea.vmem %s148, %s2976 [#allocation5]
          %2978 = vst.msk [vmem:[%s2977] sm:$0xff] %vm221, %v2975
          %v2979 = vmul.f32 %v160, -0.009216146
          %v2980 = vmul.f32 %v160, 0.09158072
          %2982 = vrot.lane.b32.xlu0 %v2980, 127
          %v2983 = vpop.permute.xlu0 %2982
          %v2985 = vadd.f32 %v2979, %v2983
          %v2986 = vmul.f32 %v160, -0.27660543
          %2988 = vrot.lane.b32.xlu0 %v2986, 126
          %v2989 = vpop.permute.xlu0 %2988
          %v2991 = vadd.f32 %v2985, %v2989
          %v2992 = vmul.f32 %v160, 0.26981217
          %2994 = vrot.lane.b32.xlu0 %v2992, 125
          %v2995 = vpop.permute.xlu0 %2994
          %v2997 = vadd.f32 %v2991, %v2995
          %v2998 = vmul.f32 %v160, -3.0421646e-16
          %3000 = vrot.lane.b32.xlu0 %v2998, 124
          %v3001 = vpop.permute.xlu0 %3000
          %v3003 = vadd.f32 %v2997, %v3001
          %v3004 = vmul.f32 %v163, 0.09158072
          %v3005 = vadd.f32 %v3003, %v3004
          %v3006 = vmul.f32 %v163, -0.3551684
          %3008 = vrot.lane.b32.xlu0 %v3006, 127
          %v3009 = vpop.permute.xlu0 %3008
          %v3011 = vadd.f32 %v3005, %v3009
          %v3012 = vmul.f32 %v163, 0.44484505
          %3014 = vrot.lane.b32.xlu0 %v3012, 126
          %v3015 = vpop.permute.xlu0 %3014
          %v3017 = vadd.f32 %v3011, %v3015
          %v3018 = vmul.f32 %v163, -2.9816923e-16
          %3020 = vrot.lane.b32.xlu0 %v3018, 125
          %v3021 = vpop.permute.xlu0 %3020
          %v3023 = vadd.f32 %v3017, %v3021
          %v3024 = vmul.f32 %v163, -0.26981217
          %3026 = vrot.lane.b32.xlu0 %v3024, 124
          %v3027 = vpop.permute.xlu0 %3026
          %v3029 = vadd.f32 %v3023, %v3027
          %v3030 = vadd.f32 %v3029, %v2779
          %v3031 = vmul.f32 %v166, 0.44484505
          %3033 = vrot.lane.b32.xlu0 %v3031, 127
          %v3034 = vpop.permute.xlu0 %3033
          %v3036 = vadd.f32 %v3030, %v3034
          %v3037 = vadd.f32 %v3036, %v1785
          %v3038 = vmul.f32 %v166, -0.44484505
          %3040 = vrot.lane.b32.xlu0 %v3038, 125
          %v3041 = vpop.permute.xlu0 %3040
          %v3043 = vadd.f32 %v3037, %v3041
          %3044 = vrot.lane.b32.xlu0 %v2786, 124
          %v3045 = vpop.permute.xlu0 %3044
          %v3047 = vadd.f32 %v3043, %v3045
          %v3048 = vmul.f32 %v169, 0.26981217
          %v3049 = vadd.f32 %v3047, %v3048
          %v3050 = vmul.f32 %v169, 3.9354482e-16
          %3052 = vrot.lane.b32.xlu0 %v3050, 127
          %v3053 = vpop.permute.xlu0 %3052
          %v3055 = vadd.f32 %v3049, %v3053
          %v3056 = vmul.f32 %v169, -0.44484505
          %3058 = vrot.lane.b32.xlu0 %v3056, 126
          %v3059 = vpop.permute.xlu0 %3058
          %v3061 = vadd.f32 %v3055, %v3059
          %v3062 = vmul.f32 %v169, 0.3551684
          %3064 = vrot.lane.b32.xlu0 %v3062, 125
          %v3065 = vpop.permute.xlu0 %3064
          %v3067 = vadd.f32 %v3061, %v3065
          %v3068 = vmul.f32 %v169, -0.09158072
          %3070 = vrot.lane.b32.xlu0 %v3068, 124
          %v3071 = vpop.permute.xlu0 %3070
          %v3073 = vadd.f32 %v3067, %v3071
          %v3074 = vmul.f32 %v172, 3.492687e-16
          %v3075 = vadd.f32 %v3073, %v3074
          %v3076 = vmul.f32 %v172, -0.26981217
          %3078 = vrot.lane.b32.xlu0 %v3076, 127
          %v3079 = vpop.permute.xlu0 %3078
          %v3081 = vadd.f32 %v3075, %v3079
          %v3082 = vmul.f32 %v172, 0.27660543
          %3084 = vrot.lane.b32.xlu0 %v3082, 126
          %v3085 = vpop.permute.xlu0 %3084
          %v3087 = vadd.f32 %v3081, %v3085
          %v3088 = vmul.f32 %v172, -0.09158072
          %3090 = vrot.lane.b32.xlu0 %v3088, 125
          %v3091 = vpop.permute.xlu0 %3090
          %v3093 = vadd.f32 %v3087, %v3091
          %v3094 = vmul.f32 %v172, 0.009216146
          %3096 = vrot.lane.b32.xlu0 %v3094, 124
          %v3097 = vpop.permute.xlu0 %3096
          %v3099 = vadd.f32 %v3093, %v3097
          %v3100 = vmax.f32 %v3099, -5.0
          %v3101 = vmin.f32 %v3100, 5.0
          %s3102 = sadd.s32 %s157, 656
          %s3103 = scalar_lea.vmem %s148, %s3102 [#allocation5]
          %3104 = vst.msk [vmem:[%s3103] sm:$0xff] %vm221, %v3101
          %v3105 = vmul.f32 %v160, -4.7140304e-05
          %3107 = vrot.lane.b32.xlu0 %v3105, 127
          %v3108 = vpop.permute.xlu0 %3107
          %v3110 = vadd.f32 %v2095, %v3108
          %v3111 = vmul.f32 %v160, 0.00073192635
          %3113 = vrot.lane.b32.xlu0 %v3111, 126
          %v3114 = vpop.permute.xlu0 %3113
          %v3116 = vadd.f32 %v3110, %v3114
          %v3117 = vmul.f32 %v160, -0.0020771723
          %3119 = vrot.lane.b32.xlu0 %v3117, 125
          %v3120 = vpop.permute.xlu0 %3119
          %v3122 = vadd.f32 %v3116, %v3120
          %v3123 = vadd.f32 %v3122, %v2117
          %v3124 = vmul.f32 %v163, 0.00088405795
          %v3125 = vadd.f32 %v3123, %v3124
          %v3126 = vadd.f32 %v3125, %v2125
          %v3127 = vmul.f32 %v163, 0.16458116
          %3129 = vrot.lane.b32.xlu0 %v3127, 126
          %v3130 = vpop.permute.xlu0 %3129
          %v3132 = vadd.f32 %v3126, %v3130
          %v3133 = vadd.f32 %v3132, %v2137
          %v3134 = vmul.f32 %v163, 0.034761433
          %3136 = vrot.lane.b32.xlu0 %v3134, 124
          %v3137 = vpop.permute.xlu0 %3136
          %v3139 = vadd.f32 %v3133, %v3137
          %v3140 = vmul.f32 %v166, 0.035064477
          %v3141 = vadd.f32 %v3139, %v3140
          %v3142 = vmul.f32 %v166, -0.43873855
          %3144 = vrot.lane.b32.xlu0 %v3142, 127
          %v3145 = vpop.permute.xlu0 %3144
          %v3147 = vadd.f32 %v3141, %v3145
          %v3148 = vadd.f32 %v3147, %v1660
          %3149 = vrot.lane.b32.xlu0 %v3142, 125
          %v3150 = vpop.permute.xlu0 %3149
          %v3152 = vadd.f32 %v3148, %v3150
          %3154 = vrot.lane.b32.xlu0 %v3140, 124
          %v3155 = vpop.permute.xlu0 %3154
          %v3157 = vadd.f32 %v3152, %v3155
          %v3158 = vmul.f32 %v169, 0.034761433
          %v3159 = vadd.f32 %v3157, %v3158
          %v3160 = vadd.f32 %v3159, %v2169
          %v3161 = vmul.f32 %v169, 0.16458116
          %3163 = vrot.lane.b32.xlu0 %v3161, 126
          %v3164 = vpop.permute.xlu0 %3163
          %v3166 = vadd.f32 %v3160, %v3164
          %v3167 = vadd.f32 %v3166, %v2181
          %v3168 = vmul.f32 %v169, 0.00088405795
          %3170 = vrot.lane.b32.xlu0 %v3168, 124
          %v3171 = vpop.permute.xlu0 %3170
          %v3173 = vadd.f32 %v3167, %v3171
          %v3174 = vadd.f32 %v3173, %v2190
          %v3175 = vmul.f32 %v172, -0.0020771723
          %3177 = vrot.lane.b32.xlu0 %v3175, 127
          %v3178 = vpop.permute.xlu0 %3177
          %v3180 = vadd.f32 %v3174, %v3178
          %v3181 = vmul.f32 %v172, 0.00073192635
          %3183 = vrot.lane.b32.xlu0 %v3181, 126
          %v3184 = vpop.permute.xlu0 %3183
          %v3186 = vadd.f32 %v3180, %v3184
          %v3187 = vmul.f32 %v172, -4.7140304e-05
          %3189 = vrot.lane.b32.xlu0 %v3187, 125
          %v3190 = vpop.permute.xlu0 %3189
          %v3192 = vadd.f32 %v3186, %v3190
          %v3193 = vadd.f32 %v3192, %v2213
          %v3194 = vmax.f32 %v3193, -5.0
          %v3195 = vmin.f32 %v3194, 5.0
          %s3196 = sadd.s32 %s157, 672
          %s3197 = scalar_lea.vmem %s148, %s3196 [#allocation5]
          %3198 = vst.msk [vmem:[%s3197] sm:$0xff] %vm221, %v3195
          %v3199 = vmul.f32 %v160, 5.640944e-07
          %3201 = vrot.lane.b32.xlu0 %v3199, 127
          %v3202 = vpop.permute.xlu0 %3201
          %v3204 = vadd.f32 %v2221, %v3202
          %v3205 = vmul.f32 %v160, 0.00034155883
          %3207 = vrot.lane.b32.xlu0 %v3205, 126
          %v3208 = vpop.permute.xlu0 %3207
          %v3210 = vadd.f32 %v3204, %v3208
          %v3211 = vmul.f32 %v160, -0.0025394808
          %3213 = vrot.lane.b32.xlu0 %v3211, 125
          %v3214 = vpop.permute.xlu0 %3213
          %v3216 = vadd.f32 %v3210, %v3214
          %v3217 = vmul.f32 %v160, 0.003071122
          %3219 = vrot.lane.b32.xlu0 %v3217, 124
          %v3220 = vpop.permute.xlu0 %3219
          %v3222 = vadd.f32 %v3216, %v3220
          %v3223 = vmul.f32 %v163, -0.0007132392
          %v3224 = vadd.f32 %v3222, %v3223
          %v3225 = vadd.f32 %v3224, %v2251
          %v3226 = vmul.f32 %v163, 0.036511563
          %3228 = vrot.lane.b32.xlu0 %v3226, 126
          %v3229 = vpop.permute.xlu0 %3228
          %v3231 = vadd.f32 %v3225, %v3229
          %v3232 = vmul.f32 %v163, -0.14664826
          %3234 = vrot.lane.b32.xlu0 %v3232, 125
          %v3235 = vpop.permute.xlu0 %3234
          %v3237 = vadd.f32 %v3231, %v3235
          %v3238 = vmul.f32 %v163, 0.07099551
          %3240 = vrot.lane.b32.xlu0 %v3238, 124
          %v3241 = vpop.permute.xlu0 %3240
          %v3243 = vadd.f32 %v3237, %v3241
          %v3244 = vmul.f32 %v166, -0.043930925
          %v3245 = vadd.f32 %v3243, %v3244
          %v3246 = vmul.f32 %v166, 0.21116985
          %3248 = vrot.lane.b32.xlu0 %v3246, 127
          %v3249 = vpop.permute.xlu0 %3248
          %v3251 = vadd.f32 %v3245, %v3249
          %v3252 = vadd.f32 %v3251, %v1785
          %v3253 = vmul.f32 %v166, -0.21116985
          %3255 = vrot.lane.b32.xlu0 %v3253, 125
          %v3256 = vpop.permute.xlu0 %3255
          %v3258 = vadd.f32 %v3252, %v3256
          %v3259 = vmul.f32 %v166, 0.043930925
          %3261 = vrot.lane.b32.xlu0 %v3259, 124
          %v3262 = vpop.permute.xlu0 %3261
          %v3264 = vadd.f32 %v3258, %v3262
          %v3265 = vmul.f32 %v169, -0.07099551
          %v3266 = vadd.f32 %v3264, %v3265
          %v3267 = vmul.f32 %v169, 0.14664826
          %3269 = vrot.lane.b32.xlu0 %v3267, 127
          %v3270 = vpop.permute.xlu0 %3269
          %v3272 = vadd.f32 %v3266, %v3270
          %v3273 = vmul.f32 %v169, -0.036511563
          %3275 = vrot.lane.b32.xlu0 %v3273, 126
          %v3276 = vpop.permute.xlu0 %3275
          %v3278 = vadd.f32 %v3272, %v3276
          %v3279 = vadd.f32 %v3278, %v2310
          %v3280 = vmul.f32 %v169, 0.0007132392
          %3282 = vrot.lane.b32.xlu0 %v3280, 124
          %v3283 = vpop.permute.xlu0 %3282
          %v3285 = vadd.f32 %v3279, %v3283
          %v3286 = vmul.f32 %v172, -0.003071122
          %v3287 = vadd.f32 %v3285, %v3286
          %v3288 = vmul.f32 %v172, 0.0025394808
          %3290 = vrot.lane.b32.xlu0 %v3288, 127
          %v3291 = vpop.permute.xlu0 %3290
          %v3293 = vadd.f32 %v3287, %v3291
          %v3294 = vmul.f32 %v172, -0.00034155883
          %3296 = vrot.lane.b32.xlu0 %v3294, 126
          %v3297 = vpop.permute.xlu0 %3296
          %v3299 = vadd.f32 %v3293, %v3297
          %v3300 = vmul.f32 %v172, -5.640944e-07
          %3302 = vrot.lane.b32.xlu0 %v3300, 125
          %v3303 = vpop.permute.xlu0 %3302
          %v3305 = vadd.f32 %v3299, %v3303
          %v3306 = vadd.f32 %v3305, %v2342
          %v3307 = vmax.f32 %v3306, -5.0
          %v3308 = vmin.f32 %v3307, 5.0
          %s3309 = sadd.s32 %s157, 688
          %s3310 = scalar_lea.vmem %s148, %s3309 [#allocation5]
          %3311 = vst.msk [vmem:[%s3310] sm:$0xff] %vm221, %v3308
          %v3312 = vmul.f32 %v160, 0.0004957492
          %3314 = vrot.lane.b32.xlu0 %v3312, 127
          %v3315 = vpop.permute.xlu0 %3314
          %v3317 = vadd.f32 %v2350, %v3315
          %v3318 = vmul.f32 %v160, 0.16458116
          %3320 = vrot.lane.b32.xlu0 %v3318, 126
          %v3321 = vpop.permute.xlu0 %3320
          %v3323 = vadd.f32 %v3317, %v3321
          %v3324 = vmul.f32 %v160, 0.10250268
          %3326 = vrot.lane.b32.xlu0 %v3324, 125
          %v3327 = vpop.permute.xlu0 %3326
          %v3329 = vadd.f32 %v3323, %v3327
          %v3330 = vadd.f32 %v3329, %v2372
          %v3331 = vmul.f32 %v163, 0.17310959
          %v3332 = vadd.f32 %v3330, %v3331
          %v3333 = vadd.f32 %v3332, %v2380
          %v3334 = vmul.f32 %v163, -0.6369579
          %3336 = vrot.lane.b32.xlu0 %v3334, 126
          %v3337 = vpop.permute.xlu0 %3336
          %v3339 = vadd.f32 %v3333, %v3337
          %v3340 = vadd.f32 %v3339, %v2392
          %v3341 = vmul.f32 %v163, 0.44988537
          %3343 = vrot.lane.b32.xlu0 %v3341, 124
          %v3344 = vpop.permute.xlu0 %3343
          %v3346 = vadd.f32 %v3340, %v3344
          %v3347 = vadd.f32 %v3346, %v3142
          %v3348 = vmul.f32 %v166, 0.18579341
          %3350 = vrot.lane.b32.xlu0 %v3348, 127
          %v3351 = vpop.permute.xlu0 %3350
          %v3353 = vadd.f32 %v3347, %v3351
          %v3354 = vadd.f32 %v3353, %v1660
          %3355 = vrot.lane.b32.xlu0 %v3348, 125
          %v3356 = vpop.permute.xlu0 %3355
          %v3358 = vadd.f32 %v3354, %v3356
          %3359 = vrot.lane.b32.xlu0 %v3142, 124
          %v3360 = vpop.permute.xlu0 %3359
          %v3362 = vadd.f32 %v3358, %v3360
          %v3363 = vmul.f32 %v169, 0.44988537
          %v3364 = vadd.f32 %v3362, %v3363
          %v3365 = vadd.f32 %v3364, %v2422
          %v3366 = vmul.f32 %v169, -0.6369579
          %3368 = vrot.lane.b32.xlu0 %v3366, 126
          %v3369 = vpop.permute.xlu0 %3368
          %v3371 = vadd.f32 %v3365, %v3369
          %v3372 = vadd.f32 %v3371, %v2434
          %v3373 = vmul.f32 %v169, 0.17310959
          %3375 = vrot.lane.b32.xlu0 %v3373, 124
          %v3376 = vpop.permute.xlu0 %3375
          %v3378 = vadd.f32 %v3372, %v3376
          %v3379 = vadd.f32 %v3378, %v2443
          %v3380 = vmul.f32 %v172, 0.10250268
          %3382 = vrot.lane.b32.xlu0 %v3380, 127
          %v3383 = vpop.permute.xlu0 %3382
          %v3385 = vadd.f32 %v3379, %v3383
          %v3386 = vmul.f32 %v172, 0.16458116
          %3388 = vrot.lane.b32.xlu0 %v3386, 126
          %v3389 = vpop.permute.xlu0 %3388
          %v3391 = vadd.f32 %v3385, %v3389
          %v3392 = vmul.f32 %v172, 0.0004957492
          %3394 = vrot.lane.b32.xlu0 %v3392, 125
          %v3395 = vpop.permute.xlu0 %3394
          %v3397 = vadd.f32 %v3391, %v3395
          %v3398 = vadd.f32 %v3397, %v2466
          %v3399 = vmax.f32 %v3398, -5.0
          %v3400 = vmin.f32 %v3399, 5.0
          %s3401 = sadd.s32 %s157, 704
          %s3402 = scalar_lea.vmem %s148, %s3401 [#allocation5]
          %3403 = vst.msk [vmem:[%s3402] sm:$0xff] %vm221, %v3400
          %v3404 = vmul.f32 %v160, 0.082860604
          %3406 = vrot.lane.b32.xlu0 %v3404, 127
          %v3407 = vpop.permute.xlu0 %3406
          %v3409 = vadd.f32 %v2474, %v3407
          %v3410 = vmul.f32 %v160, 0.036511563
          %3412 = vrot.lane.b32.xlu0 %v3410, 126
          %v3413 = vpop.permute.xlu0 %3412
          %v3415 = vadd.f32 %v3409, %v3413
          %v3416 = vmul.f32 %v160, -0.21626699
          %3418 = vrot.lane.b32.xlu0 %v3416, 125
          %v3419 = vpop.permute.xlu0 %3418
          %v3421 = vadd.f32 %v3415, %v3419
          %v3422 = vmul.f32 %v160, -0.14664826
          %3424 = vrot.lane.b32.xlu0 %v3422, 124
          %v3425 = vpop.permute.xlu0 %3424
          %v3427 = vadd.f32 %v3421, %v3425
          %v3428 = vmul.f32 %v163, -0.061124317
          %v3429 = vadd.f32 %v3427, %v3428
          %v3430 = vadd.f32 %v3429, %v2504
          %v3431 = vmul.f32 %v163, -0.06980451
          %3433 = vrot.lane.b32.xlu0 %v3431, 126
          %v3434 = vpop.permute.xlu0 %3433
          %v3436 = vadd.f32 %v3430, %v3434
          %v3437 = vmul.f32 %v163, 0.65935683
          %3439 = vrot.lane.b32.xlu0 %v3437, 125
          %v3440 = vpop.permute.xlu0 %3439
          %v3442 = vadd.f32 %v3436, %v3440
          %v3443 = vmul.f32 %v163, 0.28064108
          %3445 = vrot.lane.b32.xlu0 %v3443, 124
          %v3446 = vpop.permute.xlu0 %3445
          %v3448 = vadd.f32 %v3442, %v3446
          %v3449 = vadd.f32 %v3448, %v3246
          %v3450 = vmul.f32 %v166, 0.8144153
          %3452 = vrot.lane.b32.xlu0 %v3450, 127
          %v3453 = vpop.permute.xlu0 %3452
          %v3455 = vadd.f32 %v3449, %v3453
          %v3456 = vadd.f32 %v3455, %v1785
          %v3457 = vmul.f32 %v166, -0.8144153
          %3459 = vrot.lane.b32.xlu0 %v3457, 125
          %v3460 = vpop.permute.xlu0 %3459
          %v3462 = vadd.f32 %v3456, %v3460
          %3463 = vrot.lane.b32.xlu0 %v3253, 124
          %v3464 = vpop.permute.xlu0 %3463
          %v3466 = vadd.f32 %v3462, %v3464
          %v3467 = vmul.f32 %v169, -0.28064108
          %v3468 = vadd.f32 %v3466, %v3467
          %v3469 = vmul.f32 %v169, -0.65935683
          %3471 = vrot.lane.b32.xlu0 %v3469, 127
          %v3472 = vpop.permute.xlu0 %3471
          %v3474 = vadd.f32 %v3468, %v3472
          %v3475 = vmul.f32 %v169, 0.06980451
          %3477 = vrot.lane.b32.xlu0 %v3475, 126
          %v3478 = vpop.permute.xlu0 %3477
          %v3480 = vadd.f32 %v3474, %v3478
          %v3481 = vadd.f32 %v3480, %v2560
          %v3482 = vmul.f32 %v169, 0.061124317
          %3484 = vrot.lane.b32.xlu0 %v3482, 124
          %v3485 = vpop.permute.xlu0 %3484
          %v3487 = vadd.f32 %v3481, %v3485
          %v3488 = vmul.f32 %v172, 0.14664826
          %v3489 = vadd.f32 %v3487, %v3488
          %v3490 = vmul.f32 %v172, 0.21626699
          %3492 = vrot.lane.b32.xlu0 %v3490, 127
          %v3493 = vpop.permute.xlu0 %3492
          %v3495 = vadd.f32 %v3489, %v3493
          %v3496 = vmul.f32 %v172, -0.036511563
          %3498 = vrot.lane.b32.xlu0 %v3496, 126
          %v3499 = vpop.permute.xlu0 %3498
          %v3501 = vadd.f32 %v3495, %v3499
          %v3502 = vmul.f32 %v172, -0.082860604
          %3504 = vrot.lane.b32.xlu0 %v3502, 125
          %v3505 = vpop.permute.xlu0 %3504
          %v3507 = vadd.f32 %v3501, %v3505
          %v3508 = vadd.f32 %v3507, %v2592
          %v3509 = vmax.f32 %v3508, -5.0
          %v3510 = vmin.f32 %v3509, 5.0
          %s3511 = sadd.s32 %s157, 720
          %s3512 = scalar_lea.vmem %s148, %s3511 [#allocation5]
          %3513 = vst.msk [vmem:[%s3512] sm:$0xff] %vm221, %v3510
          %v3514 = vmul.f32 %v160, 1.2775885e-05
          %3516 = vrot.lane.b32.xlu0 %v3514, 127
          %v3517 = vpop.permute.xlu0 %3516
          %v3519 = vadd.f32 %v1606, %v3517
          %v3520 = vmul.f32 %v160, 2.1063872e-05
          %3522 = vrot.lane.b32.xlu0 %v3520, 126
          %v3523 = vpop.permute.xlu0 %3522
          %v3525 = vadd.f32 %v3519, %v3523
          %3526 = vrot.lane.b32.xlu0 %v3514, 125
          %v3527 = vpop.permute.xlu0 %3526
          %v3529 = vadd.f32 %v3525, %v3527
          %v3530 = vadd.f32 %v3529, %v1625
          %v3531 = vmul.f32 %v163, 0.013351526
          %v3532 = vadd.f32 %v3530, %v3531
          %v3533 = vadd.f32 %v3532, %v1633
          %v3534 = vmul.f32 %v163, 0.09865518
          %3536 = vrot.lane.b32.xlu0 %v3534, 126
          %v3537 = vpop.permute.xlu0 %3536
          %v3539 = vadd.f32 %v3533, %v3537
          %v3540 = vadd.f32 %v3539, %v1643
          %3542 = vrot.lane.b32.xlu0 %v3531, 124
          %v3543 = vpop.permute.xlu0 %3542
          %v3545 = vadd.f32 %v3540, %v3543
          %v3546 = vmul.f32 %v166, 0.13533528
          %v3547 = vadd.f32 %v3545, %v3546
          %v3548 = vmul.f32 %v166, 0.60653067
          %3550 = vrot.lane.b32.xlu0 %v3548, 127
          %v3551 = vpop.permute.xlu0 %3550
          %v3553 = vadd.f32 %v3547, %v3551
          %v3554 = vadd.f32 %v3553, %v1660
          %3555 = vrot.lane.b32.xlu0 %v3548, 125
          %v3556 = vpop.permute.xlu0 %3555
          %v3558 = vadd.f32 %v3554, %v3556
          %3560 = vrot.lane.b32.xlu0 %v3546, 124
          %v3561 = vpop.permute.xlu0 %3560
          %v3563 = vadd.f32 %v3558, %v3561
          %v3564 = vmul.f32 %v169, 0.013351526
          %v3565 = vadd.f32 %v3563, %v3564
          %v3566 = vadd.f32 %v3565, %v1677
          %v3567 = vmul.f32 %v169, 0.09865518
          %3569 = vrot.lane.b32.xlu0 %v3567, 126
          %v3570 = vpop.permute.xlu0 %3569
          %v3572 = vadd.f32 %v3566, %v3570
          %v3573 = vadd.f32 %v3572, %v1687
          %3575 = vrot.lane.b32.xlu0 %v3564, 124
          %v3576 = vpop.permute.xlu0 %3575
          %v3578 = vadd.f32 %v3573, %v3576
          %v3579 = vadd.f32 %v3578, %v1695
          %v3580 = vmul.f32 %v172, 1.2775885e-05
          %3582 = vrot.lane.b32.xlu0 %v3580, 127
          %v3583 = vpop.permute.xlu0 %3582
          %v3585 = vadd.f32 %v3579, %v3583
          %v3586 = vmul.f32 %v172, 2.1063872e-05
          %3588 = vrot.lane.b32.xlu0 %v3586, 126
          %v3589 = vpop.permute.xlu0 %3588
          %v3591 = vadd.f32 %v3585, %v3589
          %3592 = vrot.lane.b32.xlu0 %v3580, 125
          %v3593 = vpop.permute.xlu0 %3592
          %v3595 = vadd.f32 %v3591, %v3593
          %v3596 = vadd.f32 %v3595, %v1715
          %v3597 = vmax.f32 %v3596, -5.0
          %v3598 = vmin.f32 %v3597, 5.0
          %s3599 = sadd.s32 %s157, 736
          %s3600 = scalar_lea.vmem %s148, %s3599 [#allocation5]
          %3601 = vst.msk [vmem:[%s3600] sm:$0xff] %vm221, %v3598
          %v3602 = vmul.f32 %v160, 0.00020306687
          %3604 = vrot.lane.b32.xlu0 %v3602, 127
          %v3605 = vpop.permute.xlu0 %3604
          %v3607 = vadd.f32 %v1723, %v3605
          %v3608 = vmul.f32 %v160, 0.00033480066
          %3610 = vrot.lane.b32.xlu0 %v3608, 126
          %v3611 = vpop.permute.xlu0 %3610
          %v3613 = vadd.f32 %v3607, %v3611
          %3614 = vrot.lane.b32.xlu0 %v3602, 125
          %v3615 = vpop.permute.xlu0 %3614
          %v3617 = vadd.f32 %v3613, %v3615
          %3619 = vrot.lane.b32.xlu0 %v1723, 124
          %v3620 = vpop.permute.xlu0 %3619
          %v3622 = vadd.f32 %v3617, %v3620
          %v3623 = vmul.f32 %v163, 0.012537918
          %v3624 = vadd.f32 %v3622, %v3623
          %v3625 = vadd.f32 %v3624, %v1753
          %v3626 = vmul.f32 %v163, 0.09264338
          %3628 = vrot.lane.b32.xlu0 %v3626, 126
          %v3629 = vpop.permute.xlu0 %3628
          %v3631 = vadd.f32 %v3625, %v3629
          %3632 = vrot.lane.b32.xlu0 %v1750, 125
          %v3633 = vpop.permute.xlu0 %3632
          %v3635 = vadd.f32 %v3631, %v3633
          %3637 = vrot.lane.b32.xlu0 %v3623, 124
          %v3638 = vpop.permute.xlu0 %3637
          %v3640 = vadd.f32 %v3635, %v3638
          %v3641 = vmul.f32 %v166, 1.2848877e-16
          %v3642 = vadd.f32 %v3640, %v3641
          %v3643 = vmul.f32 %v166, 3.0649302e-16
          %3645 = vrot.lane.b32.xlu0 %v3643, 127
          %v3646 = vpop.permute.xlu0 %3645
          %v3648 = vadd.f32 %v3642, %v3646
          %v3649 = vadd.f32 %v3648, %v1785
          %v3650 = vmul.f32 %v166, -2.3221443e-16
          %3652 = vrot.lane.b32.xlu0 %v3650, 125
          %v3653 = vpop.permute.xlu0 %3652
          %v3655 = vadd.f32 %v3649, %v3653
          %v3656 = vmul.f32 %v166, -1.1191498e-16
          %3658 = vrot.lane.b32.xlu0 %v3656, 124
          %v3659 = vpop.permute.xlu0 %3658
          %v3661 = vadd.f32 %v3655, %v3659
          %v3662 = vmul.f32 %v169, -0.012537918
          %v3663 = vadd.f32 %v3661, %v3662
          %3664 = vrot.lane.b32.xlu0 %v1814, 127
          %v3665 = vpop.permute.xlu0 %3664
          %v3667 = vadd.f32 %v3663, %v3665
          %v3668 = vmul.f32 %v169, -0.09264338
          %3670 = vrot.lane.b32.xlu0 %v3668, 126
          %v3671 = vpop.permute.xlu0 %3670
          %v3673 = vadd.f32 %v3667, %v3671
          %v3674 = vadd.f32 %v3673, %v1817
          %3676 = vrot.lane.b32.xlu0 %v3662, 124
          %v3677 = vpop.permute.xlu0 %3676
          %v3679 = vadd.f32 %v3674, %v3677
          %v3680 = vadd.f32 %v3679, %v1846
          %v3681 = vmul.f32 %v172, -0.00020306687
          %3683 = vrot.lane.b32.xlu0 %v3681, 127
          %v3684 = vpop.permute.xlu0 %3683
          %v3686 = vadd.f32 %v3680, %v3684
          %v3687 = vmul.f32 %v172, -0.00033480066
          %3689 = vrot.lane.b32.xlu0 %v3687, 126
          %v3690 = vpop.permute.xlu0 %3689
          %v3692 = vadd.f32 %v3686, %v3690
          %3693 = vrot.lane.b32.xlu0 %v3681, 125
          %v3694 = vpop.permute.xlu0 %3693
          %v3696 = vadd.f32 %v3692, %v3694
          %v3697 = vadd.f32 %v3696, %v1849
          %v3698 = vmax.f32 %v3697, -5.0
          %v3699 = vmin.f32 %v3698, 5.0
          %s3700 = sadd.s32 %s157, 752
          %s3701 = scalar_lea.vmem %s148, %s3700 [#allocation5]
          %3702 = vst.msk [vmem:[%s3701] sm:$0xff] %vm221, %v3699
          %v3703 = vmul.f32 %v160, 0.08706289
          %3705 = vrot.lane.b32.xlu0 %v3703, 127
          %v3706 = vpop.permute.xlu0 %3705
          %v3708 = vadd.f32 %v1857, %v3706
          %v3709 = vmul.f32 %v160, 0.09865518
          %3711 = vrot.lane.b32.xlu0 %v3709, 126
          %v3712 = vpop.permute.xlu0 %3711
          %v3714 = vadd.f32 %v3708, %v3712
          %3715 = vrot.lane.b32.xlu0 %v3703, 125
          %v3716 = vpop.permute.xlu0 %3715
          %v3718 = vadd.f32 %v3714, %v3716
          %v3719 = vadd.f32 %v3718, %v1876
          %v3720 = vmul.f32 %v163, -0.34204566
          %v3721 = vadd.f32 %v3719, %v3720
          %v3722 = vadd.f32 %v3721, %v1884
          %v3723 = vmul.f32 %v163, -0.56393796
          %3725 = vrot.lane.b32.xlu0 %v3723, 126
          %v3726 = vpop.permute.xlu0 %3725
          %v3728 = vadd.f32 %v3722, %v3726
          %v3729 = vadd.f32 %v3728, %v1894
          %3731 = vrot.lane.b32.xlu0 %v3720, 124
          %v3732 = vpop.permute.xlu0 %3731
          %v3734 = vadd.f32 %v3729, %v3732
          %v3735 = vadd.f32 %v3734, %v3548
          %v3736 = vmul.f32 %v166, 0.8824969
          %3738 = vrot.lane.b32.xlu0 %v3736, 127
          %v3739 = vpop.permute.xlu0 %3738
          %v3741 = vadd.f32 %v3735, %v3739
          %v3742 = vadd.f32 %v3741, %v1660
          %3743 = vrot.lane.b32.xlu0 %v3736, 125
          %v3744 = vpop.permute.xlu0 %3743
          %v3746 = vadd.f32 %v3742, %v3744
          %3747 = vrot.lane.b32.xlu0 %v3548, 124
          %v3748 = vpop.permute.xlu0 %3747
          %v3750 = vadd.f32 %v3746, %v3748
          %v3751 = vmul.f32 %v169, -0.34204566
          %v3752 = vadd.f32 %v3750, %v3751
          %v3753 = vadd.f32 %v3752, %v1923
          %v3754 = vmul.f32 %v169, -0.56393796
          %3756 = vrot.lane.b32.xlu0 %v3754, 126
          %v3757 = vpop.permute.xlu0 %3756
          %v3759 = vadd.f32 %v3753, %v3757
          %v3760 = vadd.f32 %v3759, %v1933
          %3762 = vrot.lane.b32.xlu0 %v3751, 124
          %v3763 = vpop.permute.xlu0 %3762
          %v3765 = vadd.f32 %v3760, %v3763
          %v3766 = vadd.f32 %v3765, %v1941
          %v3767 = vmul.f32 %v172, 0.08706289
          %3769 = vrot.lane.b32.xlu0 %v3767, 127
          %v3770 = vpop.permute.xlu0 %3769
          %v3772 = vadd.f32 %v3766, %v3770
          %v3773 = vmul.f32 %v172, 0.09865518
          %3775 = vrot.lane.b32.xlu0 %v3773, 126
          %v3776 = vpop.permute.xlu0 %3775
          %v3778 = vadd.f32 %v3772, %v3776
          %3779 = vrot.lane.b32.xlu0 %v3767, 125
          %v3780 = vpop.permute.xlu0 %3779
          %v3782 = vadd.f32 %v3778, %v3780
          %v3783 = vadd.f32 %v3782, %v1961
          %v3784 = vmax.f32 %v3783, -5.0
          %v3785 = vmin.f32 %v3784, 5.0
          %s3786 = sadd.s32 %s157, 768
          %s3787 = scalar_lea.vmem %s148, %s3786 [#allocation5]
          %3788 = vst.msk [vmem:[%s3787] sm:$0xff] %vm221, %v3785
          %v3789 = vmul.f32 %v160, 0.08175749
          %3791 = vrot.lane.b32.xlu0 %v3789, 127
          %v3792 = vpop.permute.xlu0 %3791
          %v3794 = vadd.f32 %v1969, %v3792
          %v3795 = vmul.f32 %v160, 0.09264338
          %3797 = vrot.lane.b32.xlu0 %v3795, 126
          %v3798 = vpop.permute.xlu0 %3797
          %v3800 = vadd.f32 %v3794, %v3798
          %3801 = vrot.lane.b32.xlu0 %v3789, 125
          %v3802 = vpop.permute.xlu0 %3801
          %v3804 = vadd.f32 %v3800, %v3802
          %3806 = vrot.lane.b32.xlu0 %v1969, 124
          %v3807 = vpop.permute.xlu0 %3806
          %v3809 = vadd.f32 %v3804, %v3807
          %v3810 = vmul.f32 %v163, -0.13542545
          %v3811 = vadd.f32 %v3809, %v3810
          %v3812 = vadd.f32 %v3811, %v1999
          %v3813 = vmul.f32 %v163, -0.22327882
          %3815 = vrot.lane.b32.xlu0 %v3813, 126
          %v3816 = vpop.permute.xlu0 %3815
          %v3818 = vadd.f32 %v3812, %v3816
          %3819 = vrot.lane.b32.xlu0 %v1996, 125
          %v3820 = vpop.permute.xlu0 %3819
          %v3822 = vadd.f32 %v3818, %v3820
          %3824 = vrot.lane.b32.xlu0 %v3810, 124
          %v3825 = vpop.permute.xlu0 %3824
          %v3827 = vadd.f32 %v3822, %v3825
          %v3828 = vadd.f32 %v3827, %v3643
          %v3829 = vmul.f32 %v166, 2.4999103e-16
          %3831 = vrot.lane.b32.xlu0 %v3829, 127
          %v3832 = vpop.permute.xlu0 %3831
          %v3834 = vadd.f32 %v3828, %v3832
          %v3835 = vadd.f32 %v3834, %v1785
          %v3836 = vmul.f32 %v166, -1.4191632e-16
          %3838 = vrot.lane.b32.xlu0 %v3836, 125
          %v3839 = vpop.permute.xlu0 %3838
          %v3841 = vadd.f32 %v3835, %v3839
          %3842 = vrot.lane.b32.xlu0 %v3650, 124
          %v3843 = vpop.permute.xlu0 %3842
          %v3845 = vadd.f32 %v3841, %v3843
          %v3846 = vmul.f32 %v169, 0.13542545
          %v3847 = vadd.f32 %v3845, %v3846
          %3848 = vrot.lane.b32.xlu0 %v2052, 127
          %v3849 = vpop.permute.xlu0 %3848
          %v3851 = vadd.f32 %v3847, %v3849
          %v3852 = vmul.f32 %v169, 0.22327882
          %3854 = vrot.lane.b32.xlu0 %v3852, 126
          %v3855 = vpop.permute.xlu0 %3854
          %v3857 = vadd.f32 %v3851, %v3855
          %v3858 = vadd.f32 %v3857, %v2055
          %3860 = vrot.lane.b32.xlu0 %v3846, 124
          %v3861 = vpop.permute.xlu0 %3860
          %v3863 = vadd.f32 %v3858, %v3861
          %v3864 = vadd.f32 %v3863, %v2084
          %v3865 = vmul.f32 %v172, -0.08175749
          %3867 = vrot.lane.b32.xlu0 %v3865, 127
          %v3868 = vpop.permute.xlu0 %3867
          %v3870 = vadd.f32 %v3864, %v3868
          %v3871 = vmul.f32 %v172, -0.09264338
          %3873 = vrot.lane.b32.xlu0 %v3871, 126
          %v3874 = vpop.permute.xlu0 %3873
          %v3876 = vadd.f32 %v3870, %v3874
          %3877 = vrot.lane.b32.xlu0 %v3865, 125
          %v3878 = vpop.permute.xlu0 %3877
          %v3880 = vadd.f32 %v3876, %v3878
          %v3881 = vadd.f32 %v3880, %v2087
          %v3882 = vmax.f32 %v3881, -5.0
          %v3883 = vmin.f32 %v3882, 5.0
          %s3884 = sadd.s32 %s157, 784
          %s3885 = scalar_lea.vmem %s148, %s3884 [#allocation5]
          %3886 = vst.msk [vmem:[%s3885] sm:$0xff] %vm221, %v3883
          %3887 = vrot.lane.b32.xlu0 %v3117, 127
          %v3888 = vpop.permute.xlu0 %3887
          %v3890 = vadd.f32 %v2114, %v3888
          %v3891 = vadd.f32 %v3890, %v3114
          %3892 = vrot.lane.b32.xlu0 %v3105, 125
          %v3893 = vpop.permute.xlu0 %3892
          %v3895 = vadd.f32 %v3891, %v3893
          %3897 = vrot.lane.b32.xlu0 %v2095, 124
          %v3898 = vpop.permute.xlu0 %3897
          %v3900 = vadd.f32 %v3895, %v3898
          %v3901 = vadd.f32 %v3900, %v3134
          %3902 = vrot.lane.b32.xlu0 %v2134, 127
          %v3903 = vpop.permute.xlu0 %3902
          %v3905 = vadd.f32 %v3901, %v3903
          %v3906 = vadd.f32 %v3905, %v3130
          %3907 = vrot.lane.b32.xlu0 %v2122, 125
          %v3908 = vpop.permute.xlu0 %3907
          %v3910 = vadd.f32 %v3906, %v3908
          %3912 = vrot.lane.b32.xlu0 %v3124, 124
          %v3913 = vpop.permute.xlu0 %3912
          %v3915 = vadd.f32 %v3910, %v3913
          %v3916 = vadd.f32 %v3915, %v3140
          %v3917 = vadd.f32 %v3916, %v3145
          %v3918 = vadd.f32 %v3917, %v1660
          %v3919 = vadd.f32 %v3918, %v3150
          %v3920 = vadd.f32 %v3919, %v3155
          %v3921 = vadd.f32 %v3920, %v3168
          %3922 = vrot.lane.b32.xlu0 %v2178, 127
          %v3923 = vpop.permute.xlu0 %3922
          %v3925 = vadd.f32 %v3921, %v3923
          %v3926 = vadd.f32 %v3925, %v3164
          %3927 = vrot.lane.b32.xlu0 %v2166, 125
          %v3928 = vpop.permute.xlu0 %3927
          %v3930 = vadd.f32 %v3926, %v3928
          %3932 = vrot.lane.b32.xlu0 %v3158, 124
          %v3933 = vpop.permute.xlu0 %3932
          %v3935 = vadd.f32 %v3930, %v3933
          %v3936 = vadd.f32 %v3935, %v2210
          %3937 = vrot.lane.b32.xlu0 %v3187, 127
          %v3938 = vpop.permute.xlu0 %3937
          %v3940 = vadd.f32 %v3936, %v3938
          %v3941 = vadd.f32 %v3940, %v3184
          %3942 = vrot.lane.b32.xlu0 %v3175, 125
          %v3943 = vpop.permute.xlu0 %3942
          %v3945 = vadd.f32 %v3941, %v3943
          %3947 = vrot.lane.b32.xlu0 %v2190, 124
          %v3948 = vpop.permute.xlu0 %3947
          %v3950 = vadd.f32 %v3945, %v3948
          %v3951 = vmax.f32 %v3950, -5.0
          %v3952 = vmin.f32 %v3951, 5.0
          %s3953 = sadd.s32 %s157, 800
          %s3954 = scalar_lea.vmem %s148, %s3953 [#allocation5]
          %3955 = vst.msk [vmem:[%s3954] sm:$0xff] %vm221, %v3952
          %3956 = vrot.lane.b32.xlu0 %v3211, 127
          %v3957 = vpop.permute.xlu0 %3956
          %v3959 = vadd.f32 %v3217, %v3957
          %v3960 = vadd.f32 %v3959, %v3208
          %3961 = vrot.lane.b32.xlu0 %v3199, 125
          %v3962 = vpop.permute.xlu0 %3961
          %v3964 = vadd.f32 %v3960, %v3962
          %3966 = vrot.lane.b32.xlu0 %v2221, 124
          %v3967 = vpop.permute.xlu0 %3966
          %v3969 = vadd.f32 %v3964, %v3967
          %v3970 = vadd.f32 %v3969, %v3238
          %3971 = vrot.lane.b32.xlu0 %v3232, 127
          %v3972 = vpop.permute.xlu0 %3971
          %v3974 = vadd.f32 %v3970, %v3972
          %v3975 = vadd.f32 %v3974, %v3229
          %3976 = vrot.lane.b32.xlu0 %v2248, 125
          %v3977 = vpop.permute.xlu0 %3976
          %v3979 = vadd.f32 %v3975, %v3977
          %3981 = vrot.lane.b32.xlu0 %v3223, 124
          %v3982 = vpop.permute.xlu0 %3981
          %v3984 = vadd.f32 %v3979, %v3982
          %v3985 = vadd.f32 %v3984, %v3259
          %3986 = vrot.lane.b32.xlu0 %v3253, 127
          %v3987 = vpop.permute.xlu0 %3986
          %v3989 = vadd.f32 %v3985, %v3987
          %v3990 = vadd.f32 %v3989, %v1785
          %3991 = vrot.lane.b32.xlu0 %v3246, 125
          %v3992 = vpop.permute.xlu0 %3991
          %v3994 = vadd.f32 %v3990, %v3992
          %3996 = vrot.lane.b32.xlu0 %v3244, 124
          %v3997 = vpop.permute.xlu0 %3996
          %v3999 = vadd.f32 %v3994, %v3997
          %v4000 = vadd.f32 %v3999, %v3280
          %4001 = vrot.lane.b32.xlu0 %v2307, 127
          %v4002 = vpop.permute.xlu0 %4001
          %v4004 = vadd.f32 %v4000, %v4002
          %v4005 = vadd.f32 %v4004, %v3276
          %4006 = vrot.lane.b32.xlu0 %v3267, 125
          %v4007 = vpop.permute.xlu0 %4006
          %v4009 = vadd.f32 %v4005, %v4007
          %4011 = vrot.lane.b32.xlu0 %v3265, 124
          %v4012 = vpop.permute.xlu0 %4011
          %v4014 = vadd.f32 %v4009, %v4012
          %v4015 = vadd.f32 %v4014, %v2339
          %4016 = vrot.lane.b32.xlu0 %v3300, 127
          %v4017 = vpop.permute.xlu0 %4016
          %v4019 = vadd.f32 %v4015, %v4017
          %v4020 = vadd.f32 %v4019, %v3297
          %4021 = vrot.lane.b32.xlu0 %v3288, 125
          %v4022 = vpop.permute.xlu0 %4021
          %v4024 = vadd.f32 %v4020, %v4022
          %4026 = vrot.lane.b32.xlu0 %v3286, 124
          %v4027 = vpop.permute.xlu0 %4026
          %v4029 = vadd.f32 %v4024, %v4027
          %v4030 = vmax.f32 %v4029, -5.0
          %v4031 = vmin.f32 %v4030, 5.0
          %s4032 = sadd.s32 %s157, 816
          %s4033 = scalar_lea.vmem %s148, %s4032 [#allocation5]
          %4034 = vst.msk [vmem:[%s4033] sm:$0xff] %vm221, %v4031
          %4035 = vrot.lane.b32.xlu0 %v3324, 127
          %v4036 = vpop.permute.xlu0 %4035
          %v4038 = vadd.f32 %v2369, %v4036
          %v4039 = vadd.f32 %v4038, %v3321
          %4040 = vrot.lane.b32.xlu0 %v3312, 125
          %v4041 = vpop.permute.xlu0 %4040
          %v4043 = vadd.f32 %v4039, %v4041
          %4045 = vrot.lane.b32.xlu0 %v2350, 124
          %v4046 = vpop.permute.xlu0 %4045
          %v4048 = vadd.f32 %v4043, %v4046
          %v4049 = vadd.f32 %v4048, %v3341
          %4050 = vrot.lane.b32.xlu0 %v2389, 127
          %v4051 = vpop.permute.xlu0 %4050
          %v4053 = vadd.f32 %v4049, %v4051
          %v4054 = vadd.f32 %v4053, %v3337
          %4055 = vrot.lane.b32.xlu0 %v2377, 125
          %v4056 = vpop.permute.xlu0 %4055
          %v4058 = vadd.f32 %v4054, %v4056
          %4060 = vrot.lane.b32.xlu0 %v3331, 124
          %v4061 = vpop.permute.xlu0 %4060
          %v4063 = vadd.f32 %v4058, %v4061
          %v4064 = vadd.f32 %v4063, %v3142
          %v4065 = vadd.f32 %v4064, %v3351
          %v4066 = vadd.f32 %v4065, %v1660
          %v4067 = vadd.f32 %v4066, %v3356
          %v4068 = vadd.f32 %v4067, %v3360
          %v4069 = vadd.f32 %v4068, %v3373
          %4070 = vrot.lane.b32.xlu0 %v2431, 127
          %v4071 = vpop.permute.xlu0 %4070
          %v4073 = vadd.f32 %v4069, %v4071
          %v4074 = vadd.f32 %v4073, %v3369
          %4075 = vrot.lane.b32.xlu0 %v2419, 125
          %v4076 = vpop.permute.xlu0 %4075
          %v4078 = vadd.f32 %v4074, %v4076
          %4080 = vrot.lane.b32.xlu0 %v3363, 124
          %v4081 = vpop.permute.xlu0 %4080
          %v4083 = vadd.f32 %v4078, %v4081
          %v4084 = vadd.f32 %v4083, %v2463
          %4085 = vrot.lane.b32.xlu0 %v3392, 127
          %v4086 = vpop.permute.xlu0 %4085
          %v4088 = vadd.f32 %v4084, %v4086
          %v4089 = vadd.f32 %v4088, %v3389
          %4090 = vrot.lane.b32.xlu0 %v3380, 125
          %v4091 = vpop.permute.xlu0 %4090
          %v4093 = vadd.f32 %v4089, %v4091
          %4095 = vrot.lane.b32.xlu0 %v2443, 124
          %v4096 = vpop.permute.xlu0 %4095
          %v4098 = vadd.f32 %v4093, %v4096
          %v4099 = vmax.f32 %v4098, -5.0
          %v4100 = vmin.f32 %v4099, 5.0
          %s4101 = sadd.s32 %s157, 832
          %s4102 = scalar_lea.vmem %s148, %s4101 [#allocation5]
          %4103 = vst.msk [vmem:[%s4102] sm:$0xff] %vm221, %v4100
          %4104 = vrot.lane.b32.xlu0 %v3416, 127
          %v4105 = vpop.permute.xlu0 %4104
          %v4107 = vadd.f32 %v3422, %v4105
          %v4108 = vadd.f32 %v4107, %v3413
          %4109 = vrot.lane.b32.xlu0 %v3404, 125
          %v4110 = vpop.permute.xlu0 %4109
          %v4112 = vadd.f32 %v4108, %v4110
          %4114 = vrot.lane.b32.xlu0 %v2474, 124
          %v4115 = vpop.permute.xlu0 %4114
          %v4117 = vadd.f32 %v4112, %v4115
          %v4118 = vadd.f32 %v4117, %v3443
          %4119 = vrot.lane.b32.xlu0 %v3437, 127
          %v4120 = vpop.permute.xlu0 %4119
          %v4122 = vadd.f32 %v4118, %v4120
          %v4123 = vadd.f32 %v4122, %v3434
          %4124 = vrot.lane.b32.xlu0 %v2501, 125
          %v4125 = vpop.permute.xlu0 %4124
          %v4127 = vadd.f32 %v4123, %v4125
          %4129 = vrot.lane.b32.xlu0 %v3428, 124
          %v4130 = vpop.permute.xlu0 %4129
          %v4132 = vadd.f32 %v4127, %v4130
          %v4133 = vadd.f32 %v4132, %v3253
          %4134 = vrot.lane.b32.xlu0 %v3457, 127
          %v4135 = vpop.permute.xlu0 %4134
          %v4137 = vadd.f32 %v4133, %v4135
          %v4138 = vadd.f32 %v4137, %v1785
          %4139 = vrot.lane.b32.xlu0 %v3450, 125
          %v4140 = vpop.permute.xlu0 %4139
          %v4142 = vadd.f32 %v4138, %v4140
          %4143 = vrot.lane.b32.xlu0 %v3246, 124
          %v4144 = vpop.permute.xlu0 %4143
          %v4146 = vadd.f32 %v4142, %v4144
          %v4147 = vadd.f32 %v4146, %v3482
          %4148 = vrot.lane.b32.xlu0 %v2557, 127
          %v4149 = vpop.permute.xlu0 %4148
          %v4151 = vadd.f32 %v4147, %v4149
          %v4152 = vadd.f32 %v4151, %v3478
          %4153 = vrot.lane.b32.xlu0 %v3469, 125
          %v4154 = vpop.permute.xlu0 %4153
          %v4156 = vadd.f32 %v4152, %v4154
          %4158 = vrot.lane.b32.xlu0 %v3467, 124
          %v4159 = vpop.permute.xlu0 %4158
          %v4161 = vadd.f32 %v4156, %v4159
          %v4162 = vadd.f32 %v4161, %v2589
          %4163 = vrot.lane.b32.xlu0 %v3502, 127
          %v4164 = vpop.permute.xlu0 %4163
          %v4166 = vadd.f32 %v4162, %v4164
          %v4167 = vadd.f32 %v4166, %v3499
          %4168 = vrot.lane.b32.xlu0 %v3490, 125
          %v4169 = vpop.permute.xlu0 %4168
          %v4171 = vadd.f32 %v4167, %v4169
          %4173 = vrot.lane.b32.xlu0 %v3488, 124
          %v4174 = vpop.permute.xlu0 %4173
          %v4176 = vadd.f32 %v4171, %v4174
          %v4177 = vmax.f32 %v4176, -5.0
          %v4178 = vmin.f32 %v4177, 5.0
          %s4179 = sadd.s32 %s157, 848
          %s4180 = scalar_lea.vmem %s148, %s4179 [#allocation5]
          %4181 = vst.msk [vmem:[%s4180] sm:$0xff] %vm221, %v4178
          %4182 = vrot.lane.b32.xlu0 %v2613, 127
          %v4183 = vpop.permute.xlu0 %4182
          %v4185 = vadd.f32 %v2619, %v4183
          %v4186 = vadd.f32 %v4185, %v2610
          %4187 = vrot.lane.b32.xlu0 %v2601, 125
          %v4188 = vpop.permute.xlu0 %4187
          %v4190 = vadd.f32 %v4186, %v4188
          %4192 = vrot.lane.b32.xlu0 %v2600, 124
          %v4193 = vpop.permute.xlu0 %4192
          %v4195 = vadd.f32 %v4190, %v4193
          %v4196 = vadd.f32 %v4195, %v2645
          %4197 = vrot.lane.b32.xlu0 %v2639, 127
          %v4198 = vpop.permute.xlu0 %4197
          %v4200 = vadd.f32 %v4196, %v4198
          %v4201 = vadd.f32 %v4200, %v2636
          %4202 = vrot.lane.b32.xlu0 %v2627, 125
          %v4203 = vpop.permute.xlu0 %4202
          %v4205 = vadd.f32 %v4201, %v4203
          %4207 = vrot.lane.b32.xlu0 %v2625, 124
          %v4208 = vpop.permute.xlu0 %4207
          %v4210 = vadd.f32 %v4205, %v4208
          %v4211 = vadd.f32 %v4210, %v2651
          %v4212 = vadd.f32 %v4211, %v2656
          %v4213 = vadd.f32 %v4212, %v1660
          %v4214 = vadd.f32 %v4213, %v2661
          %v4215 = vadd.f32 %v4214, %v2666
          %v4216 = vadd.f32 %v4215, %v2689
          %4217 = vrot.lane.b32.xlu0 %v2683, 127
          %v4218 = vpop.permute.xlu0 %4217
          %v4220 = vadd.f32 %v4216, %v4218
          %v4221 = vadd.f32 %v4220, %v2680
          %4222 = vrot.lane.b32.xlu0 %v2671, 125
          %v4223 = vpop.permute.xlu0 %4222
          %v4225 = vadd.f32 %v4221, %v4223
          %4227 = vrot.lane.b32.xlu0 %v2669, 124
          %v4228 = vpop.permute.xlu0 %4227
          %v4230 = vadd.f32 %v4225, %v4228
          %v4231 = vadd.f32 %v4230, %v2715
          %4232 = vrot.lane.b32.xlu0 %v2709, 127
          %v4233 = vpop.permute.xlu0 %4232
          %v4235 = vadd.f32 %v4231, %v4233
          %v4236 = vadd.f32 %v4235, %v2706
          %4237 = vrot.lane.b32.xlu0 %v2697, 125
          %v4238 = vpop.permute.xlu0 %4237
          %v4240 = vadd.f32 %v4236, %v4238
          %4242 = vrot.lane.b32.xlu0 %v2695, 124
          %v4243 = vpop.permute.xlu0 %4242
          %v4245 = vadd.f32 %v4240, %v4243
          %v4246 = vmax.f32 %v4245, -5.0
          %v4247 = vmin.f32 %v4246, 5.0
          %s4248 = sadd.s32 %s157, 864
          %s4249 = scalar_lea.vmem %s148, %s4248 [#allocation5]
          %4250 = vst.msk [vmem:[%s4249] sm:$0xff] %vm221, %v4247
          %v4251 = vmul.f32 %v160, 2.958973e-17
          %4252 = vrot.lane.b32.xlu0 %v2739, 127
          %v4253 = vpop.permute.xlu0 %4252
          %v4255 = vadd.f32 %v4251, %v4253
          %v4256 = vadd.f32 %v4255, %v2736
          %4257 = vrot.lane.b32.xlu0 %v2727, 125
          %v4258 = vpop.permute.xlu0 %4257
          %v4260 = vadd.f32 %v4256, %v4258
          %4262 = vrot.lane.b32.xlu0 %v2726, 124
          %v4263 = vpop.permute.xlu0 %4262
          %v4265 = vadd.f32 %v4260, %v4263
          %v4266 = vadd.f32 %v4265, %v2771
          %v4267 = vmul.f32 %v163, 3.492687e-16
          %4269 = vrot.lane.b32.xlu0 %v4267, 127
          %v4270 = vpop.permute.xlu0 %4269
          %v4272 = vadd.f32 %v4266, %v4270
          %v4273 = vadd.f32 %v4272, %v2762
          %4274 = vrot.lane.b32.xlu0 %v2753, 125
          %v4275 = vpop.permute.xlu0 %4274
          %v4277 = vadd.f32 %v4273, %v4275
          %4279 = vrot.lane.b32.xlu0 %v2751, 124
          %v4280 = vpop.permute.xlu0 %4279
          %v4282 = vadd.f32 %v4277, %v4280
          %v4283 = vadd.f32 %v4282, %v2792
          %4284 = vrot.lane.b32.xlu0 %v2786, 127
          %v4285 = vpop.permute.xlu0 %4284
          %v4287 = vadd.f32 %v4283, %v4285
          %v4288 = vadd.f32 %v4287, %v1785
          %4289 = vrot.lane.b32.xlu0 %v2779, 125
          %v4290 = vpop.permute.xlu0 %4289
          %v4292 = vadd.f32 %v4288, %v4290
          %4294 = vrot.lane.b32.xlu0 %v2777, 124
          %v4295 = vpop.permute.xlu0 %4294
          %v4297 = vadd.f32 %v4292, %v4295
          %v4298 = vadd.f32 %v4297, %v2818
          %4299 = vrot.lane.b32.xlu0 %v2812, 127
          %v4300 = vpop.permute.xlu0 %4299
          %v4302 = vadd.f32 %v4298, %v4300
          %v4303 = vadd.f32 %v4302, %v2809
          %v4304 = vmul.f32 %v169, -3.0421646e-16
          %4306 = vrot.lane.b32.xlu0 %v4304, 125
          %v4307 = vpop.permute.xlu0 %4306
          %v4309 = vadd.f32 %v4303, %v4307
          %4311 = vrot.lane.b32.xlu0 %v2798, 124
          %v4312 = vpop.permute.xlu0 %4311
          %v4314 = vadd.f32 %v4309, %v4312
          %v4315 = vadd.f32 %v4314, %v2844
          %4316 = vrot.lane.b32.xlu0 %v2838, 127
          %v4317 = vpop.permute.xlu0 %4316
          %v4319 = vadd.f32 %v4315, %v4317
          %v4320 = vadd.f32 %v4319, %v2835
          %4321 = vrot.lane.b32.xlu0 %v2826, 125
          %v4322 = vpop.permute.xlu0 %4321
          %v4324 = vadd.f32 %v4320, %v4322
          %v4325 = vmul.f32 %v172, -2.7346712e-17
          %4327 = vrot.lane.b32.xlu0 %v4325, 124
          %v4328 = vpop.permute.xlu0 %4327
          %v4330 = vadd.f32 %v4324, %v4328
          %v4331 = vmax.f32 %v4330, -5.0
          %v4332 = vmin.f32 %v4331, 5.0
          %s4333 = sadd.s32 %s157, 880
          %s4334 = scalar_lea.vmem %s148, %s4333 [#allocation5]
          %4335 = vst.msk [vmem:[%s4334] sm:$0xff] %vm221, %v4332
          %4336 = vrot.lane.b32.xlu0 %v2868, 127
          %v4337 = vpop.permute.xlu0 %4336
          %v4339 = vadd.f32 %v2874, %v4337
          %v4340 = vadd.f32 %v4339, %v2865
          %4341 = vrot.lane.b32.xlu0 %v2856, 125
          %v4342 = vpop.permute.xlu0 %4341
          %v4344 = vadd.f32 %v4340, %v4342
          %4346 = vrot.lane.b32.xlu0 %v2855, 124
          %v4347 = vpop.permute.xlu0 %4346
          %v4349 = vadd.f32 %v4344, %v4347
          %v4350 = vadd.f32 %v4349, %v2900
          %4351 = vrot.lane.b32.xlu0 %v2894, 127
          %v4352 = vpop.permute.xlu0 %4351
          %v4354 = vadd.f32 %v4350, %v4352
          %v4355 = vadd.f32 %v4354, %v2891
          %4356 = vrot.lane.b32.xlu0 %v2882, 125
          %v4357 = vpop.permute.xlu0 %4356
          %v4359 = vadd.f32 %v4355, %v4357
          %4361 = vrot.lane.b32.xlu0 %v2880, 124
          %v4362 = vpop.permute.xlu0 %4361
          %v4364 = vadd.f32 %v4359, %v4362
          %v4365 = vadd.f32 %v4364, %v2653
          %v4366 = vadd.f32 %v4365, %v2910
          %v4367 = vadd.f32 %v4366, %v1660
          %v4368 = vadd.f32 %v4367, %v2915
          %v4369 = vadd.f32 %v4368, %v2919
          %v4370 = vadd.f32 %v4369, %v2942
          %4371 = vrot.lane.b32.xlu0 %v2936, 127
          %v4372 = vpop.permute.xlu0 %4371
          %v4374 = vadd.f32 %v4370, %v4372
          %v4375 = vadd.f32 %v4374, %v2933
          %4376 = vrot.lane.b32.xlu0 %v2924, 125
          %v4377 = vpop.permute.xlu0 %4376
          %v4379 = vadd.f32 %v4375, %v4377
          %4381 = vrot.lane.b32.xlu0 %v2922, 124
          %v4382 = vpop.permute.xlu0 %4381
          %v4384 = vadd.f32 %v4379, %v4382
          %v4385 = vadd.f32 %v4384, %v2968
          %4386 = vrot.lane.b32.xlu0 %v2962, 127
          %v4387 = vpop.permute.xlu0 %4386
          %v4389 = vadd.f32 %v4385, %v4387
          %v4390 = vadd.f32 %v4389, %v2959
          %4391 = vrot.lane.b32.xlu0 %v2950, 125
          %v4392 = vpop.permute.xlu0 %4391
          %v4394 = vadd.f32 %v4390, %v4392
          %4396 = vrot.lane.b32.xlu0 %v2948, 124
          %v4397 = vpop.permute.xlu0 %4396
          %v4399 = vadd.f32 %v4394, %v4397
          %v4400 = vmax.f32 %v4399, -5.0
          %v4401 = vmin.f32 %v4400, 5.0
          %s4402 = sadd.s32 %s157, 896
          %s4403 = scalar_lea.vmem %s148, %s4402 [#allocation5]
          %4404 = vst.msk [vmem:[%s4403] sm:$0xff] %vm221, %v4401
          %v4405 = vmul.f32 %v160, 3.492687e-16
          %4406 = vrot.lane.b32.xlu0 %v2992, 127
          %v4407 = vpop.permute.xlu0 %4406
          %v4409 = vadd.f32 %v4405, %v4407
          %v4410 = vadd.f32 %v4409, %v2989
          %4411 = vrot.lane.b32.xlu0 %v2980, 125
          %v4412 = vpop.permute.xlu0 %4411
          %v4414 = vadd.f32 %v4410, %v4412
          %4416 = vrot.lane.b32.xlu0 %v2979, 124
          %v4417 = vpop.permute.xlu0 %4416
          %v4419 = vadd.f32 %v4414, %v4417
          %v4420 = vadd.f32 %v4419, %v3024
          %v4421 = vmul.f32 %v163, 3.9354482e-16
          %4423 = vrot.lane.b32.xlu0 %v4421, 127
          %v4424 = vpop.permute.xlu0 %4423
          %v4426 = vadd.f32 %v4420, %v4424
          %v4427 = vadd.f32 %v4426, %v3015
          %4428 = vrot.lane.b32.xlu0 %v3006, 125
          %v4429 = vpop.permute.xlu0 %4428
          %v4431 = vadd.f32 %v4427, %v4429
          %4433 = vrot.lane.b32.xlu0 %v3004, 124
          %v4434 = vpop.permute.xlu0 %4433
          %v4436 = vadd.f32 %v4431, %v4434
          %v4437 = vadd.f32 %v4436, %v2786
          %4438 = vrot.lane.b32.xlu0 %v3038, 127
          %v4439 = vpop.permute.xlu0 %4438
          %v4441 = vadd.f32 %v4437, %v4439
          %v4442 = vadd.f32 %v4441, %v1785
          %4443 = vrot.lane.b32.xlu0 %v3031, 125
          %v4444 = vpop.permute.xlu0 %4443
          %v4446 = vadd.f32 %v4442, %v4444
          %4447 = vrot.lane.b32.xlu0 %v2779, 124
          %v4448 = vpop.permute.xlu0 %4447
          %v4450 = vadd.f32 %v4446, %v4448
          %v4451 = vadd.f32 %v4450, %v3068
          %4452 = vrot.lane.b32.xlu0 %v3062, 127
          %v4453 = vpop.permute.xlu0 %4452
          %v4455 = vadd.f32 %v4451, %v4453
          %v4456 = vadd.f32 %v4455, %v3059
          %v4457 = vmul.f32 %v169, -2.9816923e-16
          %4459 = vrot.lane.b32.xlu0 %v4457, 125
          %v4460 = vpop.permute.xlu0 %4459
          %v4462 = vadd.f32 %v4456, %v4460
          %4464 = vrot.lane.b32.xlu0 %v3048, 124
          %v4465 = vpop.permute.xlu0 %4464
          %v4467 = vadd.f32 %v4462, %v4465
          %v4468 = vadd.f32 %v4467, %v3094
          %4469 = vrot.lane.b32.xlu0 %v3088, 127
          %v4470 = vpop.permute.xlu0 %4469
          %v4472 = vadd.f32 %v4468, %v4470
          %v4473 = vadd.f32 %v4472, %v3085
          %4474 = vrot.lane.b32.xlu0 %v3076, 125
          %v4475 = vpop.permute.xlu0 %4474
          %v4477 = vadd.f32 %v4473, %v4475
          %v4478 = vmul.f32 %v172, -3.0421646e-16
          %4480 = vrot.lane.b32.xlu0 %v4478, 124
          %v4481 = vpop.permute.xlu0 %4480
          %v4483 = vadd.f32 %v4477, %v4481
          %v4484 = vmax.f32 %v4483, -5.0
          %v4485 = vmin.f32 %v4484, 5.0
          %s4486 = sadd.s32 %s157, 912
          %s4487 = scalar_lea.vmem %s148, %s4486 [#allocation5]
          %4488 = vst.msk [vmem:[%s4487] sm:$0xff] %vm221, %v4485
          %4489 = vrot.lane.b32.xlu0 %v2108, 127
          %v4490 = vpop.permute.xlu0 %4489
          %v4492 = vadd.f32 %v2114, %v4490
          %v4493 = vadd.f32 %v4492, %v2105
          %4494 = vrot.lane.b32.xlu0 %v2096, 125
          %v4495 = vpop.permute.xlu0 %4494
          %v4497 = vadd.f32 %v4493, %v4495
          %v4498 = vadd.f32 %v4497, %v3898
          %v4499 = vadd.f32 %v4498, %v2140
          %v4500 = vadd.f32 %v4499, %v3903
          %v4501 = vadd.f32 %v4500, %v2131
          %v4502 = vadd.f32 %v4501, %v3908
          %4504 = vrot.lane.b32.xlu0 %v2120, 124
          %v4505 = vpop.permute.xlu0 %4504
          %v4507 = vadd.f32 %v4502, %v4505
          %v4508 = vadd.f32 %v4507, %v2146
          %v4509 = vadd.f32 %v4508, %v2151
          %v4510 = vadd.f32 %v4509, %v1660
          %v4511 = vadd.f32 %v4510, %v2156
          %v4512 = vadd.f32 %v4511, %v2161
          %v4513 = vadd.f32 %v4512, %v2184
          %v4514 = vadd.f32 %v4513, %v3923
          %v4515 = vadd.f32 %v4514, %v2175
          %v4516 = vadd.f32 %v4515, %v3928
          %4518 = vrot.lane.b32.xlu0 %v2164, 124
          %v4519 = vpop.permute.xlu0 %4518
          %v4521 = vadd.f32 %v4516, %v4519
          %v4522 = vadd.f32 %v4521, %v2210
          %4523 = vrot.lane.b32.xlu0 %v2204, 127
          %v4524 = vpop.permute.xlu0 %4523
          %v4526 = vadd.f32 %v4522, %v4524
          %v4527 = vadd.f32 %v4526, %v2201
          %4528 = vrot.lane.b32.xlu0 %v2192, 125
          %v4529 = vpop.permute.xlu0 %4528
          %v4531 = vadd.f32 %v4527, %v4529
          %v4532 = vadd.f32 %v4531, %v3948
          %v4533 = vmax.f32 %v4532, -5.0
          %v4534 = vmin.f32 %v4533, 5.0
          %s4535 = sadd.s32 %s157, 928
          %s4536 = scalar_lea.vmem %s148, %s4535 [#allocation5]
          %4537 = vst.msk [vmem:[%s4536] sm:$0xff] %vm221, %v4534
          %4538 = vrot.lane.b32.xlu0 %v2234, 127
          %v4539 = vpop.permute.xlu0 %4538
          %v4541 = vadd.f32 %v2240, %v4539
          %v4542 = vadd.f32 %v4541, %v2231
          %4543 = vrot.lane.b32.xlu0 %v2222, 125
          %v4544 = vpop.permute.xlu0 %4543
          %v4546 = vadd.f32 %v4542, %v4544
          %v4547 = vadd.f32 %v4546, %v3967
          %v4548 = vadd.f32 %v4547, %v2266
          %4549 = vrot.lane.b32.xlu0 %v2260, 127
          %v4550 = vpop.permute.xlu0 %4549
          %v4552 = vadd.f32 %v4548, %v4550
          %v4553 = vadd.f32 %v4552, %v2257
          %v4554 = vadd.f32 %v4553, %v3977
          %4556 = vrot.lane.b32.xlu0 %v2246, 124
          %v4557 = vpop.permute.xlu0 %4556
          %v4559 = vadd.f32 %v4554, %v4557
          %v4560 = vadd.f32 %v4559, %v2287
          %4561 = vrot.lane.b32.xlu0 %v2281, 127
          %v4562 = vpop.permute.xlu0 %4561
          %v4564 = vadd.f32 %v4560, %v4562
          %v4565 = vadd.f32 %v4564, %v1785
          %4566 = vrot.lane.b32.xlu0 %v2274, 125
          %v4567 = vpop.permute.xlu0 %4566
          %v4569 = vadd.f32 %v4565, %v4567
          %4571 = vrot.lane.b32.xlu0 %v2272, 124
          %v4572 = vpop.permute.xlu0 %4571
          %v4574 = vadd.f32 %v4569, %v4572
          %v4575 = vadd.f32 %v4574, %v2313
          %v4576 = vadd.f32 %v4575, %v4002
          %v4577 = vadd.f32 %v4576, %v2304
          %4578 = vrot.lane.b32.xlu0 %v2295, 125
          %v4579 = vpop.permute.xlu0 %4578
          %v4581 = vadd.f32 %v4577, %v4579
          %4583 = vrot.lane.b32.xlu0 %v2293, 124
          %v4584 = vpop.permute.xlu0 %4583
          %v4586 = vadd.f32 %v4581, %v4584
          %v4587 = vadd.f32 %v4586, %v2339
          %4588 = vrot.lane.b32.xlu0 %v2333, 127
          %v4589 = vpop.permute.xlu0 %4588
          %v4591 = vadd.f32 %v4587, %v4589
          %v4592 = vadd.f32 %v4591, %v2330
          %4593 = vrot.lane.b32.xlu0 %v2321, 125
          %v4594 = vpop.permute.xlu0 %4593
          %v4596 = vadd.f32 %v4592, %v4594
          %4598 = vrot.lane.b32.xlu0 %v2319, 124
          %v4599 = vpop.permute.xlu0 %4598
          %v4601 = vadd.f32 %v4596, %v4599
          %v4602 = vmax.f32 %v4601, -5.0
          %v4603 = vmin.f32 %v4602, 5.0
          %s4604 = sadd.s32 %s157, 944
          %s4605 = scalar_lea.vmem %s148, %s4604 [#allocation5]
          %4606 = vst.msk [vmem:[%s4605] sm:$0xff] %vm221, %v4603
          %4607 = vrot.lane.b32.xlu0 %v2363, 127
          %v4608 = vpop.permute.xlu0 %4607
          %v4610 = vadd.f32 %v2369, %v4608
          %v4611 = vadd.f32 %v4610, %v2360
          %4612 = vrot.lane.b32.xlu0 %v2351, 125
          %v4613 = vpop.permute.xlu0 %4612
          %v4615 = vadd.f32 %v4611, %v4613
          %v4616 = vadd.f32 %v4615, %v4046
          %v4617 = vadd.f32 %v4616, %v2395
          %v4618 = vadd.f32 %v4617, %v4051
          %v4619 = vadd.f32 %v4618, %v2386
          %v4620 = vadd.f32 %v4619, %v4056
          %4622 = vrot.lane.b32.xlu0 %v2375, 124
          %v4623 = vpop.permute.xlu0 %4622
          %v4625 = vadd.f32 %v4620, %v4623
          %v4626 = vadd.f32 %v4625, %v2148
          %v4627 = vadd.f32 %v4626, %v2405
          %v4628 = vadd.f32 %v4627, %v1660
          %v4629 = vadd.f32 %v4628, %v2410
          %v4630 = vadd.f32 %v4629, %v2414
          %v4631 = vadd.f32 %v4630, %v2437
          %v4632 = vadd.f32 %v4631, %v4071
          %v4633 = vadd.f32 %v4632, %v2428
          %v4634 = vadd.f32 %v4633, %v4076
          %4636 = vrot.lane.b32.xlu0 %v2417, 124
          %v4637 = vpop.permute.xlu0 %4636
          %v4639 = vadd.f32 %v4634, %v4637
          %v4640 = vadd.f32 %v4639, %v2463
          %4641 = vrot.lane.b32.xlu0 %v2457, 127
          %v4642 = vpop.permute.xlu0 %4641
          %v4644 = vadd.f32 %v4640, %v4642
          %v4645 = vadd.f32 %v4644, %v2454
          %4646 = vrot.lane.b32.xlu0 %v2445, 125
          %v4647 = vpop.permute.xlu0 %4646
          %v4649 = vadd.f32 %v4645, %v4647
          %v4650 = vadd.f32 %v4649, %v4096
          %v4651 = vmax.f32 %v4650, -5.0
          %v4652 = vmin.f32 %v4651, 5.0
          %s4653 = sadd.s32 %s157, 960
          %s4654 = scalar_lea.vmem %s148, %s4653 [#allocation5]
          %4655 = vst.msk [vmem:[%s4654] sm:$0xff] %vm221, %v4652
          %4656 = vrot.lane.b32.xlu0 %v2487, 127
          %v4657 = vpop.permute.xlu0 %4656
          %v4659 = vadd.f32 %v2493, %v4657
          %v4660 = vadd.f32 %v4659, %v2484
          %4661 = vrot.lane.b32.xlu0 %v2475, 125
          %v4662 = vpop.permute.xlu0 %4661
          %v4664 = vadd.f32 %v4660, %v4662
          %v4665 = vadd.f32 %v4664, %v4115
          %v4666 = vadd.f32 %v4665, %v2519
          %4667 = vrot.lane.b32.xlu0 %v2513, 127
          %v4668 = vpop.permute.xlu0 %4667
          %v4670 = vadd.f32 %v4666, %v4668
          %v4671 = vadd.f32 %v4670, %v2510
          %v4672 = vadd.f32 %v4671, %v4125
          %4674 = vrot.lane.b32.xlu0 %v2499, 124
          %v4675 = vpop.permute.xlu0 %4674
          %v4677 = vadd.f32 %v4672, %v4675
          %v4678 = vadd.f32 %v4677, %v2281
          %4679 = vrot.lane.b32.xlu0 %v2533, 127
          %v4680 = vpop.permute.xlu0 %4679
          %v4682 = vadd.f32 %v4678, %v4680
          %v4683 = vadd.f32 %v4682, %v1785
          %4684 = vrot.lane.b32.xlu0 %v2526, 125
          %v4685 = vpop.permute.xlu0 %4684
          %v4687 = vadd.f32 %v4683, %v4685
          %4688 = vrot.lane.b32.xlu0 %v2274, 124
          %v4689 = vpop.permute.xlu0 %4688
          %v4691 = vadd.f32 %v4687, %v4689
          %v4692 = vadd.f32 %v4691, %v2563
          %v4693 = vadd.f32 %v4692, %v4149
          %v4694 = vadd.f32 %v4693, %v2554
          %4695 = vrot.lane.b32.xlu0 %v2545, 125
          %v4696 = vpop.permute.xlu0 %4695
          %v4698 = vadd.f32 %v4694, %v4696
          %4700 = vrot.lane.b32.xlu0 %v2543, 124
          %v4701 = vpop.permute.xlu0 %4700
          %v4703 = vadd.f32 %v4698, %v4701
          %v4704 = vadd.f32 %v4703, %v2589
          %4705 = vrot.lane.b32.xlu0 %v2583, 127
          %v4706 = vpop.permute.xlu0 %4705
          %v4708 = vadd.f32 %v4704, %v4706
          %v4709 = vadd.f32 %v4708, %v2580
          %4710 = vrot.lane.b32.xlu0 %v2571, 125
          %v4711 = vpop.permute.xlu0 %4710
          %v4713 = vadd.f32 %v4709, %v4711
          %4715 = vrot.lane.b32.xlu0 %v2569, 124
          %v4716 = vpop.permute.xlu0 %4715
          %v4718 = vadd.f32 %v4713, %v4716
          %v4719 = vmax.f32 %v4718, -5.0
          %v4720 = vmin.f32 %v4719, 5.0
          %s4721 = sadd.s32 %s157, 976
          %s4722 = scalar_lea.vmem %s148, %s4721 [#allocation5]
          %4723 = vst.msk [vmem:[%s4722] sm:$0xff] %vm221, %v4720
        $region33: #{tpu_custom_call.1} parent=23 // loop_footer
          %s156 = sadd.s32 1, %s152
        $region34: #{tpu_custom_call.1} parent=23 // loop_footer_branch
          %151 = sbr.rel target = $region30
        $region35: #{tpu_custom_call.1} parent=23 // loop_exit
          _
        %s4724 = sand.u32 %s66, 1
        %s4725 = scalar_lea.sflag [#allocation4], %s4724
        %s4726 = sand.u32 %s66, 1
        %s4727 = smul.addr %s4726, 992
        %s4728 = scalar_lea.vmem [#allocation5], %s4727
        // Predicated region
        $region36: #{tpu_custom_call.1} parent=23 // pred_check
          %p4729 = pneg %p76
        $region37: #{tpu_custom_call.1} parent=23 // pred_check_branch
          %4731 = sbr.rel (%p4729) target = $region39
        $region38: #{tpu_custom_call.1} parent=23 // pred_region
          %s4732 = smul.u32 2, %s23
          %s4734 = ssub.s32 15872, 15872
          %4735 = vsyncadd %s4725, %s4734
          %s4736 = smul.addr %s22, 124
          %s4737 = sadd.s32 %s4732, %s4736
          %s4738 = smul.addr %s4737, 128
          %s4739 = scalar_lea.hbm %s1, %s4738
          %s4740 = sshll.u32 %s4728, 4
          %s4741 = int_to_ptr.vmem [resolvable:$true] %s4740
          %4746 = dma.vmem_to_hbm [thread:$0]  %s4741, 15872, %s4739, %s4725, 128, 128, 8
        $region39: #{tpu_custom_call.1} parent=23 // pred_fallthru
          _
      $region24: #{tpu_custom_call.1} parent=5 // pred_fallthru
        _
      %p4747 = scmp.le.s32.totalorder 2, %s13
      // Predicated region
      $region40: #{tpu_custom_call.1} parent=5 // pred_check
        %p4748 = pneg %p4747
      $region41: #{tpu_custom_call.1} parent=5 // pred_check_branch
        %4750 = sbr.rel (%p4748) target = $region43
      $region42: #{tpu_custom_call.1} parent=5 // pred_region
        %s4751 = ssub.s32 %s13, 2
        // Predicated region
        $region44: #{tpu_custom_call.1} parent=42 // pred_check
          %p4752 = pneg %p82
        $region45: #{tpu_custom_call.1} parent=42 // pred_check_branch
          %4754 = sbr.rel (%p4752) target = $region47
        $region46: #{tpu_custom_call.1} parent=42 // pred_region
          %s4755 = sand.u32 %s67, 1
          %s4756 = scalar_lea.sflag [#allocation4], %s4755
          %s4757 = sand.u32 %s67, 1
          %s4758 = smul.addr %s4757, 992
          %s4759 = scalar_lea.vmem [#allocation5], %s4758
          %4760 = dma.done %s4756, 15872
        $region47: #{tpu_custom_call.1} parent=42 // pred_fallthru
          _
      $region43: #{tpu_custom_call.1} parent=5 // pred_fallthru
        _
    $region6: #{tpu_custom_call.1} parent=1 // loop_footer
      %s17 = sadd.s32 1, %s13
    $region7: #{tpu_custom_call.1} parent=1 // loop_footer_branch
      %12 = sbr.rel target = $region3
    $region8: #{tpu_custom_call.1} parent=1 // loop_exit
      _
    %4761 = vsyncpa [#allocation3], 1
    %s4762 = scalar_lea.sflag [#allocation3], 1
    %4763 = vsyncpa %s4762, 1
    %4764 = vsyncpa [#allocation4], 1
    %s4765 = scalar_lea.sflag [#allocation4], 1
    %4766 = vsyncpa %s4765, 1

</llo_original>
